<compile_context>
chip_gen: v5e
topology: v5e:2x2
jax: 0.10.0
libtpu: 0.0.40
codegen_flags: <defaults>
</compile_context>

<pallas_src>
import functools
import math

import jax
import jax.numpy as jnp
from jax.experimental import pallas as pl
from jax.experimental.pallas import tpu as pltpu


# ----------------------------- in-kernel helpers -----------------------------

def _layernorm(x, w, b, eps=1e-5):
    mu = jnp.mean(x, axis=-1, keepdims=True)
    var = jnp.mean(jnp.square(x - mu), axis=-1, keepdims=True)
    return (x - mu) * jax.lax.rsqrt(var + eps) * w + b


def _gelu(x):
    # TODO(synk): PyTorch activation='gelu' is the exact erf GELU; tanh
    # approximation (max abs dev ~1e-3) is used for guaranteed Mosaic lowering.
    c = 0.7978845608028654  # sqrt(2/pi)
    return 0.5 * x * (1.0 + jnp.tanh(c * (x + 0.044715 * x * x * x)))


def _sigmoid(x):
    # division-free and numerically robust; tanh runs on the (otherwise idle) EUP
    return 0.5 * (jnp.tanh(0.5 * x) + 1.0)


# --------------------------------- kernel ------------------------------------

_BRANCH_KEYS = ('w_in', 'b_in', 'wqkv', 'bqkv', 'wo', 'bo', 'ln1w', 'ln1b',
                'w1', 'b1', 'w2', 'b2', 'ln2w', 'ln2b', 'fnw', 'fnb')
_PER_BRANCH = len(_BRANCH_KEYS)  # 16 weight refs per branch


def fused_forward_kernel(*refs, B, S, layer_num, branch_cfgs):
    """Whole forward in one invocation.

    refs layout (all whole-array VMEM refs):
      [x_talk, x_gaze, x_me]                          3 inputs, each (B*S, F_branch)
      16 weight refs per branch * 3 branches          48 weights (per-layer stacked)
      [clf_wt, clf_wg, clf_wm, clf_b]                 4 classifier refs
      o_ref                                           output (B, out_dim)
    """
    n_branch = len(branch_cfgs)
    xs = refs[:n_branch]
    w_off = n_branch
    clf_refs = refs[w_off + n_branch * _PER_BRANCH:
                    w_off + n_branch * _PER_BRANCH + n_branch + 1]
    o_ref = refs[-1]
    BS = B * S

    pooled = []
    for bi, (H, nh) in enumerate(branch_cfgs):
        (w_in, b_in, wqkv, bqkv, wo, bo, ln1w, ln1b,
         w1, b1, w2, b2, ln2w, ln2b, fnw, fnb) = refs[w_off + bi * _PER_BRANCH:
                                                      w_off + (bi + 1) * _PER_BRANCH]
        hd = H // nh
        scale = 1.0 / math.sqrt(hd)

        # input Linear + ReLU in the flattened (B*S, F) domain
        h = jnp.maximum(
            jnp.dot(xs[bi][...], w_in[...],
                    preferred_element_type=jnp.float32) + b_in[...], 0.0)

        for l in range(layer_num):
            # ---- multi-head self attention: one packed QKV matmul ----
            qkv = jnp.dot(h, wqkv[l],
                          preferred_element_type=jnp.float32) + bqkv[l]     # (BS, 3H)
            wo_l = wo[l]                                                     # (H, H)
            attn = bo[l]                                                     # (1, H), broadcasts
            for hh in range(nh):
                lo = hh * hd
                qh = qkv[:, lo:lo + hd].reshape(B, S, hd)
                kh = qkv[:, H + lo:H + lo + hd].reshape(B, S, hd)
                vh = qkv[:, 2 * H + lo:2 * H + lo + hd].reshape(B, S, hd)
                s = jnp.einsum('bqd,bkd->bqk', qh, kh,
                               preferred_element_type=jnp.float32) * scale   # (B,S,S)
                s = s - jnp.max(s, axis=-1, keepdims=True)
                p = jnp.exp(s)
                p = p * pl.reciprocal(jnp.sum(p, axis=-1, keepdims=True), approx=True)
                ctx = jnp.einsum('bqk,bkd->bqd', p, vh,
                                 preferred_element_type=jnp.float32)         # (B,S,hd)
                # per-head slab of the output projection:
                #   sum_h ctx_h @ Wo[h*hd:(h+1)*hd, :] == concat(ctx) @ Wo
                attn = attn + jnp.dot(ctx.reshape(BS, hd), wo_l[lo:lo + hd, :],
                                      preferred_element_type=jnp.float32)

            # ---- post-norm encoder layer (PyTorch norm_first=False, eval) ----
            y = _layernorm(h + attn, ln1w[l], ln1b[l])
            f = _gelu(jnp.dot(y, w1[l], preferred_element_type=jnp.float32) + b1[l])
            f = jnp.dot(f, w2[l], preferred_element_type=jnp.float32) + b2[l]
            h = _layernorm(y + f, ln2w[l], ln2b[l])

        # TransformerEncoder final norm, then mean over the sequence axis
        h = _layernorm(h, fnw[...], fnb[...])
        pooled.append(jnp.mean(h.reshape(B, S, H), axis=1))                  # (B, H)

    # classifier: Linear over concat([talk, other_gaze, me_gaze]) + Sigmoid
    logits = clf_refs[-1][...]                                               # (1, out_dim)
    for bi in range(n_branch):
        logits = logits + jnp.dot(pooled[bi], clf_refs[bi][...],
                                  preferred_element_type=jnp.float32)
    o_ref[...] = _sigmoid(logits)


# ------------------------------ pallas wrapper --------------------------------

def _vmem_spec():
    return pl.BlockSpec(memory_space=pltpu.MemorySpace.VMEM)


def att_combine_me_forward(params, talk, candi, right, middle, left):
    B, S, _ = talk.shape
    other_gaze = jnp.concatenate([right, middle, left], axis=2)   # torch.cat(dim=2)

    branch_inputs = (talk, other_gaze, candi)                     # talk | gaze | me
    branch_params = (params['talk'], params['gaze'], params['me'])

    branch_cfgs = tuple((bp['w_in'].shape[1], bp['heads']) for bp in branch_params)
    layer_num = branch_params[0]['wqkv'].shape[0]
    out_dim = params['clf_b'].shape[1]

    args = [x.reshape(B * S, x.shape[2]) for x in branch_inputs]
    for bp in branch_params:
        args += [bp[k] for k in _BRANCH_KEYS]
    args += [params['clf_wt'], params['clf_wg'], params['clf_wm'], params['clf_b']]

    kernel = functools.partial(fused_forward_kernel, B=B, S=S,
                               layer_num=layer_num, branch_cfgs=branch_cfgs)
    return pl.pallas_call(
        kernel,
        out_shape=jax.ShapeDtypeStruct((B, out_dim), jnp.float32),
        in_specs=[_vmem_spec() for _ in args],
        out_specs=_vmem_spec(),
    )(*args)


# --------------------------- deterministic parameters --------------------------

def init_params(key, *, talk_fea, talk_hidden, me_gaze_fea, me_gaze_hidden,
                gaze_fea, gaze_hidden, layer_num, tfm_head_talk, tfm_head_gaze,
                head_me_gaze, out_dim):
    keys = iter(jax.random.split(key, 128))

    def nrm(shape, fan_in, scale=1.0):
        return jax.random.normal(next(keys), shape, jnp.float32) * (scale / math.sqrt(fan_in))

    def make_branch(fea, H, nh):
        L = layer_num
        return dict(
            heads=nh,
            w_in=nrm((fea, H), fea), b_in=nrm((1, H), fea, 0.1),
            wqkv=nrm((L, H, 3 * H), H), bqkv=nrm((L, 1, 3 * H), H, 0.1),
            wo=nrm((L, H, H), H), bo=nrm((L, 1, H), H, 0.1),
            ln1w=jnp.ones((L, 1, H), jnp.float32), ln1b=jnp.zeros((L, 1, H), jnp.float32),
            w1=nrm((L, H, H), H), b1=nrm((L, 1, H), H, 0.1),   # dim_feedforward == hidden
            w2=nrm((L, H, H), H), b2=nrm((L, 1, H), H, 0.1),
            ln2w=jnp.ones((L, 1, H), jnp.float32), ln2b=jnp.zeros((L, 1, H), jnp.float32),
            fnw=jnp.ones((1, H), jnp.float32), fnb=jnp.zeros((1, H), jnp.float32),
        )

    params = dict(
        talk=make_branch(talk_fea, talk_hidden, tfm_head_talk),
        gaze=make_branch(3 * gaze_fea, gaze_hidden, tfm_head_gaze),
        me=make_branch(me_gaze_fea, me_gaze_hidden, head_me_gaze),
    )
    total_h = talk_hidden + gaze_hidden + me_gaze_hidden
    w_clf = nrm((total_h, out_dim), total_h)   # Linear over cat([talk, gaze, me])
    params['clf_wt'] = w_clf[:talk_hidden]
    params['clf_wg'] = w_clf[talk_hidden:talk_hidden + gaze_hidden]
    params['clf_wm'] = w_clf[talk_hidden + gaze_hidden:]
    params['clf_b'] = nrm((1, out_dim), total_h, 0.1)
    return params


# ------------------------------------ main -------------------------------------

if __name__ == "__main__":
    B, S = 2, 8
    talk_fea, me_gaze_fea, gaze_fea = 12, 10, 6
    talk_hidden, me_gaze_hidden, gaze_hidden = 32, 32, 32
    layer_num = 2
    tfm_head_talk, tfm_head_gaze, head_me_gaze = 4, 4, 4
    out_dim = 4

    root = jax.random.PRNGKey(0)
    pkey, dkey = jax.random.split(root)
    params = init_params(pkey, talk_fea=talk_fea, talk_hidden=talk_hidden,
                         me_gaze_fea=me_gaze_fea, me_gaze_hidden=me_gaze_hidden,
                         gaze_fea=gaze_fea, gaze_hidden=gaze_hidden,
                         layer_num=layer_num, tfm_head_talk=tfm_head_talk,
                         tfm_head_gaze=tfm_head_gaze, head_me_gaze=head_me_gaze,
                         out_dim=out_dim)

    dk = jax.random.split(dkey, 5)
    talk = jax.random.normal(dk[0], (B, S, talk_fea), jnp.float32)
    candi = jax.random.normal(dk[1], (B, S, me_gaze_fea), jnp.float32)
    right = jax.random.normal(dk[2], (B, S, gaze_fea), jnp.float32)
    middle = jax.random.normal(dk[3], (B, S, gaze_fea), jnp.float32)
    left = jax.random.normal(dk[4], (B, S, gaze_fea), jnp.float32)

    out = att_combine_me_forward(params, talk, candi, right, middle, left)
    out = jax.block_until_ready(out)

    assert out.shape == (B, out_dim)
    assert bool(jnp.all(jnp.isfinite(out)))
    assert bool(jnp.all((out >= 0.0) & (out <= 1.0)))   # sigmoid output range
    print("KERNEL_OK")
</pallas_src>

<mosaic_0001>
module attributes {stable_mosaic.version = 11 : i64} {
  func.func @fused_forward_kernel(%arg0: memref<16x12xf32, #tpu.memory_space<vmem>>, %arg1: memref<16x18xf32, #tpu.memory_space<vmem>>, %arg2: memref<16x10xf32, #tpu.memory_space<vmem>>, %arg3: memref<12x32xf32, #tpu.memory_space<vmem>>, %arg4: memref<1x32xf32, #tpu.memory_space<vmem>>, %arg5: memref<2x32x96xf32, #tpu.memory_space<vmem>>, %arg6: memref<2x1x96xf32, #tpu.memory_space<vmem>>, %arg7: memref<2x32x32xf32, #tpu.memory_space<vmem>>, %arg8: memref<2x1x32xf32, #tpu.memory_space<vmem>>, %arg9: memref<2x1x32xf32, #tpu.memory_space<vmem>>, %arg10: memref<2x1x32xf32, #tpu.memory_space<vmem>>, %arg11: memref<2x32x32xf32, #tpu.memory_space<vmem>>, %arg12: memref<2x1x32xf32, #tpu.memory_space<vmem>>, %arg13: memref<2x32x32xf32, #tpu.memory_space<vmem>>, %arg14: memref<2x1x32xf32, #tpu.memory_space<vmem>>, %arg15: memref<2x1x32xf32, #tpu.memory_space<vmem>>, %arg16: memref<2x1x32xf32, #tpu.memory_space<vmem>>, %arg17: memref<1x32xf32, #tpu.memory_space<vmem>>, %arg18: memref<1x32xf32, #tpu.memory_space<vmem>>, %arg19: memref<18x32xf32, #tpu.memory_space<vmem>>, %arg20: memref<1x32xf32, #tpu.memory_space<vmem>>, %arg21: memref<2x32x96xf32, #tpu.memory_space<vmem>>, %arg22: memref<2x1x96xf32, #tpu.memory_space<vmem>>, %arg23: memref<2x32x32xf32, #tpu.memory_space<vmem>>, %arg24: memref<2x1x32xf32, #tpu.memory_space<vmem>>, %arg25: memref<2x1x32xf32, #tpu.memory_space<vmem>>, %arg26: memref<2x1x32xf32, #tpu.memory_space<vmem>>, %arg27: memref<2x32x32xf32, #tpu.memory_space<vmem>>, %arg28: memref<2x1x32xf32, #tpu.memory_space<vmem>>, %arg29: memref<2x32x32xf32, #tpu.memory_space<vmem>>, %arg30: memref<2x1x32xf32, #tpu.memory_space<vmem>>, %arg31: memref<2x1x32xf32, #tpu.memory_space<vmem>>, %arg32: memref<2x1x32xf32, #tpu.memory_space<vmem>>, %arg33: memref<1x32xf32, #tpu.memory_space<vmem>>, %arg34: memref<1x32xf32, #tpu.memory_space<vmem>>, %arg35: memref<10x32xf32, #tpu.memory_space<vmem>>, %arg36: memref<1x32xf32, #tpu.memory_space<vmem>>, %arg37: memref<2x32x96xf32, #tpu.memory_space<vmem>>, %arg38: memref<2x1x96xf32, #tpu.memory_space<vmem>>, %arg39: memref<2x32x32xf32, #tpu.memory_space<vmem>>, %arg40: memref<2x1x32xf32, #tpu.memory_space<vmem>>, %arg41: memref<2x1x32xf32, #tpu.memory_space<vmem>>, %arg42: memref<2x1x32xf32, #tpu.memory_space<vmem>>, %arg43: memref<2x32x32xf32, #tpu.memory_space<vmem>>, %arg44: memref<2x1x32xf32, #tpu.memory_space<vmem>>, %arg45: memref<2x32x32xf32, #tpu.memory_space<vmem>>, %arg46: memref<2x1x32xf32, #tpu.memory_space<vmem>>, %arg47: memref<2x1x32xf32, #tpu.memory_space<vmem>>, %arg48: memref<2x1x32xf32, #tpu.memory_space<vmem>>, %arg49: memref<1x32xf32, #tpu.memory_space<vmem>>, %arg50: memref<1x32xf32, #tpu.memory_space<vmem>>, %arg51: memref<32x4xf32, #tpu.memory_space<vmem>>, %arg52: memref<32x4xf32, #tpu.memory_space<vmem>>, %arg53: memref<32x4xf32, #tpu.memory_space<vmem>>, %arg54: memref<1x4xf32, #tpu.memory_space<vmem>>, %arg55: memref<2x4xf32, #tpu.memory_space<vmem>>) attributes {dimension_semantics = [], scalar_prefetch = 0 : i64, scratch_operands = 0 : i64, tpu.core_type = #tpu.core_type<tc>} {
    %c0 = arith.constant 0 : index
    %c0_0 = arith.constant 0 : index
    %0 = vector.load %arg0[%c0, %c0_0] : memref<16x12xf32, #tpu.memory_space<vmem>>, vector<16x12xf32>
    %c0_1 = arith.constant 0 : index
    %c0_2 = arith.constant 0 : index
    %1 = vector.load %arg3[%c0_1, %c0_2] : memref<12x32xf32, #tpu.memory_space<vmem>>, vector<12x32xf32>
    %cst = arith.constant dense<0.000000e+00> : vector<16x32xf32>
    %2 = tpu.matmul %0, %1, %cst {dimension_numbers = #tpu.dot_dimension_numbers<[1], [0], [0], [1], [0, 0, 1, 1], [], []>} : vector<16x12xf32>, vector<12x32xf32>, vector<16x32xf32> -> vector<16x32xf32>
    %c0_3 = arith.constant 0 : index
    %c0_4 = arith.constant 0 : index
    %3 = vector.load %arg4[%c0_3, %c0_4] : memref<1x32xf32, #tpu.memory_space<vmem>>, vector<1x32xf32>
    %4 = vector.broadcast %3 : vector<1x32xf32> to vector<16x32xf32>
    %5 = arith.addf %2, %4 : vector<16x32xf32>
    %cst_5 = arith.constant 0.000000e+00 : f32
    %6 = vector.broadcast %cst_5 : f32 to vector<16x32xf32>
    %7 = arith.maximumf %5, %6 : vector<16x32xf32>
    %c0_6 = arith.constant 0 : index
    %c0_7 = arith.constant 0 : index
    %c0_8 = arith.constant 0 : index
    %8 = vector.load %arg5[%c0_6, %c0_7, %c0_8] : memref<2x32x96xf32, #tpu.memory_space<vmem>>, vector<1x32x96xf32>
    %9 = vector.shape_cast %8 : vector<1x32x96xf32> to vector<32x96xf32>
    %cst_9 = arith.constant dense<0.000000e+00> : vector<16x96xf32>
    %10 = tpu.matmul %7, %9, %cst_9 {dimension_numbers = #tpu.dot_dimension_numbers<[1], [0], [0], [1], [0, 0, 1, 1], [], []>} : vector<16x32xf32>, vector<32x96xf32>, vector<16x96xf32> -> vector<16x96xf32>
    %c0_10 = arith.constant 0 : index
    %c0_11 = arith.constant 0 : index
    %c0_12 = arith.constant 0 : index
    %11 = vector.load %arg6[%c0_10, %c0_11, %c0_12] : memref<2x1x96xf32, #tpu.memory_space<vmem>>, vector<1x1x96xf32>
    %12 = vector.shape_cast %11 : vector<1x1x96xf32> to vector<1x96xf32>
    %13 = vector.broadcast %12 : vector<1x96xf32> to vector<16x96xf32>
    %14 = arith.addf %10, %13 : vector<16x96xf32>
    %c0_13 = arith.constant 0 : index
    %c0_14 = arith.constant 0 : index
    %c0_15 = arith.constant 0 : index
    %15 = vector.load %arg7[%c0_13, %c0_14, %c0_15] : memref<2x32x32xf32, #tpu.memory_space<vmem>>, vector<1x32x32xf32>
    %16 = vector.shape_cast %15 : vector<1x32x32xf32> to vector<32x32xf32>
    %c0_16 = arith.constant 0 : index
    %c0_17 = arith.constant 0 : index
    %c0_18 = arith.constant 0 : index
    %17 = vector.load %arg8[%c0_16, %c0_17, %c0_18] : memref<2x1x32xf32, #tpu.memory_space<vmem>>, vector<1x1x32xf32>
    %18 = vector.shape_cast %17 : vector<1x1x32xf32> to vector<1x32xf32>
    %19 = vector.extract_strided_slice %14 {offsets = [0, 0], sizes = [16, 8], strides = [1, 1]} : vector<16x96xf32> to vector<16x8xf32>
    %20 = vector.shape_cast %19 : vector<16x8xf32> to vector<2x8x8xf32>
    %21 = vector.extract_strided_slice %14 {offsets = [0, 32], sizes = [16, 8], strides = [1, 1]} : vector<16x96xf32> to vector<16x8xf32>
    %22 = vector.shape_cast %21 : vector<16x8xf32> to vector<2x8x8xf32>
    %23 = vector.extract_strided_slice %14 {offsets = [0, 64], sizes = [16, 8], strides = [1, 1]} : vector<16x96xf32> to vector<16x8xf32>
    %24 = vector.shape_cast %23 : vector<16x8xf32> to vector<2x8x8xf32>
    "tpu.trace_start"() <{level = 10 : i32, message = "bqd,bkd->bqk"}> : () -> ()
    %cst_19 = arith.constant dense<0.000000e+00> : vector<2x8x8xf32>
    %25 = tpu.matmul %20, %22, %cst_19 {dimension_numbers = #tpu.dot_dimension_numbers<[2], [2], [1], [1], [0, 0, 0, 1, 1, 1], [0], [0]>} : vector<2x8x8xf32>, vector<2x8x8xf32>, vector<2x8x8xf32> -> vector<2x8x8xf32>
    "tpu.trace_stop"() : () -> ()
    %cst_20 = arith.constant 0.353553385 : f32
    %26 = vector.broadcast %cst_20 : f32 to vector<2x8x8xf32>
    %27 = arith.mulf %25, %26 : vector<2x8x8xf32>
    %cst_21 = arith.constant dense<0xFF800000> : vector<2x8xf32>
    %28 = vector.multi_reduction <maximumf>, %27, %cst_21 [2] : vector<2x8x8xf32> to vector<2x8xf32>
    %29 = vector.shape_cast %28 : vector<2x8xf32> to vector<2x8x1xf32>
    %30 = vector.broadcast %29 : vector<2x8x1xf32> to vector<2x8x8xf32>
    %31 = arith.subf %27, %30 : vector<2x8x8xf32>
    %32 = math.exp %31 : vector<2x8x8xf32>
    %cst_22 = arith.constant dense<0.000000e+00> : vector<2x8xf32>
    %33 = vector.multi_reduction <add>, %32, %cst_22 [2] : vector<2x8x8xf32> to vector<2x8xf32>
    %34 = vector.shape_cast %33 : vector<2x8xf32> to vector<2x8x1xf32>
    %35 = tpu.reciprocal %34 {approx = true} : vector<2x8x1xf32> -> vector<2x8x1xf32>
    %36 = vector.broadcast %35 : vector<2x8x1xf32> to vector<2x8x8xf32>
    %37 = arith.mulf %32, %36 : vector<2x8x8xf32>
    "tpu.trace_start"() <{level = 10 : i32, message = "bqk,bkd->bqd"}> : () -> ()
    %cst_23 = arith.constant dense<0.000000e+00> : vector<2x8x8xf32>
    %38 = tpu.matmul %37, %24, %cst_23 {dimension_numbers = #tpu.dot_dimension_numbers<[2], [1], [1], [2], [0, 0, 0, 1, 1, 2], [0], [0]>} : vector<2x8x8xf32>, vector<2x8x8xf32>, vector<2x8x8xf32> -> vector<2x8x8xf32>
    "tpu.trace_stop"() : () -> ()
    %39 = vector.shape_cast %38 : vector<2x8x8xf32> to vector<16x8xf32>
    %40 = vector.extract_strided_slice %16 {offsets = [0, 0], sizes = [8, 32], strides = [1, 1]} : vector<32x32xf32> to vector<8x32xf32>
    %cst_24 = arith.constant dense<0.000000e+00> : vector<16x32xf32>
    %41 = tpu.matmul %39, %40, %cst_24 {dimension_numbers = #tpu.dot_dimension_numbers<[1], [0], [0], [1], [0, 0, 1, 1], [], []>} : vector<16x8xf32>, vector<8x32xf32>, vector<16x32xf32> -> vector<16x32xf32>
    %42 = vector.broadcast %18 : vector<1x32xf32> to vector<16x32xf32>
    %43 = arith.addf %42, %41 : vector<16x32xf32>
    %44 = vector.extract_strided_slice %14 {offsets = [0, 8], sizes = [16, 8], strides = [1, 1]} : vector<16x96xf32> to vector<16x8xf32>
    %45 = vector.shape_cast %44 : vector<16x8xf32> to vector<2x8x8xf32>
    %46 = vector.extract_strided_slice %14 {offsets = [0, 40], sizes = [16, 8], strides = [1, 1]} : vector<16x96xf32> to vector<16x8xf32>
    %47 = vector.shape_cast %46 : vector<16x8xf32> to vector<2x8x8xf32>
    %48 = vector.extract_strided_slice %14 {offsets = [0, 72], sizes = [16, 8], strides = [1, 1]} : vector<16x96xf32> to vector<16x8xf32>
    %49 = vector.shape_cast %48 : vector<16x8xf32> to vector<2x8x8xf32>
    "tpu.trace_start"() <{level = 10 : i32, message = "bqd,bkd->bqk"}> : () -> ()
    %cst_25 = arith.constant dense<0.000000e+00> : vector<2x8x8xf32>
    %50 = tpu.matmul %45, %47, %cst_25 {dimension_numbers = #tpu.dot_dimension_numbers<[2], [2], [1], [1], [0, 0, 0, 1, 1, 1], [0], [0]>} : vector<2x8x8xf32>, vector<2x8x8xf32>, vector<2x8x8xf32> -> vector<2x8x8xf32>
    "tpu.trace_stop"() : () -> ()
    %cst_26 = arith.constant 0.353553385 : f32
    %51 = vector.broadcast %cst_26 : f32 to vector<2x8x8xf32>
    %52 = arith.mulf %50, %51 : vector<2x8x8xf32>
    %cst_27 = arith.constant dense<0xFF800000> : vector<2x8xf32>
    %53 = vector.multi_reduction <maximumf>, %52, %cst_27 [2] : vector<2x8x8xf32> to vector<2x8xf32>
    %54 = vector.shape_cast %53 : vector<2x8xf32> to vector<2x8x1xf32>
    %55 = vector.broadcast %54 : vector<2x8x1xf32> to vector<2x8x8xf32>
    %56 = arith.subf %52, %55 : vector<2x8x8xf32>
    %57 = math.exp %56 : vector<2x8x8xf32>
    %cst_28 = arith.constant dense<0.000000e+00> : vector<2x8xf32>
    %58 = vector.multi_reduction <add>, %57, %cst_28 [2] : vector<2x8x8xf32> to vector<2x8xf32>
    %59 = vector.shape_cast %58 : vector<2x8xf32> to vector<2x8x1xf32>
    %60 = tpu.reciprocal %59 {approx = true} : vector<2x8x1xf32> -> vector<2x8x1xf32>
    %61 = vector.broadcast %60 : vector<2x8x1xf32> to vector<2x8x8xf32>
    %62 = arith.mulf %57, %61 : vector<2x8x8xf32>
    "tpu.trace_start"() <{level = 10 : i32, message = "bqk,bkd->bqd"}> : () -> ()
    %cst_29 = arith.constant dense<0.000000e+00> : vector<2x8x8xf32>
    %63 = tpu.matmul %62, %49, %cst_29 {dimension_numbers = #tpu.dot_dimension_numbers<[2], [1], [1], [2], [0, 0, 0, 1, 1, 2], [0], [0]>} : vector<2x8x8xf32>, vector<2x8x8xf32>, vector<2x8x8xf32> -> vector<2x8x8xf32>
    "tpu.trace_stop"() : () -> ()
    %64 = vector.shape_cast %63 : vector<2x8x8xf32> to vector<16x8xf32>
    %65 = vector.extract_strided_slice %16 {offsets = [8, 0], sizes = [8, 32], strides = [1, 1]} : vector<32x32xf32> to vector<8x32xf32>
    %cst_30 = arith.constant dense<0.000000e+00> : vector<16x32xf32>
    %66 = tpu.matmul %64, %65, %cst_30 {dimension_numbers = #tpu.dot_dimension_numbers<[1], [0], [0], [1], [0, 0, 1, 1], [], []>} : vector<16x8xf32>, vector<8x32xf32>, vector<16x32xf32> -> vector<16x32xf32>
    %67 = arith.addf %43, %66 : vector<16x32xf32>
    %68 = vector.extract_strided_slice %14 {offsets = [0, 16], sizes = [16, 8], strides = [1, 1]} : vector<16x96xf32> to vector<16x8xf32>
    %69 = vector.shape_cast %68 : vector<16x8xf32> to vector<2x8x8xf32>
    %70 = vector.extract_strided_slice %14 {offsets = [0, 48], sizes = [16, 8], strides = [1, 1]} : vector<16x96xf32> to vector<16x8xf32>
    %71 = vector.shape_cast %70 : vector<16x8xf32> to vector<2x8x8xf32>
    %72 = vector.extract_strided_slice %14 {offsets = [0, 80], sizes = [16, 8], strides = [1, 1]} : vector<16x96xf32> to vector<16x8xf32>
    %73 = vector.shape_cast %72 : vector<16x8xf32> to vector<2x8x8xf32>
    "tpu.trace_start"() <{level = 10 : i32, message = "bqd,bkd->bqk"}> : () -> ()
    %cst_31 = arith.constant dense<0.000000e+00> : vector<2x8x8xf32>
    %74 = tpu.matmul %69, %71, %cst_31 {dimension_numbers = #tpu.dot_dimension_numbers<[2], [2], [1], [1], [0, 0, 0, 1, 1, 1], [0], [0]>} : vector<2x8x8xf32>, vector<2x8x8xf32>, vector<2x8x8xf32> -> vector<2x8x8xf32>
    "tpu.trace_stop"() : () -> ()
    %cst_32 = arith.constant 0.353553385 : f32
    %75 = vector.broadcast %cst_32 : f32 to vector<2x8x8xf32>
    %76 = arith.mulf %74, %75 : vector<2x8x8xf32>
    %cst_33 = arith.constant dense<0xFF800000> : vector<2x8xf32>
    %77 = vector.multi_reduction <maximumf>, %76, %cst_33 [2] : vector<2x8x8xf32> to vector<2x8xf32>
    %78 = vector.shape_cast %77 : vector<2x8xf32> to vector<2x8x1xf32>
    %79 = vector.broadcast %78 : vector<2x8x1xf32> to vector<2x8x8xf32>
    %80 = arith.subf %76, %79 : vector<2x8x8xf32>
    %81 = math.exp %80 : vector<2x8x8xf32>
    %cst_34 = arith.constant dense<0.000000e+00> : vector<2x8xf32>
    %82 = vector.multi_reduction <add>, %81, %cst_34 [2] : vector<2x8x8xf32> to vector<2x8xf32>
    %83 = vector.shape_cast %82 : vector<2x8xf32> to vector<2x8x1xf32>
    %84 = tpu.reciprocal %83 {approx = true} : vector<2x8x1xf32> -> vector<2x8x1xf32>
    %85 = vector.broadcast %84 : vector<2x8x1xf32> to vector<2x8x8xf32>
    %86 = arith.mulf %81, %85 : vector<2x8x8xf32>
    "tpu.trace_start"() <{level = 10 : i32, message = "bqk,bkd->bqd"}> : () -> ()
    %cst_35 = arith.constant dense<0.000000e+00> : vector<2x8x8xf32>
    %87 = tpu.matmul %86, %73, %cst_35 {dimension_numbers = #tpu.dot_dimension_numbers<[2], [1], [1], [2], [0, 0, 0, 1, 1, 2], [0], [0]>} : vector<2x8x8xf32>, vector<2x8x8xf32>, vector<2x8x8xf32> -> vector<2x8x8xf32>
    "tpu.trace_stop"() : () -> ()
    %88 = vector.shape_cast %87 : vector<2x8x8xf32> to vector<16x8xf32>
    %89 = vector.extract_strided_slice %16 {offsets = [16, 0], sizes = [8, 32], strides = [1, 1]} : vector<32x32xf32> to vector<8x32xf32>
    %cst_36 = arith.constant dense<0.000000e+00> : vector<16x32xf32>
    %90 = tpu.matmul %88, %89, %cst_36 {dimension_numbers = #tpu.dot_dimension_numbers<[1], [0], [0], [1], [0, 0, 1, 1], [], []>} : vector<16x8xf32>, vector<8x32xf32>, vector<16x32xf32> -> vector<16x32xf32>
    %91 = arith.addf %67, %90 : vector<16x32xf32>
    %92 = vector.extract_strided_slice %14 {offsets = [0, 24], sizes = [16, 8], strides = [1, 1]} : vector<16x96xf32> to vector<16x8xf32>
    %93 = vector.shape_cast %92 : vector<16x8xf32> to vector<2x8x8xf32>
    %94 = vector.extract_strided_slice %14 {offsets = [0, 56], sizes = [16, 8], strides = [1, 1]} : vector<16x96xf32> to vector<16x8xf32>
    %95 = vector.shape_cast %94 : vector<16x8xf32> to vector<2x8x8xf32>
    %96 = vector.extract_strided_slice %14 {offsets = [0, 88], sizes = [16, 8], strides = [1, 1]} : vector<16x96xf32> to vector<16x8xf32>
    %97 = vector.shape_cast %96 : vector<16x8xf32> to vector<2x8x8xf32>
    "tpu.trace_start"() <{level = 10 : i32, message = "bqd,bkd->bqk"}> : () -> ()
    %cst_37 = arith.constant dense<0.000000e+00> : vector<2x8x8xf32>
    %98 = tpu.matmul %93, %95, %cst_37 {dimension_numbers = #tpu.dot_dimension_numbers<[2], [2], [1], [1], [0, 0, 0, 1, 1, 1], [0], [0]>} : vector<2x8x8xf32>, vector<2x8x8xf32>, vector<2x8x8xf32> -> vector<2x8x8xf32>
    "tpu.trace_stop"() : () -> ()
    %cst_38 = arith.constant 0.353553385 : f32
    %99 = vector.broadcast %cst_38 : f32 to vector<2x8x8xf32>
    %100 = arith.mulf %98, %99 : vector<2x8x8xf32>
    %cst_39 = arith.constant dense<0xFF800000> : vector<2x8xf32>
    %101 = vector.multi_reduction <maximumf>, %100, %cst_39 [2] : vector<2x8x8xf32> to vector<2x8xf32>
    %102 = vector.shape_cast %101 : vector<2x8xf32> to vector<2x8x1xf32>
    %103 = vector.broadcast %102 : vector<2x8x1xf32> to vector<2x8x8xf32>
    %104 = arith.subf %100, %103 : vector<2x8x8xf32>
    %105 = math.exp %104 : vector<2x8x8xf32>
    %cst_40 = arith.constant dense<0.000000e+00> : vector<2x8xf32>
    %106 = vector.multi_reduction <add>, %105, %cst_40 [2] : vector<2x8x8xf32> to vector<2x8xf32>
    %107 = vector.shape_cast %106 : vector<2x8xf32> to vector<2x8x1xf32>
    %108 = tpu.reciprocal %107 {approx = true} : vector<2x8x1xf32> -> vector<2x8x1xf32>
    %109 = vector.broadcast %108 : vector<2x8x1xf32> to vector<2x8x8xf32>
    %110 = arith.mulf %105, %109 : vector<2x8x8xf32>
    "tpu.trace_start"() <{level = 10 : i32, message = "bqk,bkd->bqd"}> : () -> ()
    %cst_41 = arith.constant dense<0.000000e+00> : vector<2x8x8xf32>
    %111 = tpu.matmul %110, %97, %cst_41 {dimension_numbers = #tpu.dot_dimension_numbers<[2], [1], [1], [2], [0, 0, 0, 1, 1, 2], [0], [0]>} : vector<2x8x8xf32>, vector<2x8x8xf32>, vector<2x8x8xf32> -> vector<2x8x8xf32>
    "tpu.trace_stop"() : () -> ()
    %112 = vector.shape_cast %111 : vector<2x8x8xf32> to vector<16x8xf32>
    %113 = vector.extract_strided_slice %16 {offsets = [24, 0], sizes = [8, 32], strides = [1, 1]} : vector<32x32xf32> to vector<8x32xf32>
    %cst_42 = arith.constant dense<0.000000e+00> : vector<16x32xf32>
    %114 = tpu.matmul %112, %113, %cst_42 {dimension_numbers = #tpu.dot_dimension_numbers<[1], [0], [0], [1], [0, 0, 1, 1], [], []>} : vector<16x8xf32>, vector<8x32xf32>, vector<16x32xf32> -> vector<16x32xf32>
    %115 = arith.addf %91, %114 : vector<16x32xf32>
    %116 = arith.addf %7, %115 : vector<16x32xf32>
    %c0_43 = arith.constant 0 : index
    %c0_44 = arith.constant 0 : index
    %c0_45 = arith.constant 0 : index
    %117 = vector.load %arg9[%c0_43, %c0_44, %c0_45] : memref<2x1x32xf32, #tpu.memory_space<vmem>>, vector<1x1x32xf32>
    %118 = vector.shape_cast %117 : vector<1x1x32xf32> to vector<1x32xf32>
    %c0_46 = arith.constant 0 : index
    %c0_47 = arith.constant 0 : index
    %c0_48 = arith.constant 0 : index
    %119 = vector.load %arg10[%c0_46, %c0_47, %c0_48] : memref<2x1x32xf32, #tpu.memory_space<vmem>>, vector<1x1x32xf32>
    %120 = vector.shape_cast %119 : vector<1x1x32xf32> to vector<1x32xf32>
    %cst_49 = arith.constant dense<0.000000e+00> : vector<16xf32>
    %121 = vector.multi_reduction <add>, %116, %cst_49 [1] : vector<16x32xf32> to vector<16xf32>
    %122 = vector.shape_cast %121 : vector<16xf32> to vector<16x1xf32>
    %cst_50 = arith.constant 3.200000e+01 : f32
    %123 = vector.broadcast %cst_50 : f32 to vector<16x1xf32>
    %124 = arith.divf %122, %123 : vector<16x1xf32>
    %125 = vector.broadcast %124 : vector<16x1xf32> to vector<16x32xf32>
    %126 = arith.subf %116, %125 : vector<16x32xf32>
    %127 = arith.mulf %126, %126 : vector<16x32xf32>
    %cst_51 = arith.constant dense<0.000000e+00> : vector<16xf32>
    %128 = vector.multi_reduction <add>, %127, %cst_51 [1] : vector<16x32xf32> to vector<16xf32>
    %129 = vector.shape_cast %128 : vector<16xf32> to vector<16x1xf32>
    %cst_52 = arith.constant 3.200000e+01 : f32
    %130 = vector.broadcast %cst_52 : f32 to vector<16x1xf32>
    %131 = arith.divf %129, %130 : vector<16x1xf32>
    %132 = vector.broadcast %124 : vector<16x1xf32> to vector<16x32xf32>
    %133 = arith.subf %116, %132 : vector<16x32xf32>
    %cst_53 = arith.constant 9.99999974E-6 : f32
    %134 = vector.broadcast %cst_53 : f32 to vector<16x1xf32>
    %135 = arith.addf %131, %134 : vector<16x1xf32>
    %136 = math.rsqrt %135 : vector<16x1xf32>
    %137 = vector.broadcast %136 : vector<16x1xf32> to vector<16x32xf32>
    %138 = arith.mulf %133, %137 : vector<16x32xf32>
    %139 = vector.broadcast %118 : vector<1x32xf32> to vector<16x32xf32>
    %140 = arith.mulf %138, %139 : vector<16x32xf32>
    %141 = vector.broadcast %120 : vector<1x32xf32> to vector<16x32xf32>
    %142 = arith.addf %140, %141 : vector<16x32xf32>
    %c0_54 = arith.constant 0 : index
    %c0_55 = arith.constant 0 : index
    %c0_56 = arith.constant 0 : index
    %143 = vector.load %arg11[%c0_54, %c0_55, %c0_56] : memref<2x32x32xf32, #tpu.memory_space<vmem>>, vector<1x32x32xf32>
    %144 = vector.shape_cast %143 : vector<1x32x32xf32> to vector<32x32xf32>
    %cst_57 = arith.constant dense<0.000000e+00> : vector<16x32xf32>
    %145 = tpu.matmul %142, %144, %cst_57 {dimension_numbers = #tpu.dot_dimension_numbers<[1], [0], [0], [1], [0, 0, 1, 1], [], []>} : vector<16x32xf32>, vector<32x32xf32>, vector<16x32xf32> -> vector<16x32xf32>
    %c0_58 = arith.constant 0 : index
    %c0_59 = arith.constant 0 : index
    %c0_60 = arith.constant 0 : index
    %146 = vector.load %arg12[%c0_58, %c0_59, %c0_60] : memref<2x1x32xf32, #tpu.memory_space<vmem>>, vector<1x1x32xf32>
    %147 = vector.shape_cast %146 : vector<1x1x32xf32> to vector<1x32xf32>
    %148 = vector.broadcast %147 : vector<1x32xf32> to vector<16x32xf32>
    %149 = arith.addf %145, %148 : vector<16x32xf32>
    %cst_61 = arith.constant 5.000000e-01 : f32
    %150 = vector.broadcast %cst_61 : f32 to vector<16x32xf32>
    %151 = arith.mulf %150, %149 : vector<16x32xf32>
    %cst_62 = arith.constant 4.471500e-02 : f32
    %152 = vector.broadcast %cst_62 : f32 to vector<16x32xf32>
    %153 = arith.mulf %152, %149 : vector<16x32xf32>
    %154 = arith.mulf %153, %149 : vector<16x32xf32>
    %155 = arith.mulf %154, %149 : vector<16x32xf32>
    %156 = arith.addf %149, %155 : vector<16x32xf32>
    %cst_63 = arith.constant 0.797884583 : f32
    %157 = vector.broadcast %cst_63 : f32 to vector<16x32xf32>
    %158 = arith.mulf %157, %156 : vector<16x32xf32>
    %159 = math.tanh %158 : vector<16x32xf32>
    %cst_64 = arith.constant 1.000000e+00 : f32
    %160 = vector.broadcast %cst_64 : f32 to vector<16x32xf32>
    %161 = arith.addf %160, %159 : vector<16x32xf32>
    %162 = arith.mulf %151, %161 : vector<16x32xf32>
    %c0_65 = arith.constant 0 : index
    %c0_66 = arith.constant 0 : index
    %c0_67 = arith.constant 0 : index
    %163 = vector.load %arg13[%c0_65, %c0_66, %c0_67] : memref<2x32x32xf32, #tpu.memory_space<vmem>>, vector<1x32x32xf32>
    %164 = vector.shape_cast %163 : vector<1x32x32xf32> to vector<32x32xf32>
    %cst_68 = arith.constant dense<0.000000e+00> : vector<16x32xf32>
    %165 = tpu.matmul %162, %164, %cst_68 {dimension_numbers = #tpu.dot_dimension_numbers<[1], [0], [0], [1], [0, 0, 1, 1], [], []>} : vector<16x32xf32>, vector<32x32xf32>, vector<16x32xf32> -> vector<16x32xf32>
    %c0_69 = arith.constant 0 : index
    %c0_70 = arith.constant 0 : index
    %c0_71 = arith.constant 0 : index
    %166 = vector.load %arg14[%c0_69, %c0_70, %c0_71] : memref<2x1x32xf32, #tpu.memory_space<vmem>>, vector<1x1x32xf32>
    %167 = vector.shape_cast %166 : vector<1x1x32xf32> to vector<1x32xf32>
    %168 = vector.broadcast %167 : vector<1x32xf32> to vector<16x32xf32>
    %169 = arith.addf %165, %168 : vector<16x32xf32>
    %170 = arith.addf %142, %169 : vector<16x32xf32>
    %c0_72 = arith.constant 0 : index
    %c0_73 = arith.constant 0 : index
    %c0_74 = arith.constant 0 : index
    %171 = vector.load %arg15[%c0_72, %c0_73, %c0_74] : memref<2x1x32xf32, #tpu.memory_space<vmem>>, vector<1x1x32xf32>
    %172 = vector.shape_cast %171 : vector<1x1x32xf32> to vector<1x32xf32>
    %c0_75 = arith.constant 0 : index
    %c0_76 = arith.constant 0 : index
    %c0_77 = arith.constant 0 : index
    %173 = vector.load %arg16[%c0_75, %c0_76, %c0_77] : memref<2x1x32xf32, #tpu.memory_space<vmem>>, vector<1x1x32xf32>
    %174 = vector.shape_cast %173 : vector<1x1x32xf32> to vector<1x32xf32>
    %cst_78 = arith.constant dense<0.000000e+00> : vector<16xf32>
    %175 = vector.multi_reduction <add>, %170, %cst_78 [1] : vector<16x32xf32> to vector<16xf32>
    %176 = vector.shape_cast %175 : vector<16xf32> to vector<16x1xf32>
    %cst_79 = arith.constant 3.200000e+01 : f32
    %177 = vector.broadcast %cst_79 : f32 to vector<16x1xf32>
    %178 = arith.divf %176, %177 : vector<16x1xf32>
    %179 = vector.broadcast %178 : vector<16x1xf32> to vector<16x32xf32>
    %180 = arith.subf %170, %179 : vector<16x32xf32>
    %181 = arith.mulf %180, %180 : vector<16x32xf32>
    %cst_80 = arith.constant dense<0.000000e+00> : vector<16xf32>
    %182 = vector.multi_reduction <add>, %181, %cst_80 [1] : vector<16x32xf32> to vector<16xf32>
    %183 = vector.shape_cast %182 : vector<16xf32> to vector<16x1xf32>
    %cst_81 = arith.constant 3.200000e+01 : f32
    %184 = vector.broadcast %cst_81 : f32 to vector<16x1xf32>
    %185 = arith.divf %183, %184 : vector<16x1xf32>
    %186 = vector.broadcast %178 : vector<16x1xf32> to vector<16x32xf32>
    %187 = arith.subf %170, %186 : vector<16x32xf32>
    %cst_82 = arith.constant 9.99999974E-6 : f32
    %188 = vector.broadcast %cst_82 : f32 to vector<16x1xf32>
    %189 = arith.addf %185, %188 : vector<16x1xf32>
    %190 = math.rsqrt %189 : vector<16x1xf32>
    %191 = vector.broadcast %190 : vector<16x1xf32> to vector<16x32xf32>
    %192 = arith.mulf %187, %191 : vector<16x32xf32>
    %193 = vector.broadcast %172 : vector<1x32xf32> to vector<16x32xf32>
    %194 = arith.mulf %192, %193 : vector<16x32xf32>
    %195 = vector.broadcast %174 : vector<1x32xf32> to vector<16x32xf32>
    %196 = arith.addf %194, %195 : vector<16x32xf32>
    %c1 = arith.constant 1 : index
    %c0_83 = arith.constant 0 : index
    %c0_84 = arith.constant 0 : index
    %197 = vector.load %arg5[%c1, %c0_83, %c0_84] : memref<2x32x96xf32, #tpu.memory_space<vmem>>, vector<1x32x96xf32>
    %198 = vector.shape_cast %197 : vector<1x32x96xf32> to vector<32x96xf32>
    %cst_85 = arith.constant dense<0.000000e+00> : vector<16x96xf32>
    %199 = tpu.matmul %196, %198, %cst_85 {dimension_numbers = #tpu.dot_dimension_numbers<[1], [0], [0], [1], [0, 0, 1, 1], [], []>} : vector<16x32xf32>, vector<32x96xf32>, vector<16x96xf32> -> vector<16x96xf32>
    %c1_86 = arith.constant 1 : index
    %c0_87 = arith.constant 0 : index
    %c0_88 = arith.constant 0 : index
    %200 = vector.load %arg6[%c1_86, %c0_87, %c0_88] : memref<2x1x96xf32, #tpu.memory_space<vmem>>, vector<1x1x96xf32>
    %201 = vector.shape_cast %200 : vector<1x1x96xf32> to vector<1x96xf32>
    %202 = vector.broadcast %201 : vector<1x96xf32> to vector<16x96xf32>
    %203 = arith.addf %199, %202 : vector<16x96xf32>
    %c1_89 = arith.constant 1 : index
    %c0_90 = arith.constant 0 : index
    %c0_91 = arith.constant 0 : index
    %204 = vector.load %arg7[%c1_89, %c0_90, %c0_91] : memref<2x32x32xf32, #tpu.memory_space<vmem>>, vector<1x32x32xf32>
    %205 = vector.shape_cast %204 : vector<1x32x32xf32> to vector<32x32xf32>
    %c1_92 = arith.constant 1 : index
    %c0_93 = arith.constant 0 : index
    %c0_94 = arith.constant 0 : index
    %206 = vector.load %arg8[%c1_92, %c0_93, %c0_94] : memref<2x1x32xf32, #tpu.memory_space<vmem>>, vector<1x1x32xf32>
    %207 = vector.shape_cast %206 : vector<1x1x32xf32> to vector<1x32xf32>
    %208 = vector.extract_strided_slice %203 {offsets = [0, 0], sizes = [16, 8], strides = [1, 1]} : vector<16x96xf32> to vector<16x8xf32>
    %209 = vector.shape_cast %208 : vector<16x8xf32> to vector<2x8x8xf32>
    %210 = vector.extract_strided_slice %203 {offsets = [0, 32], sizes = [16, 8], strides = [1, 1]} : vector<16x96xf32> to vector<16x8xf32>
    %211 = vector.shape_cast %210 : vector<16x8xf32> to vector<2x8x8xf32>
    %212 = vector.extract_strided_slice %203 {offsets = [0, 64], sizes = [16, 8], strides = [1, 1]} : vector<16x96xf32> to vector<16x8xf32>
    %213 = vector.shape_cast %212 : vector<16x8xf32> to vector<2x8x8xf32>
    "tpu.trace_start"() <{level = 10 : i32, message = "bqd,bkd->bqk"}> : () -> ()
    %cst_95 = arith.constant dense<0.000000e+00> : vector<2x8x8xf32>
    %214 = tpu.matmul %209, %211, %cst_95 {dimension_numbers = #tpu.dot_dimension_numbers<[2], [2], [1], [1], [0, 0, 0, 1, 1, 1], [0], [0]>} : vector<2x8x8xf32>, vector<2x8x8xf32>, vector<2x8x8xf32> -> vector<2x8x8xf32>
    "tpu.trace_stop"() : () -> ()
    %cst_96 = arith.constant 0.353553385 : f32
    %215 = vector.broadcast %cst_96 : f32 to vector<2x8x8xf32>
    %216 = arith.mulf %214, %215 : vector<2x8x8xf32>
    %cst_97 = arith.constant dense<0xFF800000> : vector<2x8xf32>
    %217 = vector.multi_reduction <maximumf>, %216, %cst_97 [2] : vector<2x8x8xf32> to vector<2x8xf32>
    %218 = vector.shape_cast %217 : vector<2x8xf32> to vector<2x8x1xf32>
    %219 = vector.broadcast %218 : vector<2x8x1xf32> to vector<2x8x8xf32>
    %220 = arith.subf %216, %219 : vector<2x8x8xf32>
    %221 = math.exp %220 : vector<2x8x8xf32>
    %cst_98 = arith.constant dense<0.000000e+00> : vector<2x8xf32>
    %222 = vector.multi_reduction <add>, %221, %cst_98 [2] : vector<2x8x8xf32> to vector<2x8xf32>
    %223 = vector.shape_cast %222 : vector<2x8xf32> to vector<2x8x1xf32>
    %224 = tpu.reciprocal %223 {approx = true} : vector<2x8x1xf32> -> vector<2x8x1xf32>
    %225 = vector.broadcast %224 : vector<2x8x1xf32> to vector<2x8x8xf32>
    %226 = arith.mulf %221, %225 : vector<2x8x8xf32>
    "tpu.trace_start"() <{level = 10 : i32, message = "bqk,bkd->bqd"}> : () -> ()
    %cst_99 = arith.constant dense<0.000000e+00> : vector<2x8x8xf32>
    %227 = tpu.matmul %226, %213, %cst_99 {dimension_numbers = #tpu.dot_dimension_numbers<[2], [1], [1], [2], [0, 0, 0, 1, 1, 2], [0], [0]>} : vector<2x8x8xf32>, vector<2x8x8xf32>, vector<2x8x8xf32> -> vector<2x8x8xf32>
    "tpu.trace_stop"() : () -> ()
    %228 = vector.shape_cast %227 : vector<2x8x8xf32> to vector<16x8xf32>
    %229 = vector.extract_strided_slice %205 {offsets = [0, 0], sizes = [8, 32], strides = [1, 1]} : vector<32x32xf32> to vector<8x32xf32>
    %cst_100 = arith.constant dense<0.000000e+00> : vector<16x32xf32>
    %230 = tpu.matmul %228, %229, %cst_100 {dimension_numbers = #tpu.dot_dimension_numbers<[1], [0], [0], [1], [0, 0, 1, 1], [], []>} : vector<16x8xf32>, vector<8x32xf32>, vector<16x32xf32> -> vector<16x32xf32>
    %231 = vector.broadcast %207 : vector<1x32xf32> to vector<16x32xf32>
    %232 = arith.addf %231, %230 : vector<16x32xf32>
    %233 = vector.extract_strided_slice %203 {offsets = [0, 8], sizes = [16, 8], strides = [1, 1]} : vector<16x96xf32> to vector<16x8xf32>
    %234 = vector.shape_cast %233 : vector<16x8xf32> to vector<2x8x8xf32>
    %235 = vector.extract_strided_slice %203 {offsets = [0, 40], sizes = [16, 8], strides = [1, 1]} : vector<16x96xf32> to vector<16x8xf32>
    %236 = vector.shape_cast %235 : vector<16x8xf32> to vector<2x8x8xf32>
    %237 = vector.extract_strided_slice %203 {offsets = [0, 72], sizes = [16, 8], strides = [1, 1]} : vector<16x96xf32> to vector<16x8xf32>
    %238 = vector.shape_cast %237 : vector<16x8xf32> to vector<2x8x8xf32>
    "tpu.trace_start"() <{level = 10 : i32, message = "bqd,bkd->bqk"}> : () -> ()
    %cst_101 = arith.constant dense<0.000000e+00> : vector<2x8x8xf32>
    %239 = tpu.matmul %234, %236, %cst_101 {dimension_numbers = #tpu.dot_dimension_numbers<[2], [2], [1], [1], [0, 0, 0, 1, 1, 1], [0], [0]>} : vector<2x8x8xf32>, vector<2x8x8xf32>, vector<2x8x8xf32> -> vector<2x8x8xf32>
    "tpu.trace_stop"() : () -> ()
    %cst_102 = arith.constant 0.353553385 : f32
    %240 = vector.broadcast %cst_102 : f32 to vector<2x8x8xf32>
    %241 = arith.mulf %239, %240 : vector<2x8x8xf32>
    %cst_103 = arith.constant dense<0xFF800000> : vector<2x8xf32>
    %242 = vector.multi_reduction <maximumf>, %241, %cst_103 [2] : vector<2x8x8xf32> to vector<2x8xf32>
    %243 = vector.shape_cast %242 : vector<2x8xf32> to vector<2x8x1xf32>
    %244 = vector.broadcast %243 : vector<2x8x1xf32> to vector<2x8x8xf32>
    %245 = arith.subf %241, %244 : vector<2x8x8xf32>
    %246 = math.exp %245 : vector<2x8x8xf32>
    %cst_104 = arith.constant dense<0.000000e+00> : vector<2x8xf32>
    %247 = vector.multi_reduction <add>, %246, %cst_104 [2] : vector<2x8x8xf32> to vector<2x8xf32>
    %248 = vector.shape_cast %247 : vector<2x8xf32> to vector<2x8x1xf32>
    %249 = tpu.reciprocal %248 {approx = true} : vector<2x8x1xf32> -> vector<2x8x1xf32>
    %250 = vector.broadcast %249 : vector<2x8x1xf32> to vector<2x8x8xf32>
    %251 = arith.mulf %246, %250 : vector<2x8x8xf32>
    "tpu.trace_start"() <{level = 10 : i32, message = "bqk,bkd->bqd"}> : () -> ()
    %cst_105 = arith.constant dense<0.000000e+00> : vector<2x8x8xf32>
    %252 = tpu.matmul %251, %238, %cst_105 {dimension_numbers = #tpu.dot_dimension_numbers<[2], [1], [1], [2], [0, 0, 0, 1, 1, 2], [0], [0]>} : vector<2x8x8xf32>, vector<2x8x8xf32>, vector<2x8x8xf32> -> vector<2x8x8xf32>
    "tpu.trace_stop"() : () -> ()
    %253 = vector.shape_cast %252 : vector<2x8x8xf32> to vector<16x8xf32>
    %254 = vector.extract_strided_slice %205 {offsets = [8, 0], sizes = [8, 32], strides = [1, 1]} : vector<32x32xf32> to vector<8x32xf32>
    %cst_106 = arith.constant dense<0.000000e+00> : vector<16x32xf32>
    %255 = tpu.matmul %253, %254, %cst_106 {dimension_numbers = #tpu.dot_dimension_numbers<[1], [0], [0], [1], [0, 0, 1, 1], [], []>} : vector<16x8xf32>, vector<8x32xf32>, vector<16x32xf32> -> vector<16x32xf32>
    %256 = arith.addf %232, %255 : vector<16x32xf32>
    %257 = vector.extract_strided_slice %203 {offsets = [0, 16], sizes = [16, 8], strides = [1, 1]} : vector<16x96xf32> to vector<16x8xf32>
    %258 = vector.shape_cast %257 : vector<16x8xf32> to vector<2x8x8xf32>
    %259 = vector.extract_strided_slice %203 {offsets = [0, 48], sizes = [16, 8], strides = [1, 1]} : vector<16x96xf32> to vector<16x8xf32>
    %260 = vector.shape_cast %259 : vector<16x8xf32> to vector<2x8x8xf32>
    %261 = vector.extract_strided_slice %203 {offsets = [0, 80], sizes = [16, 8], strides = [1, 1]} : vector<16x96xf32> to vector<16x8xf32>
    %262 = vector.shape_cast %261 : vector<16x8xf32> to vector<2x8x8xf32>
    "tpu.trace_start"() <{level = 10 : i32, message = "bqd,bkd->bqk"}> : () -> ()
    %cst_107 = arith.constant dense<0.000000e+00> : vector<2x8x8xf32>
    %263 = tpu.matmul %258, %260, %cst_107 {dimension_numbers = #tpu.dot_dimension_numbers<[2], [2], [1], [1], [0, 0, 0, 1, 1, 1], [0], [0]>} : vector<2x8x8xf32>, vector<2x8x8xf32>, vector<2x8x8xf32> -> vector<2x8x8xf32>
    "tpu.trace_stop"() : () -> ()
    %cst_108 = arith.constant 0.353553385 : f32
    %264 = vector.broadcast %cst_108 : f32 to vector<2x8x8xf32>
    %265 = arith.mulf %263, %264 : vector<2x8x8xf32>
    %cst_109 = arith.constant dense<0xFF800000> : vector<2x8xf32>
    %266 = vector.multi_reduction <maximumf>, %265, %cst_109 [2] : vector<2x8x8xf32> to vector<2x8xf32>
    %267 = vector.shape_cast %266 : vector<2x8xf32> to vector<2x8x1xf32>
    %268 = vector.broadcast %267 : vector<2x8x1xf32> to vector<2x8x8xf32>
    %269 = arith.subf %265, %268 : vector<2x8x8xf32>
    %270 = math.exp %269 : vector<2x8x8xf32>
    %cst_110 = arith.constant dense<0.000000e+00> : vector<2x8xf32>
    %271 = vector.multi_reduction <add>, %270, %cst_110 [2] : vector<2x8x8xf32> to vector<2x8xf32>
    %272 = vector.shape_cast %271 : vector<2x8xf32> to vector<2x8x1xf32>
    %273 = tpu.reciprocal %272 {approx = true} : vector<2x8x1xf32> -> vector<2x8x1xf32>
    %274 = vector.broadcast %273 : vector<2x8x1xf32> to vector<2x8x8xf32>
    %275 = arith.mulf %270, %274 : vector<2x8x8xf32>
    "tpu.trace_start"() <{level = 10 : i32, message = "bqk,bkd->bqd"}> : () -> ()
    %cst_111 = arith.constant dense<0.000000e+00> : vector<2x8x8xf32>
    %276 = tpu.matmul %275, %262, %cst_111 {dimension_numbers = #tpu.dot_dimension_numbers<[2], [1], [1], [2], [0, 0, 0, 1, 1, 2], [0], [0]>} : vector<2x8x8xf32>, vector<2x8x8xf32>, vector<2x8x8xf32> -> vector<2x8x8xf32>
    "tpu.trace_stop"() : () -> ()
    %277 = vector.shape_cast %276 : vector<2x8x8xf32> to vector<16x8xf32>
    %278 = vector.extract_strided_slice %205 {offsets = [16, 0], sizes = [8, 32], strides = [1, 1]} : vector<32x32xf32> to vector<8x32xf32>
    %cst_112 = arith.constant dense<0.000000e+00> : vector<16x32xf32>
    %279 = tpu.matmul %277, %278, %cst_112 {dimension_numbers = #tpu.dot_dimension_numbers<[1], [0], [0], [1], [0, 0, 1, 1], [], []>} : vector<16x8xf32>, vector<8x32xf32>, vector<16x32xf32> -> vector<16x32xf32>
    %280 = arith.addf %256, %279 : vector<16x32xf32>
    %281 = vector.extract_strided_slice %203 {offsets = [0, 24], sizes = [16, 8], strides = [1, 1]} : vector<16x96xf32> to vector<16x8xf32>
    %282 = vector.shape_cast %281 : vector<16x8xf32> to vector<2x8x8xf32>
    %283 = vector.extract_strided_slice %203 {offsets = [0, 56], sizes = [16, 8], strides = [1, 1]} : vector<16x96xf32> to vector<16x8xf32>
    %284 = vector.shape_cast %283 : vector<16x8xf32> to vector<2x8x8xf32>
    %285 = vector.extract_strided_slice %203 {offsets = [0, 88], sizes = [16, 8], strides = [1, 1]} : vector<16x96xf32> to vector<16x8xf32>
    %286 = vector.shape_cast %285 : vector<16x8xf32> to vector<2x8x8xf32>
    "tpu.trace_start"() <{level = 10 : i32, message = "bqd,bkd->bqk"}> : () -> ()
    %cst_113 = arith.constant dense<0.000000e+00> : vector<2x8x8xf32>
    %287 = tpu.matmul %282, %284, %cst_113 {dimension_numbers = #tpu.dot_dimension_numbers<[2], [2], [1], [1], [0, 0, 0, 1, 1, 1], [0], [0]>} : vector<2x8x8xf32>, vector<2x8x8xf32>, vector<2x8x8xf32> -> vector<2x8x8xf32>
    "tpu.trace_stop"() : () -> ()
    %cst_114 = arith.constant 0.353553385 : f32
    %288 = vector.broadcast %cst_114 : f32 to vector<2x8x8xf32>
    %289 = arith.mulf %287, %288 : vector<2x8x8xf32>
    %cst_115 = arith.constant dense<0xFF800000> : vector<2x8xf32>
    %290 = vector.multi_reduction <maximumf>, %289, %cst_115 [2] : vector<2x8x8xf32> to vector<2x8xf32>
    %291 = vector.shape_cast %290 : vector<2x8xf32> to vector<2x8x1xf32>
    %292 = vector.broadcast %291 : vector<2x8x1xf32> to vector<2x8x8xf32>
    %293 = arith.subf %289, %292 : vector<2x8x8xf32>
    %294 = math.exp %293 : vector<2x8x8xf32>
    %cst_116 = arith.constant dense<0.000000e+00> : vector<2x8xf32>
    %295 = vector.multi_reduction <add>, %294, %cst_116 [2] : vector<2x8x8xf32> to vector<2x8xf32>
    %296 = vector.shape_cast %295 : vector<2x8xf32> to vector<2x8x1xf32>
    %297 = tpu.reciprocal %296 {approx = true} : vector<2x8x1xf32> -> vector<2x8x1xf32>
    %298 = vector.broadcast %297 : vector<2x8x1xf32> to vector<2x8x8xf32>
    %299 = arith.mulf %294, %298 : vector<2x8x8xf32>
    "tpu.trace_start"() <{level = 10 : i32, message = "bqk,bkd->bqd"}> : () -> ()
    %cst_117 = arith.constant dense<0.000000e+00> : vector<2x8x8xf32>
    %300 = tpu.matmul %299, %286, %cst_117 {dimension_numbers = #tpu.dot_dimension_numbers<[2], [1], [1], [2], [0, 0, 0, 1, 1, 2], [0], [0]>} : vector<2x8x8xf32>, vector<2x8x8xf32>, vector<2x8x8xf32> -> vector<2x8x8xf32>
    "tpu.trace_stop"() : () -> ()
    %301 = vector.shape_cast %300 : vector<2x8x8xf32> to vector<16x8xf32>
    %302 = vector.extract_strided_slice %205 {offsets = [24, 0], sizes = [8, 32], strides = [1, 1]} : vector<32x32xf32> to vector<8x32xf32>
    %cst_118 = arith.constant dense<0.000000e+00> : vector<16x32xf32>
    %303 = tpu.matmul %301, %302, %cst_118 {dimension_numbers = #tpu.dot_dimension_numbers<[1], [0], [0], [1], [0, 0, 1, 1], [], []>} : vector<16x8xf32>, vector<8x32xf32>, vector<16x32xf32> -> vector<16x32xf32>
    %304 = arith.addf %280, %303 : vector<16x32xf32>
    %305 = arith.addf %196, %304 : vector<16x32xf32>
    %c1_119 = arith.constant 1 : index
    %c0_120 = arith.constant 0 : index
    %c0_121 = arith.constant 0 : index
    %306 = vector.load %arg9[%c1_119, %c0_120, %c0_121] : memref<2x1x32xf32, #tpu.memory_space<vmem>>, vector<1x1x32xf32>
    %307 = vector.shape_cast %306 : vector<1x1x32xf32> to vector<1x32xf32>
    %c1_122 = arith.constant 1 : index
    %c0_123 = arith.constant 0 : index
    %c0_124 = arith.constant 0 : index
    %308 = vector.load %arg10[%c1_122, %c0_123, %c0_124] : memref<2x1x32xf32, #tpu.memory_space<vmem>>, vector<1x1x32xf32>
    %309 = vector.shape_cast %308 : vector<1x1x32xf32> to vector<1x32xf32>
    %cst_125 = arith.constant dense<0.000000e+00> : vector<16xf32>
    %310 = vector.multi_reduction <add>, %305, %cst_125 [1] : vector<16x32xf32> to vector<16xf32>
    %311 = vector.shape_cast %310 : vector<16xf32> to vector<16x1xf32>
    %cst_126 = arith.constant 3.200000e+01 : f32
    %312 = vector.broadcast %cst_126 : f32 to vector<16x1xf32>
    %313 = arith.divf %311, %312 : vector<16x1xf32>
    %314 = vector.broadcast %313 : vector<16x1xf32> to vector<16x32xf32>
    %315 = arith.subf %305, %314 : vector<16x32xf32>
    %316 = arith.mulf %315, %315 : vector<16x32xf32>
    %cst_127 = arith.constant dense<0.000000e+00> : vector<16xf32>
    %317 = vector.multi_reduction <add>, %316, %cst_127 [1] : vector<16x32xf32> to vector<16xf32>
    %318 = vector.shape_cast %317 : vector<16xf32> to vector<16x1xf32>
    %cst_128 = arith.constant 3.200000e+01 : f32
    %319 = vector.broadcast %cst_128 : f32 to vector<16x1xf32>
    %320 = arith.divf %318, %319 : vector<16x1xf32>
    %321 = vector.broadcast %313 : vector<16x1xf32> to vector<16x32xf32>
    %322 = arith.subf %305, %321 : vector<16x32xf32>
    %cst_129 = arith.constant 9.99999974E-6 : f32
    %323 = vector.broadcast %cst_129 : f32 to vector<16x1xf32>
    %324 = arith.addf %320, %323 : vector<16x1xf32>
    %325 = math.rsqrt %324 : vector<16x1xf32>
    %326 = vector.broadcast %325 : vector<16x1xf32> to vector<16x32xf32>
    %327 = arith.mulf %322, %326 : vector<16x32xf32>
    %328 = vector.broadcast %307 : vector<1x32xf32> to vector<16x32xf32>
    %329 = arith.mulf %327, %328 : vector<16x32xf32>
    %330 = vector.broadcast %309 : vector<1x32xf32> to vector<16x32xf32>
    %331 = arith.addf %329, %330 : vector<16x32xf32>
    %c1_130 = arith.constant 1 : index
    %c0_131 = arith.constant 0 : index
    %c0_132 = arith.constant 0 : index
    %332 = vector.load %arg11[%c1_130, %c0_131, %c0_132] : memref<2x32x32xf32, #tpu.memory_space<vmem>>, vector<1x32x32xf32>
    %333 = vector.shape_cast %332 : vector<1x32x32xf32> to vector<32x32xf32>
    %cst_133 = arith.constant dense<0.000000e+00> : vector<16x32xf32>
    %334 = tpu.matmul %331, %333, %cst_133 {dimension_numbers = #tpu.dot_dimension_numbers<[1], [0], [0], [1], [0, 0, 1, 1], [], []>} : vector<16x32xf32>, vector<32x32xf32>, vector<16x32xf32> -> vector<16x32xf32>
    %c1_134 = arith.constant 1 : index
    %c0_135 = arith.constant 0 : index
    %c0_136 = arith.constant 0 : index
    %335 = vector.load %arg12[%c1_134, %c0_135, %c0_136] : memref<2x1x32xf32, #tpu.memory_space<vmem>>, vector<1x1x32xf32>
    %336 = vector.shape_cast %335 : vector<1x1x32xf32> to vector<1x32xf32>
    %337 = vector.broadcast %336 : vector<1x32xf32> to vector<16x32xf32>
    %338 = arith.addf %334, %337 : vector<16x32xf32>
    %cst_137 = arith.constant 5.000000e-01 : f32
    %339 = vector.broadcast %cst_137 : f32 to vector<16x32xf32>
    %340 = arith.mulf %339, %338 : vector<16x32xf32>
    %cst_138 = arith.constant 4.471500e-02 : f32
    %341 = vector.broadcast %cst_138 : f32 to vector<16x32xf32>
    %342 = arith.mulf %341, %338 : vector<16x32xf32>
    %343 = arith.mulf %342, %338 : vector<16x32xf32>
    %344 = arith.mulf %343, %338 : vector<16x32xf32>
    %345 = arith.addf %338, %344 : vector<16x32xf32>
    %cst_139 = arith.constant 0.797884583 : f32
    %346 = vector.broadcast %cst_139 : f32 to vector<16x32xf32>
    %347 = arith.mulf %346, %345 : vector<16x32xf32>
    %348 = math.tanh %347 : vector<16x32xf32>
    %cst_140 = arith.constant 1.000000e+00 : f32
    %349 = vector.broadcast %cst_140 : f32 to vector<16x32xf32>
    %350 = arith.addf %349, %348 : vector<16x32xf32>
    %351 = arith.mulf %340, %350 : vector<16x32xf32>
    %c1_141 = arith.constant 1 : index
    %c0_142 = arith.constant 0 : index
    %c0_143 = arith.constant 0 : index
    %352 = vector.load %arg13[%c1_141, %c0_142, %c0_143] : memref<2x32x32xf32, #tpu.memory_space<vmem>>, vector<1x32x32xf32>
    %353 = vector.shape_cast %352 : vector<1x32x32xf32> to vector<32x32xf32>
    %cst_144 = arith.constant dense<0.000000e+00> : vector<16x32xf32>
    %354 = tpu.matmul %351, %353, %cst_144 {dimension_numbers = #tpu.dot_dimension_numbers<[1], [0], [0], [1], [0, 0, 1, 1], [], []>} : vector<16x32xf32>, vector<32x32xf32>, vector<16x32xf32> -> vector<16x32xf32>
    %c1_145 = arith.constant 1 : index
    %c0_146 = arith.constant 0 : index
    %c0_147 = arith.constant 0 : index
    %355 = vector.load %arg14[%c1_145, %c0_146, %c0_147] : memref<2x1x32xf32, #tpu.memory_space<vmem>>, vector<1x1x32xf32>
    %356 = vector.shape_cast %355 : vector<1x1x32xf32> to vector<1x32xf32>
    %357 = vector.broadcast %356 : vector<1x32xf32> to vector<16x32xf32>
    %358 = arith.addf %354, %357 : vector<16x32xf32>
    %359 = arith.addf %331, %358 : vector<16x32xf32>
    %c1_148 = arith.constant 1 : index
    %c0_149 = arith.constant 0 : index
    %c0_150 = arith.constant 0 : index
    %360 = vector.load %arg15[%c1_148, %c0_149, %c0_150] : memref<2x1x32xf32, #tpu.memory_space<vmem>>, vector<1x1x32xf32>
    %361 = vector.shape_cast %360 : vector<1x1x32xf32> to vector<1x32xf32>
    %c1_151 = arith.constant 1 : index
    %c0_152 = arith.constant 0 : index
    %c0_153 = arith.constant 0 : index
    %362 = vector.load %arg16[%c1_151, %c0_152, %c0_153] : memref<2x1x32xf32, #tpu.memory_space<vmem>>, vector<1x1x32xf32>
    %363 = vector.shape_cast %362 : vector<1x1x32xf32> to vector<1x32xf32>
    %cst_154 = arith.constant dense<0.000000e+00> : vector<16xf32>
    %364 = vector.multi_reduction <add>, %359, %cst_154 [1] : vector<16x32xf32> to vector<16xf32>
    %365 = vector.shape_cast %364 : vector<16xf32> to vector<16x1xf32>
    %cst_155 = arith.constant 3.200000e+01 : f32
    %366 = vector.broadcast %cst_155 : f32 to vector<16x1xf32>
    %367 = arith.divf %365, %366 : vector<16x1xf32>
    %368 = vector.broadcast %367 : vector<16x1xf32> to vector<16x32xf32>
    %369 = arith.subf %359, %368 : vector<16x32xf32>
    %370 = arith.mulf %369, %369 : vector<16x32xf32>
    %cst_156 = arith.constant dense<0.000000e+00> : vector<16xf32>
    %371 = vector.multi_reduction <add>, %370, %cst_156 [1] : vector<16x32xf32> to vector<16xf32>
    %372 = vector.shape_cast %371 : vector<16xf32> to vector<16x1xf32>
    %cst_157 = arith.constant 3.200000e+01 : f32
    %373 = vector.broadcast %cst_157 : f32 to vector<16x1xf32>
    %374 = arith.divf %372, %373 : vector<16x1xf32>
    %375 = vector.broadcast %367 : vector<16x1xf32> to vector<16x32xf32>
    %376 = arith.subf %359, %375 : vector<16x32xf32>
    %cst_158 = arith.constant 9.99999974E-6 : f32
    %377 = vector.broadcast %cst_158 : f32 to vector<16x1xf32>
    %378 = arith.addf %374, %377 : vector<16x1xf32>
    %379 = math.rsqrt %378 : vector<16x1xf32>
    %380 = vector.broadcast %379 : vector<16x1xf32> to vector<16x32xf32>
    %381 = arith.mulf %376, %380 : vector<16x32xf32>
    %382 = vector.broadcast %361 : vector<1x32xf32> to vector<16x32xf32>
    %383 = arith.mulf %381, %382 : vector<16x32xf32>
    %384 = vector.broadcast %363 : vector<1x32xf32> to vector<16x32xf32>
    %385 = arith.addf %383, %384 : vector<16x32xf32>
    %c0_159 = arith.constant 0 : index
    %c0_160 = arith.constant 0 : index
    %386 = vector.load %arg17[%c0_159, %c0_160] : memref<1x32xf32, #tpu.memory_space<vmem>>, vector<1x32xf32>
    %c0_161 = arith.constant 0 : index
    %c0_162 = arith.constant 0 : index
    %387 = vector.load %arg18[%c0_161, %c0_162] : memref<1x32xf32, #tpu.memory_space<vmem>>, vector<1x32xf32>
    %cst_163 = arith.constant dense<0.000000e+00> : vector<16xf32>
    %388 = vector.multi_reduction <add>, %385, %cst_163 [1] : vector<16x32xf32> to vector<16xf32>
    %389 = vector.shape_cast %388 : vector<16xf32> to vector<16x1xf32>
    %cst_164 = arith.constant 3.200000e+01 : f32
    %390 = vector.broadcast %cst_164 : f32 to vector<16x1xf32>
    %391 = arith.divf %389, %390 : vector<16x1xf32>
    %392 = vector.broadcast %391 : vector<16x1xf32> to vector<16x32xf32>
    %393 = arith.subf %385, %392 : vector<16x32xf32>
    %394 = arith.mulf %393, %393 : vector<16x32xf32>
    %cst_165 = arith.constant dense<0.000000e+00> : vector<16xf32>
    %395 = vector.multi_reduction <add>, %394, %cst_165 [1] : vector<16x32xf32> to vector<16xf32>
    %396 = vector.shape_cast %395 : vector<16xf32> to vector<16x1xf32>
    %cst_166 = arith.constant 3.200000e+01 : f32
    %397 = vector.broadcast %cst_166 : f32 to vector<16x1xf32>
    %398 = arith.divf %396, %397 : vector<16x1xf32>
    %399 = vector.broadcast %391 : vector<16x1xf32> to vector<16x32xf32>
    %400 = arith.subf %385, %399 : vector<16x32xf32>
    %cst_167 = arith.constant 9.99999974E-6 : f32
    %401 = vector.broadcast %cst_167 : f32 to vector<16x1xf32>
    %402 = arith.addf %398, %401 : vector<16x1xf32>
    %403 = math.rsqrt %402 : vector<16x1xf32>
    %404 = vector.broadcast %403 : vector<16x1xf32> to vector<16x32xf32>
    %405 = arith.mulf %400, %404 : vector<16x32xf32>
    %406 = vector.broadcast %386 : vector<1x32xf32> to vector<16x32xf32>
    %407 = arith.mulf %405, %406 : vector<16x32xf32>
    %408 = vector.broadcast %387 : vector<1x32xf32> to vector<16x32xf32>
    %409 = arith.addf %407, %408 : vector<16x32xf32>
    %410 = vector.shape_cast %409 : vector<16x32xf32> to vector<2x8x32xf32>
    %cst_168 = arith.constant dense<0.000000e+00> : vector<2x32xf32>
    %411 = vector.multi_reduction <add>, %410, %cst_168 [1] : vector<2x8x32xf32> to vector<2x32xf32>
    %cst_169 = arith.constant 8.000000e+00 : f32
    %412 = vector.broadcast %cst_169 : f32 to vector<2x32xf32>
    %413 = arith.divf %411, %412 : vector<2x32xf32>
    %c0_170 = arith.constant 0 : index
    %c0_171 = arith.constant 0 : index
    %414 = vector.load %arg1[%c0_170, %c0_171] : memref<16x18xf32, #tpu.memory_space<vmem>>, vector<16x18xf32>
    %c0_172 = arith.constant 0 : index
    %c0_173 = arith.constant 0 : index
    %415 = vector.load %arg19[%c0_172, %c0_173] : memref<18x32xf32, #tpu.memory_space<vmem>>, vector<18x32xf32>
    %cst_174 = arith.constant dense<0.000000e+00> : vector<16x32xf32>
    %416 = tpu.matmul %414, %415, %cst_174 {dimension_numbers = #tpu.dot_dimension_numbers<[1], [0], [0], [1], [0, 0, 1, 1], [], []>} : vector<16x18xf32>, vector<18x32xf32>, vector<16x32xf32> -> vector<16x32xf32>
    %c0_175 = arith.constant 0 : index
    %c0_176 = arith.constant 0 : index
    %417 = vector.load %arg20[%c0_175, %c0_176] : memref<1x32xf32, #tpu.memory_space<vmem>>, vector<1x32xf32>
    %418 = vector.broadcast %417 : vector<1x32xf32> to vector<16x32xf32>
    %419 = arith.addf %416, %418 : vector<16x32xf32>
    %cst_177 = arith.constant 0.000000e+00 : f32
    %420 = vector.broadcast %cst_177 : f32 to vector<16x32xf32>
    %421 = arith.maximumf %419, %420 : vector<16x32xf32>
    %c0_178 = arith.constant 0 : index
    %c0_179 = arith.constant 0 : index
    %c0_180 = arith.constant 0 : index
    %422 = vector.load %arg21[%c0_178, %c0_179, %c0_180] : memref<2x32x96xf32, #tpu.memory_space<vmem>>, vector<1x32x96xf32>
    %423 = vector.shape_cast %422 : vector<1x32x96xf32> to vector<32x96xf32>
    %cst_181 = arith.constant dense<0.000000e+00> : vector<16x96xf32>
    %424 = tpu.matmul %421, %423, %cst_181 {dimension_numbers = #tpu.dot_dimension_numbers<[1], [0], [0], [1], [0, 0, 1, 1], [], []>} : vector<16x32xf32>, vector<32x96xf32>, vector<16x96xf32> -> vector<16x96xf32>
    %c0_182 = arith.constant 0 : index
    %c0_183 = arith.constant 0 : index
    %c0_184 = arith.constant 0 : index
    %425 = vector.load %arg22[%c0_182, %c0_183, %c0_184] : memref<2x1x96xf32, #tpu.memory_space<vmem>>, vector<1x1x96xf32>
    %426 = vector.shape_cast %425 : vector<1x1x96xf32> to vector<1x96xf32>
    %427 = vector.broadcast %426 : vector<1x96xf32> to vector<16x96xf32>
    %428 = arith.addf %424, %427 : vector<16x96xf32>
    %c0_185 = arith.constant 0 : index
    %c0_186 = arith.constant 0 : index
    %c0_187 = arith.constant 0 : index
    %429 = vector.load %arg23[%c0_185, %c0_186, %c0_187] : memref<2x32x32xf32, #tpu.memory_space<vmem>>, vector<1x32x32xf32>
    %430 = vector.shape_cast %429 : vector<1x32x32xf32> to vector<32x32xf32>
    %c0_188 = arith.constant 0 : index
    %c0_189 = arith.constant 0 : index
    %c0_190 = arith.constant 0 : index
    %431 = vector.load %arg24[%c0_188, %c0_189, %c0_190] : memref<2x1x32xf32, #tpu.memory_space<vmem>>, vector<1x1x32xf32>
    %432 = vector.shape_cast %431 : vector<1x1x32xf32> to vector<1x32xf32>
    %433 = vector.extract_strided_slice %428 {offsets = [0, 0], sizes = [16, 8], strides = [1, 1]} : vector<16x96xf32> to vector<16x8xf32>
    %434 = vector.shape_cast %433 : vector<16x8xf32> to vector<2x8x8xf32>
    %435 = vector.extract_strided_slice %428 {offsets = [0, 32], sizes = [16, 8], strides = [1, 1]} : vector<16x96xf32> to vector<16x8xf32>
    %436 = vector.shape_cast %435 : vector<16x8xf32> to vector<2x8x8xf32>
    %437 = vector.extract_strided_slice %428 {offsets = [0, 64], sizes = [16, 8], strides = [1, 1]} : vector<16x96xf32> to vector<16x8xf32>
    %438 = vector.shape_cast %437 : vector<16x8xf32> to vector<2x8x8xf32>
    "tpu.trace_start"() <{level = 10 : i32, message = "bqd,bkd->bqk"}> : () -> ()
    %cst_191 = arith.constant dense<0.000000e+00> : vector<2x8x8xf32>
    %439 = tpu.matmul %434, %436, %cst_191 {dimension_numbers = #tpu.dot_dimension_numbers<[2], [2], [1], [1], [0, 0, 0, 1, 1, 1], [0], [0]>} : vector<2x8x8xf32>, vector<2x8x8xf32>, vector<2x8x8xf32> -> vector<2x8x8xf32>
    "tpu.trace_stop"() : () -> ()
    %cst_192 = arith.constant 0.353553385 : f32
    %440 = vector.broadcast %cst_192 : f32 to vector<2x8x8xf32>
    %441 = arith.mulf %439, %440 : vector<2x8x8xf32>
    %cst_193 = arith.constant dense<0xFF800000> : vector<2x8xf32>
    %442 = vector.multi_reduction <maximumf>, %441, %cst_193 [2] : vector<2x8x8xf32> to vector<2x8xf32>
    %443 = vector.shape_cast %442 : vector<2x8xf32> to vector<2x8x1xf32>
    %444 = vector.broadcast %443 : vector<2x8x1xf32> to vector<2x8x8xf32>
    %445 = arith.subf %441, %444 : vector<2x8x8xf32>
    %446 = math.exp %445 : vector<2x8x8xf32>
    %cst_194 = arith.constant dense<0.000000e+00> : vector<2x8xf32>
    %447 = vector.multi_reduction <add>, %446, %cst_194 [2] : vector<2x8x8xf32> to vector<2x8xf32>
    %448 = vector.shape_cast %447 : vector<2x8xf32> to vector<2x8x1xf32>
    %449 = tpu.reciprocal %448 {approx = true} : vector<2x8x1xf32> -> vector<2x8x1xf32>
    %450 = vector.broadcast %449 : vector<2x8x1xf32> to vector<2x8x8xf32>
    %451 = arith.mulf %446, %450 : vector<2x8x8xf32>
    "tpu.trace_start"() <{level = 10 : i32, message = "bqk,bkd->bqd"}> : () -> ()
    %cst_195 = arith.constant dense<0.000000e+00> : vector<2x8x8xf32>
    %452 = tpu.matmul %451, %438, %cst_195 {dimension_numbers = #tpu.dot_dimension_numbers<[2], [1], [1], [2], [0, 0, 0, 1, 1, 2], [0], [0]>} : vector<2x8x8xf32>, vector<2x8x8xf32>, vector<2x8x8xf32> -> vector<2x8x8xf32>
    "tpu.trace_stop"() : () -> ()
    %453 = vector.shape_cast %452 : vector<2x8x8xf32> to vector<16x8xf32>
    %454 = vector.extract_strided_slice %430 {offsets = [0, 0], sizes = [8, 32], strides = [1, 1]} : vector<32x32xf32> to vector<8x32xf32>
    %cst_196 = arith.constant dense<0.000000e+00> : vector<16x32xf32>
    %455 = tpu.matmul %453, %454, %cst_196 {dimension_numbers = #tpu.dot_dimension_numbers<[1], [0], [0], [1], [0, 0, 1, 1], [], []>} : vector<16x8xf32>, vector<8x32xf32>, vector<16x32xf32> -> vector<16x32xf32>
    %456 = vector.broadcast %432 : vector<1x32xf32> to vector<16x32xf32>
    %457 = arith.addf %456, %455 : vector<16x32xf32>
    %458 = vector.extract_strided_slice %428 {offsets = [0, 8], sizes = [16, 8], strides = [1, 1]} : vector<16x96xf32> to vector<16x8xf32>
    %459 = vector.shape_cast %458 : vector<16x8xf32> to vector<2x8x8xf32>
    %460 = vector.extract_strided_slice %428 {offsets = [0, 40], sizes = [16, 8], strides = [1, 1]} : vector<16x96xf32> to vector<16x8xf32>
    %461 = vector.shape_cast %460 : vector<16x8xf32> to vector<2x8x8xf32>
    %462 = vector.extract_strided_slice %428 {offsets = [0, 72], sizes = [16, 8], strides = [1, 1]} : vector<16x96xf32> to vector<16x8xf32>
    %463 = vector.shape_cast %462 : vector<16x8xf32> to vector<2x8x8xf32>
    "tpu.trace_start"() <{level = 10 : i32, message = "bqd,bkd->bqk"}> : () -> ()
    %cst_197 = arith.constant dense<0.000000e+00> : vector<2x8x8xf32>
    %464 = tpu.matmul %459, %461, %cst_197 {dimension_numbers = #tpu.dot_dimension_numbers<[2], [2], [1], [1], [0, 0, 0, 1, 1, 1], [0], [0]>} : vector<2x8x8xf32>, vector<2x8x8xf32>, vector<2x8x8xf32> -> vector<2x8x8xf32>
    "tpu.trace_stop"() : () -> ()
    %cst_198 = arith.constant 0.353553385 : f32
    %465 = vector.broadcast %cst_198 : f32 to vector<2x8x8xf32>
    %466 = arith.mulf %464, %465 : vector<2x8x8xf32>
    %cst_199 = arith.constant dense<0xFF800000> : vector<2x8xf32>
    %467 = vector.multi_reduction <maximumf>, %466, %cst_199 [2] : vector<2x8x8xf32> to vector<2x8xf32>
    %468 = vector.shape_cast %467 : vector<2x8xf32> to vector<2x8x1xf32>
    %469 = vector.broadcast %468 : vector<2x8x1xf32> to vector<2x8x8xf32>
    %470 = arith.subf %466, %469 : vector<2x8x8xf32>
    %471 = math.exp %470 : vector<2x8x8xf32>
    %cst_200 = arith.constant dense<0.000000e+00> : vector<2x8xf32>
    %472 = vector.multi_reduction <add>, %471, %cst_200 [2] : vector<2x8x8xf32> to vector<2x8xf32>
    %473 = vector.shape_cast %472 : vector<2x8xf32> to vector<2x8x1xf32>
    %474 = tpu.reciprocal %473 {approx = true} : vector<2x8x1xf32> -> vector<2x8x1xf32>
    %475 = vector.broadcast %474 : vector<2x8x1xf32> to vector<2x8x8xf32>
    %476 = arith.mulf %471, %475 : vector<2x8x8xf32>
    "tpu.trace_start"() <{level = 10 : i32, message = "bqk,bkd->bqd"}> : () -> ()
    %cst_201 = arith.constant dense<0.000000e+00> : vector<2x8x8xf32>
    %477 = tpu.matmul %476, %463, %cst_201 {dimension_numbers = #tpu.dot_dimension_numbers<[2], [1], [1], [2], [0, 0, 0, 1, 1, 2], [0], [0]>} : vector<2x8x8xf32>, vector<2x8x8xf32>, vector<2x8x8xf32> -> vector<2x8x8xf32>
    "tpu.trace_stop"() : () -> ()
    %478 = vector.shape_cast %477 : vector<2x8x8xf32> to vector<16x8xf32>
    %479 = vector.extract_strided_slice %430 {offsets = [8, 0], sizes = [8, 32], strides = [1, 1]} : vector<32x32xf32> to vector<8x32xf32>
    %cst_202 = arith.constant dense<0.000000e+00> : vector<16x32xf32>
    %480 = tpu.matmul %478, %479, %cst_202 {dimension_numbers = #tpu.dot_dimension_numbers<[1], [0], [0], [1], [0, 0, 1, 1], [], []>} : vector<16x8xf32>, vector<8x32xf32>, vector<16x32xf32> -> vector<16x32xf32>
    %481 = arith.addf %457, %480 : vector<16x32xf32>
    %482 = vector.extract_strided_slice %428 {offsets = [0, 16], sizes = [16, 8], strides = [1, 1]} : vector<16x96xf32> to vector<16x8xf32>
    %483 = vector.shape_cast %482 : vector<16x8xf32> to vector<2x8x8xf32>
    %484 = vector.extract_strided_slice %428 {offsets = [0, 48], sizes = [16, 8], strides = [1, 1]} : vector<16x96xf32> to vector<16x8xf32>
    %485 = vector.shape_cast %484 : vector<16x8xf32> to vector<2x8x8xf32>
    %486 = vector.extract_strided_slice %428 {offsets = [0, 80], sizes = [16, 8], strides = [1, 1]} : vector<16x96xf32> to vector<16x8xf32>
    %487 = vector.shape_cast %486 : vector<16x8xf32> to vector<2x8x8xf32>
    "tpu.trace_start"() <{level = 10 : i32, message = "bqd,bkd->bqk"}> : () -> ()
    %cst_203 = arith.constant dense<0.000000e+00> : vector<2x8x8xf32>
    %488 = tpu.matmul %483, %485, %cst_203 {dimension_numbers = #tpu.dot_dimension_numbers<[2], [2], [1], [1], [0, 0, 0, 1, 1, 1], [0], [0]>} : vector<2x8x8xf32>, vector<2x8x8xf32>, vector<2x8x8xf32> -> vector<2x8x8xf32>
    "tpu.trace_stop"() : () -> ()
    %cst_204 = arith.constant 0.353553385 : f32
    %489 = vector.broadcast %cst_204 : f32 to vector<2x8x8xf32>
    %490 = arith.mulf %488, %489 : vector<2x8x8xf32>
    %cst_205 = arith.constant dense<0xFF800000> : vector<2x8xf32>
    %491 = vector.multi_reduction <maximumf>, %490, %cst_205 [2] : vector<2x8x8xf32> to vector<2x8xf32>
    %492 = vector.shape_cast %491 : vector<2x8xf32> to vector<2x8x1xf32>
    %493 = vector.broadcast %492 : vector<2x8x1xf32> to vector<2x8x8xf32>
    %494 = arith.subf %490, %493 : vector<2x8x8xf32>
    %495 = math.exp %494 : vector<2x8x8xf32>
    %cst_206 = arith.constant dense<0.000000e+00> : vector<2x8xf32>
    %496 = vector.multi_reduction <add>, %495, %cst_206 [2] : vector<2x8x8xf32> to vector<2x8xf32>
    %497 = vector.shape_cast %496 : vector<2x8xf32> to vector<2x8x1xf32>
    %498 = tpu.reciprocal %497 {approx = true} : vector<2x8x1xf32> -> vector<2x8x1xf32>
    %499 = vector.broadcast %498 : vector<2x8x1xf32> to vector<2x8x8xf32>
    %500 = arith.mulf %495, %499 : vector<2x8x8xf32>
    "tpu.trace_start"() <{level = 10 : i32, message = "bqk,bkd->bqd"}> : () -> ()
    %cst_207 = arith.constant dense<0.000000e+00> : vector<2x8x8xf32>
    %501 = tpu.matmul %500, %487, %cst_207 {dimension_numbers = #tpu.dot_dimension_numbers<[2], [1], [1], [2], [0, 0, 0, 1, 1, 2], [0], [0]>} : vector<2x8x8xf32>, vector<2x8x8xf32>, vector<2x8x8xf32> -> vector<2x8x8xf32>
    "tpu.trace_stop"() : () -> ()
    %502 = vector.shape_cast %501 : vector<2x8x8xf32> to vector<16x8xf32>
    %503 = vector.extract_strided_slice %430 {offsets = [16, 0], sizes = [8, 32], strides = [1, 1]} : vector<32x32xf32> to vector<8x32xf32>
    %cst_208 = arith.constant dense<0.000000e+00> : vector<16x32xf32>
    %504 = tpu.matmul %502, %503, %cst_208 {dimension_numbers = #tpu.dot_dimension_numbers<[1], [0], [0], [1], [0, 0, 1, 1], [], []>} : vector<16x8xf32>, vector<8x32xf32>, vector<16x32xf32> -> vector<16x32xf32>
    %505 = arith.addf %481, %504 : vector<16x32xf32>
    %506 = vector.extract_strided_slice %428 {offsets = [0, 24], sizes = [16, 8], strides = [1, 1]} : vector<16x96xf32> to vector<16x8xf32>
    %507 = vector.shape_cast %506 : vector<16x8xf32> to vector<2x8x8xf32>
    %508 = vector.extract_strided_slice %428 {offsets = [0, 56], sizes = [16, 8], strides = [1, 1]} : vector<16x96xf32> to vector<16x8xf32>
    %509 = vector.shape_cast %508 : vector<16x8xf32> to vector<2x8x8xf32>
    %510 = vector.extract_strided_slice %428 {offsets = [0, 88], sizes = [16, 8], strides = [1, 1]} : vector<16x96xf32> to vector<16x8xf32>
    %511 = vector.shape_cast %510 : vector<16x8xf32> to vector<2x8x8xf32>
    "tpu.trace_start"() <{level = 10 : i32, message = "bqd,bkd->bqk"}> : () -> ()
    %cst_209 = arith.constant dense<0.000000e+00> : vector<2x8x8xf32>
    %512 = tpu.matmul %507, %509, %cst_209 {dimension_numbers = #tpu.dot_dimension_numbers<[2], [2], [1], [1], [0, 0, 0, 1, 1, 1], [0], [0]>} : vector<2x8x8xf32>, vector<2x8x8xf32>, vector<2x8x8xf32> -> vector<2x8x8xf32>
    "tpu.trace_stop"() : () -> ()
    %cst_210 = arith.constant 0.353553385 : f32
    %513 = vector.broadcast %cst_210 : f32 to vector<2x8x8xf32>
    %514 = arith.mulf %512, %513 : vector<2x8x8xf32>
    %cst_211 = arith.constant dense<0xFF800000> : vector<2x8xf32>
    %515 = vector.multi_reduction <maximumf>, %514, %cst_211 [2] : vector<2x8x8xf32> to vector<2x8xf32>
    %516 = vector.shape_cast %515 : vector<2x8xf32> to vector<2x8x1xf32>
    %517 = vector.broadcast %516 : vector<2x8x1xf32> to vector<2x8x8xf32>
    %518 = arith.subf %514, %517 : vector<2x8x8xf32>
    %519 = math.exp %518 : vector<2x8x8xf32>
    %cst_212 = arith.constant dense<0.000000e+00> : vector<2x8xf32>
    %520 = vector.multi_reduction <add>, %519, %cst_212 [2] : vector<2x8x8xf32> to vector<2x8xf32>
    %521 = vector.shape_cast %520 : vector<2x8xf32> to vector<2x8x1xf32>
    %522 = tpu.reciprocal %521 {approx = true} : vector<2x8x1xf32> -> vector<2x8x1xf32>
    %523 = vector.broadcast %522 : vector<2x8x1xf32> to vector<2x8x8xf32>
    %524 = arith.mulf %519, %523 : vector<2x8x8xf32>
    "tpu.trace_start"() <{level = 10 : i32, message = "bqk,bkd->bqd"}> : () -> ()
    %cst_213 = arith.constant dense<0.000000e+00> : vector<2x8x8xf32>
    %525 = tpu.matmul %524, %511, %cst_213 {dimension_numbers = #tpu.dot_dimension_numbers<[2], [1], [1], [2], [0, 0, 0, 1, 1, 2], [0], [0]>} : vector<2x8x8xf32>, vector<2x8x8xf32>, vector<2x8x8xf32> -> vector<2x8x8xf32>
    "tpu.trace_stop"() : () -> ()
    %526 = vector.shape_cast %525 : vector<2x8x8xf32> to vector<16x8xf32>
    %527 = vector.extract_strided_slice %430 {offsets = [24, 0], sizes = [8, 32], strides = [1, 1]} : vector<32x32xf32> to vector<8x32xf32>
    %cst_214 = arith.constant dense<0.000000e+00> : vector<16x32xf32>
    %528 = tpu.matmul %526, %527, %cst_214 {dimension_numbers = #tpu.dot_dimension_numbers<[1], [0], [0], [1], [0, 0, 1, 1], [], []>} : vector<16x8xf32>, vector<8x32xf32>, vector<16x32xf32> -> vector<16x32xf32>
    %529 = arith.addf %505, %528 : vector<16x32xf32>
    %530 = arith.addf %421, %529 : vector<16x32xf32>
    %c0_215 = arith.constant 0 : index
    %c0_216 = arith.constant 0 : index
    %c0_217 = arith.constant 0 : index
    %531 = vector.load %arg25[%c0_215, %c0_216, %c0_217] : memref<2x1x32xf32, #tpu.memory_space<vmem>>, vector<1x1x32xf32>
    %532 = vector.shape_cast %531 : vector<1x1x32xf32> to vector<1x32xf32>
    %c0_218 = arith.constant 0 : index
    %c0_219 = arith.constant 0 : index
    %c0_220 = arith.constant 0 : index
    %533 = vector.load %arg26[%c0_218, %c0_219, %c0_220] : memref<2x1x32xf32, #tpu.memory_space<vmem>>, vector<1x1x32xf32>
    %534 = vector.shape_cast %533 : vector<1x1x32xf32> to vector<1x32xf32>
    %cst_221 = arith.constant dense<0.000000e+00> : vector<16xf32>
    %535 = vector.multi_reduction <add>, %530, %cst_221 [1] : vector<16x32xf32> to vector<16xf32>
    %536 = vector.shape_cast %535 : vector<16xf32> to vector<16x1xf32>
    %cst_222 = arith.constant 3.200000e+01 : f32
    %537 = vector.broadcast %cst_222 : f32 to vector<16x1xf32>
    %538 = arith.divf %536, %537 : vector<16x1xf32>
    %539 = vector.broadcast %538 : vector<16x1xf32> to vector<16x32xf32>
    %540 = arith.subf %530, %539 : vector<16x32xf32>
    %541 = arith.mulf %540, %540 : vector<16x32xf32>
    %cst_223 = arith.constant dense<0.000000e+00> : vector<16xf32>
    %542 = vector.multi_reduction <add>, %541, %cst_223 [1] : vector<16x32xf32> to vector<16xf32>
    %543 = vector.shape_cast %542 : vector<16xf32> to vector<16x1xf32>
    %cst_224 = arith.constant 3.200000e+01 : f32
    %544 = vector.broadcast %cst_224 : f32 to vector<16x1xf32>
    %545 = arith.divf %543, %544 : vector<16x1xf32>
    %546 = vector.broadcast %538 : vector<16x1xf32> to vector<16x32xf32>
    %547 = arith.subf %530, %546 : vector<16x32xf32>
    %cst_225 = arith.constant 9.99999974E-6 : f32
    %548 = vector.broadcast %cst_225 : f32 to vector<16x1xf32>
    %549 = arith.addf %545, %548 : vector<16x1xf32>
    %550 = math.rsqrt %549 : vector<16x1xf32>
    %551 = vector.broadcast %550 : vector<16x1xf32> to vector<16x32xf32>
    %552 = arith.mulf %547, %551 : vector<16x32xf32>
    %553 = vector.broadcast %532 : vector<1x32xf32> to vector<16x32xf32>
    %554 = arith.mulf %552, %553 : vector<16x32xf32>
    %555 = vector.broadcast %534 : vector<1x32xf32> to vector<16x32xf32>
    %556 = arith.addf %554, %555 : vector<16x32xf32>
    %c0_226 = arith.constant 0 : index
    %c0_227 = arith.constant 0 : index
    %c0_228 = arith.constant 0 : index
    %557 = vector.load %arg27[%c0_226, %c0_227, %c0_228] : memref<2x32x32xf32, #tpu.memory_space<vmem>>, vector<1x32x32xf32>
    %558 = vector.shape_cast %557 : vector<1x32x32xf32> to vector<32x32xf32>
    %cst_229 = arith.constant dense<0.000000e+00> : vector<16x32xf32>
    %559 = tpu.matmul %556, %558, %cst_229 {dimension_numbers = #tpu.dot_dimension_numbers<[1], [0], [0], [1], [0, 0, 1, 1], [], []>} : vector<16x32xf32>, vector<32x32xf32>, vector<16x32xf32> -> vector<16x32xf32>
    %c0_230 = arith.constant 0 : index
    %c0_231 = arith.constant 0 : index
    %c0_232 = arith.constant 0 : index
    %560 = vector.load %arg28[%c0_230, %c0_231, %c0_232] : memref<2x1x32xf32, #tpu.memory_space<vmem>>, vector<1x1x32xf32>
    %561 = vector.shape_cast %560 : vector<1x1x32xf32> to vector<1x32xf32>
    %562 = vector.broadcast %561 : vector<1x32xf32> to vector<16x32xf32>
    %563 = arith.addf %559, %562 : vector<16x32xf32>
    %cst_233 = arith.constant 5.000000e-01 : f32
    %564 = vector.broadcast %cst_233 : f32 to vector<16x32xf32>
    %565 = arith.mulf %564, %563 : vector<16x32xf32>
    %cst_234 = arith.constant 4.471500e-02 : f32
    %566 = vector.broadcast %cst_234 : f32 to vector<16x32xf32>
    %567 = arith.mulf %566, %563 : vector<16x32xf32>
    %568 = arith.mulf %567, %563 : vector<16x32xf32>
    %569 = arith.mulf %568, %563 : vector<16x32xf32>
    %570 = arith.addf %563, %569 : vector<16x32xf32>
    %cst_235 = arith.constant 0.797884583 : f32
    %571 = vector.broadcast %cst_235 : f32 to vector<16x32xf32>
    %572 = arith.mulf %571, %570 : vector<16x32xf32>
    %573 = math.tanh %572 : vector<16x32xf32>
    %cst_236 = arith.constant 1.000000e+00 : f32
    %574 = vector.broadcast %cst_236 : f32 to vector<16x32xf32>
    %575 = arith.addf %574, %573 : vector<16x32xf32>
    %576 = arith.mulf %565, %575 : vector<16x32xf32>
    %c0_237 = arith.constant 0 : index
    %c0_238 = arith.constant 0 : index
    %c0_239 = arith.constant 0 : index
    %577 = vector.load %arg29[%c0_237, %c0_238, %c0_239] : memref<2x32x32xf32, #tpu.memory_space<vmem>>, vector<1x32x32xf32>
    %578 = vector.shape_cast %577 : vector<1x32x32xf32> to vector<32x32xf32>
    %cst_240 = arith.constant dense<0.000000e+00> : vector<16x32xf32>
    %579 = tpu.matmul %576, %578, %cst_240 {dimension_numbers = #tpu.dot_dimension_numbers<[1], [0], [0], [1], [0, 0, 1, 1], [], []>} : vector<16x32xf32>, vector<32x32xf32>, vector<16x32xf32> -> vector<16x32xf32>
    %c0_241 = arith.constant 0 : index
    %c0_242 = arith.constant 0 : index
    %c0_243 = arith.constant 0 : index
    %580 = vector.load %arg30[%c0_241, %c0_242, %c0_243] : memref<2x1x32xf32, #tpu.memory_space<vmem>>, vector<1x1x32xf32>
    %581 = vector.shape_cast %580 : vector<1x1x32xf32> to vector<1x32xf32>
    %582 = vector.broadcast %581 : vector<1x32xf32> to vector<16x32xf32>
    %583 = arith.addf %579, %582 : vector<16x32xf32>
    %584 = arith.addf %556, %583 : vector<16x32xf32>
    %c0_244 = arith.constant 0 : index
    %c0_245 = arith.constant 0 : index
    %c0_246 = arith.constant 0 : index
    %585 = vector.load %arg31[%c0_244, %c0_245, %c0_246] : memref<2x1x32xf32, #tpu.memory_space<vmem>>, vector<1x1x32xf32>
    %586 = vector.shape_cast %585 : vector<1x1x32xf32> to vector<1x32xf32>
    %c0_247 = arith.constant 0 : index
    %c0_248 = arith.constant 0 : index
    %c0_249 = arith.constant 0 : index
    %587 = vector.load %arg32[%c0_247, %c0_248, %c0_249] : memref<2x1x32xf32, #tpu.memory_space<vmem>>, vector<1x1x32xf32>
    %588 = vector.shape_cast %587 : vector<1x1x32xf32> to vector<1x32xf32>
    %cst_250 = arith.constant dense<0.000000e+00> : vector<16xf32>
    %589 = vector.multi_reduction <add>, %584, %cst_250 [1] : vector<16x32xf32> to vector<16xf32>
    %590 = vector.shape_cast %589 : vector<16xf32> to vector<16x1xf32>
    %cst_251 = arith.constant 3.200000e+01 : f32
    %591 = vector.broadcast %cst_251 : f32 to vector<16x1xf32>
    %592 = arith.divf %590, %591 : vector<16x1xf32>
    %593 = vector.broadcast %592 : vector<16x1xf32> to vector<16x32xf32>
    %594 = arith.subf %584, %593 : vector<16x32xf32>
    %595 = arith.mulf %594, %594 : vector<16x32xf32>
    %cst_252 = arith.constant dense<0.000000e+00> : vector<16xf32>
    %596 = vector.multi_reduction <add>, %595, %cst_252 [1] : vector<16x32xf32> to vector<16xf32>
    %597 = vector.shape_cast %596 : vector<16xf32> to vector<16x1xf32>
    %cst_253 = arith.constant 3.200000e+01 : f32
    %598 = vector.broadcast %cst_253 : f32 to vector<16x1xf32>
    %599 = arith.divf %597, %598 : vector<16x1xf32>
    %600 = vector.broadcast %592 : vector<16x1xf32> to vector<16x32xf32>
    %601 = arith.subf %584, %600 : vector<16x32xf32>
    %cst_254 = arith.constant 9.99999974E-6 : f32
    %602 = vector.broadcast %cst_254 : f32 to vector<16x1xf32>
    %603 = arith.addf %599, %602 : vector<16x1xf32>
    %604 = math.rsqrt %603 : vector<16x1xf32>
    %605 = vector.broadcast %604 : vector<16x1xf32> to vector<16x32xf32>
    %606 = arith.mulf %601, %605 : vector<16x32xf32>
    %607 = vector.broadcast %586 : vector<1x32xf32> to vector<16x32xf32>
    %608 = arith.mulf %606, %607 : vector<16x32xf32>
    %609 = vector.broadcast %588 : vector<1x32xf32> to vector<16x32xf32>
    %610 = arith.addf %608, %609 : vector<16x32xf32>
    %c1_255 = arith.constant 1 : index
    %c0_256 = arith.constant 0 : index
    %c0_257 = arith.constant 0 : index
    %611 = vector.load %arg21[%c1_255, %c0_256, %c0_257] : memref<2x32x96xf32, #tpu.memory_space<vmem>>, vector<1x32x96xf32>
    %612 = vector.shape_cast %611 : vector<1x32x96xf32> to vector<32x96xf32>
    %cst_258 = arith.constant dense<0.000000e+00> : vector<16x96xf32>
    %613 = tpu.matmul %610, %612, %cst_258 {dimension_numbers = #tpu.dot_dimension_numbers<[1], [0], [0], [1], [0, 0, 1, 1], [], []>} : vector<16x32xf32>, vector<32x96xf32>, vector<16x96xf32> -> vector<16x96xf32>
    %c1_259 = arith.constant 1 : index
    %c0_260 = arith.constant 0 : index
    %c0_261 = arith.constant 0 : index
    %614 = vector.load %arg22[%c1_259, %c0_260, %c0_261] : memref<2x1x96xf32, #tpu.memory_space<vmem>>, vector<1x1x96xf32>
    %615 = vector.shape_cast %614 : vector<1x1x96xf32> to vector<1x96xf32>
    %616 = vector.broadcast %615 : vector<1x96xf32> to vector<16x96xf32>
    %617 = arith.addf %613, %616 : vector<16x96xf32>
    %c1_262 = arith.constant 1 : index
    %c0_263 = arith.constant 0 : index
    %c0_264 = arith.constant 0 : index
    %618 = vector.load %arg23[%c1_262, %c0_263, %c0_264] : memref<2x32x32xf32, #tpu.memory_space<vmem>>, vector<1x32x32xf32>
    %619 = vector.shape_cast %618 : vector<1x32x32xf32> to vector<32x32xf32>
    %c1_265 = arith.constant 1 : index
    %c0_266 = arith.constant 0 : index
    %c0_267 = arith.constant 0 : index
    %620 = vector.load %arg24[%c1_265, %c0_266, %c0_267] : memref<2x1x32xf32, #tpu.memory_space<vmem>>, vector<1x1x32xf32>
    %621 = vector.shape_cast %620 : vector<1x1x32xf32> to vector<1x32xf32>
    %622 = vector.extract_strided_slice %617 {offsets = [0, 0], sizes = [16, 8], strides = [1, 1]} : vector<16x96xf32> to vector<16x8xf32>
    %623 = vector.shape_cast %622 : vector<16x8xf32> to vector<2x8x8xf32>
    %624 = vector.extract_strided_slice %617 {offsets = [0, 32], sizes = [16, 8], strides = [1, 1]} : vector<16x96xf32> to vector<16x8xf32>
    %625 = vector.shape_cast %624 : vector<16x8xf32> to vector<2x8x8xf32>
    %626 = vector.extract_strided_slice %617 {offsets = [0, 64], sizes = [16, 8], strides = [1, 1]} : vector<16x96xf32> to vector<16x8xf32>
    %627 = vector.shape_cast %626 : vector<16x8xf32> to vector<2x8x8xf32>
    "tpu.trace_start"() <{level = 10 : i32, message = "bqd,bkd->bqk"}> : () -> ()
    %cst_268 = arith.constant dense<0.000000e+00> : vector<2x8x8xf32>
    %628 = tpu.matmul %623, %625, %cst_268 {dimension_numbers = #tpu.dot_dimension_numbers<[2], [2], [1], [1], [0, 0, 0, 1, 1, 1], [0], [0]>} : vector<2x8x8xf32>, vector<2x8x8xf32>, vector<2x8x8xf32> -> vector<2x8x8xf32>
    "tpu.trace_stop"() : () -> ()
    %cst_269 = arith.constant 0.353553385 : f32
    %629 = vector.broadcast %cst_269 : f32 to vector<2x8x8xf32>
    %630 = arith.mulf %628, %629 : vector<2x8x8xf32>
    %cst_270 = arith.constant dense<0xFF800000> : vector<2x8xf32>
    %631 = vector.multi_reduction <maximumf>, %630, %cst_270 [2] : vector<2x8x8xf32> to vector<2x8xf32>
    %632 = vector.shape_cast %631 : vector<2x8xf32> to vector<2x8x1xf32>
    %633 = vector.broadcast %632 : vector<2x8x1xf32> to vector<2x8x8xf32>
    %634 = arith.subf %630, %633 : vector<2x8x8xf32>
    %635 = math.exp %634 : vector<2x8x8xf32>
    %cst_271 = arith.constant dense<0.000000e+00> : vector<2x8xf32>
    %636 = vector.multi_reduction <add>, %635, %cst_271 [2] : vector<2x8x8xf32> to vector<2x8xf32>
    %637 = vector.shape_cast %636 : vector<2x8xf32> to vector<2x8x1xf32>
    %638 = tpu.reciprocal %637 {approx = true} : vector<2x8x1xf32> -> vector<2x8x1xf32>
    %639 = vector.broadcast %638 : vector<2x8x1xf32> to vector<2x8x8xf32>
    %640 = arith.mulf %635, %639 : vector<2x8x8xf32>
    "tpu.trace_start"() <{level = 10 : i32, message = "bqk,bkd->bqd"}> : () -> ()
    %cst_272 = arith.constant dense<0.000000e+00> : vector<2x8x8xf32>
    %641 = tpu.matmul %640, %627, %cst_272 {dimension_numbers = #tpu.dot_dimension_numbers<[2], [1], [1], [2], [0, 0, 0, 1, 1, 2], [0], [0]>} : vector<2x8x8xf32>, vector<2x8x8xf32>, vector<2x8x8xf32> -> vector<2x8x8xf32>
    "tpu.trace_stop"() : () -> ()
    %642 = vector.shape_cast %641 : vector<2x8x8xf32> to vector<16x8xf32>
    %643 = vector.extract_strided_slice %619 {offsets = [0, 0], sizes = [8, 32], strides = [1, 1]} : vector<32x32xf32> to vector<8x32xf32>
    %cst_273 = arith.constant dense<0.000000e+00> : vector<16x32xf32>
    %644 = tpu.matmul %642, %643, %cst_273 {dimension_numbers = #tpu.dot_dimension_numbers<[1], [0], [0], [1], [0, 0, 1, 1], [], []>} : vector<16x8xf32>, vector<8x32xf32>, vector<16x32xf32> -> vector<16x32xf32>
    %645 = vector.broadcast %621 : vector<1x32xf32> to vector<16x32xf32>
    %646 = arith.addf %645, %644 : vector<16x32xf32>
    %647 = vector.extract_strided_slice %617 {offsets = [0, 8], sizes = [16, 8], strides = [1, 1]} : vector<16x96xf32> to vector<16x8xf32>
    %648 = vector.shape_cast %647 : vector<16x8xf32> to vector<2x8x8xf32>
    %649 = vector.extract_strided_slice %617 {offsets = [0, 40], sizes = [16, 8], strides = [1, 1]} : vector<16x96xf32> to vector<16x8xf32>
    %650 = vector.shape_cast %649 : vector<16x8xf32> to vector<2x8x8xf32>
    %651 = vector.extract_strided_slice %617 {offsets = [0, 72], sizes = [16, 8], strides = [1, 1]} : vector<16x96xf32> to vector<16x8xf32>
    %652 = vector.shape_cast %651 : vector<16x8xf32> to vector<2x8x8xf32>
    "tpu.trace_start"() <{level = 10 : i32, message = "bqd,bkd->bqk"}> : () -> ()
    %cst_274 = arith.constant dense<0.000000e+00> : vector<2x8x8xf32>
    %653 = tpu.matmul %648, %650, %cst_274 {dimension_numbers = #tpu.dot_dimension_numbers<[2], [2], [1], [1], [0, 0, 0, 1, 1, 1], [0], [0]>} : vector<2x8x8xf32>, vector<2x8x8xf32>, vector<2x8x8xf32> -> vector<2x8x8xf32>
    "tpu.trace_stop"() : () -> ()
    %cst_275 = arith.constant 0.353553385 : f32
    %654 = vector.broadcast %cst_275 : f32 to vector<2x8x8xf32>
    %655 = arith.mulf %653, %654 : vector<2x8x8xf32>
    %cst_276 = arith.constant dense<0xFF800000> : vector<2x8xf32>
    %656 = vector.multi_reduction <maximumf>, %655, %cst_276 [2] : vector<2x8x8xf32> to vector<2x8xf32>
    %657 = vector.shape_cast %656 : vector<2x8xf32> to vector<2x8x1xf32>
    %658 = vector.broadcast %657 : vector<2x8x1xf32> to vector<2x8x8xf32>
    %659 = arith.subf %655, %658 : vector<2x8x8xf32>
    %660 = math.exp %659 : vector<2x8x8xf32>
    %cst_277 = arith.constant dense<0.000000e+00> : vector<2x8xf32>
    %661 = vector.multi_reduction <add>, %660, %cst_277 [2] : vector<2x8x8xf32> to vector<2x8xf32>
    %662 = vector.shape_cast %661 : vector<2x8xf32> to vector<2x8x1xf32>
    %663 = tpu.reciprocal %662 {approx = true} : vector<2x8x1xf32> -> vector<2x8x1xf32>
    %664 = vector.broadcast %663 : vector<2x8x1xf32> to vector<2x8x8xf32>
    %665 = arith.mulf %660, %664 : vector<2x8x8xf32>
    "tpu.trace_start"() <{level = 10 : i32, message = "bqk,bkd->bqd"}> : () -> ()
    %cst_278 = arith.constant dense<0.000000e+00> : vector<2x8x8xf32>
    %666 = tpu.matmul %665, %652, %cst_278 {dimension_numbers = #tpu.dot_dimension_numbers<[2], [1], [1], [2], [0, 0, 0, 1, 1, 2], [0], [0]>} : vector<2x8x8xf32>, vector<2x8x8xf32>, vector<2x8x8xf32> -> vector<2x8x8xf32>
    "tpu.trace_stop"() : () -> ()
    %667 = vector.shape_cast %666 : vector<2x8x8xf32> to vector<16x8xf32>
    %668 = vector.extract_strided_slice %619 {offsets = [8, 0], sizes = [8, 32], strides = [1, 1]} : vector<32x32xf32> to vector<8x32xf32>
    %cst_279 = arith.constant dense<0.000000e+00> : vector<16x32xf32>
    %669 = tpu.matmul %667, %668, %cst_279 {dimension_numbers = #tpu.dot_dimension_numbers<[1], [0], [0], [1], [0, 0, 1, 1], [], []>} : vector<16x8xf32>, vector<8x32xf32>, vector<16x32xf32> -> vector<16x32xf32>
    %670 = arith.addf %646, %669 : vector<16x32xf32>
    %671 = vector.extract_strided_slice %617 {offsets = [0, 16], sizes = [16, 8], strides = [1, 1]} : vector<16x96xf32> to vector<16x8xf32>
    %672 = vector.shape_cast %671 : vector<16x8xf32> to vector<2x8x8xf32>
    %673 = vector.extract_strided_slice %617 {offsets = [0, 48], sizes = [16, 8], strides = [1, 1]} : vector<16x96xf32> to vector<16x8xf32>
    %674 = vector.shape_cast %673 : vector<16x8xf32> to vector<2x8x8xf32>
    %675 = vector.extract_strided_slice %617 {offsets = [0, 80], sizes = [16, 8], strides = [1, 1]} : vector<16x96xf32> to vector<16x8xf32>
    %676 = vector.shape_cast %675 : vector<16x8xf32> to vector<2x8x8xf32>
    "tpu.trace_start"() <{level = 10 : i32, message = "bqd,bkd->bqk"}> : () -> ()
    %cst_280 = arith.constant dense<0.000000e+00> : vector<2x8x8xf32>
    %677 = tpu.matmul %672, %674, %cst_280 {dimension_numbers = #tpu.dot_dimension_numbers<[2], [2], [1], [1], [0, 0, 0, 1, 1, 1], [0], [0]>} : vector<2x8x8xf32>, vector<2x8x8xf32>, vector<2x8x8xf32> -> vector<2x8x8xf32>
    "tpu.trace_stop"() : () -> ()
    %cst_281 = arith.constant 0.353553385 : f32
    %678 = vector.broadcast %cst_281 : f32 to vector<2x8x8xf32>
    %679 = arith.mulf %677, %678 : vector<2x8x8xf32>
    %cst_282 = arith.constant dense<0xFF800000> : vector<2x8xf32>
    %680 = vector.multi_reduction <maximumf>, %679, %cst_282 [2] : vector<2x8x8xf32> to vector<2x8xf32>
    %681 = vector.shape_cast %680 : vector<2x8xf32> to vector<2x8x1xf32>
    %682 = vector.broadcast %681 : vector<2x8x1xf32> to vector<2x8x8xf32>
    %683 = arith.subf %679, %682 : vector<2x8x8xf32>
    %684 = math.exp %683 : vector<2x8x8xf32>
    %cst_283 = arith.constant dense<0.000000e+00> : vector<2x8xf32>
    %685 = vector.multi_reduction <add>, %684, %cst_283 [2] : vector<2x8x8xf32> to vector<2x8xf32>
    %686 = vector.shape_cast %685 : vector<2x8xf32> to vector<2x8x1xf32>
    %687 = tpu.reciprocal %686 {approx = true} : vector<2x8x1xf32> -> vector<2x8x1xf32>
    %688 = vector.broadcast %687 : vector<2x8x1xf32> to vector<2x8x8xf32>
    %689 = arith.mulf %684, %688 : vector<2x8x8xf32>
    "tpu.trace_start"() <{level = 10 : i32, message = "bqk,bkd->bqd"}> : () -> ()
    %cst_284 = arith.constant dense<0.000000e+00> : vector<2x8x8xf32>
    %690 = tpu.matmul %689, %676, %cst_284 {dimension_numbers = #tpu.dot_dimension_numbers<[2], [1], [1], [2], [0, 0, 0, 1, 1, 2], [0], [0]>} : vector<2x8x8xf32>, vector<2x8x8xf32>, vector<2x8x8xf32> -> vector<2x8x8xf32>
    "tpu.trace_stop"() : () -> ()
    %691 = vector.shape_cast %690 : vector<2x8x8xf32> to vector<16x8xf32>
    %692 = vector.extract_strided_slice %619 {offsets = [16, 0], sizes = [8, 32], strides = [1, 1]} : vector<32x32xf32> to vector<8x32xf32>
    %cst_285 = arith.constant dense<0.000000e+00> : vector<16x32xf32>
    %693 = tpu.matmul %691, %692, %cst_285 {dimension_numbers = #tpu.dot_dimension_numbers<[1], [0], [0], [1], [0, 0, 1, 1], [], []>} : vector<16x8xf32>, vector<8x32xf32>, vector<16x32xf32> -> vector<16x32xf32>
    %694 = arith.addf %670, %693 : vector<16x32xf32>
    %695 = vector.extract_strided_slice %617 {offsets = [0, 24], sizes = [16, 8], strides = [1, 1]} : vector<16x96xf32> to vector<16x8xf32>
    %696 = vector.shape_cast %695 : vector<16x8xf32> to vector<2x8x8xf32>
    %697 = vector.extract_strided_slice %617 {offsets = [0, 56], sizes = [16, 8], strides = [1, 1]} : vector<16x96xf32> to vector<16x8xf32>
    %698 = vector.shape_cast %697 : vector<16x8xf32> to vector<2x8x8xf32>
    %699 = vector.extract_strided_slice %617 {offsets = [0, 88], sizes = [16, 8], strides = [1, 1]} : vector<16x96xf32> to vector<16x8xf32>
    %700 = vector.shape_cast %699 : vector<16x8xf32> to vector<2x8x8xf32>
    "tpu.trace_start"() <{level = 10 : i32, message = "bqd,bkd->bqk"}> : () -> ()
    %cst_286 = arith.constant dense<0.000000e+00> : vector<2x8x8xf32>
    %701 = tpu.matmul %696, %698, %cst_286 {dimension_numbers = #tpu.dot_dimension_numbers<[2], [2], [1], [1], [0, 0, 0, 1, 1, 1], [0], [0]>} : vector<2x8x8xf32>, vector<2x8x8xf32>, vector<2x8x8xf32> -> vector<2x8x8xf32>
    "tpu.trace_stop"() : () -> ()
    %cst_287 = arith.constant 0.353553385 : f32
    %702 = vector.broadcast %cst_287 : f32 to vector<2x8x8xf32>
    %703 = arith.mulf %701, %702 : vector<2x8x8xf32>
    %cst_288 = arith.constant dense<0xFF800000> : vector<2x8xf32>
    %704 = vector.multi_reduction <maximumf>, %703, %cst_288 [2] : vector<2x8x8xf32> to vector<2x8xf32>
    %705 = vector.shape_cast %704 : vector<2x8xf32> to vector<2x8x1xf32>
    %706 = vector.broadcast %705 : vector<2x8x1xf32> to vector<2x8x8xf32>
    %707 = arith.subf %703, %706 : vector<2x8x8xf32>
    %708 = math.exp %707 : vector<2x8x8xf32>
    %cst_289 = arith.constant dense<0.000000e+00> : vector<2x8xf32>
    %709 = vector.multi_reduction <add>, %708, %cst_289 [2] : vector<2x8x8xf32> to vector<2x8xf32>
    %710 = vector.shape_cast %709 : vector<2x8xf32> to vector<2x8x1xf32>
    %711 = tpu.reciprocal %710 {approx = true} : vector<2x8x1xf32> -> vector<2x8x1xf32>
    %712 = vector.broadcast %711 : vector<2x8x1xf32> to vector<2x8x8xf32>
    %713 = arith.mulf %708, %712 : vector<2x8x8xf32>
    "tpu.trace_start"() <{level = 10 : i32, message = "bqk,bkd->bqd"}> : () -> ()
    %cst_290 = arith.constant dense<0.000000e+00> : vector<2x8x8xf32>
    %714 = tpu.matmul %713, %700, %cst_290 {dimension_numbers = #tpu.dot_dimension_numbers<[2], [1], [1], [2], [0, 0, 0, 1, 1, 2], [0], [0]>} : vector<2x8x8xf32>, vector<2x8x8xf32>, vector<2x8x8xf32> -> vector<2x8x8xf32>
    "tpu.trace_stop"() : () -> ()
    %715 = vector.shape_cast %714 : vector<2x8x8xf32> to vector<16x8xf32>
    %716 = vector.extract_strided_slice %619 {offsets = [24, 0], sizes = [8, 32], strides = [1, 1]} : vector<32x32xf32> to vector<8x32xf32>
    %cst_291 = arith.constant dense<0.000000e+00> : vector<16x32xf32>
    %717 = tpu.matmul %715, %716, %cst_291 {dimension_numbers = #tpu.dot_dimension_numbers<[1], [0], [0], [1], [0, 0, 1, 1], [], []>} : vector<16x8xf32>, vector<8x32xf32>, vector<16x32xf32> -> vector<16x32xf32>
    %718 = arith.addf %694, %717 : vector<16x32xf32>
    %719 = arith.addf %610, %718 : vector<16x32xf32>
    %c1_292 = arith.constant 1 : index
    %c0_293 = arith.constant 0 : index
    %c0_294 = arith.constant 0 : index
    %720 = vector.load %arg25[%c1_292, %c0_293, %c0_294] : memref<2x1x32xf32, #tpu.memory_space<vmem>>, vector<1x1x32xf32>
    %721 = vector.shape_cast %720 : vector<1x1x32xf32> to vector<1x32xf32>
    %c1_295 = arith.constant 1 : index
    %c0_296 = arith.constant 0 : index
    %c0_297 = arith.constant 0 : index
    %722 = vector.load %arg26[%c1_295, %c0_296, %c0_297] : memref<2x1x32xf32, #tpu.memory_space<vmem>>, vector<1x1x32xf32>
    %723 = vector.shape_cast %722 : vector<1x1x32xf32> to vector<1x32xf32>
    %cst_298 = arith.constant dense<0.000000e+00> : vector<16xf32>
    %724 = vector.multi_reduction <add>, %719, %cst_298 [1] : vector<16x32xf32> to vector<16xf32>
    %725 = vector.shape_cast %724 : vector<16xf32> to vector<16x1xf32>
    %cst_299 = arith.constant 3.200000e+01 : f32
    %726 = vector.broadcast %cst_299 : f32 to vector<16x1xf32>
    %727 = arith.divf %725, %726 : vector<16x1xf32>
    %728 = vector.broadcast %727 : vector<16x1xf32> to vector<16x32xf32>
    %729 = arith.subf %719, %728 : vector<16x32xf32>
    %730 = arith.mulf %729, %729 : vector<16x32xf32>
    %cst_300 = arith.constant dense<0.000000e+00> : vector<16xf32>
    %731 = vector.multi_reduction <add>, %730, %cst_300 [1] : vector<16x32xf32> to vector<16xf32>
    %732 = vector.shape_cast %731 : vector<16xf32> to vector<16x1xf32>
    %cst_301 = arith.constant 3.200000e+01 : f32
    %733 = vector.broadcast %cst_301 : f32 to vector<16x1xf32>
    %734 = arith.divf %732, %733 : vector<16x1xf32>
    %735 = vector.broadcast %727 : vector<16x1xf32> to vector<16x32xf32>
    %736 = arith.subf %719, %735 : vector<16x32xf32>
    %cst_302 = arith.constant 9.99999974E-6 : f32
    %737 = vector.broadcast %cst_302 : f32 to vector<16x1xf32>
    %738 = arith.addf %734, %737 : vector<16x1xf32>
    %739 = math.rsqrt %738 : vector<16x1xf32>
    %740 = vector.broadcast %739 : vector<16x1xf32> to vector<16x32xf32>
    %741 = arith.mulf %736, %740 : vector<16x32xf32>
    %742 = vector.broadcast %721 : vector<1x32xf32> to vector<16x32xf32>
    %743 = arith.mulf %741, %742 : vector<16x32xf32>
    %744 = vector.broadcast %723 : vector<1x32xf32> to vector<16x32xf32>
    %745 = arith.addf %743, %744 : vector<16x32xf32>
    %c1_303 = arith.constant 1 : index
    %c0_304 = arith.constant 0 : index
    %c0_305 = arith.constant 0 : index
    %746 = vector.load %arg27[%c1_303, %c0_304, %c0_305] : memref<2x32x32xf32, #tpu.memory_space<vmem>>, vector<1x32x32xf32>
    %747 = vector.shape_cast %746 : vector<1x32x32xf32> to vector<32x32xf32>
    %cst_306 = arith.constant dense<0.000000e+00> : vector<16x32xf32>
    %748 = tpu.matmul %745, %747, %cst_306 {dimension_numbers = #tpu.dot_dimension_numbers<[1], [0], [0], [1], [0, 0, 1, 1], [], []>} : vector<16x32xf32>, vector<32x32xf32>, vector<16x32xf32> -> vector<16x32xf32>
    %c1_307 = arith.constant 1 : index
    %c0_308 = arith.constant 0 : index
    %c0_309 = arith.constant 0 : index
    %749 = vector.load %arg28[%c1_307, %c0_308, %c0_309] : memref<2x1x32xf32, #tpu.memory_space<vmem>>, vector<1x1x32xf32>
    %750 = vector.shape_cast %749 : vector<1x1x32xf32> to vector<1x32xf32>
    %751 = vector.broadcast %750 : vector<1x32xf32> to vector<16x32xf32>
    %752 = arith.addf %748, %751 : vector<16x32xf32>
    %cst_310 = arith.constant 5.000000e-01 : f32
    %753 = vector.broadcast %cst_310 : f32 to vector<16x32xf32>
    %754 = arith.mulf %753, %752 : vector<16x32xf32>
    %cst_311 = arith.constant 4.471500e-02 : f32
    %755 = vector.broadcast %cst_311 : f32 to vector<16x32xf32>
    %756 = arith.mulf %755, %752 : vector<16x32xf32>
    %757 = arith.mulf %756, %752 : vector<16x32xf32>
    %758 = arith.mulf %757, %752 : vector<16x32xf32>
    %759 = arith.addf %752, %758 : vector<16x32xf32>
    %cst_312 = arith.constant 0.797884583 : f32
    %760 = vector.broadcast %cst_312 : f32 to vector<16x32xf32>
    %761 = arith.mulf %760, %759 : vector<16x32xf32>
    %762 = math.tanh %761 : vector<16x32xf32>
    %cst_313 = arith.constant 1.000000e+00 : f32
    %763 = vector.broadcast %cst_313 : f32 to vector<16x32xf32>
    %764 = arith.addf %763, %762 : vector<16x32xf32>
    %765 = arith.mulf %754, %764 : vector<16x32xf32>
    %c1_314 = arith.constant 1 : index
    %c0_315 = arith.constant 0 : index
    %c0_316 = arith.constant 0 : index
    %766 = vector.load %arg29[%c1_314, %c0_315, %c0_316] : memref<2x32x32xf32, #tpu.memory_space<vmem>>, vector<1x32x32xf32>
    %767 = vector.shape_cast %766 : vector<1x32x32xf32> to vector<32x32xf32>
    %cst_317 = arith.constant dense<0.000000e+00> : vector<16x32xf32>
    %768 = tpu.matmul %765, %767, %cst_317 {dimension_numbers = #tpu.dot_dimension_numbers<[1], [0], [0], [1], [0, 0, 1, 1], [], []>} : vector<16x32xf32>, vector<32x32xf32>, vector<16x32xf32> -> vector<16x32xf32>
    %c1_318 = arith.constant 1 : index
    %c0_319 = arith.constant 0 : index
    %c0_320 = arith.constant 0 : index
    %769 = vector.load %arg30[%c1_318, %c0_319, %c0_320] : memref<2x1x32xf32, #tpu.memory_space<vmem>>, vector<1x1x32xf32>
    %770 = vector.shape_cast %769 : vector<1x1x32xf32> to vector<1x32xf32>
    %771 = vector.broadcast %770 : vector<1x32xf32> to vector<16x32xf32>
    %772 = arith.addf %768, %771 : vector<16x32xf32>
    %773 = arith.addf %745, %772 : vector<16x32xf32>
    %c1_321 = arith.constant 1 : index
    %c0_322 = arith.constant 0 : index
    %c0_323 = arith.constant 0 : index
    %774 = vector.load %arg31[%c1_321, %c0_322, %c0_323] : memref<2x1x32xf32, #tpu.memory_space<vmem>>, vector<1x1x32xf32>
    %775 = vector.shape_cast %774 : vector<1x1x32xf32> to vector<1x32xf32>
    %c1_324 = arith.constant 1 : index
    %c0_325 = arith.constant 0 : index
    %c0_326 = arith.constant 0 : index
    %776 = vector.load %arg32[%c1_324, %c0_325, %c0_326] : memref<2x1x32xf32, #tpu.memory_space<vmem>>, vector<1x1x32xf32>
    %777 = vector.shape_cast %776 : vector<1x1x32xf32> to vector<1x32xf32>
    %cst_327 = arith.constant dense<0.000000e+00> : vector<16xf32>
    %778 = vector.multi_reduction <add>, %773, %cst_327 [1] : vector<16x32xf32> to vector<16xf32>
    %779 = vector.shape_cast %778 : vector<16xf32> to vector<16x1xf32>
    %cst_328 = arith.constant 3.200000e+01 : f32
    %780 = vector.broadcast %cst_328 : f32 to vector<16x1xf32>
    %781 = arith.divf %779, %780 : vector<16x1xf32>
    %782 = vector.broadcast %781 : vector<16x1xf32> to vector<16x32xf32>
    %783 = arith.subf %773, %782 : vector<16x32xf32>
    %784 = arith.mulf %783, %783 : vector<16x32xf32>
    %cst_329 = arith.constant dense<0.000000e+00> : vector<16xf32>
    %785 = vector.multi_reduction <add>, %784, %cst_329 [1] : vector<16x32xf32> to vector<16xf32>
    %786 = vector.shape_cast %785 : vector<16xf32> to vector<16x1xf32>
    %cst_330 = arith.constant 3.200000e+01 : f32
    %787 = vector.broadcast %cst_330 : f32 to vector<16x1xf32>
    %788 = arith.divf %786, %787 : vector<16x1xf32>
    %789 = vector.broadcast %781 : vector<16x1xf32> to vector<16x32xf32>
    %790 = arith.subf %773, %789 : vector<16x32xf32>
    %cst_331 = arith.constant 9.99999974E-6 : f32
    %791 = vector.broadcast %cst_331 : f32 to vector<16x1xf32>
    %792 = arith.addf %788, %791 : vector<16x1xf32>
    %793 = math.rsqrt %792 : vector<16x1xf32>
    %794 = vector.broadcast %793 : vector<16x1xf32> to vector<16x32xf32>
    %795 = arith.mulf %790, %794 : vector<16x32xf32>
    %796 = vector.broadcast %775 : vector<1x32xf32> to vector<16x32xf32>
    %797 = arith.mulf %795, %796 : vector<16x32xf32>
    %798 = vector.broadcast %777 : vector<1x32xf32> to vector<16x32xf32>
    %799 = arith.addf %797, %798 : vector<16x32xf32>
    %c0_332 = arith.constant 0 : index
    %c0_333 = arith.constant 0 : index
    %800 = vector.load %arg33[%c0_332, %c0_333] : memref<1x32xf32, #tpu.memory_space<vmem>>, vector<1x32xf32>
    %c0_334 = arith.constant 0 : index
    %c0_335 = arith.constant 0 : index
    %801 = vector.load %arg34[%c0_334, %c0_335] : memref<1x32xf32, #tpu.memory_space<vmem>>, vector<1x32xf32>
    %cst_336 = arith.constant dense<0.000000e+00> : vector<16xf32>
    %802 = vector.multi_reduction <add>, %799, %cst_336 [1] : vector<16x32xf32> to vector<16xf32>
    %803 = vector.shape_cast %802 : vector<16xf32> to vector<16x1xf32>
    %cst_337 = arith.constant 3.200000e+01 : f32
    %804 = vector.broadcast %cst_337 : f32 to vector<16x1xf32>
    %805 = arith.divf %803, %804 : vector<16x1xf32>
    %806 = vector.broadcast %805 : vector<16x1xf32> to vector<16x32xf32>
    %807 = arith.subf %799, %806 : vector<16x32xf32>
    %808 = arith.mulf %807, %807 : vector<16x32xf32>
    %cst_338 = arith.constant dense<0.000000e+00> : vector<16xf32>
    %809 = vector.multi_reduction <add>, %808, %cst_338 [1] : vector<16x32xf32> to vector<16xf32>
    %810 = vector.shape_cast %809 : vector<16xf32> to vector<16x1xf32>
    %cst_339 = arith.constant 3.200000e+01 : f32
    %811 = vector.broadcast %cst_339 : f32 to vector<16x1xf32>
    %812 = arith.divf %810, %811 : vector<16x1xf32>
    %813 = vector.broadcast %805 : vector<16x1xf32> to vector<16x32xf32>
    %814 = arith.subf %799, %813 : vector<16x32xf32>
    %cst_340 = arith.constant 9.99999974E-6 : f32
    %815 = vector.broadcast %cst_340 : f32 to vector<16x1xf32>
    %816 = arith.addf %812, %815 : vector<16x1xf32>
    %817 = math.rsqrt %816 : vector<16x1xf32>
    %818 = vector.broadcast %817 : vector<16x1xf32> to vector<16x32xf32>
    %819 = arith.mulf %814, %818 : vector<16x32xf32>
    %820 = vector.broadcast %800 : vector<1x32xf32> to vector<16x32xf32>
    %821 = arith.mulf %819, %820 : vector<16x32xf32>
    %822 = vector.broadcast %801 : vector<1x32xf32> to vector<16x32xf32>
    %823 = arith.addf %821, %822 : vector<16x32xf32>
    %824 = vector.shape_cast %823 : vector<16x32xf32> to vector<2x8x32xf32>
    %cst_341 = arith.constant dense<0.000000e+00> : vector<2x32xf32>
    %825 = vector.multi_reduction <add>, %824, %cst_341 [1] : vector<2x8x32xf32> to vector<2x32xf32>
    %cst_342 = arith.constant 8.000000e+00 : f32
    %826 = vector.broadcast %cst_342 : f32 to vector<2x32xf32>
    %827 = arith.divf %825, %826 : vector<2x32xf32>
    %c0_343 = arith.constant 0 : index
    %c0_344 = arith.constant 0 : index
    %828 = vector.load %arg2[%c0_343, %c0_344] : memref<16x10xf32, #tpu.memory_space<vmem>>, vector<16x10xf32>
    %c0_345 = arith.constant 0 : index
    %c0_346 = arith.constant 0 : index
    %829 = vector.load %arg35[%c0_345, %c0_346] : memref<10x32xf32, #tpu.memory_space<vmem>>, vector<10x32xf32>
    %cst_347 = arith.constant dense<0.000000e+00> : vector<16x32xf32>
    %830 = tpu.matmul %828, %829, %cst_347 {dimension_numbers = #tpu.dot_dimension_numbers<[1], [0], [0], [1], [0, 0, 1, 1], [], []>} : vector<16x10xf32>, vector<10x32xf32>, vector<16x32xf32> -> vector<16x32xf32>
    %c0_348 = arith.constant 0 : index
    %c0_349 = arith.constant 0 : index
    %831 = vector.load %arg36[%c0_348, %c0_349] : memref<1x32xf32, #tpu.memory_space<vmem>>, vector<1x32xf32>
    %832 = vector.broadcast %831 : vector<1x32xf32> to vector<16x32xf32>
    %833 = arith.addf %830, %832 : vector<16x32xf32>
    %cst_350 = arith.constant 0.000000e+00 : f32
    %834 = vector.broadcast %cst_350 : f32 to vector<16x32xf32>
    %835 = arith.maximumf %833, %834 : vector<16x32xf32>
    %c0_351 = arith.constant 0 : index
    %c0_352 = arith.constant 0 : index
    %c0_353 = arith.constant 0 : index
    %836 = vector.load %arg37[%c0_351, %c0_352, %c0_353] : memref<2x32x96xf32, #tpu.memory_space<vmem>>, vector<1x32x96xf32>
    %837 = vector.shape_cast %836 : vector<1x32x96xf32> to vector<32x96xf32>
    %cst_354 = arith.constant dense<0.000000e+00> : vector<16x96xf32>
    %838 = tpu.matmul %835, %837, %cst_354 {dimension_numbers = #tpu.dot_dimension_numbers<[1], [0], [0], [1], [0, 0, 1, 1], [], []>} : vector<16x32xf32>, vector<32x96xf32>, vector<16x96xf32> -> vector<16x96xf32>
    %c0_355 = arith.constant 0 : index
    %c0_356 = arith.constant 0 : index
    %c0_357 = arith.constant 0 : index
    %839 = vector.load %arg38[%c0_355, %c0_356, %c0_357] : memref<2x1x96xf32, #tpu.memory_space<vmem>>, vector<1x1x96xf32>
    %840 = vector.shape_cast %839 : vector<1x1x96xf32> to vector<1x96xf32>
    %841 = vector.broadcast %840 : vector<1x96xf32> to vector<16x96xf32>
    %842 = arith.addf %838, %841 : vector<16x96xf32>
    %c0_358 = arith.constant 0 : index
    %c0_359 = arith.constant 0 : index
    %c0_360 = arith.constant 0 : index
    %843 = vector.load %arg39[%c0_358, %c0_359, %c0_360] : memref<2x32x32xf32, #tpu.memory_space<vmem>>, vector<1x32x32xf32>
    %844 = vector.shape_cast %843 : vector<1x32x32xf32> to vector<32x32xf32>
    %c0_361 = arith.constant 0 : index
    %c0_362 = arith.constant 0 : index
    %c0_363 = arith.constant 0 : index
    %845 = vector.load %arg40[%c0_361, %c0_362, %c0_363] : memref<2x1x32xf32, #tpu.memory_space<vmem>>, vector<1x1x32xf32>
    %846 = vector.shape_cast %845 : vector<1x1x32xf32> to vector<1x32xf32>
    %847 = vector.extract_strided_slice %842 {offsets = [0, 0], sizes = [16, 8], strides = [1, 1]} : vector<16x96xf32> to vector<16x8xf32>
    %848 = vector.shape_cast %847 : vector<16x8xf32> to vector<2x8x8xf32>
    %849 = vector.extract_strided_slice %842 {offsets = [0, 32], sizes = [16, 8], strides = [1, 1]} : vector<16x96xf32> to vector<16x8xf32>
    %850 = vector.shape_cast %849 : vector<16x8xf32> to vector<2x8x8xf32>
    %851 = vector.extract_strided_slice %842 {offsets = [0, 64], sizes = [16, 8], strides = [1, 1]} : vector<16x96xf32> to vector<16x8xf32>
    %852 = vector.shape_cast %851 : vector<16x8xf32> to vector<2x8x8xf32>
    "tpu.trace_start"() <{level = 10 : i32, message = "bqd,bkd->bqk"}> : () -> ()
    %cst_364 = arith.constant dense<0.000000e+00> : vector<2x8x8xf32>
    %853 = tpu.matmul %848, %850, %cst_364 {dimension_numbers = #tpu.dot_dimension_numbers<[2], [2], [1], [1], [0, 0, 0, 1, 1, 1], [0], [0]>} : vector<2x8x8xf32>, vector<2x8x8xf32>, vector<2x8x8xf32> -> vector<2x8x8xf32>
    "tpu.trace_stop"() : () -> ()
    %cst_365 = arith.constant 0.353553385 : f32
    %854 = vector.broadcast %cst_365 : f32 to vector<2x8x8xf32>
    %855 = arith.mulf %853, %854 : vector<2x8x8xf32>
    %cst_366 = arith.constant dense<0xFF800000> : vector<2x8xf32>
    %856 = vector.multi_reduction <maximumf>, %855, %cst_366 [2] : vector<2x8x8xf32> to vector<2x8xf32>
    %857 = vector.shape_cast %856 : vector<2x8xf32> to vector<2x8x1xf32>
    %858 = vector.broadcast %857 : vector<2x8x1xf32> to vector<2x8x8xf32>
    %859 = arith.subf %855, %858 : vector<2x8x8xf32>
    %860 = math.exp %859 : vector<2x8x8xf32>
    %cst_367 = arith.constant dense<0.000000e+00> : vector<2x8xf32>
    %861 = vector.multi_reduction <add>, %860, %cst_367 [2] : vector<2x8x8xf32> to vector<2x8xf32>
    %862 = vector.shape_cast %861 : vector<2x8xf32> to vector<2x8x1xf32>
    %863 = tpu.reciprocal %862 {approx = true} : vector<2x8x1xf32> -> vector<2x8x1xf32>
    %864 = vector.broadcast %863 : vector<2x8x1xf32> to vector<2x8x8xf32>
    %865 = arith.mulf %860, %864 : vector<2x8x8xf32>
    "tpu.trace_start"() <{level = 10 : i32, message = "bqk,bkd->bqd"}> : () -> ()
    %cst_368 = arith.constant dense<0.000000e+00> : vector<2x8x8xf32>
    %866 = tpu.matmul %865, %852, %cst_368 {dimension_numbers = #tpu.dot_dimension_numbers<[2], [1], [1], [2], [0, 0, 0, 1, 1, 2], [0], [0]>} : vector<2x8x8xf32>, vector<2x8x8xf32>, vector<2x8x8xf32> -> vector<2x8x8xf32>
    "tpu.trace_stop"() : () -> ()
    %867 = vector.shape_cast %866 : vector<2x8x8xf32> to vector<16x8xf32>
    %868 = vector.extract_strided_slice %844 {offsets = [0, 0], sizes = [8, 32], strides = [1, 1]} : vector<32x32xf32> to vector<8x32xf32>
    %cst_369 = arith.constant dense<0.000000e+00> : vector<16x32xf32>
    %869 = tpu.matmul %867, %868, %cst_369 {dimension_numbers = #tpu.dot_dimension_numbers<[1], [0], [0], [1], [0, 0, 1, 1], [], []>} : vector<16x8xf32>, vector<8x32xf32>, vector<16x32xf32> -> vector<16x32xf32>
    %870 = vector.broadcast %846 : vector<1x32xf32> to vector<16x32xf32>
    %871 = arith.addf %870, %869 : vector<16x32xf32>
    %872 = vector.extract_strided_slice %842 {offsets = [0, 8], sizes = [16, 8], strides = [1, 1]} : vector<16x96xf32> to vector<16x8xf32>
    %873 = vector.shape_cast %872 : vector<16x8xf32> to vector<2x8x8xf32>
    %874 = vector.extract_strided_slice %842 {offsets = [0, 40], sizes = [16, 8], strides = [1, 1]} : vector<16x96xf32> to vector<16x8xf32>
    %875 = vector.shape_cast %874 : vector<16x8xf32> to vector<2x8x8xf32>
    %876 = vector.extract_strided_slice %842 {offsets = [0, 72], sizes = [16, 8], strides = [1, 1]} : vector<16x96xf32> to vector<16x8xf32>
    %877 = vector.shape_cast %876 : vector<16x8xf32> to vector<2x8x8xf32>
    "tpu.trace_start"() <{level = 10 : i32, message = "bqd,bkd->bqk"}> : () -> ()
    %cst_370 = arith.constant dense<0.000000e+00> : vector<2x8x8xf32>
    %878 = tpu.matmul %873, %875, %cst_370 {dimension_numbers = #tpu.dot_dimension_numbers<[2], [2], [1], [1], [0, 0, 0, 1, 1, 1], [0], [0]>} : vector<2x8x8xf32>, vector<2x8x8xf32>, vector<2x8x8xf32> -> vector<2x8x8xf32>
    "tpu.trace_stop"() : () -> ()
    %cst_371 = arith.constant 0.353553385 : f32
    %879 = vector.broadcast %cst_371 : f32 to vector<2x8x8xf32>
    %880 = arith.mulf %878, %879 : vector<2x8x8xf32>
    %cst_372 = arith.constant dense<0xFF800000> : vector<2x8xf32>
    %881 = vector.multi_reduction <maximumf>, %880, %cst_372 [2] : vector<2x8x8xf32> to vector<2x8xf32>
    %882 = vector.shape_cast %881 : vector<2x8xf32> to vector<2x8x1xf32>
    %883 = vector.broadcast %882 : vector<2x8x1xf32> to vector<2x8x8xf32>
    %884 = arith.subf %880, %883 : vector<2x8x8xf32>
    %885 = math.exp %884 : vector<2x8x8xf32>
    %cst_373 = arith.constant dense<0.000000e+00> : vector<2x8xf32>
    %886 = vector.multi_reduction <add>, %885, %cst_373 [2] : vector<2x8x8xf32> to vector<2x8xf32>
    %887 = vector.shape_cast %886 : vector<2x8xf32> to vector<2x8x1xf32>
    %888 = tpu.reciprocal %887 {approx = true} : vector<2x8x1xf32> -> vector<2x8x1xf32>
    %889 = vector.broadcast %888 : vector<2x8x1xf32> to vector<2x8x8xf32>
    %890 = arith.mulf %885, %889 : vector<2x8x8xf32>
    "tpu.trace_start"() <{level = 10 : i32, message = "bqk,bkd->bqd"}> : () -> ()
    %cst_374 = arith.constant dense<0.000000e+00> : vector<2x8x8xf32>
    %891 = tpu.matmul %890, %877, %cst_374 {dimension_numbers = #tpu.dot_dimension_numbers<[2], [1], [1], [2], [0, 0, 0, 1, 1, 2], [0], [0]>} : vector<2x8x8xf32>, vector<2x8x8xf32>, vector<2x8x8xf32> -> vector<2x8x8xf32>
    "tpu.trace_stop"() : () -> ()
    %892 = vector.shape_cast %891 : vector<2x8x8xf32> to vector<16x8xf32>
    %893 = vector.extract_strided_slice %844 {offsets = [8, 0], sizes = [8, 32], strides = [1, 1]} : vector<32x32xf32> to vector<8x32xf32>
    %cst_375 = arith.constant dense<0.000000e+00> : vector<16x32xf32>
    %894 = tpu.matmul %892, %893, %cst_375 {dimension_numbers = #tpu.dot_dimension_numbers<[1], [0], [0], [1], [0, 0, 1, 1], [], []>} : vector<16x8xf32>, vector<8x32xf32>, vector<16x32xf32> -> vector<16x32xf32>
    %895 = arith.addf %871, %894 : vector<16x32xf32>
    %896 = vector.extract_strided_slice %842 {offsets = [0, 16], sizes = [16, 8], strides = [1, 1]} : vector<16x96xf32> to vector<16x8xf32>
    %897 = vector.shape_cast %896 : vector<16x8xf32> to vector<2x8x8xf32>
    %898 = vector.extract_strided_slice %842 {offsets = [0, 48], sizes = [16, 8], strides = [1, 1]} : vector<16x96xf32> to vector<16x8xf32>
    %899 = vector.shape_cast %898 : vector<16x8xf32> to vector<2x8x8xf32>
    %900 = vector.extract_strided_slice %842 {offsets = [0, 80], sizes = [16, 8], strides = [1, 1]} : vector<16x96xf32> to vector<16x8xf32>
    %901 = vector.shape_cast %900 : vector<16x8xf32> to vector<2x8x8xf32>
    "tpu.trace_start"() <{level = 10 : i32, message = "bqd,bkd->bqk"}> : () -> ()
    %cst_376 = arith.constant dense<0.000000e+00> : vector<2x8x8xf32>
    %902 = tpu.matmul %897, %899, %cst_376 {dimension_numbers = #tpu.dot_dimension_numbers<[2], [2], [1], [1], [0, 0, 0, 1, 1, 1], [0], [0]>} : vector<2x8x8xf32>, vector<2x8x8xf32>, vector<2x8x8xf32> -> vector<2x8x8xf32>
    "tpu.trace_stop"() : () -> ()
    %cst_377 = arith.constant 0.353553385 : f32
    %903 = vector.broadcast %cst_377 : f32 to vector<2x8x8xf32>
    %904 = arith.mulf %902, %903 : vector<2x8x8xf32>
    %cst_378 = arith.constant dense<0xFF800000> : vector<2x8xf32>
    %905 = vector.multi_reduction <maximumf>, %904, %cst_378 [2] : vector<2x8x8xf32> to vector<2x8xf32>
    %906 = vector.shape_cast %905 : vector<2x8xf32> to vector<2x8x1xf32>
    %907 = vector.broadcast %906 : vector<2x8x1xf32> to vector<2x8x8xf32>
    %908 = arith.subf %904, %907 : vector<2x8x8xf32>
    %909 = math.exp %908 : vector<2x8x8xf32>
    %cst_379 = arith.constant dense<0.000000e+00> : vector<2x8xf32>
    %910 = vector.multi_reduction <add>, %909, %cst_379 [2] : vector<2x8x8xf32> to vector<2x8xf32>
    %911 = vector.shape_cast %910 : vector<2x8xf32> to vector<2x8x1xf32>
    %912 = tpu.reciprocal %911 {approx = true} : vector<2x8x1xf32> -> vector<2x8x1xf32>
    %913 = vector.broadcast %912 : vector<2x8x1xf32> to vector<2x8x8xf32>
    %914 = arith.mulf %909, %913 : vector<2x8x8xf32>
    "tpu.trace_start"() <{level = 10 : i32, message = "bqk,bkd->bqd"}> : () -> ()
    %cst_380 = arith.constant dense<0.000000e+00> : vector<2x8x8xf32>
    %915 = tpu.matmul %914, %901, %cst_380 {dimension_numbers = #tpu.dot_dimension_numbers<[2], [1], [1], [2], [0, 0, 0, 1, 1, 2], [0], [0]>} : vector<2x8x8xf32>, vector<2x8x8xf32>, vector<2x8x8xf32> -> vector<2x8x8xf32>
    "tpu.trace_stop"() : () -> ()
    %916 = vector.shape_cast %915 : vector<2x8x8xf32> to vector<16x8xf32>
    %917 = vector.extract_strided_slice %844 {offsets = [16, 0], sizes = [8, 32], strides = [1, 1]} : vector<32x32xf32> to vector<8x32xf32>
    %cst_381 = arith.constant dense<0.000000e+00> : vector<16x32xf32>
    %918 = tpu.matmul %916, %917, %cst_381 {dimension_numbers = #tpu.dot_dimension_numbers<[1], [0], [0], [1], [0, 0, 1, 1], [], []>} : vector<16x8xf32>, vector<8x32xf32>, vector<16x32xf32> -> vector<16x32xf32>
    %919 = arith.addf %895, %918 : vector<16x32xf32>
    %920 = vector.extract_strided_slice %842 {offsets = [0, 24], sizes = [16, 8], strides = [1, 1]} : vector<16x96xf32> to vector<16x8xf32>
    %921 = vector.shape_cast %920 : vector<16x8xf32> to vector<2x8x8xf32>
    %922 = vector.extract_strided_slice %842 {offsets = [0, 56], sizes = [16, 8], strides = [1, 1]} : vector<16x96xf32> to vector<16x8xf32>
    %923 = vector.shape_cast %922 : vector<16x8xf32> to vector<2x8x8xf32>
    %924 = vector.extract_strided_slice %842 {offsets = [0, 88], sizes = [16, 8], strides = [1, 1]} : vector<16x96xf32> to vector<16x8xf32>
    %925 = vector.shape_cast %924 : vector<16x8xf32> to vector<2x8x8xf32>
    "tpu.trace_start"() <{level = 10 : i32, message = "bqd,bkd->bqk"}> : () -> ()
    %cst_382 = arith.constant dense<0.000000e+00> : vector<2x8x8xf32>
    %926 = tpu.matmul %921, %923, %cst_382 {dimension_numbers = #tpu.dot_dimension_numbers<[2], [2], [1], [1], [0, 0, 0, 1, 1, 1], [0], [0]>} : vector<2x8x8xf32>, vector<2x8x8xf32>, vector<2x8x8xf32> -> vector<2x8x8xf32>
    "tpu.trace_stop"() : () -> ()
    %cst_383 = arith.constant 0.353553385 : f32
    %927 = vector.broadcast %cst_383 : f32 to vector<2x8x8xf32>
    %928 = arith.mulf %926, %927 : vector<2x8x8xf32>
    %cst_384 = arith.constant dense<0xFF800000> : vector<2x8xf32>
    %929 = vector.multi_reduction <maximumf>, %928, %cst_384 [2] : vector<2x8x8xf32> to vector<2x8xf32>
    %930 = vector.shape_cast %929 : vector<2x8xf32> to vector<2x8x1xf32>
    %931 = vector.broadcast %930 : vector<2x8x1xf32> to vector<2x8x8xf32>
    %932 = arith.subf %928, %931 : vector<2x8x8xf32>
    %933 = math.exp %932 : vector<2x8x8xf32>
    %cst_385 = arith.constant dense<0.000000e+00> : vector<2x8xf32>
    %934 = vector.multi_reduction <add>, %933, %cst_385 [2] : vector<2x8x8xf32> to vector<2x8xf32>
    %935 = vector.shape_cast %934 : vector<2x8xf32> to vector<2x8x1xf32>
    %936 = tpu.reciprocal %935 {approx = true} : vector<2x8x1xf32> -> vector<2x8x1xf32>
    %937 = vector.broadcast %936 : vector<2x8x1xf32> to vector<2x8x8xf32>
    %938 = arith.mulf %933, %937 : vector<2x8x8xf32>
    "tpu.trace_start"() <{level = 10 : i32, message = "bqk,bkd->bqd"}> : () -> ()
    %cst_386 = arith.constant dense<0.000000e+00> : vector<2x8x8xf32>
    %939 = tpu.matmul %938, %925, %cst_386 {dimension_numbers = #tpu.dot_dimension_numbers<[2], [1], [1], [2], [0, 0, 0, 1, 1, 2], [0], [0]>} : vector<2x8x8xf32>, vector<2x8x8xf32>, vector<2x8x8xf32> -> vector<2x8x8xf32>
    "tpu.trace_stop"() : () -> ()
    %940 = vector.shape_cast %939 : vector<2x8x8xf32> to vector<16x8xf32>
    %941 = vector.extract_strided_slice %844 {offsets = [24, 0], sizes = [8, 32], strides = [1, 1]} : vector<32x32xf32> to vector<8x32xf32>
    %cst_387 = arith.constant dense<0.000000e+00> : vector<16x32xf32>
    %942 = tpu.matmul %940, %941, %cst_387 {dimension_numbers = #tpu.dot_dimension_numbers<[1], [0], [0], [1], [0, 0, 1, 1], [], []>} : vector<16x8xf32>, vector<8x32xf32>, vector<16x32xf32> -> vector<16x32xf32>
    %943 = arith.addf %919, %942 : vector<16x32xf32>
    %944 = arith.addf %835, %943 : vector<16x32xf32>
    %c0_388 = arith.constant 0 : index
    %c0_389 = arith.constant 0 : index
    %c0_390 = arith.constant 0 : index
    %945 = vector.load %arg41[%c0_388, %c0_389, %c0_390] : memref<2x1x32xf32, #tpu.memory_space<vmem>>, vector<1x1x32xf32>
    %946 = vector.shape_cast %945 : vector<1x1x32xf32> to vector<1x32xf32>
    %c0_391 = arith.constant 0 : index
    %c0_392 = arith.constant 0 : index
    %c0_393 = arith.constant 0 : index
    %947 = vector.load %arg42[%c0_391, %c0_392, %c0_393] : memref<2x1x32xf32, #tpu.memory_space<vmem>>, vector<1x1x32xf32>
    %948 = vector.shape_cast %947 : vector<1x1x32xf32> to vector<1x32xf32>
    %cst_394 = arith.constant dense<0.000000e+00> : vector<16xf32>
    %949 = vector.multi_reduction <add>, %944, %cst_394 [1] : vector<16x32xf32> to vector<16xf32>
    %950 = vector.shape_cast %949 : vector<16xf32> to vector<16x1xf32>
    %cst_395 = arith.constant 3.200000e+01 : f32
    %951 = vector.broadcast %cst_395 : f32 to vector<16x1xf32>
    %952 = arith.divf %950, %951 : vector<16x1xf32>
    %953 = vector.broadcast %952 : vector<16x1xf32> to vector<16x32xf32>
    %954 = arith.subf %944, %953 : vector<16x32xf32>
    %955 = arith.mulf %954, %954 : vector<16x32xf32>
    %cst_396 = arith.constant dense<0.000000e+00> : vector<16xf32>
    %956 = vector.multi_reduction <add>, %955, %cst_396 [1] : vector<16x32xf32> to vector<16xf32>
    %957 = vector.shape_cast %956 : vector<16xf32> to vector<16x1xf32>
    %cst_397 = arith.constant 3.200000e+01 : f32
    %958 = vector.broadcast %cst_397 : f32 to vector<16x1xf32>
    %959 = arith.divf %957, %958 : vector<16x1xf32>
    %960 = vector.broadcast %952 : vector<16x1xf32> to vector<16x32xf32>
    %961 = arith.subf %944, %960 : vector<16x32xf32>
    %cst_398 = arith.constant 9.99999974E-6 : f32
    %962 = vector.broadcast %cst_398 : f32 to vector<16x1xf32>
    %963 = arith.addf %959, %962 : vector<16x1xf32>
    %964 = math.rsqrt %963 : vector<16x1xf32>
    %965 = vector.broadcast %964 : vector<16x1xf32> to vector<16x32xf32>
    %966 = arith.mulf %961, %965 : vector<16x32xf32>
    %967 = vector.broadcast %946 : vector<1x32xf32> to vector<16x32xf32>
    %968 = arith.mulf %966, %967 : vector<16x32xf32>
    %969 = vector.broadcast %948 : vector<1x32xf32> to vector<16x32xf32>
    %970 = arith.addf %968, %969 : vector<16x32xf32>
    %c0_399 = arith.constant 0 : index
    %c0_400 = arith.constant 0 : index
    %c0_401 = arith.constant 0 : index
    %971 = vector.load %arg43[%c0_399, %c0_400, %c0_401] : memref<2x32x32xf32, #tpu.memory_space<vmem>>, vector<1x32x32xf32>
    %972 = vector.shape_cast %971 : vector<1x32x32xf32> to vector<32x32xf32>
    %cst_402 = arith.constant dense<0.000000e+00> : vector<16x32xf32>
    %973 = tpu.matmul %970, %972, %cst_402 {dimension_numbers = #tpu.dot_dimension_numbers<[1], [0], [0], [1], [0, 0, 1, 1], [], []>} : vector<16x32xf32>, vector<32x32xf32>, vector<16x32xf32> -> vector<16x32xf32>
    %c0_403 = arith.constant 0 : index
    %c0_404 = arith.constant 0 : index
    %c0_405 = arith.constant 0 : index
    %974 = vector.load %arg44[%c0_403, %c0_404, %c0_405] : memref<2x1x32xf32, #tpu.memory_space<vmem>>, vector<1x1x32xf32>
    %975 = vector.shape_cast %974 : vector<1x1x32xf32> to vector<1x32xf32>
    %976 = vector.broadcast %975 : vector<1x32xf32> to vector<16x32xf32>
    %977 = arith.addf %973, %976 : vector<16x32xf32>
    %cst_406 = arith.constant 5.000000e-01 : f32
    %978 = vector.broadcast %cst_406 : f32 to vector<16x32xf32>
    %979 = arith.mulf %978, %977 : vector<16x32xf32>
    %cst_407 = arith.constant 4.471500e-02 : f32
    %980 = vector.broadcast %cst_407 : f32 to vector<16x32xf32>
    %981 = arith.mulf %980, %977 : vector<16x32xf32>
    %982 = arith.mulf %981, %977 : vector<16x32xf32>
    %983 = arith.mulf %982, %977 : vector<16x32xf32>
    %984 = arith.addf %977, %983 : vector<16x32xf32>
    %cst_408 = arith.constant 0.797884583 : f32
    %985 = vector.broadcast %cst_408 : f32 to vector<16x32xf32>
    %986 = arith.mulf %985, %984 : vector<16x32xf32>
    %987 = math.tanh %986 : vector<16x32xf32>
    %cst_409 = arith.constant 1.000000e+00 : f32
    %988 = vector.broadcast %cst_409 : f32 to vector<16x32xf32>
    %989 = arith.addf %988, %987 : vector<16x32xf32>
    %990 = arith.mulf %979, %989 : vector<16x32xf32>
    %c0_410 = arith.constant 0 : index
    %c0_411 = arith.constant 0 : index
    %c0_412 = arith.constant 0 : index
    %991 = vector.load %arg45[%c0_410, %c0_411, %c0_412] : memref<2x32x32xf32, #tpu.memory_space<vmem>>, vector<1x32x32xf32>
    %992 = vector.shape_cast %991 : vector<1x32x32xf32> to vector<32x32xf32>
    %cst_413 = arith.constant dense<0.000000e+00> : vector<16x32xf32>
    %993 = tpu.matmul %990, %992, %cst_413 {dimension_numbers = #tpu.dot_dimension_numbers<[1], [0], [0], [1], [0, 0, 1, 1], [], []>} : vector<16x32xf32>, vector<32x32xf32>, vector<16x32xf32> -> vector<16x32xf32>
    %c0_414 = arith.constant 0 : index
    %c0_415 = arith.constant 0 : index
    %c0_416 = arith.constant 0 : index
    %994 = vector.load %arg46[%c0_414, %c0_415, %c0_416] : memref<2x1x32xf32, #tpu.memory_space<vmem>>, vector<1x1x32xf32>
    %995 = vector.shape_cast %994 : vector<1x1x32xf32> to vector<1x32xf32>
    %996 = vector.broadcast %995 : vector<1x32xf32> to vector<16x32xf32>
    %997 = arith.addf %993, %996 : vector<16x32xf32>
    %998 = arith.addf %970, %997 : vector<16x32xf32>
    %c0_417 = arith.constant 0 : index
    %c0_418 = arith.constant 0 : index
    %c0_419 = arith.constant 0 : index
    %999 = vector.load %arg47[%c0_417, %c0_418, %c0_419] : memref<2x1x32xf32, #tpu.memory_space<vmem>>, vector<1x1x32xf32>
    %1000 = vector.shape_cast %999 : vector<1x1x32xf32> to vector<1x32xf32>
    %c0_420 = arith.constant 0 : index
    %c0_421 = arith.constant 0 : index
    %c0_422 = arith.constant 0 : index
    %1001 = vector.load %arg48[%c0_420, %c0_421, %c0_422] : memref<2x1x32xf32, #tpu.memory_space<vmem>>, vector<1x1x32xf32>
    %1002 = vector.shape_cast %1001 : vector<1x1x32xf32> to vector<1x32xf32>
    %cst_423 = arith.constant dense<0.000000e+00> : vector<16xf32>
    %1003 = vector.multi_reduction <add>, %998, %cst_423 [1] : vector<16x32xf32> to vector<16xf32>
    %1004 = vector.shape_cast %1003 : vector<16xf32> to vector<16x1xf32>
    %cst_424 = arith.constant 3.200000e+01 : f32
    %1005 = vector.broadcast %cst_424 : f32 to vector<16x1xf32>
    %1006 = arith.divf %1004, %1005 : vector<16x1xf32>
    %1007 = vector.broadcast %1006 : vector<16x1xf32> to vector<16x32xf32>
    %1008 = arith.subf %998, %1007 : vector<16x32xf32>
    %1009 = arith.mulf %1008, %1008 : vector<16x32xf32>
    %cst_425 = arith.constant dense<0.000000e+00> : vector<16xf32>
    %1010 = vector.multi_reduction <add>, %1009, %cst_425 [1] : vector<16x32xf32> to vector<16xf32>
    %1011 = vector.shape_cast %1010 : vector<16xf32> to vector<16x1xf32>
    %cst_426 = arith.constant 3.200000e+01 : f32
    %1012 = vector.broadcast %cst_426 : f32 to vector<16x1xf32>
    %1013 = arith.divf %1011, %1012 : vector<16x1xf32>
    %1014 = vector.broadcast %1006 : vector<16x1xf32> to vector<16x32xf32>
    %1015 = arith.subf %998, %1014 : vector<16x32xf32>
    %cst_427 = arith.constant 9.99999974E-6 : f32
    %1016 = vector.broadcast %cst_427 : f32 to vector<16x1xf32>
    %1017 = arith.addf %1013, %1016 : vector<16x1xf32>
    %1018 = math.rsqrt %1017 : vector<16x1xf32>
    %1019 = vector.broadcast %1018 : vector<16x1xf32> to vector<16x32xf32>
    %1020 = arith.mulf %1015, %1019 : vector<16x32xf32>
    %1021 = vector.broadcast %1000 : vector<1x32xf32> to vector<16x32xf32>
    %1022 = arith.mulf %1020, %1021 : vector<16x32xf32>
    %1023 = vector.broadcast %1002 : vector<1x32xf32> to vector<16x32xf32>
    %1024 = arith.addf %1022, %1023 : vector<16x32xf32>
    %c1_428 = arith.constant 1 : index
    %c0_429 = arith.constant 0 : index
    %c0_430 = arith.constant 0 : index
    %1025 = vector.load %arg37[%c1_428, %c0_429, %c0_430] : memref<2x32x96xf32, #tpu.memory_space<vmem>>, vector<1x32x96xf32>
    %1026 = vector.shape_cast %1025 : vector<1x32x96xf32> to vector<32x96xf32>
    %cst_431 = arith.constant dense<0.000000e+00> : vector<16x96xf32>
    %1027 = tpu.matmul %1024, %1026, %cst_431 {dimension_numbers = #tpu.dot_dimension_numbers<[1], [0], [0], [1], [0, 0, 1, 1], [], []>} : vector<16x32xf32>, vector<32x96xf32>, vector<16x96xf32> -> vector<16x96xf32>
    %c1_432 = arith.constant 1 : index
    %c0_433 = arith.constant 0 : index
    %c0_434 = arith.constant 0 : index
    %1028 = vector.load %arg38[%c1_432, %c0_433, %c0_434] : memref<2x1x96xf32, #tpu.memory_space<vmem>>, vector<1x1x96xf32>
    %1029 = vector.shape_cast %1028 : vector<1x1x96xf32> to vector<1x96xf32>
    %1030 = vector.broadcast %1029 : vector<1x96xf32> to vector<16x96xf32>
    %1031 = arith.addf %1027, %1030 : vector<16x96xf32>
    %c1_435 = arith.constant 1 : index
    %c0_436 = arith.constant 0 : index
    %c0_437 = arith.constant 0 : index
    %1032 = vector.load %arg39[%c1_435, %c0_436, %c0_437] : memref<2x32x32xf32, #tpu.memory_space<vmem>>, vector<1x32x32xf32>
    %1033 = vector.shape_cast %1032 : vector<1x32x32xf32> to vector<32x32xf32>
    %c1_438 = arith.constant 1 : index
    %c0_439 = arith.constant 0 : index
    %c0_440 = arith.constant 0 : index
    %1034 = vector.load %arg40[%c1_438, %c0_439, %c0_440] : memref<2x1x32xf32, #tpu.memory_space<vmem>>, vector<1x1x32xf32>
    %1035 = vector.shape_cast %1034 : vector<1x1x32xf32> to vector<1x32xf32>
    %1036 = vector.extract_strided_slice %1031 {offsets = [0, 0], sizes = [16, 8], strides = [1, 1]} : vector<16x96xf32> to vector<16x8xf32>
    %1037 = vector.shape_cast %1036 : vector<16x8xf32> to vector<2x8x8xf32>
    %1038 = vector.extract_strided_slice %1031 {offsets = [0, 32], sizes = [16, 8], strides = [1, 1]} : vector<16x96xf32> to vector<16x8xf32>
    %1039 = vector.shape_cast %1038 : vector<16x8xf32> to vector<2x8x8xf32>
    %1040 = vector.extract_strided_slice %1031 {offsets = [0, 64], sizes = [16, 8], strides = [1, 1]} : vector<16x96xf32> to vector<16x8xf32>
    %1041 = vector.shape_cast %1040 : vector<16x8xf32> to vector<2x8x8xf32>
    "tpu.trace_start"() <{level = 10 : i32, message = "bqd,bkd->bqk"}> : () -> ()
    %cst_441 = arith.constant dense<0.000000e+00> : vector<2x8x8xf32>
    %1042 = tpu.matmul %1037, %1039, %cst_441 {dimension_numbers = #tpu.dot_dimension_numbers<[2], [2], [1], [1], [0, 0, 0, 1, 1, 1], [0], [0]>} : vector<2x8x8xf32>, vector<2x8x8xf32>, vector<2x8x8xf32> -> vector<2x8x8xf32>
    "tpu.trace_stop"() : () -> ()
    %cst_442 = arith.constant 0.353553385 : f32
    %1043 = vector.broadcast %cst_442 : f32 to vector<2x8x8xf32>
    %1044 = arith.mulf %1042, %1043 : vector<2x8x8xf32>
    %cst_443 = arith.constant dense<0xFF800000> : vector<2x8xf32>
    %1045 = vector.multi_reduction <maximumf>, %1044, %cst_443 [2] : vector<2x8x8xf32> to vector<2x8xf32>
    %1046 = vector.shape_cast %1045 : vector<2x8xf32> to vector<2x8x1xf32>
    %1047 = vector.broadcast %1046 : vector<2x8x1xf32> to vector<2x8x8xf32>
    %1048 = arith.subf %1044, %1047 : vector<2x8x8xf32>
    %1049 = math.exp %1048 : vector<2x8x8xf32>
    %cst_444 = arith.constant dense<0.000000e+00> : vector<2x8xf32>
    %1050 = vector.multi_reduction <add>, %1049, %cst_444 [2] : vector<2x8x8xf32> to vector<2x8xf32>
    %1051 = vector.shape_cast %1050 : vector<2x8xf32> to vector<2x8x1xf32>
    %1052 = tpu.reciprocal %1051 {approx = true} : vector<2x8x1xf32> -> vector<2x8x1xf32>
    %1053 = vector.broadcast %1052 : vector<2x8x1xf32> to vector<2x8x8xf32>
    %1054 = arith.mulf %1049, %1053 : vector<2x8x8xf32>
    "tpu.trace_start"() <{level = 10 : i32, message = "bqk,bkd->bqd"}> : () -> ()
    %cst_445 = arith.constant dense<0.000000e+00> : vector<2x8x8xf32>
    %1055 = tpu.matmul %1054, %1041, %cst_445 {dimension_numbers = #tpu.dot_dimension_numbers<[2], [1], [1], [2], [0, 0, 0, 1, 1, 2], [0], [0]>} : vector<2x8x8xf32>, vector<2x8x8xf32>, vector<2x8x8xf32> -> vector<2x8x8xf32>
    "tpu.trace_stop"() : () -> ()
    %1056 = vector.shape_cast %1055 : vector<2x8x8xf32> to vector<16x8xf32>
    %1057 = vector.extract_strided_slice %1033 {offsets = [0, 0], sizes = [8, 32], strides = [1, 1]} : vector<32x32xf32> to vector<8x32xf32>
    %cst_446 = arith.constant dense<0.000000e+00> : vector<16x32xf32>
    %1058 = tpu.matmul %1056, %1057, %cst_446 {dimension_numbers = #tpu.dot_dimension_numbers<[1], [0], [0], [1], [0, 0, 1, 1], [], []>} : vector<16x8xf32>, vector<8x32xf32>, vector<16x32xf32> -> vector<16x32xf32>
    %1059 = vector.broadcast %1035 : vector<1x32xf32> to vector<16x32xf32>
    %1060 = arith.addf %1059, %1058 : vector<16x32xf32>
    %1061 = vector.extract_strided_slice %1031 {offsets = [0, 8], sizes = [16, 8], strides = [1, 1]} : vector<16x96xf32> to vector<16x8xf32>
    %1062 = vector.shape_cast %1061 : vector<16x8xf32> to vector<2x8x8xf32>
    %1063 = vector.extract_strided_slice %1031 {offsets = [0, 40], sizes = [16, 8], strides = [1, 1]} : vector<16x96xf32> to vector<16x8xf32>
    %1064 = vector.shape_cast %1063 : vector<16x8xf32> to vector<2x8x8xf32>
    %1065 = vector.extract_strided_slice %1031 {offsets = [0, 72], sizes = [16, 8], strides = [1, 1]} : vector<16x96xf32> to vector<16x8xf32>
    %1066 = vector.shape_cast %1065 : vector<16x8xf32> to vector<2x8x8xf32>
    "tpu.trace_start"() <{level = 10 : i32, message = "bqd,bkd->bqk"}> : () -> ()
    %cst_447 = arith.constant dense<0.000000e+00> : vector<2x8x8xf32>
    %1067 = tpu.matmul %1062, %1064, %cst_447 {dimension_numbers = #tpu.dot_dimension_numbers<[2], [2], [1], [1], [0, 0, 0, 1, 1, 1], [0], [0]>} : vector<2x8x8xf32>, vector<2x8x8xf32>, vector<2x8x8xf32> -> vector<2x8x8xf32>
    "tpu.trace_stop"() : () -> ()
    %cst_448 = arith.constant 0.353553385 : f32
    %1068 = vector.broadcast %cst_448 : f32 to vector<2x8x8xf32>
    %1069 = arith.mulf %1067, %1068 : vector<2x8x8xf32>
    %cst_449 = arith.constant dense<0xFF800000> : vector<2x8xf32>
    %1070 = vector.multi_reduction <maximumf>, %1069, %cst_449 [2] : vector<2x8x8xf32> to vector<2x8xf32>
    %1071 = vector.shape_cast %1070 : vector<2x8xf32> to vector<2x8x1xf32>
    %1072 = vector.broadcast %1071 : vector<2x8x1xf32> to vector<2x8x8xf32>
    %1073 = arith.subf %1069, %1072 : vector<2x8x8xf32>
    %1074 = math.exp %1073 : vector<2x8x8xf32>
    %cst_450 = arith.constant dense<0.000000e+00> : vector<2x8xf32>
    %1075 = vector.multi_reduction <add>, %1074, %cst_450 [2] : vector<2x8x8xf32> to vector<2x8xf32>
    %1076 = vector.shape_cast %1075 : vector<2x8xf32> to vector<2x8x1xf32>
    %1077 = tpu.reciprocal %1076 {approx = true} : vector<2x8x1xf32> -> vector<2x8x1xf32>
    %1078 = vector.broadcast %1077 : vector<2x8x1xf32> to vector<2x8x8xf32>
    %1079 = arith.mulf %1074, %1078 : vector<2x8x8xf32>
    "tpu.trace_start"() <{level = 10 : i32, message = "bqk,bkd->bqd"}> : () -> ()
    %cst_451 = arith.constant dense<0.000000e+00> : vector<2x8x8xf32>
    %1080 = tpu.matmul %1079, %1066, %cst_451 {dimension_numbers = #tpu.dot_dimension_numbers<[2], [1], [1], [2], [0, 0, 0, 1, 1, 2], [0], [0]>} : vector<2x8x8xf32>, vector<2x8x8xf32>, vector<2x8x8xf32> -> vector<2x8x8xf32>
    "tpu.trace_stop"() : () -> ()
    %1081 = vector.shape_cast %1080 : vector<2x8x8xf32> to vector<16x8xf32>
    %1082 = vector.extract_strided_slice %1033 {offsets = [8, 0], sizes = [8, 32], strides = [1, 1]} : vector<32x32xf32> to vector<8x32xf32>
    %cst_452 = arith.constant dense<0.000000e+00> : vector<16x32xf32>
    %1083 = tpu.matmul %1081, %1082, %cst_452 {dimension_numbers = #tpu.dot_dimension_numbers<[1], [0], [0], [1], [0, 0, 1, 1], [], []>} : vector<16x8xf32>, vector<8x32xf32>, vector<16x32xf32> -> vector<16x32xf32>
    %1084 = arith.addf %1060, %1083 : vector<16x32xf32>
    %1085 = vector.extract_strided_slice %1031 {offsets = [0, 16], sizes = [16, 8], strides = [1, 1]} : vector<16x96xf32> to vector<16x8xf32>
    %1086 = vector.shape_cast %1085 : vector<16x8xf32> to vector<2x8x8xf32>
    %1087 = vector.extract_strided_slice %1031 {offsets = [0, 48], sizes = [16, 8], strides = [1, 1]} : vector<16x96xf32> to vector<16x8xf32>
    %1088 = vector.shape_cast %1087 : vector<16x8xf32> to vector<2x8x8xf32>
    %1089 = vector.extract_strided_slice %1031 {offsets = [0, 80], sizes = [16, 8], strides = [1, 1]} : vector<16x96xf32> to vector<16x8xf32>
    %1090 = vector.shape_cast %1089 : vector<16x8xf32> to vector<2x8x8xf32>
    "tpu.trace_start"() <{level = 10 : i32, message = "bqd,bkd->bqk"}> : () -> ()
    %cst_453 = arith.constant dense<0.000000e+00> : vector<2x8x8xf32>
    %1091 = tpu.matmul %1086, %1088, %cst_453 {dimension_numbers = #tpu.dot_dimension_numbers<[2], [2], [1], [1], [0, 0, 0, 1, 1, 1], [0], [0]>} : vector<2x8x8xf32>, vector<2x8x8xf32>, vector<2x8x8xf32> -> vector<2x8x8xf32>
    "tpu.trace_stop"() : () -> ()
    %cst_454 = arith.constant 0.353553385 : f32
    %1092 = vector.broadcast %cst_454 : f32 to vector<2x8x8xf32>
    %1093 = arith.mulf %1091, %1092 : vector<2x8x8xf32>
    %cst_455 = arith.constant dense<0xFF800000> : vector<2x8xf32>
    %1094 = vector.multi_reduction <maximumf>, %1093, %cst_455 [2] : vector<2x8x8xf32> to vector<2x8xf32>
    %1095 = vector.shape_cast %1094 : vector<2x8xf32> to vector<2x8x1xf32>
    %1096 = vector.broadcast %1095 : vector<2x8x1xf32> to vector<2x8x8xf32>
    %1097 = arith.subf %1093, %1096 : vector<2x8x8xf32>
    %1098 = math.exp %1097 : vector<2x8x8xf32>
    %cst_456 = arith.constant dense<0.000000e+00> : vector<2x8xf32>
    %1099 = vector.multi_reduction <add>, %1098, %cst_456 [2] : vector<2x8x8xf32> to vector<2x8xf32>
    %1100 = vector.shape_cast %1099 : vector<2x8xf32> to vector<2x8x1xf32>
    %1101 = tpu.reciprocal %1100 {approx = true} : vector<2x8x1xf32> -> vector<2x8x1xf32>
    %1102 = vector.broadcast %1101 : vector<2x8x1xf32> to vector<2x8x8xf32>
    %1103 = arith.mulf %1098, %1102 : vector<2x8x8xf32>
    "tpu.trace_start"() <{level = 10 : i32, message = "bqk,bkd->bqd"}> : () -> ()
    %cst_457 = arith.constant dense<0.000000e+00> : vector<2x8x8xf32>
    %1104 = tpu.matmul %1103, %1090, %cst_457 {dimension_numbers = #tpu.dot_dimension_numbers<[2], [1], [1], [2], [0, 0, 0, 1, 1, 2], [0], [0]>} : vector<2x8x8xf32>, vector<2x8x8xf32>, vector<2x8x8xf32> -> vector<2x8x8xf32>
    "tpu.trace_stop"() : () -> ()
    %1105 = vector.shape_cast %1104 : vector<2x8x8xf32> to vector<16x8xf32>
    %1106 = vector.extract_strided_slice %1033 {offsets = [16, 0], sizes = [8, 32], strides = [1, 1]} : vector<32x32xf32> to vector<8x32xf32>
    %cst_458 = arith.constant dense<0.000000e+00> : vector<16x32xf32>
    %1107 = tpu.matmul %1105, %1106, %cst_458 {dimension_numbers = #tpu.dot_dimension_numbers<[1], [0], [0], [1], [0, 0, 1, 1], [], []>} : vector<16x8xf32>, vector<8x32xf32>, vector<16x32xf32> -> vector<16x32xf32>
    %1108 = arith.addf %1084, %1107 : vector<16x32xf32>
    %1109 = vector.extract_strided_slice %1031 {offsets = [0, 24], sizes = [16, 8], strides = [1, 1]} : vector<16x96xf32> to vector<16x8xf32>
    %1110 = vector.shape_cast %1109 : vector<16x8xf32> to vector<2x8x8xf32>
    %1111 = vector.extract_strided_slice %1031 {offsets = [0, 56], sizes = [16, 8], strides = [1, 1]} : vector<16x96xf32> to vector<16x8xf32>
    %1112 = vector.shape_cast %1111 : vector<16x8xf32> to vector<2x8x8xf32>
    %1113 = vector.extract_strided_slice %1031 {offsets = [0, 88], sizes = [16, 8], strides = [1, 1]} : vector<16x96xf32> to vector<16x8xf32>
    %1114 = vector.shape_cast %1113 : vector<16x8xf32> to vector<2x8x8xf32>
    "tpu.trace_start"() <{level = 10 : i32, message = "bqd,bkd->bqk"}> : () -> ()
    %cst_459 = arith.constant dense<0.000000e+00> : vector<2x8x8xf32>
    %1115 = tpu.matmul %1110, %1112, %cst_459 {dimension_numbers = #tpu.dot_dimension_numbers<[2], [2], [1], [1], [0, 0, 0, 1, 1, 1], [0], [0]>} : vector<2x8x8xf32>, vector<2x8x8xf32>, vector<2x8x8xf32> -> vector<2x8x8xf32>
    "tpu.trace_stop"() : () -> ()
    %cst_460 = arith.constant 0.353553385 : f32
    %1116 = vector.broadcast %cst_460 : f32 to vector<2x8x8xf32>
    %1117 = arith.mulf %1115, %1116 : vector<2x8x8xf32>
    %cst_461 = arith.constant dense<0xFF800000> : vector<2x8xf32>
    %1118 = vector.multi_reduction <maximumf>, %1117, %cst_461 [2] : vector<2x8x8xf32> to vector<2x8xf32>
    %1119 = vector.shape_cast %1118 : vector<2x8xf32> to vector<2x8x1xf32>
    %1120 = vector.broadcast %1119 : vector<2x8x1xf32> to vector<2x8x8xf32>
    %1121 = arith.subf %1117, %1120 : vector<2x8x8xf32>
    %1122 = math.exp %1121 : vector<2x8x8xf32>
    %cst_462 = arith.constant dense<0.000000e+00> : vector<2x8xf32>
    %1123 = vector.multi_reduction <add>, %1122, %cst_462 [2] : vector<2x8x8xf32> to vector<2x8xf32>
    %1124 = vector.shape_cast %1123 : vector<2x8xf32> to vector<2x8x1xf32>
    %1125 = tpu.reciprocal %1124 {approx = true} : vector<2x8x1xf32> -> vector<2x8x1xf32>
    %1126 = vector.broadcast %1125 : vector<2x8x1xf32> to vector<2x8x8xf32>
    %1127 = arith.mulf %1122, %1126 : vector<2x8x8xf32>
    "tpu.trace_start"() <{level = 10 : i32, message = "bqk,bkd->bqd"}> : () -> ()
    %cst_463 = arith.constant dense<0.000000e+00> : vector<2x8x8xf32>
    %1128 = tpu.matmul %1127, %1114, %cst_463 {dimension_numbers = #tpu.dot_dimension_numbers<[2], [1], [1], [2], [0, 0, 0, 1, 1, 2], [0], [0]>} : vector<2x8x8xf32>, vector<2x8x8xf32>, vector<2x8x8xf32> -> vector<2x8x8xf32>
    "tpu.trace_stop"() : () -> ()
    %1129 = vector.shape_cast %1128 : vector<2x8x8xf32> to vector<16x8xf32>
    %1130 = vector.extract_strided_slice %1033 {offsets = [24, 0], sizes = [8, 32], strides = [1, 1]} : vector<32x32xf32> to vector<8x32xf32>
    %cst_464 = arith.constant dense<0.000000e+00> : vector<16x32xf32>
    %1131 = tpu.matmul %1129, %1130, %cst_464 {dimension_numbers = #tpu.dot_dimension_numbers<[1], [0], [0], [1], [0, 0, 1, 1], [], []>} : vector<16x8xf32>, vector<8x32xf32>, vector<16x32xf32> -> vector<16x32xf32>
    %1132 = arith.addf %1108, %1131 : vector<16x32xf32>
    %1133 = arith.addf %1024, %1132 : vector<16x32xf32>
    %c1_465 = arith.constant 1 : index
    %c0_466 = arith.constant 0 : index
    %c0_467 = arith.constant 0 : index
    %1134 = vector.load %arg41[%c1_465, %c0_466, %c0_467] : memref<2x1x32xf32, #tpu.memory_space<vmem>>, vector<1x1x32xf32>
    %1135 = vector.shape_cast %1134 : vector<1x1x32xf32> to vector<1x32xf32>
    %c1_468 = arith.constant 1 : index
    %c0_469 = arith.constant 0 : index
    %c0_470 = arith.constant 0 : index
    %1136 = vector.load %arg42[%c1_468, %c0_469, %c0_470] : memref<2x1x32xf32, #tpu.memory_space<vmem>>, vector<1x1x32xf32>
    %1137 = vector.shape_cast %1136 : vector<1x1x32xf32> to vector<1x32xf32>
    %cst_471 = arith.constant dense<0.000000e+00> : vector<16xf32>
    %1138 = vector.multi_reduction <add>, %1133, %cst_471 [1] : vector<16x32xf32> to vector<16xf32>
    %1139 = vector.shape_cast %1138 : vector<16xf32> to vector<16x1xf32>
    %cst_472 = arith.constant 3.200000e+01 : f32
    %1140 = vector.broadcast %cst_472 : f32 to vector<16x1xf32>
    %1141 = arith.divf %1139, %1140 : vector<16x1xf32>
    %1142 = vector.broadcast %1141 : vector<16x1xf32> to vector<16x32xf32>
    %1143 = arith.subf %1133, %1142 : vector<16x32xf32>
    %1144 = arith.mulf %1143, %1143 : vector<16x32xf32>
    %cst_473 = arith.constant dense<0.000000e+00> : vector<16xf32>
    %1145 = vector.multi_reduction <add>, %1144, %cst_473 [1] : vector<16x32xf32> to vector<16xf32>
    %1146 = vector.shape_cast %1145 : vector<16xf32> to vector<16x1xf32>
    %cst_474 = arith.constant 3.200000e+01 : f32
    %1147 = vector.broadcast %cst_474 : f32 to vector<16x1xf32>
    %1148 = arith.divf %1146, %1147 : vector<16x1xf32>
    %1149 = vector.broadcast %1141 : vector<16x1xf32> to vector<16x32xf32>
    %1150 = arith.subf %1133, %1149 : vector<16x32xf32>
    %cst_475 = arith.constant 9.99999974E-6 : f32
    %1151 = vector.broadcast %cst_475 : f32 to vector<16x1xf32>
    %1152 = arith.addf %1148, %1151 : vector<16x1xf32>
    %1153 = math.rsqrt %1152 : vector<16x1xf32>
    %1154 = vector.broadcast %1153 : vector<16x1xf32> to vector<16x32xf32>
    %1155 = arith.mulf %1150, %1154 : vector<16x32xf32>
    %1156 = vector.broadcast %1135 : vector<1x32xf32> to vector<16x32xf32>
    %1157 = arith.mulf %1155, %1156 : vector<16x32xf32>
    %1158 = vector.broadcast %1137 : vector<1x32xf32> to vector<16x32xf32>
    %1159 = arith.addf %1157, %1158 : vector<16x32xf32>
    %c1_476 = arith.constant 1 : index
    %c0_477 = arith.constant 0 : index
    %c0_478 = arith.constant 0 : index
    %1160 = vector.load %arg43[%c1_476, %c0_477, %c0_478] : memref<2x32x32xf32, #tpu.memory_space<vmem>>, vector<1x32x32xf32>
    %1161 = vector.shape_cast %1160 : vector<1x32x32xf32> to vector<32x32xf32>
    %cst_479 = arith.constant dense<0.000000e+00> : vector<16x32xf32>
    %1162 = tpu.matmul %1159, %1161, %cst_479 {dimension_numbers = #tpu.dot_dimension_numbers<[1], [0], [0], [1], [0, 0, 1, 1], [], []>} : vector<16x32xf32>, vector<32x32xf32>, vector<16x32xf32> -> vector<16x32xf32>
    %c1_480 = arith.constant 1 : index
    %c0_481 = arith.constant 0 : index
    %c0_482 = arith.constant 0 : index
    %1163 = vector.load %arg44[%c1_480, %c0_481, %c0_482] : memref<2x1x32xf32, #tpu.memory_space<vmem>>, vector<1x1x32xf32>
    %1164 = vector.shape_cast %1163 : vector<1x1x32xf32> to vector<1x32xf32>
    %1165 = vector.broadcast %1164 : vector<1x32xf32> to vector<16x32xf32>
    %1166 = arith.addf %1162, %1165 : vector<16x32xf32>
    %cst_483 = arith.constant 5.000000e-01 : f32
    %1167 = vector.broadcast %cst_483 : f32 to vector<16x32xf32>
    %1168 = arith.mulf %1167, %1166 : vector<16x32xf32>
    %cst_484 = arith.constant 4.471500e-02 : f32
    %1169 = vector.broadcast %cst_484 : f32 to vector<16x32xf32>
    %1170 = arith.mulf %1169, %1166 : vector<16x32xf32>
    %1171 = arith.mulf %1170, %1166 : vector<16x32xf32>
    %1172 = arith.mulf %1171, %1166 : vector<16x32xf32>
    %1173 = arith.addf %1166, %1172 : vector<16x32xf32>
    %cst_485 = arith.constant 0.797884583 : f32
    %1174 = vector.broadcast %cst_485 : f32 to vector<16x32xf32>
    %1175 = arith.mulf %1174, %1173 : vector<16x32xf32>
    %1176 = math.tanh %1175 : vector<16x32xf32>
    %cst_486 = arith.constant 1.000000e+00 : f32
    %1177 = vector.broadcast %cst_486 : f32 to vector<16x32xf32>
    %1178 = arith.addf %1177, %1176 : vector<16x32xf32>
    %1179 = arith.mulf %1168, %1178 : vector<16x32xf32>
    %c1_487 = arith.constant 1 : index
    %c0_488 = arith.constant 0 : index
    %c0_489 = arith.constant 0 : index
    %1180 = vector.load %arg45[%c1_487, %c0_488, %c0_489] : memref<2x32x32xf32, #tpu.memory_space<vmem>>, vector<1x32x32xf32>
    %1181 = vector.shape_cast %1180 : vector<1x32x32xf32> to vector<32x32xf32>
    %cst_490 = arith.constant dense<0.000000e+00> : vector<16x32xf32>
    %1182 = tpu.matmul %1179, %1181, %cst_490 {dimension_numbers = #tpu.dot_dimension_numbers<[1], [0], [0], [1], [0, 0, 1, 1], [], []>} : vector<16x32xf32>, vector<32x32xf32>, vector<16x32xf32> -> vector<16x32xf32>
    %c1_491 = arith.constant 1 : index
    %c0_492 = arith.constant 0 : index
    %c0_493 = arith.constant 0 : index
    %1183 = vector.load %arg46[%c1_491, %c0_492, %c0_493] : memref<2x1x32xf32, #tpu.memory_space<vmem>>, vector<1x1x32xf32>
    %1184 = vector.shape_cast %1183 : vector<1x1x32xf32> to vector<1x32xf32>
    %1185 = vector.broadcast %1184 : vector<1x32xf32> to vector<16x32xf32>
    %1186 = arith.addf %1182, %1185 : vector<16x32xf32>
    %1187 = arith.addf %1159, %1186 : vector<16x32xf32>
    %c1_494 = arith.constant 1 : index
    %c0_495 = arith.constant 0 : index
    %c0_496 = arith.constant 0 : index
    %1188 = vector.load %arg47[%c1_494, %c0_495, %c0_496] : memref<2x1x32xf32, #tpu.memory_space<vmem>>, vector<1x1x32xf32>
    %1189 = vector.shape_cast %1188 : vector<1x1x32xf32> to vector<1x32xf32>
    %c1_497 = arith.constant 1 : index
    %c0_498 = arith.constant 0 : index
    %c0_499 = arith.constant 0 : index
    %1190 = vector.load %arg48[%c1_497, %c0_498, %c0_499] : memref<2x1x32xf32, #tpu.memory_space<vmem>>, vector<1x1x32xf32>
    %1191 = vector.shape_cast %1190 : vector<1x1x32xf32> to vector<1x32xf32>
    %cst_500 = arith.constant dense<0.000000e+00> : vector<16xf32>
    %1192 = vector.multi_reduction <add>, %1187, %cst_500 [1] : vector<16x32xf32> to vector<16xf32>
    %1193 = vector.shape_cast %1192 : vector<16xf32> to vector<16x1xf32>
    %cst_501 = arith.constant 3.200000e+01 : f32
    %1194 = vector.broadcast %cst_501 : f32 to vector<16x1xf32>
    %1195 = arith.divf %1193, %1194 : vector<16x1xf32>
    %1196 = vector.broadcast %1195 : vector<16x1xf32> to vector<16x32xf32>
    %1197 = arith.subf %1187, %1196 : vector<16x32xf32>
    %1198 = arith.mulf %1197, %1197 : vector<16x32xf32>
    %cst_502 = arith.constant dense<0.000000e+00> : vector<16xf32>
    %1199 = vector.multi_reduction <add>, %1198, %cst_502 [1] : vector<16x32xf32> to vector<16xf32>
    %1200 = vector.shape_cast %1199 : vector<16xf32> to vector<16x1xf32>
    %cst_503 = arith.constant 3.200000e+01 : f32
    %1201 = vector.broadcast %cst_503 : f32 to vector<16x1xf32>
    %1202 = arith.divf %1200, %1201 : vector<16x1xf32>
    %1203 = vector.broadcast %1195 : vector<16x1xf32> to vector<16x32xf32>
    %1204 = arith.subf %1187, %1203 : vector<16x32xf32>
    %cst_504 = arith.constant 9.99999974E-6 : f32
    %1205 = vector.broadcast %cst_504 : f32 to vector<16x1xf32>
    %1206 = arith.addf %1202, %1205 : vector<16x1xf32>
    %1207 = math.rsqrt %1206 : vector<16x1xf32>
    %1208 = vector.broadcast %1207 : vector<16x1xf32> to vector<16x32xf32>
    %1209 = arith.mulf %1204, %1208 : vector<16x32xf32>
    %1210 = vector.broadcast %1189 : vector<1x32xf32> to vector<16x32xf32>
    %1211 = arith.mulf %1209, %1210 : vector<16x32xf32>
    %1212 = vector.broadcast %1191 : vector<1x32xf32> to vector<16x32xf32>
    %1213 = arith.addf %1211, %1212 : vector<16x32xf32>
    %c0_505 = arith.constant 0 : index
    %c0_506 = arith.constant 0 : index
    %1214 = vector.load %arg49[%c0_505, %c0_506] : memref<1x32xf32, #tpu.memory_space<vmem>>, vector<1x32xf32>
    %c0_507 = arith.constant 0 : index
    %c0_508 = arith.constant 0 : index
    %1215 = vector.load %arg50[%c0_507, %c0_508] : memref<1x32xf32, #tpu.memory_space<vmem>>, vector<1x32xf32>
    %cst_509 = arith.constant dense<0.000000e+00> : vector<16xf32>
    %1216 = vector.multi_reduction <add>, %1213, %cst_509 [1] : vector<16x32xf32> to vector<16xf32>
    %1217 = vector.shape_cast %1216 : vector<16xf32> to vector<16x1xf32>
    %cst_510 = arith.constant 3.200000e+01 : f32
    %1218 = vector.broadcast %cst_510 : f32 to vector<16x1xf32>
    %1219 = arith.divf %1217, %1218 : vector<16x1xf32>
    %1220 = vector.broadcast %1219 : vector<16x1xf32> to vector<16x32xf32>
    %1221 = arith.subf %1213, %1220 : vector<16x32xf32>
    %1222 = arith.mulf %1221, %1221 : vector<16x32xf32>
    %cst_511 = arith.constant dense<0.000000e+00> : vector<16xf32>
    %1223 = vector.multi_reduction <add>, %1222, %cst_511 [1] : vector<16x32xf32> to vector<16xf32>
    %1224 = vector.shape_cast %1223 : vector<16xf32> to vector<16x1xf32>
    %cst_512 = arith.constant 3.200000e+01 : f32
    %1225 = vector.broadcast %cst_512 : f32 to vector<16x1xf32>
    %1226 = arith.divf %1224, %1225 : vector<16x1xf32>
    %1227 = vector.broadcast %1219 : vector<16x1xf32> to vector<16x32xf32>
    %1228 = arith.subf %1213, %1227 : vector<16x32xf32>
    %cst_513 = arith.constant 9.99999974E-6 : f32
    %1229 = vector.broadcast %cst_513 : f32 to vector<16x1xf32>
    %1230 = arith.addf %1226, %1229 : vector<16x1xf32>
    %1231 = math.rsqrt %1230 : vector<16x1xf32>
    %1232 = vector.broadcast %1231 : vector<16x1xf32> to vector<16x32xf32>
    %1233 = arith.mulf %1228, %1232 : vector<16x32xf32>
    %1234 = vector.broadcast %1214 : vector<1x32xf32> to vector<16x32xf32>
    %1235 = arith.mulf %1233, %1234 : vector<16x32xf32>
    %1236 = vector.broadcast %1215 : vector<1x32xf32> to vector<16x32xf32>
    %1237 = arith.addf %1235, %1236 : vector<16x32xf32>
    %1238 = vector.shape_cast %1237 : vector<16x32xf32> to vector<2x8x32xf32>
    %cst_514 = arith.constant dense<0.000000e+00> : vector<2x32xf32>
    %1239 = vector.multi_reduction <add>, %1238, %cst_514 [1] : vector<2x8x32xf32> to vector<2x32xf32>
    %cst_515 = arith.constant 8.000000e+00 : f32
    %1240 = vector.broadcast %cst_515 : f32 to vector<2x32xf32>
    %1241 = arith.divf %1239, %1240 : vector<2x32xf32>
    %c0_516 = arith.constant 0 : index
    %c0_517 = arith.constant 0 : index
    %1242 = vector.load %arg54[%c0_516, %c0_517] : memref<1x4xf32, #tpu.memory_space<vmem>>, vector<1x4xf32>
    %c0_518 = arith.constant 0 : index
    %c0_519 = arith.constant 0 : index
    %1243 = vector.load %arg51[%c0_518, %c0_519] : memref<32x4xf32, #tpu.memory_space<vmem>>, vector<32x4xf32>
    %cst_520 = arith.constant dense<0.000000e+00> : vector<2x4xf32>
    %1244 = tpu.matmul %413, %1243, %cst_520 {dimension_numbers = #tpu.dot_dimension_numbers<[1], [0], [0], [1], [0, 0, 1, 1], [], []>} : vector<2x32xf32>, vector<32x4xf32>, vector<2x4xf32> -> vector<2x4xf32>
    %1245 = vector.broadcast %1242 : vector<1x4xf32> to vector<2x4xf32>
    %1246 = arith.addf %1245, %1244 : vector<2x4xf32>
    %c0_521 = arith.constant 0 : index
    %c0_522 = arith.constant 0 : index
    %1247 = vector.load %arg52[%c0_521, %c0_522] : memref<32x4xf32, #tpu.memory_space<vmem>>, vector<32x4xf32>
    %cst_523 = arith.constant dense<0.000000e+00> : vector<2x4xf32>
    %1248 = tpu.matmul %827, %1247, %cst_523 {dimension_numbers = #tpu.dot_dimension_numbers<[1], [0], [0], [1], [0, 0, 1, 1], [], []>} : vector<2x32xf32>, vector<32x4xf32>, vector<2x4xf32> -> vector<2x4xf32>
    %1249 = arith.addf %1246, %1248 : vector<2x4xf32>
    %c0_524 = arith.constant 0 : index
    %c0_525 = arith.constant 0 : index
    %1250 = vector.load %arg53[%c0_524, %c0_525] : memref<32x4xf32, #tpu.memory_space<vmem>>, vector<32x4xf32>
    %cst_526 = arith.constant dense<0.000000e+00> : vector<2x4xf32>
    %1251 = tpu.matmul %1241, %1250, %cst_526 {dimension_numbers = #tpu.dot_dimension_numbers<[1], [0], [0], [1], [0, 0, 1, 1], [], []>} : vector<2x32xf32>, vector<32x4xf32>, vector<2x4xf32> -> vector<2x4xf32>
    %1252 = arith.addf %1249, %1251 : vector<2x4xf32>
    %cst_527 = arith.constant 5.000000e-01 : f32
    %1253 = vector.broadcast %cst_527 : f32 to vector<2x4xf32>
    %1254 = arith.mulf %1253, %1252 : vector<2x4xf32>
    %1255 = math.tanh %1254 : vector<2x4xf32>
    %cst_528 = arith.constant 1.000000e+00 : f32
    %1256 = vector.broadcast %cst_528 : f32 to vector<2x4xf32>
    %1257 = arith.addf %1255, %1256 : vector<2x4xf32>
    %cst_529 = arith.constant 5.000000e-01 : f32
    %1258 = vector.broadcast %cst_529 : f32 to vector<2x4xf32>
    %1259 = arith.mulf %1258, %1257 : vector<2x4xf32>
    %c0_530 = arith.constant 0 : index
    %c0_531 = arith.constant 0 : index
    %1260 = vector.load %arg55[%c0_530, %c0_531] : memref<2x4xf32, #tpu.memory_space<vmem>>, vector<2x4xf32>
    tpu.vector_store %arg55[%c0_530, %c0_531], %1259 {strides = array<i32>} : memref<2x4xf32, #tpu.memory_space<vmem>>, vector<2x4xf32>,
    return
  }
}

</mosaic_0001>

<llo_original>
// kernel: tpu_custom_call.1
$region0: #{tpu_custom_call.1}
  #allocation0 [shape = 'u32[]', space=smem, size = 0x4, offset = 0x4, fixed_abs, tag = 'smem constant byte address 0x4 - core index']
  #allocation1 [shape = 'u32[72,128]{1,0:T(1,128)}', space=vmem, size = 0x9000, scoped, tag = 'internal scratch']
  %s0 = inlined_call_operand.smem [shape: u32[56], index: -1, kind: input, shape index: {}]
  %s1 = sld [smem:[%s0]]
  %s2 = scalar_lea.smem %s0, 1
  %s3 = sld [smem:[%s2]]
  %s4 = scalar_lea.smem %s0, 2
  %s5 = sld [smem:[%s4]]
  %s6 = scalar_lea.smem %s0, 3
  %s7 = sld [smem:[%s6]]
  %s8 = scalar_lea.smem %s0, 4
  %s9 = sld [smem:[%s8]]
  %s10 = scalar_lea.smem %s0, 5
  %s11 = sld [smem:[%s10]]
  %s12 = scalar_lea.smem %s0, 6
  %s13 = sld [smem:[%s12]]
  %s14 = scalar_lea.smem %s0, 7
  %s15 = sld [smem:[%s14]]
  %s16 = scalar_lea.smem %s0, 8
  %s17 = sld [smem:[%s16]]
  %s18 = scalar_lea.smem %s0, 9
  %s19 = sld [smem:[%s18]]
  %s20 = scalar_lea.smem %s0, 10
  %s21 = sld [smem:[%s20]]
  %s22 = scalar_lea.smem %s0, 11
  %s23 = sld [smem:[%s22]]
  %s24 = scalar_lea.smem %s0, 12
  %s25 = sld [smem:[%s24]]
  %s26 = scalar_lea.smem %s0, 13
  %s27 = sld [smem:[%s26]]
  %s28 = scalar_lea.smem %s0, 14
  %s29 = sld [smem:[%s28]]
  %s30 = scalar_lea.smem %s0, 15
  %s31 = sld [smem:[%s30]]
  %s32 = scalar_lea.smem %s0, 16
  %s33 = sld [smem:[%s32]]
  %s34 = scalar_lea.smem %s0, 17
  %s35 = sld [smem:[%s34]]
  %s36 = scalar_lea.smem %s0, 18
  %s37 = sld [smem:[%s36]]
  %s38 = scalar_lea.smem %s0, 19
  %s39 = sld [smem:[%s38]]
  %s40 = scalar_lea.smem %s0, 20
  %s41 = sld [smem:[%s40]]
  %s42 = scalar_lea.smem %s0, 21
  %s43 = sld [smem:[%s42]]
  %s44 = scalar_lea.smem %s0, 22
  %s45 = sld [smem:[%s44]]
  %s46 = scalar_lea.smem %s0, 23
  %s47 = sld [smem:[%s46]]
  %s48 = scalar_lea.smem %s0, 24
  %s49 = sld [smem:[%s48]]
  %s50 = scalar_lea.smem %s0, 25
  %s51 = sld [smem:[%s50]]
  %s52 = scalar_lea.smem %s0, 26
  %s53 = sld [smem:[%s52]]
  %s54 = scalar_lea.smem %s0, 27
  %s55 = sld [smem:[%s54]]
  %s56 = scalar_lea.smem %s0, 28
  %s57 = sld [smem:[%s56]]
  %s58 = scalar_lea.smem %s0, 29
  %s59 = sld [smem:[%s58]]
  %s60 = scalar_lea.smem %s0, 30
  %s61 = sld [smem:[%s60]]
  %s62 = scalar_lea.smem %s0, 31
  %s63 = sld [smem:[%s62]]
  %s64 = scalar_lea.smem %s0, 32
  %s65 = sld [smem:[%s64]]
  %s66 = scalar_lea.smem %s0, 33
  %s67 = sld [smem:[%s66]]
  %s68 = scalar_lea.smem %s0, 34
  %s69 = sld [smem:[%s68]]
  %s70 = scalar_lea.smem %s0, 35
  %s71 = sld [smem:[%s70]]
  %s72 = scalar_lea.smem %s0, 36
  %s73 = sld [smem:[%s72]]
  %s74 = scalar_lea.smem %s0, 37
  %s75 = sld [smem:[%s74]]
  %s76 = scalar_lea.smem %s0, 38
  %s77 = sld [smem:[%s76]]
  %s78 = scalar_lea.smem %s0, 39
  %s79 = sld [smem:[%s78]]
  %s80 = scalar_lea.smem %s0, 40
  %s81 = sld [smem:[%s80]]
  %s82 = scalar_lea.smem %s0, 41
  %s83 = sld [smem:[%s82]]
  %s84 = scalar_lea.smem %s0, 42
  %s85 = sld [smem:[%s84]]
  %s86 = scalar_lea.smem %s0, 43
  %s87 = sld [smem:[%s86]]
  %s88 = scalar_lea.smem %s0, 44
  %s89 = sld [smem:[%s88]]
  %s90 = scalar_lea.smem %s0, 45
  %s91 = sld [smem:[%s90]]
  %s92 = scalar_lea.smem %s0, 46
  %s93 = sld [smem:[%s92]]
  %s94 = scalar_lea.smem %s0, 47
  %s95 = sld [smem:[%s94]]
  %s96 = scalar_lea.smem %s0, 48
  %s97 = sld [smem:[%s96]]
  %s98 = scalar_lea.smem %s0, 49
  %s99 = sld [smem:[%s98]]
  %s100 = scalar_lea.smem %s0, 50
  %s101 = sld [smem:[%s100]]
  %s102 = scalar_lea.smem %s0, 51
  %s103 = sld [smem:[%s102]]
  %s104 = scalar_lea.smem %s0, 52
  %s105 = sld [smem:[%s104]]
  %s106 = scalar_lea.smem %s0, 53
  %s107 = sld [smem:[%s106]]
  %s108 = scalar_lea.smem %s0, 54
  %s109 = sld [smem:[%s108]]
  %s110 = scalar_lea.smem %s0, 55
  %s111 = sld [smem:[%s110]]
  %s112 = sld [smem:[#allocation0]]
  $region342: #{tpu_custom_call.1} parent=0
    _
  %s114 = ssub.s32 1, %s112
  %s115 = scalar_select 0, %s114, %s112
  $region1: #{tpu_custom_call.1} parent=0
    #allocation2 [shape = 'u8[8192]{0}', space=vmem, size = 0x2000, scoped, tag = 'input window, operand 0, single buffered']
    #allocation3 [shape = 's32[1]{0}', space=sflag, size = 0x4, scoped, tag = 'scoped memory for tpu_custom_call.1']
    #allocation4 [shape = 's32[1]{0}', space=sflag, size = 0x4, scoped, tag = 'scoped memory for tpu_custom_call.1']
    #allocation5 [shape = 'u8[8192]{0}', space=vmem, size = 0x2000, scoped, tag = 'input window, operand 1, single buffered']
    #allocation6 [shape = 's32[1]{0}', space=sflag, size = 0x4, scoped, tag = 'scoped memory for tpu_custom_call.1']
    #allocation7 [shape = 'u8[8192]{0}', space=vmem, size = 0x2000, scoped, tag = 'input window, operand 2, single buffered']
    #allocation8 [shape = 'u8[8192]{0}', space=vmem, size = 0x2000, scoped, tag = 'input window, operand 3, single buffered']
    #allocation9 [shape = 's32[1]{0}', space=sflag, size = 0x4, scoped, tag = 'scoped memory for tpu_custom_call.1']
    #allocation10 [shape = 'u8[512]{0}', space=vmem, size = 0x400, scoped, tag = 'input window, operand 4, single buffered']
    #allocation11 [shape = 'u8[32768]{0}', space=vmem, size = 0x8000, scoped, tag = 'input window, operand 7, single buffered']
    #allocation12 [shape = 's32[1]{0}', space=sflag, size = 0x4, scoped, tag = 'scoped memory for tpu_custom_call.1']
    #allocation13 [shape = 'u8[32768]{0}', space=vmem, size = 0x8000, scoped, tag = 'input window, operand 11, single buffered']
    #allocation14 [shape = 'u8[32768]{0}', space=vmem, size = 0x8000, scoped, tag = 'input window, operand 13, single buffered']
    #allocation15 [shape = 's32[1]{0}', space=sflag, size = 0x4, scoped, tag = 'scoped memory for tpu_custom_call.1']
    #allocation16 [shape = 'u8[1024]{0}', space=vmem, size = 0x400, scoped, tag = 'input window, operand 15, single buffered']
    #allocation17 [shape = 'u8[1024]{0}', space=vmem, size = 0x400, scoped, tag = 'input window, operand 16, single buffered']
    #allocation18 [shape = 's32[1]{0}', space=sflag, size = 0x4, scoped, tag = 'scoped memory for tpu_custom_call.1']
    #allocation19 [shape = 'u8[512]{0}', space=vmem, size = 0x400, scoped, tag = 'input window, operand 17, single buffered']
    #allocation20 [shape = 'u8[512]{0}', space=vmem, size = 0x400, scoped, tag = 'input window, operand 18, single buffered']
    #allocation21 [shape = 's32[1]{0}', space=sflag, size = 0x4, scoped, tag = 'scoped memory for tpu_custom_call.1']
    #allocation22 [shape = 'u8[512]{0}', space=vmem, size = 0x400, scoped, tag = 'input window, operand 20, single buffered']
    #allocation23 [shape = 'u8[32768]{0}', space=vmem, size = 0x8000, scoped, tag = 'input window, operand 21, single buffered']
    #allocation24 [shape = 's32[1]{0}', space=sflag, size = 0x4, scoped, tag = 'scoped memory for tpu_custom_call.1']
    #allocation25 [shape = 'u8[1024]{0}', space=vmem, size = 0x400, scoped, tag = 'input window, operand 22, single buffered']
    #allocation26 [shape = 'u8[32768]{0}', space=vmem, size = 0x8000, scoped, tag = 'input window, operand 23, single buffered']
    #allocation27 [shape = 's32[1]{0}', space=sflag, size = 0x4, scoped, tag = 'scoped memory for tpu_custom_call.1']
    #allocation28 [shape = 'u8[1024]{0}', space=vmem, size = 0x400, scoped, tag = 'input window, operand 25, single buffered']
    #allocation29 [shape = 'u8[32768]{0}', space=vmem, size = 0x8000, scoped, tag = 'input window, operand 27, single buffered']
    #allocation30 [shape = 's32[1]{0}', space=sflag, size = 0x4, scoped, tag = 'scoped memory for tpu_custom_call.1']
    #allocation31 [shape = 'u8[32768]{0}', space=vmem, size = 0x8000, scoped, tag = 'input window, operand 29, single buffered']
    #allocation32 [shape = 'u8[1024]{0}', space=vmem, size = 0x400, scoped, tag = 'input window, operand 31, single buffered']
    #allocation33 [shape = 's32[1]{0}', space=sflag, size = 0x4, scoped, tag = 'scoped memory for tpu_custom_call.1']
    #allocation34 [shape = 'u8[512]{0}', space=vmem, size = 0x400, scoped, tag = 'input window, operand 33, single buffered']
    #allocation35 [shape = 'u8[512]{0}', space=vmem, size = 0x400, scoped, tag = 'input window, operand 34, single buffered']
    #allocation36 [shape = 's32[1]{0}', space=sflag, size = 0x4, scoped, tag = 'scoped memory for tpu_custom_call.1']
    #allocation37 [shape = 'u8[512]{0}', space=vmem, size = 0x400, scoped, tag = 'input window, operand 36, single buffered']
    #allocation38 [shape = 'u8[32768]{0}', space=vmem, size = 0x8000, scoped, tag = 'input window, operand 37, single buffered']
    #allocation39 [shape = 's32[1]{0}', space=sflag, size = 0x4, scoped, tag = 'scoped memory for tpu_custom_call.1']
    #allocation40 [shape = 'u8[32768]{0}', space=vmem, size = 0x8000, scoped, tag = 'input window, operand 39, single buffered']
    #allocation41 [shape = 'u8[32768]{0}', space=vmem, size = 0x8000, scoped, tag = 'input window, operand 43, single buffered']
    #allocation42 [shape = 's32[1]{0}', space=sflag, size = 0x4, scoped, tag = 'scoped memory for tpu_custom_call.1']
    #allocation43 [shape = 'u8[32768]{0}', space=vmem, size = 0x8000, scoped, tag = 'input window, operand 45, single buffered']
    #allocation44 [shape = 'u8[512]{0}', space=vmem, size = 0x400, scoped, tag = 'input window, operand 49, single buffered']
    #allocation45 [shape = 's32[1]{0}', space=sflag, size = 0x4, scoped, tag = 'scoped memory for tpu_custom_call.1']
    #allocation46 [shape = 'u8[1024]{0}', space=vmem, size = 0x400, scoped, tag = 'output window, operand 0, single buffered']
    %116 = vsyncpa [#allocation3], 0
    %117 = vsyncpa [#allocation6], 0
    %118 = vsyncpa [#allocation9], 0
    %119 = vsyncpa [#allocation12], 0
    %120 = vsyncpa [#allocation15], 0
    %121 = vsyncpa [#allocation18], 0
    %122 = vsyncpa [#allocation21], 0
    %123 = vsyncpa [#allocation24], 0
    %124 = vsyncpa [#allocation27], 0
    %125 = vsyncpa [#allocation30], 0
    %126 = vsyncpa [#allocation33], 0
    %127 = vsyncpa [#allocation36], 0
    %128 = vsyncpa [#allocation39], 0
    %129 = vsyncpa [#allocation42], 0
    %130 = vsyncpa [#allocation45], 0
    %131 = vsyncpa [#allocation4], 0
    // Predicated region
    $region2: #{tpu_custom_call.1} parent=1 // pred_check
      _
    $region3: #{tpu_custom_call.1} parent=1 // pred_check_branch
      %133 = sbr.rel (0) target = $region5
    $region4: #{tpu_custom_call.1} parent=1 // pred_region
      %135 = vsyncadd [#allocation3], 0
      %s136 = sshll.u32 %s1, 4
      %s137 = int_to_ptr.hbm [resolvable:$true] %s136
      %s138 = sshll.u32 [#allocation2], 4
      %s139 = int_to_ptr.vmem [resolvable:$true] %s138
      %144 = dma.hbm_to_vmem [thread:$0]  %s137, 256, %s139, [#allocation3], 128, 128, 8
    $region5: #{tpu_custom_call.1} parent=1 // pred_fallthru
      _
    // Predicated region
    $region6: #{tpu_custom_call.1} parent=1 // pred_check
      _
    $region7: #{tpu_custom_call.1} parent=1 // pred_check_branch
      %146 = sbr.rel (0) target = $region9
    $region8: #{tpu_custom_call.1} parent=1 // pred_region
      %148 = vsyncadd [#allocation6], 0
      %s149 = sshll.u32 %s3, 4
      %s150 = int_to_ptr.hbm [resolvable:$true] %s149
      %s151 = sshll.u32 [#allocation5], 4
      %s152 = int_to_ptr.vmem [resolvable:$true] %s151
      %157 = dma.hbm_to_vmem [thread:$0]  %s150, 256, %s152, [#allocation6], 128, 128, 8
    $region9: #{tpu_custom_call.1} parent=1 // pred_fallthru
      _
    // Predicated region
    $region10: #{tpu_custom_call.1} parent=1 // pred_check
      _
    $region11: #{tpu_custom_call.1} parent=1 // pred_check_branch
      %159 = sbr.rel (0) target = $region13
    $region12: #{tpu_custom_call.1} parent=1 // pred_region
      %161 = vsyncadd [#allocation6], 0
      %s162 = sshll.u32 %s5, 4
      %s163 = int_to_ptr.hbm [resolvable:$true] %s162
      %s164 = sshll.u32 [#allocation7], 4
      %s165 = int_to_ptr.vmem [resolvable:$true] %s164
      %170 = dma.hbm_to_vmem [thread:$0]  %s163, 256, %s165, [#allocation6], 128, 128, 8
    $region13: #{tpu_custom_call.1} parent=1 // pred_fallthru
      _
    // Predicated region
    $region14: #{tpu_custom_call.1} parent=1 // pred_check
      _
    $region15: #{tpu_custom_call.1} parent=1 // pred_check_branch
      %172 = sbr.rel (0) target = $region17
    $region16: #{tpu_custom_call.1} parent=1 // pred_region
      %174 = vsyncadd [#allocation9], 0
      %s175 = sshll.u32 %s7, 4
      %s176 = int_to_ptr.hbm [resolvable:$true] %s175
      %s177 = sshll.u32 [#allocation8], 4
      %s178 = int_to_ptr.vmem [resolvable:$true] %s177
      %183 = dma.hbm_to_vmem [thread:$0]  %s176, 256, %s178, [#allocation9], 128, 128, 8
    $region17: #{tpu_custom_call.1} parent=1 // pred_fallthru
      _
    // Predicated region
    $region18: #{tpu_custom_call.1} parent=1 // pred_check
      _
    $region19: #{tpu_custom_call.1} parent=1 // pred_check_branch
      %185 = sbr.rel (0) target = $region21
    $region20: #{tpu_custom_call.1} parent=1 // pred_region
      %187 = vsyncadd [#allocation9], 0
      %s189 = sshll.u32 %s9, 4
      %s190 = int_to_ptr.hbm [resolvable:$true] %s189
      %s191 = sshll.u32 [#allocation10], 4
      %s192 = int_to_ptr.vmem [resolvable:$true] %s191
      %194 = dma.hbm_to_vmem [thread:$0]  %s190, 16, %s192, [#allocation9]
    $region21: #{tpu_custom_call.1} parent=1 // pred_fallthru
      _
    // Predicated region
    $region22: #{tpu_custom_call.1} parent=1 // pred_check
      _
    $region23: #{tpu_custom_call.1} parent=1 // pred_check_branch
      %196 = sbr.rel (0) target = $region25
    $region24: #{tpu_custom_call.1} parent=1 // pred_region
      _
    $region25: #{tpu_custom_call.1} parent=1 // pred_fallthru
      _
    // Predicated region
    $region26: #{tpu_custom_call.1} parent=1 // pred_check
      _
    $region27: #{tpu_custom_call.1} parent=1 // pred_check_branch
      %198 = sbr.rel (0) target = $region29
    $region28: #{tpu_custom_call.1} parent=1 // pred_region
      _
    $region29: #{tpu_custom_call.1} parent=1 // pred_fallthru
      _
    // Predicated region
    $region30: #{tpu_custom_call.1} parent=1 // pred_check
      _
    $region31: #{tpu_custom_call.1} parent=1 // pred_check_branch
      %200 = sbr.rel (0) target = $region33
    $region32: #{tpu_custom_call.1} parent=1 // pred_region
      %202 = vsyncadd [#allocation12], 0
      %s203 = sshll.u32 %s15, 4
      %s204 = int_to_ptr.hbm [resolvable:$true] %s203
      %s205 = sshll.u32 [#allocation11], 4
      %s206 = int_to_ptr.vmem [resolvable:$true] %s205
      %211 = dma.hbm_to_vmem [thread:$0]  %s204, 1024, %s206, [#allocation12], 128, 128, 8
    $region33: #{tpu_custom_call.1} parent=1 // pred_fallthru
      _
    // Predicated region
    $region34: #{tpu_custom_call.1} parent=1 // pred_check
      _
    $region35: #{tpu_custom_call.1} parent=1 // pred_check_branch
      %213 = sbr.rel (0) target = $region37
    $region36: #{tpu_custom_call.1} parent=1 // pred_region
      _
    $region37: #{tpu_custom_call.1} parent=1 // pred_fallthru
      _
    // Predicated region
    $region38: #{tpu_custom_call.1} parent=1 // pred_check
      _
    $region39: #{tpu_custom_call.1} parent=1 // pred_check_branch
      %215 = sbr.rel (0) target = $region41
    $region40: #{tpu_custom_call.1} parent=1 // pred_region
      _
    $region41: #{tpu_custom_call.1} parent=1 // pred_fallthru
      _
    // Predicated region
    $region42: #{tpu_custom_call.1} parent=1 // pred_check
      _
    $region43: #{tpu_custom_call.1} parent=1 // pred_check_branch
      %217 = sbr.rel (0) target = $region45
    $region44: #{tpu_custom_call.1} parent=1 // pred_region
      _
    $region45: #{tpu_custom_call.1} parent=1 // pred_fallthru
      _
    // Predicated region
    $region46: #{tpu_custom_call.1} parent=1 // pred_check
      _
    $region47: #{tpu_custom_call.1} parent=1 // pred_check_branch
      %219 = sbr.rel (0) target = $region49
    $region48: #{tpu_custom_call.1} parent=1 // pred_region
      %221 = vsyncadd [#allocation12], 0
      %s222 = sshll.u32 %s23, 4
      %s223 = int_to_ptr.hbm [resolvable:$true] %s222
      %s224 = sshll.u32 [#allocation13], 4
      %s225 = int_to_ptr.vmem [resolvable:$true] %s224
      %230 = dma.hbm_to_vmem [thread:$0]  %s223, 1024, %s225, [#allocation12], 128, 128, 8
    $region49: #{tpu_custom_call.1} parent=1 // pred_fallthru
      _
    // Predicated region
    $region50: #{tpu_custom_call.1} parent=1 // pred_check
      _
    $region51: #{tpu_custom_call.1} parent=1 // pred_check_branch
      %232 = sbr.rel (0) target = $region53
    $region52: #{tpu_custom_call.1} parent=1 // pred_region
      _
    $region53: #{tpu_custom_call.1} parent=1 // pred_fallthru
      _
    // Predicated region
    $region54: #{tpu_custom_call.1} parent=1 // pred_check
      _
    $region55: #{tpu_custom_call.1} parent=1 // pred_check_branch
      %234 = sbr.rel (0) target = $region57
    $region56: #{tpu_custom_call.1} parent=1 // pred_region
      %236 = vsyncadd [#allocation15], 0
      %s237 = sshll.u32 %s27, 4
      %s238 = int_to_ptr.hbm [resolvable:$true] %s237
      %s239 = sshll.u32 [#allocation14], 4
      %s240 = int_to_ptr.vmem [resolvable:$true] %s239
      %245 = dma.hbm_to_vmem [thread:$0]  %s238, 1024, %s240, [#allocation15], 128, 128, 8
    $region57: #{tpu_custom_call.1} parent=1 // pred_fallthru
      _
    // Predicated region
    $region58: #{tpu_custom_call.1} parent=1 // pred_check
      _
    $region59: #{tpu_custom_call.1} parent=1 // pred_check_branch
      %247 = sbr.rel (0) target = $region61
    $region60: #{tpu_custom_call.1} parent=1 // pred_region
      _
    $region61: #{tpu_custom_call.1} parent=1 // pred_fallthru
      _
    // Predicated region
    $region62: #{tpu_custom_call.1} parent=1 // pred_check
      _
    $region63: #{tpu_custom_call.1} parent=1 // pred_check_branch
      %249 = sbr.rel (0) target = $region65
    $region64: #{tpu_custom_call.1} parent=1 // pred_region
      %251 = vsyncadd [#allocation15], 0
      %s252 = sshll.u32 %s31, 4
      %s253 = int_to_ptr.hbm [resolvable:$true] %s252
      %s254 = sshll.u32 [#allocation16], 4
      %s255 = int_to_ptr.vmem [resolvable:$true] %s254
      %260 = dma.hbm_to_vmem [thread:$0]  %s253, 32, %s255, [#allocation15], 16, 16, 1
    $region65: #{tpu_custom_call.1} parent=1 // pred_fallthru
      _
    // Predicated region
    $region66: #{tpu_custom_call.1} parent=1 // pred_check
      _
    $region67: #{tpu_custom_call.1} parent=1 // pred_check_branch
      %262 = sbr.rel (0) target = $region69
    $region68: #{tpu_custom_call.1} parent=1 // pred_region
      %264 = vsyncadd [#allocation18], 0
      %s265 = sshll.u32 %s33, 4
      %s266 = int_to_ptr.hbm [resolvable:$true] %s265
      %s267 = sshll.u32 [#allocation17], 4
      %s268 = int_to_ptr.vmem [resolvable:$true] %s267
      %273 = dma.hbm_to_vmem [thread:$0]  %s266, 32, %s268, [#allocation18], 16, 16, 1
    $region69: #{tpu_custom_call.1} parent=1 // pred_fallthru
      _
    // Predicated region
    $region70: #{tpu_custom_call.1} parent=1 // pred_check
      _
    $region71: #{tpu_custom_call.1} parent=1 // pred_check_branch
      %275 = sbr.rel (0) target = $region73
    $region72: #{tpu_custom_call.1} parent=1 // pred_region
      %277 = vsyncadd [#allocation18], 0
      %s279 = sshll.u32 %s35, 4
      %s280 = int_to_ptr.hbm [resolvable:$true] %s279
      %s281 = sshll.u32 [#allocation19], 4
      %s282 = int_to_ptr.vmem [resolvable:$true] %s281
      %284 = dma.hbm_to_vmem [thread:$0]  %s280, 16, %s282, [#allocation18]
    $region73: #{tpu_custom_call.1} parent=1 // pred_fallthru
      _
    // Predicated region
    $region74: #{tpu_custom_call.1} parent=1 // pred_check
      _
    $region75: #{tpu_custom_call.1} parent=1 // pred_check_branch
      %286 = sbr.rel (0) target = $region77
    $region76: #{tpu_custom_call.1} parent=1 // pred_region
      %288 = vsyncadd [#allocation21], 0
      %s290 = sshll.u32 %s37, 4
      %s291 = int_to_ptr.hbm [resolvable:$true] %s290
      %s292 = sshll.u32 [#allocation20], 4
      %s293 = int_to_ptr.vmem [resolvable:$true] %s292
      %295 = dma.hbm_to_vmem [thread:$0]  %s291, 16, %s293, [#allocation21]
    $region77: #{tpu_custom_call.1} parent=1 // pred_fallthru
      _
    // Predicated region
    $region78: #{tpu_custom_call.1} parent=1 // pred_check
      _
    $region79: #{tpu_custom_call.1} parent=1 // pred_check_branch
      %297 = sbr.rel (0) target = $region81
    $region80: #{tpu_custom_call.1} parent=1 // pred_region
      _
    $region81: #{tpu_custom_call.1} parent=1 // pred_fallthru
      _
    // Predicated region
    $region82: #{tpu_custom_call.1} parent=1 // pred_check
      _
    $region83: #{tpu_custom_call.1} parent=1 // pred_check_branch
      %299 = sbr.rel (0) target = $region85
    $region84: #{tpu_custom_call.1} parent=1 // pred_region
      %301 = vsyncadd [#allocation21], 0
      %s303 = sshll.u32 %s41, 4
      %s304 = int_to_ptr.hbm [resolvable:$true] %s303
      %s305 = sshll.u32 [#allocation22], 4
      %s306 = int_to_ptr.vmem [resolvable:$true] %s305
      %308 = dma.hbm_to_vmem [thread:$0]  %s304, 16, %s306, [#allocation21]
    $region85: #{tpu_custom_call.1} parent=1 // pred_fallthru
      _
    // Predicated region
    $region86: #{tpu_custom_call.1} parent=1 // pred_check
      _
    $region87: #{tpu_custom_call.1} parent=1 // pred_check_branch
      %310 = sbr.rel (0) target = $region89
    $region88: #{tpu_custom_call.1} parent=1 // pred_region
      %312 = vsyncadd [#allocation24], 0
      %s313 = sshll.u32 %s43, 4
      %s314 = int_to_ptr.hbm [resolvable:$true] %s313
      %s315 = sshll.u32 [#allocation23], 4
      %s316 = int_to_ptr.vmem [resolvable:$true] %s315
      %321 = dma.hbm_to_vmem [thread:$0]  %s314, 1024, %s316, [#allocation24], 128, 128, 8
    $region89: #{tpu_custom_call.1} parent=1 // pred_fallthru
      _
    // Predicated region
    $region90: #{tpu_custom_call.1} parent=1 // pred_check
      _
    $region91: #{tpu_custom_call.1} parent=1 // pred_check_branch
      %323 = sbr.rel (0) target = $region93
    $region92: #{tpu_custom_call.1} parent=1 // pred_region
      %325 = vsyncadd [#allocation24], 0
      %s326 = sshll.u32 %s45, 4
      %s327 = int_to_ptr.hbm [resolvable:$true] %s326
      %s328 = sshll.u32 [#allocation25], 4
      %s329 = int_to_ptr.vmem [resolvable:$true] %s328
      %334 = dma.hbm_to_vmem [thread:$0]  %s327, 32, %s329, [#allocation24], 16, 16, 1
    $region93: #{tpu_custom_call.1} parent=1 // pred_fallthru
      _
    // Predicated region
    $region94: #{tpu_custom_call.1} parent=1 // pred_check
      _
    $region95: #{tpu_custom_call.1} parent=1 // pred_check_branch
      %336 = sbr.rel (0) target = $region97
    $region96: #{tpu_custom_call.1} parent=1 // pred_region
      %338 = vsyncadd [#allocation27], 0
      %s339 = sshll.u32 %s47, 4
      %s340 = int_to_ptr.hbm [resolvable:$true] %s339
      %s341 = sshll.u32 [#allocation26], 4
      %s342 = int_to_ptr.vmem [resolvable:$true] %s341
      %347 = dma.hbm_to_vmem [thread:$0]  %s340, 1024, %s342, [#allocation27], 128, 128, 8
    $region97: #{tpu_custom_call.1} parent=1 // pred_fallthru
      _
    // Predicated region
    $region98: #{tpu_custom_call.1} parent=1 // pred_check
      _
    $region99: #{tpu_custom_call.1} parent=1 // pred_check_branch
      %349 = sbr.rel (0) target = $region101
    $region100: #{tpu_custom_call.1} parent=1 // pred_region
      _
    $region101: #{tpu_custom_call.1} parent=1 // pred_fallthru
      _
    // Predicated region
    $region102: #{tpu_custom_call.1} parent=1 // pred_check
      _
    $region103: #{tpu_custom_call.1} parent=1 // pred_check_branch
      %351 = sbr.rel (0) target = $region105
    $region104: #{tpu_custom_call.1} parent=1 // pred_region
      %353 = vsyncadd [#allocation27], 0
      %s354 = sshll.u32 %s51, 4
      %s355 = int_to_ptr.hbm [resolvable:$true] %s354
      %s356 = sshll.u32 [#allocation28], 4
      %s357 = int_to_ptr.vmem [resolvable:$true] %s356
      %362 = dma.hbm_to_vmem [thread:$0]  %s355, 32, %s357, [#allocation27], 16, 16, 1
    $region105: #{tpu_custom_call.1} parent=1 // pred_fallthru
      _
    // Predicated region
    $region106: #{tpu_custom_call.1} parent=1 // pred_check
      _
    $region107: #{tpu_custom_call.1} parent=1 // pred_check_branch
      %364 = sbr.rel (0) target = $region109
    $region108: #{tpu_custom_call.1} parent=1 // pred_region
      _
    $region109: #{tpu_custom_call.1} parent=1 // pred_fallthru
      _
    // Predicated region
    $region110: #{tpu_custom_call.1} parent=1 // pred_check
      _
    $region111: #{tpu_custom_call.1} parent=1 // pred_check_branch
      %366 = sbr.rel (0) target = $region113
    $region112: #{tpu_custom_call.1} parent=1 // pred_region
      %368 = vsyncadd [#allocation30], 0
      %s369 = sshll.u32 %s55, 4
      %s370 = int_to_ptr.hbm [resolvable:$true] %s369
      %s371 = sshll.u32 [#allocation29], 4
      %s372 = int_to_ptr.vmem [resolvable:$true] %s371
      %377 = dma.hbm_to_vmem [thread:$0]  %s370, 1024, %s372, [#allocation30], 128, 128, 8
    $region113: #{tpu_custom_call.1} parent=1 // pred_fallthru
      _
    // Predicated region
    $region114: #{tpu_custom_call.1} parent=1 // pred_check
      _
    $region115: #{tpu_custom_call.1} parent=1 // pred_check_branch
      %379 = sbr.rel (0) target = $region117
    $region116: #{tpu_custom_call.1} parent=1 // pred_region
      _
    $region117: #{tpu_custom_call.1} parent=1 // pred_fallthru
      _
    // Predicated region
    $region118: #{tpu_custom_call.1} parent=1 // pred_check
      _
    $region119: #{tpu_custom_call.1} parent=1 // pred_check_branch
      %381 = sbr.rel (0) target = $region121
    $region120: #{tpu_custom_call.1} parent=1 // pred_region
      %383 = vsyncadd [#allocation30], 0
      %s384 = sshll.u32 %s59, 4
      %s385 = int_to_ptr.hbm [resolvable:$true] %s384
      %s386 = sshll.u32 [#allocation31], 4
      %s387 = int_to_ptr.vmem [resolvable:$true] %s386
      %392 = dma.hbm_to_vmem [thread:$0]  %s385, 1024, %s387, [#allocation30], 128, 128, 8
    $region121: #{tpu_custom_call.1} parent=1 // pred_fallthru
      _
    // Predicated region
    $region122: #{tpu_custom_call.1} parent=1 // pred_check
      _
    $region123: #{tpu_custom_call.1} parent=1 // pred_check_branch
      %394 = sbr.rel (0) target = $region125
    $region124: #{tpu_custom_call.1} parent=1 // pred_region
      _
    $region125: #{tpu_custom_call.1} parent=1 // pred_fallthru
      _
    // Predicated region
    $region126: #{tpu_custom_call.1} parent=1 // pred_check
      _
    $region127: #{tpu_custom_call.1} parent=1 // pred_check_branch
      %396 = sbr.rel (0) target = $region129
    $region128: #{tpu_custom_call.1} parent=1 // pred_region
      %398 = vsyncadd [#allocation33], 0
      %s399 = sshll.u32 %s63, 4
      %s400 = int_to_ptr.hbm [resolvable:$true] %s399
      %s401 = sshll.u32 [#allocation32], 4
      %s402 = int_to_ptr.vmem [resolvable:$true] %s401
      %407 = dma.hbm_to_vmem [thread:$0]  %s400, 32, %s402, [#allocation33], 16, 16, 1
    $region129: #{tpu_custom_call.1} parent=1 // pred_fallthru
      _
    // Predicated region
    $region130: #{tpu_custom_call.1} parent=1 // pred_check
      _
    $region131: #{tpu_custom_call.1} parent=1 // pred_check_branch
      %409 = sbr.rel (0) target = $region133
    $region132: #{tpu_custom_call.1} parent=1 // pred_region
      _
    $region133: #{tpu_custom_call.1} parent=1 // pred_fallthru
      _
    // Predicated region
    $region134: #{tpu_custom_call.1} parent=1 // pred_check
      _
    $region135: #{tpu_custom_call.1} parent=1 // pred_check_branch
      %411 = sbr.rel (0) target = $region137
    $region136: #{tpu_custom_call.1} parent=1 // pred_region
      %413 = vsyncadd [#allocation33], 0
      %s415 = sshll.u32 %s67, 4
      %s416 = int_to_ptr.hbm [resolvable:$true] %s415
      %s417 = sshll.u32 [#allocation34], 4
      %s418 = int_to_ptr.vmem [resolvable:$true] %s417
      %420 = dma.hbm_to_vmem [thread:$0]  %s416, 16, %s418, [#allocation33]
    $region137: #{tpu_custom_call.1} parent=1 // pred_fallthru
      _
    // Predicated region
    $region138: #{tpu_custom_call.1} parent=1 // pred_check
      _
    $region139: #{tpu_custom_call.1} parent=1 // pred_check_branch
      %422 = sbr.rel (0) target = $region141
    $region140: #{tpu_custom_call.1} parent=1 // pred_region
      %424 = vsyncadd [#allocation36], 0
      %s426 = sshll.u32 %s69, 4
      %s427 = int_to_ptr.hbm [resolvable:$true] %s426
      %s428 = sshll.u32 [#allocation35], 4
      %s429 = int_to_ptr.vmem [resolvable:$true] %s428
      %431 = dma.hbm_to_vmem [thread:$0]  %s427, 16, %s429, [#allocation36]
    $region141: #{tpu_custom_call.1} parent=1 // pred_fallthru
      _
    // Predicated region
    $region142: #{tpu_custom_call.1} parent=1 // pred_check
      _
    $region143: #{tpu_custom_call.1} parent=1 // pred_check_branch
      %433 = sbr.rel (0) target = $region145
    $region144: #{tpu_custom_call.1} parent=1 // pred_region
      _
    $region145: #{tpu_custom_call.1} parent=1 // pred_fallthru
      _
    // Predicated region
    $region146: #{tpu_custom_call.1} parent=1 // pred_check
      _
    $region147: #{tpu_custom_call.1} parent=1 // pred_check_branch
      %435 = sbr.rel (0) target = $region149
    $region148: #{tpu_custom_call.1} parent=1 // pred_region
      %437 = vsyncadd [#allocation36], 0
      %s439 = sshll.u32 %s73, 4
      %s440 = int_to_ptr.hbm [resolvable:$true] %s439
      %s441 = sshll.u32 [#allocation37], 4
      %s442 = int_to_ptr.vmem [resolvable:$true] %s441
      %444 = dma.hbm_to_vmem [thread:$0]  %s440, 16, %s442, [#allocation36]
    $region149: #{tpu_custom_call.1} parent=1 // pred_fallthru
      _
    // Predicated region
    $region150: #{tpu_custom_call.1} parent=1 // pred_check
      _
    $region151: #{tpu_custom_call.1} parent=1 // pred_check_branch
      %446 = sbr.rel (0) target = $region153
    $region152: #{tpu_custom_call.1} parent=1 // pred_region
      %448 = vsyncadd [#allocation39], 0
      %s449 = sshll.u32 %s75, 4
      %s450 = int_to_ptr.hbm [resolvable:$true] %s449
      %s451 = sshll.u32 [#allocation38], 4
      %s452 = int_to_ptr.vmem [resolvable:$true] %s451
      %457 = dma.hbm_to_vmem [thread:$0]  %s450, 1024, %s452, [#allocation39], 128, 128, 8
    $region153: #{tpu_custom_call.1} parent=1 // pred_fallthru
      _
    // Predicated region
    $region154: #{tpu_custom_call.1} parent=1 // pred_check
      _
    $region155: #{tpu_custom_call.1} parent=1 // pred_check_branch
      %459 = sbr.rel (0) target = $region157
    $region156: #{tpu_custom_call.1} parent=1 // pred_region
      _
    $region157: #{tpu_custom_call.1} parent=1 // pred_fallthru
      _
    // Predicated region
    $region158: #{tpu_custom_call.1} parent=1 // pred_check
      _
    $region159: #{tpu_custom_call.1} parent=1 // pred_check_branch
      %461 = sbr.rel (0) target = $region161
    $region160: #{tpu_custom_call.1} parent=1 // pred_region
      %463 = vsyncadd [#allocation39], 0
      %s464 = sshll.u32 %s79, 4
      %s465 = int_to_ptr.hbm [resolvable:$true] %s464
      %s466 = sshll.u32 [#allocation40], 4
      %s467 = int_to_ptr.vmem [resolvable:$true] %s466
      %472 = dma.hbm_to_vmem [thread:$0]  %s465, 1024, %s467, [#allocation39], 128, 128, 8
    $region161: #{tpu_custom_call.1} parent=1 // pred_fallthru
      _
    // Predicated region
    $region162: #{tpu_custom_call.1} parent=1 // pred_check
      _
    $region163: #{tpu_custom_call.1} parent=1 // pred_check_branch
      %474 = sbr.rel (0) target = $region165
    $region164: #{tpu_custom_call.1} parent=1 // pred_region
      _
    $region165: #{tpu_custom_call.1} parent=1 // pred_fallthru
      _
    // Predicated region
    $region166: #{tpu_custom_call.1} parent=1 // pred_check
      _
    $region167: #{tpu_custom_call.1} parent=1 // pred_check_branch
      %476 = sbr.rel (0) target = $region169
    $region168: #{tpu_custom_call.1} parent=1 // pred_region
      _
    $region169: #{tpu_custom_call.1} parent=1 // pred_fallthru
      _
    // Predicated region
    $region170: #{tpu_custom_call.1} parent=1 // pred_check
      _
    $region171: #{tpu_custom_call.1} parent=1 // pred_check_branch
      %478 = sbr.rel (0) target = $region173
    $region172: #{tpu_custom_call.1} parent=1 // pred_region
      _
    $region173: #{tpu_custom_call.1} parent=1 // pred_fallthru
      _
    // Predicated region
    $region174: #{tpu_custom_call.1} parent=1 // pred_check
      _
    $region175: #{tpu_custom_call.1} parent=1 // pred_check_branch
      %480 = sbr.rel (0) target = $region177
    $region176: #{tpu_custom_call.1} parent=1 // pred_region
      %482 = vsyncadd [#allocation42], 0
      %s483 = sshll.u32 %s87, 4
      %s484 = int_to_ptr.hbm [resolvable:$true] %s483
      %s485 = sshll.u32 [#allocation41], 4
      %s486 = int_to_ptr.vmem [resolvable:$true] %s485
      %491 = dma.hbm_to_vmem [thread:$0]  %s484, 1024, %s486, [#allocation42], 128, 128, 8
    $region177: #{tpu_custom_call.1} parent=1 // pred_fallthru
      _
    // Predicated region
    $region178: #{tpu_custom_call.1} parent=1 // pred_check
      _
    $region179: #{tpu_custom_call.1} parent=1 // pred_check_branch
      %493 = sbr.rel (0) target = $region181
    $region180: #{tpu_custom_call.1} parent=1 // pred_region
      _
    $region181: #{tpu_custom_call.1} parent=1 // pred_fallthru
      _
    // Predicated region
    $region182: #{tpu_custom_call.1} parent=1 // pred_check
      _
    $region183: #{tpu_custom_call.1} parent=1 // pred_check_branch
      %495 = sbr.rel (0) target = $region185
    $region184: #{tpu_custom_call.1} parent=1 // pred_region
      %497 = vsyncadd [#allocation42], 0
      %s498 = sshll.u32 %s91, 4
      %s499 = int_to_ptr.hbm [resolvable:$true] %s498
      %s500 = sshll.u32 [#allocation43], 4
      %s501 = int_to_ptr.vmem [resolvable:$true] %s500
      %506 = dma.hbm_to_vmem [thread:$0]  %s499, 1024, %s501, [#allocation42], 128, 128, 8
    $region185: #{tpu_custom_call.1} parent=1 // pred_fallthru
      _
    // Predicated region
    $region186: #{tpu_custom_call.1} parent=1 // pred_check
      _
    $region187: #{tpu_custom_call.1} parent=1 // pred_check_branch
      %508 = sbr.rel (0) target = $region189
    $region188: #{tpu_custom_call.1} parent=1 // pred_region
      _
    $region189: #{tpu_custom_call.1} parent=1 // pred_fallthru
      _
    // Predicated region
    $region190: #{tpu_custom_call.1} parent=1 // pred_check
      _
    $region191: #{tpu_custom_call.1} parent=1 // pred_check_branch
      %510 = sbr.rel (0) target = $region193
    $region192: #{tpu_custom_call.1} parent=1 // pred_region
      _
    $region193: #{tpu_custom_call.1} parent=1 // pred_fallthru
      _
    // Predicated region
    $region194: #{tpu_custom_call.1} parent=1 // pred_check
      _
    $region195: #{tpu_custom_call.1} parent=1 // pred_check_branch
      %512 = sbr.rel (0) target = $region197
    $region196: #{tpu_custom_call.1} parent=1 // pred_region
      _
    $region197: #{tpu_custom_call.1} parent=1 // pred_fallthru
      _
    // Predicated region
    $region198: #{tpu_custom_call.1} parent=1 // pred_check
      _
    $region199: #{tpu_custom_call.1} parent=1 // pred_check_branch
      %514 = sbr.rel (0) target = $region201
    $region200: #{tpu_custom_call.1} parent=1 // pred_region
      %516 = vsyncadd [#allocation45], 0
      %s518 = sshll.u32 %s99, 4
      %s519 = int_to_ptr.hbm [resolvable:$true] %s518
      %s520 = sshll.u32 [#allocation44], 4
      %s521 = int_to_ptr.vmem [resolvable:$true] %s520
      %523 = dma.hbm_to_vmem [thread:$0]  %s519, 16, %s521, [#allocation45]
    $region201: #{tpu_custom_call.1} parent=1 // pred_fallthru
      _
    // Predicated region
    $region202: #{tpu_custom_call.1} parent=1 // pred_check
      _
    $region203: #{tpu_custom_call.1} parent=1 // pred_check_branch
      %525 = sbr.rel (0) target = $region205
    $region204: #{tpu_custom_call.1} parent=1 // pred_region
      _
    $region205: #{tpu_custom_call.1} parent=1 // pred_fallthru
      _
    // Predicated region
    $region206: #{tpu_custom_call.1} parent=1 // pred_check
      _
    $region207: #{tpu_custom_call.1} parent=1 // pred_check_branch
      %527 = sbr.rel (0) target = $region209
    $region208: #{tpu_custom_call.1} parent=1 // pred_region
      _
    $region209: #{tpu_custom_call.1} parent=1 // pred_fallthru
      _
    // Predicated region
    $region210: #{tpu_custom_call.1} parent=1 // pred_check
      _
    $region211: #{tpu_custom_call.1} parent=1 // pred_check_branch
      %529 = sbr.rel (0) target = $region213
    $region212: #{tpu_custom_call.1} parent=1 // pred_region
      _
    $region213: #{tpu_custom_call.1} parent=1 // pred_fallthru
      _
    // Predicated region
    $region214: #{tpu_custom_call.1} parent=1 // pred_check
      _
    $region215: #{tpu_custom_call.1} parent=1 // pred_check_branch
      %531 = sbr.rel (0) target = $region217
    $region216: #{tpu_custom_call.1} parent=1 // pred_region
      _
    $region217: #{tpu_custom_call.1} parent=1 // pred_fallthru
      _
    // Predicated region
    $region218: #{tpu_custom_call.1} parent=1 // pred_check
      _
    $region219: #{tpu_custom_call.1} parent=1 // pred_check_branch
      %533 = sbr.rel (0) target = $region221
    $region220: #{tpu_custom_call.1} parent=1 // pred_region
      _
    $region221: #{tpu_custom_call.1} parent=1 // pred_fallthru
      _
    // Predicated region
    $region222: #{tpu_custom_call.1} parent=1 // pred_check
      _
    $region223: #{tpu_custom_call.1} parent=1 // pred_check_branch
      %535 = sbr.rel (0) target = $region225
    $region224: #{tpu_custom_call.1} parent=1 // pred_region
      %537 = dma.done [#allocation3], 256
    $region225: #{tpu_custom_call.1} parent=1 // pred_fallthru
      _
    // Predicated region
    $region226: #{tpu_custom_call.1} parent=1 // pred_check
      _
    $region227: #{tpu_custom_call.1} parent=1 // pred_check_branch
      %539 = sbr.rel (0) target = $region229
    $region228: #{tpu_custom_call.1} parent=1 // pred_region
      %541 = dma.done [#allocation6], 256
    $region229: #{tpu_custom_call.1} parent=1 // pred_fallthru
      _
    // Predicated region
    $region230: #{tpu_custom_call.1} parent=1 // pred_check
      _
    $region231: #{tpu_custom_call.1} parent=1 // pred_check_branch
      %543 = sbr.rel (0) target = $region233
    $region232: #{tpu_custom_call.1} parent=1 // pred_region
      %545 = dma.done [#allocation6], 256
    $region233: #{tpu_custom_call.1} parent=1 // pred_fallthru
      _
    // Predicated region
    $region234: #{tpu_custom_call.1} parent=1 // pred_check
      _
    $region235: #{tpu_custom_call.1} parent=1 // pred_check_branch
      %547 = sbr.rel (0) target = $region237
    $region236: #{tpu_custom_call.1} parent=1 // pred_region
      %549 = dma.done [#allocation9], 256
    $region237: #{tpu_custom_call.1} parent=1 // pred_fallthru
      _
    // Predicated region
    $region238: #{tpu_custom_call.1} parent=1 // pred_check
      _
    $region239: #{tpu_custom_call.1} parent=1 // pred_check_branch
      %551 = sbr.rel (0) target = $region241
    $region240: #{tpu_custom_call.1} parent=1 // pred_region
      %553 = dma.done [#allocation9], 16
    $region241: #{tpu_custom_call.1} parent=1 // pred_fallthru
      _
    // Predicated region
    $region242: #{tpu_custom_call.1} parent=1 // pred_check
      _
    $region243: #{tpu_custom_call.1} parent=1 // pred_check_branch
      %555 = sbr.rel (0) target = $region245
    $region244: #{tpu_custom_call.1} parent=1 // pred_region
      %557 = dma.done [#allocation12], 1024
    $region245: #{tpu_custom_call.1} parent=1 // pred_fallthru
      _
    // Predicated region
    $region246: #{tpu_custom_call.1} parent=1 // pred_check
      _
    $region247: #{tpu_custom_call.1} parent=1 // pred_check_branch
      %559 = sbr.rel (0) target = $region249
    $region248: #{tpu_custom_call.1} parent=1 // pred_region
      %561 = dma.done [#allocation12], 1024
    $region249: #{tpu_custom_call.1} parent=1 // pred_fallthru
      _
    // Predicated region
    $region250: #{tpu_custom_call.1} parent=1 // pred_check
      _
    $region251: #{tpu_custom_call.1} parent=1 // pred_check_branch
      %563 = sbr.rel (0) target = $region253
    $region252: #{tpu_custom_call.1} parent=1 // pred_region
      %565 = dma.done [#allocation15], 1024
    $region253: #{tpu_custom_call.1} parent=1 // pred_fallthru
      _
    // Predicated region
    $region254: #{tpu_custom_call.1} parent=1 // pred_check
      _
    $region255: #{tpu_custom_call.1} parent=1 // pred_check_branch
      %567 = sbr.rel (0) target = $region257
    $region256: #{tpu_custom_call.1} parent=1 // pred_region
      %569 = dma.done [#allocation15], 32
    $region257: #{tpu_custom_call.1} parent=1 // pred_fallthru
      _
    // Predicated region
    $region258: #{tpu_custom_call.1} parent=1 // pred_check
      _
    $region259: #{tpu_custom_call.1} parent=1 // pred_check_branch
      %571 = sbr.rel (0) target = $region261
    $region260: #{tpu_custom_call.1} parent=1 // pred_region
      %573 = dma.done [#allocation18], 32
    $region261: #{tpu_custom_call.1} parent=1 // pred_fallthru
      _
    // Predicated region
    $region262: #{tpu_custom_call.1} parent=1 // pred_check
      _
    $region263: #{tpu_custom_call.1} parent=1 // pred_check_branch
      %575 = sbr.rel (0) target = $region265
    $region264: #{tpu_custom_call.1} parent=1 // pred_region
      %577 = dma.done [#allocation18], 16
    $region265: #{tpu_custom_call.1} parent=1 // pred_fallthru
      _
    // Predicated region
    $region266: #{tpu_custom_call.1} parent=1 // pred_check
      _
    $region267: #{tpu_custom_call.1} parent=1 // pred_check_branch
      %579 = sbr.rel (0) target = $region269
    $region268: #{tpu_custom_call.1} parent=1 // pred_region
      %581 = dma.done [#allocation21], 16
    $region269: #{tpu_custom_call.1} parent=1 // pred_fallthru
      _
    // Predicated region
    $region270: #{tpu_custom_call.1} parent=1 // pred_check
      _
    $region271: #{tpu_custom_call.1} parent=1 // pred_check_branch
      %583 = sbr.rel (0) target = $region273
    $region272: #{tpu_custom_call.1} parent=1 // pred_region
      %585 = dma.done [#allocation21], 16
    $region273: #{tpu_custom_call.1} parent=1 // pred_fallthru
      _
    // Predicated region
    $region274: #{tpu_custom_call.1} parent=1 // pred_check
      _
    $region275: #{tpu_custom_call.1} parent=1 // pred_check_branch
      %587 = sbr.rel (0) target = $region277
    $region276: #{tpu_custom_call.1} parent=1 // pred_region
      %589 = dma.done [#allocation24], 1024
    $region277: #{tpu_custom_call.1} parent=1 // pred_fallthru
      _
    // Predicated region
    $region278: #{tpu_custom_call.1} parent=1 // pred_check
      _
    $region279: #{tpu_custom_call.1} parent=1 // pred_check_branch
      %591 = sbr.rel (0) target = $region281
    $region280: #{tpu_custom_call.1} parent=1 // pred_region
      %593 = dma.done [#allocation24], 32
    $region281: #{tpu_custom_call.1} parent=1 // pred_fallthru
      _
    // Predicated region
    $region282: #{tpu_custom_call.1} parent=1 // pred_check
      _
    $region283: #{tpu_custom_call.1} parent=1 // pred_check_branch
      %595 = sbr.rel (0) target = $region285
    $region284: #{tpu_custom_call.1} parent=1 // pred_region
      %597 = dma.done [#allocation27], 1024
    $region285: #{tpu_custom_call.1} parent=1 // pred_fallthru
      _
    // Predicated region
    $region286: #{tpu_custom_call.1} parent=1 // pred_check
      _
    $region287: #{tpu_custom_call.1} parent=1 // pred_check_branch
      %599 = sbr.rel (0) target = $region289
    $region288: #{tpu_custom_call.1} parent=1 // pred_region
      %601 = dma.done [#allocation27], 32
    $region289: #{tpu_custom_call.1} parent=1 // pred_fallthru
      _
    // Predicated region
    $region290: #{tpu_custom_call.1} parent=1 // pred_check
      _
    $region291: #{tpu_custom_call.1} parent=1 // pred_check_branch
      %603 = sbr.rel (0) target = $region293
    $region292: #{tpu_custom_call.1} parent=1 // pred_region
      %605 = dma.done [#allocation30], 1024
    $region293: #{tpu_custom_call.1} parent=1 // pred_fallthru
      _
    // Predicated region
    $region294: #{tpu_custom_call.1} parent=1 // pred_check
      _
    $region295: #{tpu_custom_call.1} parent=1 // pred_check_branch
      %607 = sbr.rel (0) target = $region297
    $region296: #{tpu_custom_call.1} parent=1 // pred_region
      %609 = dma.done [#allocation30], 1024
    $region297: #{tpu_custom_call.1} parent=1 // pred_fallthru
      _
    // Predicated region
    $region298: #{tpu_custom_call.1} parent=1 // pred_check
      _
    $region299: #{tpu_custom_call.1} parent=1 // pred_check_branch
      %611 = sbr.rel (0) target = $region301
    $region300: #{tpu_custom_call.1} parent=1 // pred_region
      %613 = dma.done [#allocation33], 32
    $region301: #{tpu_custom_call.1} parent=1 // pred_fallthru
      _
    // Predicated region
    $region302: #{tpu_custom_call.1} parent=1 // pred_check
      _
    $region303: #{tpu_custom_call.1} parent=1 // pred_check_branch
      %615 = sbr.rel (0) target = $region305
    $region304: #{tpu_custom_call.1} parent=1 // pred_region
      %617 = dma.done [#allocation33], 16
    $region305: #{tpu_custom_call.1} parent=1 // pred_fallthru
      _
    // Predicated region
    $region306: #{tpu_custom_call.1} parent=1 // pred_check
      _
    $region307: #{tpu_custom_call.1} parent=1 // pred_check_branch
      %619 = sbr.rel (0) target = $region309
    $region308: #{tpu_custom_call.1} parent=1 // pred_region
      %621 = dma.done [#allocation36], 16
    $region309: #{tpu_custom_call.1} parent=1 // pred_fallthru
      _
    // Predicated region
    $region310: #{tpu_custom_call.1} parent=1 // pred_check
      _
    $region311: #{tpu_custom_call.1} parent=1 // pred_check_branch
      %623 = sbr.rel (0) target = $region313
    $region312: #{tpu_custom_call.1} parent=1 // pred_region
      %625 = dma.done [#allocation36], 16
    $region313: #{tpu_custom_call.1} parent=1 // pred_fallthru
      _
    // Predicated region
    $region314: #{tpu_custom_call.1} parent=1 // pred_check
      _
    $region315: #{tpu_custom_call.1} parent=1 // pred_check_branch
      %627 = sbr.rel (0) target = $region317
    $region316: #{tpu_custom_call.1} parent=1 // pred_region
      %629 = dma.done [#allocation39], 1024
    $region317: #{tpu_custom_call.1} parent=1 // pred_fallthru
      _
    // Predicated region
    $region318: #{tpu_custom_call.1} parent=1 // pred_check
      _
    $region319: #{tpu_custom_call.1} parent=1 // pred_check_branch
      %631 = sbr.rel (0) target = $region321
    $region320: #{tpu_custom_call.1} parent=1 // pred_region
      %633 = dma.done [#allocation39], 1024
    $region321: #{tpu_custom_call.1} parent=1 // pred_fallthru
      _
    // Predicated region
    $region322: #{tpu_custom_call.1} parent=1 // pred_check
      _
    $region323: #{tpu_custom_call.1} parent=1 // pred_check_branch
      %635 = sbr.rel (0) target = $region325
    $region324: #{tpu_custom_call.1} parent=1 // pred_region
      %637 = dma.done [#allocation42], 1024
    $region325: #{tpu_custom_call.1} parent=1 // pred_fallthru
      _
    // Predicated region
    $region326: #{tpu_custom_call.1} parent=1 // pred_check
      _
    $region327: #{tpu_custom_call.1} parent=1 // pred_check_branch
      %639 = sbr.rel (0) target = $region329
    $region328: #{tpu_custom_call.1} parent=1 // pred_region
      %641 = dma.done [#allocation42], 1024
    $region329: #{tpu_custom_call.1} parent=1 // pred_fallthru
      _
    // Predicated region
    $region330: #{tpu_custom_call.1} parent=1 // pred_check
      _
    $region331: #{tpu_custom_call.1} parent=1 // pred_check_branch
      %643 = sbr.rel (0) target = $region333
    $region332: #{tpu_custom_call.1} parent=1 // pred_region
      %645 = dma.done [#allocation45], 16
    $region333: #{tpu_custom_call.1} parent=1 // pred_fallthru
      _
    %v646 = vld [vmem:[#allocation2] sm:$0xff]
    %v647 = vld [vmem:[#allocation2 + $0x8] sm:$0xff]
    %v648 = vld [vmem:[#allocation8] sm:$0xff]
    %v649 = vld [vmem:[#allocation8 + $0x8] sm:$0xf]
    %v650 = vld [vmem:[#allocation10] sm:$0x1]
    %v652 = vperm.slane %v650, 0
    %vm654 = vcmask 97280
    %v656 = vsel %vm654, %v646, 0
    %v659 = vsel %vm654, %v647, 0
    %vm661 = vcmask 1043456
    %v663 = vsel %vm661, %v649, 0
    %665 = vmatpush.msra.mxu0 0.0
    %666 = vmatpush.msra.mxu0 0.0
    %667 = vmatpush.msra.mxu0 0.0
    %668 = vmatpush.msra.mxu0 0.0
    %669 = vmatpush.msra.mxu0 0.0
    %670 = vmatpush.msra.mxu0 0.0
    %671 = vmatpush.msra.mxu0 0.0
    %672 = vmatpush.msra.mxu0 0.0
    %673 = vmatpush.msra.mxu0 0.0
    %674 = vmatpush.msra.mxu0 0.0
    %675 = vmatpush.msra.mxu0 0.0
    %676 = vmatpush.msra.mxu0 0.0
    %677 = vmatpush.msra.mxu0 0.0
    %678 = vmatpush.msra.mxu0 0.0
    %679 = vmatpush.msra.mxu0 %v663
    %680 = vmatpush.msra.mxu0 %v648
    %681 = vmatmul.f32.gmra.mxu0 %v656
    %v682 = vpop.f32.mrf.mxu0
    %v683 = vadd.f32 %v652, %v682
    %684 = vmatmul.f32.gmra.mxu0 %v659
    %v685 = vpop.f32.mrf.mxu0
    %v686 = vadd.f32 %v652, %v685
    %687 = vdwg.mxu0
    %v688 = vmax.f32 %v683, 0.0
    %v689 = vmax.f32 %v686, 0.0
    %v690 = vld [vmem:[%s11] sm:$0xff]
    %v691 = vld [vmem:[%s11 + $0x8] sm:$0xff]
    %v692 = vld [vmem:[%s11 + $0x10] sm:$0xff]
    %v693 = vld [vmem:[%s11 + $0x18] sm:$0xff]
    %v694 = vld [vmem:[%s13] sm:$0x1]
    %v696 = vperm.slane %v694, 0
    %vm698 = vcmask 261120
    %v700 = vsel %vm698, %v688, 0
    %v703 = vsel %vm698, %v689, 0
    %705 = vmatpush.msra.mxu0 0.0
    %706 = vmatpush.msra.mxu0 0.0
    %707 = vmatpush.msra.mxu0 0.0
    %708 = vmatpush.msra.mxu0 0.0
    %709 = vmatpush.msra.mxu0 0.0
    %710 = vmatpush.msra.mxu0 0.0
    %711 = vmatpush.msra.mxu0 0.0
    %712 = vmatpush.msra.mxu0 0.0
    %713 = vmatpush.msra.mxu0 0.0
    %714 = vmatpush.msra.mxu0 0.0
    %715 = vmatpush.msra.mxu0 0.0
    %716 = vmatpush.msra.mxu0 0.0
    %717 = vmatpush.msra.mxu0 %v693
    %718 = vmatpush.msra.mxu0 %v692
    %719 = vmatpush.msra.mxu0 %v691
    %720 = vmatpush.msra.mxu0 %v690
    %721 = vmatmul.f32.gmra.mxu0 %v700
    %v722 = vpop.f32.mrf.mxu0
    %v723 = vadd.f32 %v696, %v722
    %724 = vmatmul.f32.gmra.mxu0 %v703
    %v725 = vpop.f32.mrf.mxu0
    %v726 = vadd.f32 %v696, %v725
    %727 = vdwg.mxu0
    %v728 = vld [vmem:[#allocation11] sm:$0xff]
    %v729 = vld [vmem:[#allocation11 + $0x8] sm:$0xff]
    %v730 = vld [vmem:[#allocation11 + $0x10] sm:$0xff]
    %v731 = vld [vmem:[#allocation11 + $0x18] sm:$0xff]
    %v732 = vld [vmem:[%s17] sm:$0x1]
    %734 = vrot.lane.b32.xlu0 %v723, 96
    %v735 = vpop.permute.xlu0 %734
    %vm736 = vcmask 64512
    %v737 = vsel %vm736, %v723, 0
    %v739 = vsel %vm736, %v735, 0
    %741 = vmatpush.xpose.msra.mxu0 0.0
    %742 = vmatpush.xpose.msra.mxu0 0.0
    %743 = vmatpush.xpose.msra.mxu0 0.0
    %744 = vmatpush.xpose.msra.mxu0 0.0
    %745 = vmatpush.xpose.msra.mxu0 0.0
    %746 = vmatpush.xpose.msra.mxu0 0.0
    %747 = vmatpush.xpose.msra.mxu0 0.0
    %748 = vmatpush.xpose.msra.mxu0 0.0
    %749 = vmatpush.xpose.msra.mxu0 0.0
    %750 = vmatpush.xpose.msra.mxu0 0.0
    %751 = vmatpush.xpose.msra.mxu0 0.0
    %752 = vmatpush.xpose.msra.mxu0 0.0
    %753 = vmatpush.xpose.msra.mxu0 0.0
    %754 = vmatpush.xpose.msra.mxu0 0.0
    %755 = vmatpush.xpose.msra.mxu0 0.0
    %756 = vmatpush.xpose.msra.mxu0 %v739
    %757 = vmatmul.f32.gmra.mxu0 %v737
    %v758 = vpop.f32.mrf.mxu0
    %v759 = vadd.f32 0.0, %v758
    %760 = vdwg.mxu0
    %762 = vrot.lane.b32.xlu0 %v726, 96
    %v763 = vpop.permute.xlu0 %762
    %v764 = vsel %vm736, %v726, 0
    %v766 = vsel %vm736, %v763, 0
    %768 = vmatpush.xpose.msra.mxu0 0.0
    %769 = vmatpush.xpose.msra.mxu0 0.0
    %770 = vmatpush.xpose.msra.mxu0 0.0
    %771 = vmatpush.xpose.msra.mxu0 0.0
    %772 = vmatpush.xpose.msra.mxu0 0.0
    %773 = vmatpush.xpose.msra.mxu0 0.0
    %774 = vmatpush.xpose.msra.mxu0 0.0
    %775 = vmatpush.xpose.msra.mxu0 0.0
    %776 = vmatpush.xpose.msra.mxu0 0.0
    %777 = vmatpush.xpose.msra.mxu0 0.0
    %778 = vmatpush.xpose.msra.mxu0 0.0
    %779 = vmatpush.xpose.msra.mxu0 0.0
    %780 = vmatpush.xpose.msra.mxu0 0.0
    %781 = vmatpush.xpose.msra.mxu0 0.0
    %782 = vmatpush.xpose.msra.mxu0 0.0
    %783 = vmatpush.xpose.msra.mxu0 %v766
    %784 = vmatmul.f32.gmra.mxu0 %v764
    %v785 = vpop.f32.mrf.mxu0
    %v786 = vadd.f32 0.0, %v785
    %787 = vdwg.mxu0
    %v788 = vmul.f32 %v759, 0.35355338
    %v789 = vmul.f32 %v786, 0.35355338
    %v790 = vsel %vm736, %v788, -inf
    %791 = vmax.xlane.f32.xlu0 %v790
    %v792 = vpop.xlane.xlu0 %791
    %v793 = vsel %vm736, %v789, -inf
    %794 = vmax.xlane.f32.xlu0 %v793
    %v795 = vpop.xlane.xlu0 %794
    %v796 = vsub.f32 %v788, %v792
    %v797 = vsub.f32 %v789, %v795
    %v798 = vmul.f32 %v796, 1.442695
    %v799 = vpow.pop %v798
    %v800 = vmul.f32 %v797, 1.442695
    %v801 = vpow.pop %v800
    %v802 = vsel %vm736, %v799, 0.0
    %803 = vadd.xlane.f32.xlu0 %v802
    %v804 = vpop.xlane.xlu0 %803
    %v805 = vsel %vm736, %v801, 0.0
    %806 = vadd.xlane.f32.xlu0 %v805
    %v807 = vpop.xlane.xlu0 %806
    %v808 = vrcp.pop %v804
    %v809 = vrcp.pop %v807
    %v810 = vmul.f32 %v799, %v808
    %v811 = vmul.f32 %v801, %v809
    %812 = vrot.lane.b32.xlu0 %v723, 64
    %v813 = vpop.permute.xlu0 %812
    %v816 = vsel %vm736, %v810, 0
    %818 = vmatpush.msra.mxu0 0.0
    %819 = vmatpush.msra.mxu0 0.0
    %820 = vmatpush.msra.mxu0 0.0
    %821 = vmatpush.msra.mxu0 0.0
    %822 = vmatpush.msra.mxu0 0.0
    %823 = vmatpush.msra.mxu0 0.0
    %824 = vmatpush.msra.mxu0 0.0
    %825 = vmatpush.msra.mxu0 0.0
    %826 = vmatpush.msra.mxu0 0.0
    %827 = vmatpush.msra.mxu0 0.0
    %828 = vmatpush.msra.mxu0 0.0
    %829 = vmatpush.msra.mxu0 0.0
    %830 = vmatpush.msra.mxu0 0.0
    %831 = vmatpush.msra.mxu0 0.0
    %832 = vmatpush.msra.mxu0 0.0
    %833 = vmatpush.msra.mxu0 %v813
    %834 = vmatmul.f32.gmra.mxu0 %v816
    %v835 = vpop.f32.mrf.mxu0
    %v836 = vadd.f32 0.0, %v835
    %837 = vdwg.mxu0
    %838 = vrot.lane.b32.xlu0 %v726, 64
    %v839 = vpop.permute.xlu0 %838
    %v842 = vsel %vm736, %v811, 0
    %844 = vmatpush.msra.mxu0 0.0
    %845 = vmatpush.msra.mxu0 0.0
    %846 = vmatpush.msra.mxu0 0.0
    %847 = vmatpush.msra.mxu0 0.0
    %848 = vmatpush.msra.mxu0 0.0
    %849 = vmatpush.msra.mxu0 0.0
    %850 = vmatpush.msra.mxu0 0.0
    %851 = vmatpush.msra.mxu0 0.0
    %852 = vmatpush.msra.mxu0 0.0
    %853 = vmatpush.msra.mxu0 0.0
    %854 = vmatpush.msra.mxu0 0.0
    %855 = vmatpush.msra.mxu0 0.0
    %856 = vmatpush.msra.mxu0 0.0
    %857 = vmatpush.msra.mxu0 0.0
    %858 = vmatpush.msra.mxu0 0.0
    %859 = vmatpush.msra.mxu0 %v839
    %860 = vmatmul.f32.gmra.mxu0 %v842
    %v861 = vpop.f32.mrf.mxu0
    %v862 = vadd.f32 0.0, %v861
    %863 = vdwg.mxu0
    %v865 = vsel %vm736, %v836, 0
    %v868 = vsel %vm736, %v862, 0
    %870 = vmatpush.msra.mxu0 0.0
    %871 = vmatpush.msra.mxu0 0.0
    %872 = vmatpush.msra.mxu0 0.0
    %873 = vmatpush.msra.mxu0 0.0
    %874 = vmatpush.msra.mxu0 0.0
    %875 = vmatpush.msra.mxu0 0.0
    %876 = vmatpush.msra.mxu0 0.0
    %877 = vmatpush.msra.mxu0 0.0
    %878 = vmatpush.msra.mxu0 0.0
    %879 = vmatpush.msra.mxu0 0.0
    %880 = vmatpush.msra.mxu0 0.0
    %881 = vmatpush.msra.mxu0 0.0
    %882 = vmatpush.msra.mxu0 0.0
    %883 = vmatpush.msra.mxu0 0.0
    %884 = vmatpush.msra.mxu0 0.0
    %885 = vmatpush.msra.mxu0 %v728
    %886 = vmatmul.f32.gmra.mxu0 %v865
    %v887 = vpop.f32.mrf.mxu0
    %v888 = vadd.f32 0.0, %v887
    %889 = vmatmul.f32.gmra.mxu0 %v868
    %v890 = vpop.f32.mrf.mxu0
    %v891 = vadd.f32 0.0, %v890
    %892 = vdwg.mxu0
    %v894 = vperm.slane %v732, 0
    %v896 = vadd.f32 %v894, %v888
    %v897 = vadd.f32 %v894, %v891
    %898 = vrot.lane.b32.xlu0 %v723, 120
    %v899 = vpop.permute.xlu0 %898
    %900 = vrot.lane.b32.xlu0 %v723, 88
    %v901 = vpop.permute.xlu0 %900
    %v902 = vsel %vm736, %v899, 0
    %v904 = vsel %vm736, %v901, 0
    %906 = vmatpush.xpose.msra.mxu0 0.0
    %907 = vmatpush.xpose.msra.mxu0 0.0
    %908 = vmatpush.xpose.msra.mxu0 0.0
    %909 = vmatpush.xpose.msra.mxu0 0.0
    %910 = vmatpush.xpose.msra.mxu0 0.0
    %911 = vmatpush.xpose.msra.mxu0 0.0
    %912 = vmatpush.xpose.msra.mxu0 0.0
    %913 = vmatpush.xpose.msra.mxu0 0.0
    %914 = vmatpush.xpose.msra.mxu0 0.0
    %915 = vmatpush.xpose.msra.mxu0 0.0
    %916 = vmatpush.xpose.msra.mxu0 0.0
    %917 = vmatpush.xpose.msra.mxu0 0.0
    %918 = vmatpush.xpose.msra.mxu0 0.0
    %919 = vmatpush.xpose.msra.mxu0 0.0
    %920 = vmatpush.xpose.msra.mxu0 0.0
    %921 = vmatpush.xpose.msra.mxu0 %v904
    %922 = vmatmul.f32.gmra.mxu0 %v902
    %v923 = vpop.f32.mrf.mxu0
    %v924 = vadd.f32 0.0, %v923
    %925 = vdwg.mxu0
    %926 = vrot.lane.b32.xlu0 %v726, 120
    %v927 = vpop.permute.xlu0 %926
    %928 = vrot.lane.b32.xlu0 %v726, 88
    %v929 = vpop.permute.xlu0 %928
    %v930 = vsel %vm736, %v927, 0
    %v932 = vsel %vm736, %v929, 0
    %934 = vmatpush.xpose.msra.mxu0 0.0
    %935 = vmatpush.xpose.msra.mxu0 0.0
    %936 = vmatpush.xpose.msra.mxu0 0.0
    %937 = vmatpush.xpose.msra.mxu0 0.0
    %938 = vmatpush.xpose.msra.mxu0 0.0
    %939 = vmatpush.xpose.msra.mxu0 0.0
    %940 = vmatpush.xpose.msra.mxu0 0.0
    %941 = vmatpush.xpose.msra.mxu0 0.0
    %942 = vmatpush.xpose.msra.mxu0 0.0
    %943 = vmatpush.xpose.msra.mxu0 0.0
    %944 = vmatpush.xpose.msra.mxu0 0.0
    %945 = vmatpush.xpose.msra.mxu0 0.0
    %946 = vmatpush.xpose.msra.mxu0 0.0
    %947 = vmatpush.xpose.msra.mxu0 0.0
    %948 = vmatpush.xpose.msra.mxu0 0.0
    %949 = vmatpush.xpose.msra.mxu0 %v932
    %950 = vmatmul.f32.gmra.mxu0 %v930
    %v951 = vpop.f32.mrf.mxu0
    %v952 = vadd.f32 0.0, %v951
    %953 = vdwg.mxu0
    %v954 = vmul.f32 %v924, 0.35355338
    %v955 = vmul.f32 %v952, 0.35355338
    %v956 = vsel %vm736, %v954, -inf
    %957 = vmax.xlane.f32.xlu0 %v956
    %v958 = vpop.xlane.xlu0 %957
    %v959 = vsel %vm736, %v955, -inf
    %960 = vmax.xlane.f32.xlu0 %v959
    %v961 = vpop.xlane.xlu0 %960
    %v962 = vsub.f32 %v954, %v958
    %v963 = vsub.f32 %v955, %v961
    %v964 = vmul.f32 %v962, 1.442695
    %v965 = vpow.pop %v964
    %v966 = vmul.f32 %v963, 1.442695
    %v967 = vpow.pop %v966
    %v968 = vsel %vm736, %v965, 0.0
    %969 = vadd.xlane.f32.xlu0 %v968
    %v970 = vpop.xlane.xlu0 %969
    %v971 = vsel %vm736, %v967, 0.0
    %972 = vadd.xlane.f32.xlu0 %v971
    %v973 = vpop.xlane.xlu0 %972
    %v974 = vrcp.pop %v970
    %v975 = vrcp.pop %v973
    %v976 = vmul.f32 %v965, %v974
    %v977 = vmul.f32 %v967, %v975
    %978 = vrot.lane.b32.xlu0 %v723, 56
    %v979 = vpop.permute.xlu0 %978
    %v982 = vsel %vm736, %v976, 0
    %984 = vmatpush.msra.mxu0 0.0
    %985 = vmatpush.msra.mxu0 0.0
    %986 = vmatpush.msra.mxu0 0.0
    %987 = vmatpush.msra.mxu0 0.0
    %988 = vmatpush.msra.mxu0 0.0
    %989 = vmatpush.msra.mxu0 0.0
    %990 = vmatpush.msra.mxu0 0.0
    %991 = vmatpush.msra.mxu0 0.0
    %992 = vmatpush.msra.mxu0 0.0
    %993 = vmatpush.msra.mxu0 0.0
    %994 = vmatpush.msra.mxu0 0.0
    %995 = vmatpush.msra.mxu0 0.0
    %996 = vmatpush.msra.mxu0 0.0
    %997 = vmatpush.msra.mxu0 0.0
    %998 = vmatpush.msra.mxu0 0.0
    %999 = vmatpush.msra.mxu0 %v979
    %1000 = vmatmul.f32.gmra.mxu0 %v982
    %v1001 = vpop.f32.mrf.mxu0
    %v1002 = vadd.f32 0.0, %v1001
    %1003 = vdwg.mxu0
    %1004 = vrot.lane.b32.xlu0 %v726, 56
    %v1005 = vpop.permute.xlu0 %1004
    %v1008 = vsel %vm736, %v977, 0
    %1010 = vmatpush.msra.mxu0 0.0
    %1011 = vmatpush.msra.mxu0 0.0
    %1012 = vmatpush.msra.mxu0 0.0
    %1013 = vmatpush.msra.mxu0 0.0
    %1014 = vmatpush.msra.mxu0 0.0
    %1015 = vmatpush.msra.mxu0 0.0
    %1016 = vmatpush.msra.mxu0 0.0
    %1017 = vmatpush.msra.mxu0 0.0
    %1018 = vmatpush.msra.mxu0 0.0
    %1019 = vmatpush.msra.mxu0 0.0
    %1020 = vmatpush.msra.mxu0 0.0
    %1021 = vmatpush.msra.mxu0 0.0
    %1022 = vmatpush.msra.mxu0 0.0
    %1023 = vmatpush.msra.mxu0 0.0
    %1024 = vmatpush.msra.mxu0 0.0
    %1025 = vmatpush.msra.mxu0 %v1005
    %1026 = vmatmul.f32.gmra.mxu0 %v1008
    %v1027 = vpop.f32.mrf.mxu0
    %v1028 = vadd.f32 0.0, %v1027
    %1029 = vdwg.mxu0
    %v1031 = vsel %vm736, %v1002, 0
    %v1034 = vsel %vm736, %v1028, 0
    %1036 = vmatpush.msra.mxu0 0.0
    %1037 = vmatpush.msra.mxu0 0.0
    %1038 = vmatpush.msra.mxu0 0.0
    %1039 = vmatpush.msra.mxu0 0.0
    %1040 = vmatpush.msra.mxu0 0.0
    %1041 = vmatpush.msra.mxu0 0.0
    %1042 = vmatpush.msra.mxu0 0.0
    %1043 = vmatpush.msra.mxu0 0.0
    %1044 = vmatpush.msra.mxu0 0.0
    %1045 = vmatpush.msra.mxu0 0.0
    %1046 = vmatpush.msra.mxu0 0.0
    %1047 = vmatpush.msra.mxu0 0.0
    %1048 = vmatpush.msra.mxu0 0.0
    %1049 = vmatpush.msra.mxu0 0.0
    %1050 = vmatpush.msra.mxu0 0.0
    %1051 = vmatpush.msra.mxu0 %v729
    %1052 = vmatmul.f32.gmra.mxu0 %v1031
    %v1053 = vpop.f32.mrf.mxu0
    %v1054 = vadd.f32 0.0, %v1053
    %1055 = vmatmul.f32.gmra.mxu0 %v1034
    %v1056 = vpop.f32.mrf.mxu0
    %v1057 = vadd.f32 0.0, %v1056
    %1058 = vdwg.mxu0
    %v1059 = vadd.f32 %v896, %v1054
    %v1060 = vadd.f32 %v897, %v1057
    %1061 = vrot.lane.b32.xlu0 %v723, 112
    %v1062 = vpop.permute.xlu0 %1061
    %1063 = vrot.lane.b32.xlu0 %v723, 80
    %v1064 = vpop.permute.xlu0 %1063
    %v1065 = vsel %vm736, %v1062, 0
    %v1067 = vsel %vm736, %v1064, 0
    %1069 = vmatpush.xpose.msra.mxu0 0.0
    %1070 = vmatpush.xpose.msra.mxu0 0.0
    %1071 = vmatpush.xpose.msra.mxu0 0.0
    %1072 = vmatpush.xpose.msra.mxu0 0.0
    %1073 = vmatpush.xpose.msra.mxu0 0.0
    %1074 = vmatpush.xpose.msra.mxu0 0.0
    %1075 = vmatpush.xpose.msra.mxu0 0.0
    %1076 = vmatpush.xpose.msra.mxu0 0.0
    %1077 = vmatpush.xpose.msra.mxu0 0.0
    %1078 = vmatpush.xpose.msra.mxu0 0.0
    %1079 = vmatpush.xpose.msra.mxu0 0.0
    %1080 = vmatpush.xpose.msra.mxu0 0.0
    %1081 = vmatpush.xpose.msra.mxu0 0.0
    %1082 = vmatpush.xpose.msra.mxu0 0.0
    %1083 = vmatpush.xpose.msra.mxu0 0.0
    %1084 = vmatpush.xpose.msra.mxu0 %v1067
    %1085 = vmatmul.f32.gmra.mxu0 %v1065
    %v1086 = vpop.f32.mrf.mxu0
    %v1087 = vadd.f32 0.0, %v1086
    %1088 = vdwg.mxu0
    %1089 = vrot.lane.b32.xlu0 %v726, 112
    %v1090 = vpop.permute.xlu0 %1089
    %1091 = vrot.lane.b32.xlu0 %v726, 80
    %v1092 = vpop.permute.xlu0 %1091
    %v1093 = vsel %vm736, %v1090, 0
    %v1095 = vsel %vm736, %v1092, 0
    %1097 = vmatpush.xpose.msra.mxu0 0.0
    %1098 = vmatpush.xpose.msra.mxu0 0.0
    %1099 = vmatpush.xpose.msra.mxu0 0.0
    %1100 = vmatpush.xpose.msra.mxu0 0.0
    %1101 = vmatpush.xpose.msra.mxu0 0.0
    %1102 = vmatpush.xpose.msra.mxu0 0.0
    %1103 = vmatpush.xpose.msra.mxu0 0.0
    %1104 = vmatpush.xpose.msra.mxu0 0.0
    %1105 = vmatpush.xpose.msra.mxu0 0.0
    %1106 = vmatpush.xpose.msra.mxu0 0.0
    %1107 = vmatpush.xpose.msra.mxu0 0.0
    %1108 = vmatpush.xpose.msra.mxu0 0.0
    %1109 = vmatpush.xpose.msra.mxu0 0.0
    %1110 = vmatpush.xpose.msra.mxu0 0.0
    %1111 = vmatpush.xpose.msra.mxu0 0.0
    %1112 = vmatpush.xpose.msra.mxu0 %v1095
    %1113 = vmatmul.f32.gmra.mxu0 %v1093
    %v1114 = vpop.f32.mrf.mxu0
    %v1115 = vadd.f32 0.0, %v1114
    %1116 = vdwg.mxu0
    %v1117 = vmul.f32 %v1087, 0.35355338
    %v1118 = vmul.f32 %v1115, 0.35355338
    %v1119 = vsel %vm736, %v1117, -inf
    %1120 = vmax.xlane.f32.xlu0 %v1119
    %v1121 = vpop.xlane.xlu0 %1120
    %v1122 = vsel %vm736, %v1118, -inf
    %1123 = vmax.xlane.f32.xlu0 %v1122
    %v1124 = vpop.xlane.xlu0 %1123
    %v1125 = vsub.f32 %v1117, %v1121
    %v1126 = vsub.f32 %v1118, %v1124
    %v1127 = vmul.f32 %v1125, 1.442695
    %v1128 = vpow.pop %v1127
    %v1129 = vmul.f32 %v1126, 1.442695
    %v1130 = vpow.pop %v1129
    %v1131 = vsel %vm736, %v1128, 0.0
    %1132 = vadd.xlane.f32.xlu0 %v1131
    %v1133 = vpop.xlane.xlu0 %1132
    %v1134 = vsel %vm736, %v1130, 0.0
    %1135 = vadd.xlane.f32.xlu0 %v1134
    %v1136 = vpop.xlane.xlu0 %1135
    %v1137 = vrcp.pop %v1133
    %v1138 = vrcp.pop %v1136
    %v1139 = vmul.f32 %v1128, %v1137
    %v1140 = vmul.f32 %v1130, %v1138
    %1141 = vrot.lane.b32.xlu0 %v723, 48
    %v1142 = vpop.permute.xlu0 %1141
    %v1145 = vsel %vm736, %v1139, 0
    %1147 = vmatpush.msra.mxu0 0.0
    %1148 = vmatpush.msra.mxu0 0.0
    %1149 = vmatpush.msra.mxu0 0.0
    %1150 = vmatpush.msra.mxu0 0.0
    %1151 = vmatpush.msra.mxu0 0.0
    %1152 = vmatpush.msra.mxu0 0.0
    %1153 = vmatpush.msra.mxu0 0.0
    %1154 = vmatpush.msra.mxu0 0.0
    %1155 = vmatpush.msra.mxu0 0.0
    %1156 = vmatpush.msra.mxu0 0.0
    %1157 = vmatpush.msra.mxu0 0.0
    %1158 = vmatpush.msra.mxu0 0.0
    %1159 = vmatpush.msra.mxu0 0.0
    %1160 = vmatpush.msra.mxu0 0.0
    %1161 = vmatpush.msra.mxu0 0.0
    %1162 = vmatpush.msra.mxu0 %v1142
    %1163 = vmatmul.f32.gmra.mxu0 %v1145
    %v1164 = vpop.f32.mrf.mxu0
    %v1165 = vadd.f32 0.0, %v1164
    %1166 = vdwg.mxu0
    %1167 = vrot.lane.b32.xlu0 %v726, 48
    %v1168 = vpop.permute.xlu0 %1167
    %v1171 = vsel %vm736, %v1140, 0
    %1173 = vmatpush.msra.mxu0 0.0
    %1174 = vmatpush.msra.mxu0 0.0
    %1175 = vmatpush.msra.mxu0 0.0
    %1176 = vmatpush.msra.mxu0 0.0
    %1177 = vmatpush.msra.mxu0 0.0
    %1178 = vmatpush.msra.mxu0 0.0
    %1179 = vmatpush.msra.mxu0 0.0
    %1180 = vmatpush.msra.mxu0 0.0
    %1181 = vmatpush.msra.mxu0 0.0
    %1182 = vmatpush.msra.mxu0 0.0
    %1183 = vmatpush.msra.mxu0 0.0
    %1184 = vmatpush.msra.mxu0 0.0
    %1185 = vmatpush.msra.mxu0 0.0
    %1186 = vmatpush.msra.mxu0 0.0
    %1187 = vmatpush.msra.mxu0 0.0
    %1188 = vmatpush.msra.mxu0 %v1168
    %1189 = vmatmul.f32.gmra.mxu0 %v1171
    %v1190 = vpop.f32.mrf.mxu0
    %v1191 = vadd.f32 0.0, %v1190
    %1192 = vdwg.mxu0
    %v1194 = vsel %vm736, %v1165, 0
    %v1197 = vsel %vm736, %v1191, 0
    %1199 = vmatpush.msra.mxu0 0.0
    %1200 = vmatpush.msra.mxu0 0.0
    %1201 = vmatpush.msra.mxu0 0.0
    %1202 = vmatpush.msra.mxu0 0.0
    %1203 = vmatpush.msra.mxu0 0.0
    %1204 = vmatpush.msra.mxu0 0.0
    %1205 = vmatpush.msra.mxu0 0.0
    %1206 = vmatpush.msra.mxu0 0.0
    %1207 = vmatpush.msra.mxu0 0.0
    %1208 = vmatpush.msra.mxu0 0.0
    %1209 = vmatpush.msra.mxu0 0.0
    %1210 = vmatpush.msra.mxu0 0.0
    %1211 = vmatpush.msra.mxu0 0.0
    %1212 = vmatpush.msra.mxu0 0.0
    %1213 = vmatpush.msra.mxu0 0.0
    %1214 = vmatpush.msra.mxu0 %v730
    %1215 = vmatmul.f32.gmra.mxu0 %v1194
    %v1216 = vpop.f32.mrf.mxu0
    %v1217 = vadd.f32 0.0, %v1216
    %1218 = vmatmul.f32.gmra.mxu0 %v1197
    %v1219 = vpop.f32.mrf.mxu0
    %v1220 = vadd.f32 0.0, %v1219
    %1221 = vdwg.mxu0
    %v1222 = vadd.f32 %v1059, %v1217
    %v1223 = vadd.f32 %v1060, %v1220
    %1224 = vrot.lane.b32.xlu0 %v723, 104
    %v1225 = vpop.permute.xlu0 %1224
    %1226 = vrot.lane.b32.xlu0 %v723, 72
    %v1227 = vpop.permute.xlu0 %1226
    %v1228 = vsel %vm736, %v1225, 0
    %v1230 = vsel %vm736, %v1227, 0
    %1232 = vmatpush.xpose.msra.mxu0 0.0
    %1233 = vmatpush.xpose.msra.mxu0 0.0
    %1234 = vmatpush.xpose.msra.mxu0 0.0
    %1235 = vmatpush.xpose.msra.mxu0 0.0
    %1236 = vmatpush.xpose.msra.mxu0 0.0
    %1237 = vmatpush.xpose.msra.mxu0 0.0
    %1238 = vmatpush.xpose.msra.mxu0 0.0
    %1239 = vmatpush.xpose.msra.mxu0 0.0
    %1240 = vmatpush.xpose.msra.mxu0 0.0
    %1241 = vmatpush.xpose.msra.mxu0 0.0
    %1242 = vmatpush.xpose.msra.mxu0 0.0
    %1243 = vmatpush.xpose.msra.mxu0 0.0
    %1244 = vmatpush.xpose.msra.mxu0 0.0
    %1245 = vmatpush.xpose.msra.mxu0 0.0
    %1246 = vmatpush.xpose.msra.mxu0 0.0
    %1247 = vmatpush.xpose.msra.mxu0 %v1230
    %1248 = vmatmul.f32.gmra.mxu0 %v1228
    %v1249 = vpop.f32.mrf.mxu0
    %v1250 = vadd.f32 0.0, %v1249
    %1251 = vdwg.mxu0
    %1252 = vrot.lane.b32.xlu0 %v726, 104
    %v1253 = vpop.permute.xlu0 %1252
    %1254 = vrot.lane.b32.xlu0 %v726, 72
    %v1255 = vpop.permute.xlu0 %1254
    %v1256 = vsel %vm736, %v1253, 0
    %v1258 = vsel %vm736, %v1255, 0
    %1260 = vmatpush.xpose.msra.mxu0 0.0
    %1261 = vmatpush.xpose.msra.mxu0 0.0
    %1262 = vmatpush.xpose.msra.mxu0 0.0
    %1263 = vmatpush.xpose.msra.mxu0 0.0
    %1264 = vmatpush.xpose.msra.mxu0 0.0
    %1265 = vmatpush.xpose.msra.mxu0 0.0
    %1266 = vmatpush.xpose.msra.mxu0 0.0
    %1267 = vmatpush.xpose.msra.mxu0 0.0
    %1268 = vmatpush.xpose.msra.mxu0 0.0
    %1269 = vmatpush.xpose.msra.mxu0 0.0
    %1270 = vmatpush.xpose.msra.mxu0 0.0
    %1271 = vmatpush.xpose.msra.mxu0 0.0
    %1272 = vmatpush.xpose.msra.mxu0 0.0
    %1273 = vmatpush.xpose.msra.mxu0 0.0
    %1274 = vmatpush.xpose.msra.mxu0 0.0
    %1275 = vmatpush.xpose.msra.mxu0 %v1258
    %1276 = vmatmul.f32.gmra.mxu0 %v1256
    %v1277 = vpop.f32.mrf.mxu0
    %v1278 = vadd.f32 0.0, %v1277
    %1279 = vdwg.mxu0
    %v1280 = vmul.f32 %v1250, 0.35355338
    %v1281 = vmul.f32 %v1278, 0.35355338
    %v1282 = vsel %vm736, %v1280, -inf
    %1283 = vmax.xlane.f32.xlu0 %v1282
    %v1284 = vpop.xlane.xlu0 %1283
    %v1285 = vsel %vm736, %v1281, -inf
    %1286 = vmax.xlane.f32.xlu0 %v1285
    %v1287 = vpop.xlane.xlu0 %1286
    %v1288 = vsub.f32 %v1280, %v1284
    %v1289 = vsub.f32 %v1281, %v1287
    %v1290 = vmul.f32 %v1288, 1.442695
    %v1291 = vpow.pop %v1290
    %v1292 = vmul.f32 %v1289, 1.442695
    %v1293 = vpow.pop %v1292
    %v1294 = vsel %vm736, %v1291, 0.0
    %1295 = vadd.xlane.f32.xlu0 %v1294
    %v1296 = vpop.xlane.xlu0 %1295
    %v1297 = vsel %vm736, %v1293, 0.0
    %1298 = vadd.xlane.f32.xlu0 %v1297
    %v1299 = vpop.xlane.xlu0 %1298
    %v1300 = vrcp.pop %v1296
    %v1301 = vrcp.pop %v1299
    %v1302 = vmul.f32 %v1291, %v1300
    %v1303 = vmul.f32 %v1293, %v1301
    %1304 = vrot.lane.b32.xlu0 %v723, 40
    %v1305 = vpop.permute.xlu0 %1304
    %v1308 = vsel %vm736, %v1302, 0
    %1310 = vmatpush.msra.mxu0 0.0
    %1311 = vmatpush.msra.mxu0 0.0
    %1312 = vmatpush.msra.mxu0 0.0
    %1313 = vmatpush.msra.mxu0 0.0
    %1314 = vmatpush.msra.mxu0 0.0
    %1315 = vmatpush.msra.mxu0 0.0
    %1316 = vmatpush.msra.mxu0 0.0
    %1317 = vmatpush.msra.mxu0 0.0
    %1318 = vmatpush.msra.mxu0 0.0
    %1319 = vmatpush.msra.mxu0 0.0
    %1320 = vmatpush.msra.mxu0 0.0
    %1321 = vmatpush.msra.mxu0 0.0
    %1322 = vmatpush.msra.mxu0 0.0
    %1323 = vmatpush.msra.mxu0 0.0
    %1324 = vmatpush.msra.mxu0 0.0
    %1325 = vmatpush.msra.mxu0 %v1305
    %1326 = vmatmul.f32.gmra.mxu0 %v1308
    %v1327 = vpop.f32.mrf.mxu0
    %v1328 = vadd.f32 0.0, %v1327
    %1329 = vdwg.mxu0
    %1330 = vrot.lane.b32.xlu0 %v726, 40
    %v1331 = vpop.permute.xlu0 %1330
    %v1334 = vsel %vm736, %v1303, 0
    %1336 = vmatpush.msra.mxu0 0.0
    %1337 = vmatpush.msra.mxu0 0.0
    %1338 = vmatpush.msra.mxu0 0.0
    %1339 = vmatpush.msra.mxu0 0.0
    %1340 = vmatpush.msra.mxu0 0.0
    %1341 = vmatpush.msra.mxu0 0.0
    %1342 = vmatpush.msra.mxu0 0.0
    %1343 = vmatpush.msra.mxu0 0.0
    %1344 = vmatpush.msra.mxu0 0.0
    %1345 = vmatpush.msra.mxu0 0.0
    %1346 = vmatpush.msra.mxu0 0.0
    %1347 = vmatpush.msra.mxu0 0.0
    %1348 = vmatpush.msra.mxu0 0.0
    %1349 = vmatpush.msra.mxu0 0.0
    %1350 = vmatpush.msra.mxu0 0.0
    %1351 = vmatpush.msra.mxu0 %v1331
    %1352 = vmatmul.f32.gmra.mxu0 %v1334
    %v1353 = vpop.f32.mrf.mxu0
    %v1354 = vadd.f32 0.0, %v1353
    %1355 = vdwg.mxu0
    %v1357 = vsel %vm736, %v1328, 0
    %v1360 = vsel %vm736, %v1354, 0
    %1362 = vmatpush.msra.mxu0 0.0
    %1363 = vmatpush.msra.mxu0 0.0
    %1364 = vmatpush.msra.mxu0 0.0
    %1365 = vmatpush.msra.mxu0 0.0
    %1366 = vmatpush.msra.mxu0 0.0
    %1367 = vmatpush.msra.mxu0 0.0
    %1368 = vmatpush.msra.mxu0 0.0
    %1369 = vmatpush.msra.mxu0 0.0
    %1370 = vmatpush.msra.mxu0 0.0
    %1371 = vmatpush.msra.mxu0 0.0
    %1372 = vmatpush.msra.mxu0 0.0
    %1373 = vmatpush.msra.mxu0 0.0
    %1374 = vmatpush.msra.mxu0 0.0
    %1375 = vmatpush.msra.mxu0 0.0
    %1376 = vmatpush.msra.mxu0 0.0
    %1377 = vmatpush.msra.mxu0 %v731
    %1378 = vmatmul.f32.gmra.mxu0 %v1357
    %v1379 = vpop.f32.mrf.mxu0
    %v1380 = vadd.f32 0.0, %v1379
    %1381 = vmatmul.f32.gmra.mxu0 %v1360
    %v1382 = vpop.f32.mrf.mxu0
    %v1383 = vadd.f32 0.0, %v1382
    %1384 = vdwg.mxu0
    %v1385 = vadd.f32 %v1222, %v1380
    %v1386 = vadd.f32 %v1223, %v1383
    %v1387 = vadd.f32 %v688, %v1385
    %v1388 = vadd.f32 %v689, %v1386
    %v1389 = vld [vmem:[%s19] sm:$0x1]
    %v1390 = vld [vmem:[%s21] sm:$0x1]
    %v1391 = vsel %vm698, %v1387, 0.0
    %1392 = vadd.xlane.f32.xlu0 %v1391
    %v1393 = vpop.xlane.xlu0 %1392
    %v1394 = vsel %vm698, %v1388, 0.0
    %1395 = vadd.xlane.f32.xlu0 %v1394
    %v1396 = vpop.xlane.xlu0 %1395
    %v1397 = vrcp.pop 32.0
    %v1398 = vmul.f32 32.0, %v1397
    %v1399 = vsub.f32 1.0, %v1398
    %v1400 = vmul.f32 %v1397, %v1399
    %v1401 = vadd.f32 %v1397, %v1400
    %vm1402 = vweird.f32 %v1397
    %v1403 = vsel %vm1402, %v1397, %v1401
    %v1404 = vmul.f32 %v1393, %v1403
    %v1405 = vmul.f32 %v1396, %v1403
    %v1406 = vsub.f32 %v1387, %v1404
    %v1407 = vsub.f32 %v1388, %v1405
    %v1408 = vmul.f32 %v1406, %v1406
    %v1409 = vmul.f32 %v1407, %v1407
    %v1410 = vsel %vm698, %v1408, 0.0
    %1411 = vadd.xlane.f32.xlu0 %v1410
    %v1412 = vpop.xlane.xlu0 %1411
    %v1413 = vsel %vm698, %v1409, 0.0
    %1414 = vadd.xlane.f32.xlu0 %v1413
    %v1415 = vpop.xlane.xlu0 %1414
    %v1416 = vmul.f32 %v1412, %v1403
    %v1417 = vmul.f32 %v1415, %v1403
    %v1418 = vadd.f32 %v1416, 1e-05
    %v1419 = vadd.f32 %v1417, 1e-05
    %v1420 = vrsqrt.pop %v1418
    %v1421 = vmul.f32 %v1420, %v1418
    %v1422 = vmul.f32 %v1421, %v1420
    %v1423 = vmul.f32 0.5, %v1422
    %v1424 = vsub.f32 1.5, %v1423
    %v1425 = vmul.f32 %v1420, %v1424
    %vm1426 = vweird.f32 %v1418
    %vm1427 = vweird.f32 %v1420
    %vm1428 = vmor %vm1426, %vm1427
    %v1429 = vsel %vm1428, %v1420, %v1425
    %v1430 = vrsqrt.pop %v1419
    %v1431 = vmul.f32 %v1430, %v1419
    %v1432 = vmul.f32 %v1431, %v1430
    %v1433 = vmul.f32 0.5, %v1432
    %v1434 = vsub.f32 1.5, %v1433
    %v1435 = vmul.f32 %v1430, %v1434
    %vm1436 = vweird.f32 %v1419
    %vm1437 = vweird.f32 %v1430
    %vm1438 = vmor %vm1436, %vm1437
    %v1439 = vsel %vm1438, %v1430, %v1435
    %v1440 = vmul.f32 %v1406, %v1429
    %v1441 = vmul.f32 %v1407, %v1439
    %v1443 = vperm.slane %v1389, 0
    %v1445 = vmul.f32 %v1440, %v1443
    %v1446 = vmul.f32 %v1441, %v1443
    %v1448 = vperm.slane %v1390, 0
    %v1450 = vadd.f32 %v1445, %v1448
    %v1451 = vadd.f32 %v1446, %v1448
    %v1452 = vld [vmem:[#allocation13] sm:$0xff]
    %v1453 = vld [vmem:[#allocation13 + $0x8] sm:$0xff]
    %v1454 = vld [vmem:[#allocation13 + $0x10] sm:$0xff]
    %v1455 = vld [vmem:[#allocation13 + $0x18] sm:$0xff]
    %v1456 = vld [vmem:[%s25] sm:$0x1]
    %v1458 = vperm.slane %v1456, 0
    %v1461 = vsel %vm698, %v1450, 0
    %v1464 = vsel %vm698, %v1451, 0
    %1466 = vmatpush.msra.mxu0 0.0
    %1467 = vmatpush.msra.mxu0 0.0
    %1468 = vmatpush.msra.mxu0 0.0
    %1469 = vmatpush.msra.mxu0 0.0
    %1470 = vmatpush.msra.mxu0 0.0
    %1471 = vmatpush.msra.mxu0 0.0
    %1472 = vmatpush.msra.mxu0 0.0
    %1473 = vmatpush.msra.mxu0 0.0
    %1474 = vmatpush.msra.mxu0 0.0
    %1475 = vmatpush.msra.mxu0 0.0
    %1476 = vmatpush.msra.mxu0 0.0
    %1477 = vmatpush.msra.mxu0 0.0
    %1478 = vmatpush.msra.mxu0 %v1455
    %1479 = vmatpush.msra.mxu0 %v1454
    %1480 = vmatpush.msra.mxu0 %v1453
    %1481 = vmatpush.msra.mxu0 %v1452
    %1482 = vmatmul.f32.gmra.mxu0 %v1461
    %v1483 = vpop.f32.mrf.mxu0
    %v1484 = vadd.f32 %v1458, %v1483
    %1485 = vmatmul.f32.gmra.mxu0 %v1464
    %v1486 = vpop.f32.mrf.mxu0
    %v1487 = vadd.f32 %v1458, %v1486
    %1488 = vdwg.mxu0
    %v1489 = vmul.f32 %v1484, 0.5
    %v1490 = vmul.f32 %v1487, 0.5
    %v1491 = vmul.f32 %v1484, 0.044715
    %v1492 = vmul.f32 %v1487, 0.044715
    %v1493 = vmul.f32 %v1491, %v1484
    %v1494 = vmul.f32 %v1492, %v1487
    %v1495 = vmul.f32 %v1493, %v1484
    %v1496 = vmul.f32 %v1494, %v1487
    %v1497 = vadd.f32 %v1484, %v1495
    %v1498 = vadd.f32 %v1487, %v1496
    %v1499 = vmul.f32 %v1497, 0.7978846
    %v1500 = vmul.f32 %v1498, 0.7978846
    %v1501 = vtanh.pop %v1499
    %v1502 = vtanh.pop %v1500
    %v1503 = vadd.f32 %v1501, 1.0
    %v1504 = vadd.f32 %v1502, 1.0
    %v1505 = vmul.f32 %v1489, %v1503
    %v1506 = vmul.f32 %v1490, %v1504
    %v1507 = vld [vmem:[#allocation14] sm:$0xff]
    %v1508 = vld [vmem:[#allocation14 + $0x8] sm:$0xff]
    %v1509 = vld [vmem:[#allocation14 + $0x10] sm:$0xff]
    %v1510 = vld [vmem:[#allocation14 + $0x18] sm:$0xff]
    %v1511 = vld [vmem:[%s29] sm:$0x1]
    %v1513 = vperm.slane %v1511, 0
    %v1516 = vsel %vm698, %v1505, 0
    %v1519 = vsel %vm698, %v1506, 0
    %1521 = vmatpush.msra.mxu0 0.0
    %1522 = vmatpush.msra.mxu0 0.0
    %1523 = vmatpush.msra.mxu0 0.0
    %1524 = vmatpush.msra.mxu0 0.0
    %1525 = vmatpush.msra.mxu0 0.0
    %1526 = vmatpush.msra.mxu0 0.0
    %1527 = vmatpush.msra.mxu0 0.0
    %1528 = vmatpush.msra.mxu0 0.0
    %1529 = vmatpush.msra.mxu0 0.0
    %1530 = vmatpush.msra.mxu0 0.0
    %1531 = vmatpush.msra.mxu0 0.0
    %1532 = vmatpush.msra.mxu0 0.0
    %1533 = vmatpush.msra.mxu0 %v1510
    %1534 = vmatpush.msra.mxu0 %v1509
    %1535 = vmatpush.msra.mxu0 %v1508
    %1536 = vmatpush.msra.mxu0 %v1507
    %1537 = vmatmul.f32.gmra.mxu0 %v1516
    %v1538 = vpop.f32.mrf.mxu0
    %v1539 = vadd.f32 %v1513, %v1538
    %1540 = vmatmul.f32.gmra.mxu0 %v1519
    %v1541 = vpop.f32.mrf.mxu0
    %v1542 = vadd.f32 %v1513, %v1541
    %1543 = vdwg.mxu0
    %v1544 = vadd.f32 %v1450, %v1539
    %v1545 = vadd.f32 %v1451, %v1542
    %v1546 = vld [vmem:[#allocation16] sm:$0x1]
    %v1547 = vld [vmem:[#allocation17] sm:$0x1]
    %v1548 = vsel %vm698, %v1544, 0.0
    %1549 = vadd.xlane.f32.xlu0 %v1548
    %v1550 = vpop.xlane.xlu0 %1549
    %v1551 = vsel %vm698, %v1545, 0.0
    %1552 = vadd.xlane.f32.xlu0 %v1551
    %v1553 = vpop.xlane.xlu0 %1552
    %v1554 = vmul.f32 %v1550, %v1403
    %v1555 = vmul.f32 %v1553, %v1403
    %v1556 = vsub.f32 %v1544, %v1554
    %v1557 = vsub.f32 %v1545, %v1555
    %v1558 = vmul.f32 %v1556, %v1556
    %v1559 = vmul.f32 %v1557, %v1557
    %v1560 = vsel %vm698, %v1558, 0.0
    %1561 = vadd.xlane.f32.xlu0 %v1560
    %v1562 = vpop.xlane.xlu0 %1561
    %v1563 = vsel %vm698, %v1559, 0.0
    %1564 = vadd.xlane.f32.xlu0 %v1563
    %v1565 = vpop.xlane.xlu0 %1564
    %v1566 = vmul.f32 %v1562, %v1403
    %v1567 = vmul.f32 %v1565, %v1403
    %v1568 = vadd.f32 %v1566, 1e-05
    %v1569 = vadd.f32 %v1567, 1e-05
    %v1570 = vrsqrt.pop %v1568
    %v1571 = vmul.f32 %v1570, %v1568
    %v1572 = vmul.f32 %v1571, %v1570
    %v1573 = vmul.f32 0.5, %v1572
    %v1574 = vsub.f32 1.5, %v1573
    %v1575 = vmul.f32 %v1570, %v1574
    %vm1576 = vweird.f32 %v1568
    %vm1577 = vweird.f32 %v1570
    %vm1578 = vmor %vm1576, %vm1577
    %v1579 = vsel %vm1578, %v1570, %v1575
    %v1580 = vrsqrt.pop %v1569
    %v1581 = vmul.f32 %v1580, %v1569
    %v1582 = vmul.f32 %v1581, %v1580
    %v1583 = vmul.f32 0.5, %v1582
    %v1584 = vsub.f32 1.5, %v1583
    %v1585 = vmul.f32 %v1580, %v1584
    %vm1586 = vweird.f32 %v1569
    %vm1587 = vweird.f32 %v1580
    %vm1588 = vmor %vm1586, %vm1587
    %v1589 = vsel %vm1588, %v1580, %v1585
    %v1590 = vmul.f32 %v1556, %v1579
    %v1591 = vmul.f32 %v1557, %v1589
    %v1593 = vperm.slane %v1546, 0
    %v1595 = vmul.f32 %v1590, %v1593
    %v1596 = vmul.f32 %v1591, %v1593
    %v1598 = vperm.slane %v1547, 0
    %v1600 = vadd.f32 %v1595, %v1598
    %v1601 = vadd.f32 %v1596, %v1598
    %s1602 = scalar_lea.vmem %s11, 32
    %v1603 = vld [vmem:[%s1602] sm:$0xff]
    %v1604 = vld [vmem:[%s1602 + $0x8] sm:$0xff]
    %v1605 = vld [vmem:[%s1602 + $0x10] sm:$0xff]
    %v1606 = vld [vmem:[%s1602 + $0x18] sm:$0xff]
    %s1607 = scalar_lea.vmem %s13, 1
    %v1608 = vld [vmem:[%s1607] sm:$0x1]
    %v1610 = vperm.slane %v1608, 0
    %v1613 = vsel %vm698, %v1600, 0
    %v1616 = vsel %vm698, %v1601, 0
    %1618 = vmatpush.msra.mxu0 0.0
    %1619 = vmatpush.msra.mxu0 0.0
    %1620 = vmatpush.msra.mxu0 0.0
    %1621 = vmatpush.msra.mxu0 0.0
    %1622 = vmatpush.msra.mxu0 0.0
    %1623 = vmatpush.msra.mxu0 0.0
    %1624 = vmatpush.msra.mxu0 0.0
    %1625 = vmatpush.msra.mxu0 0.0
    %1626 = vmatpush.msra.mxu0 0.0
    %1627 = vmatpush.msra.mxu0 0.0
    %1628 = vmatpush.msra.mxu0 0.0
    %1629 = vmatpush.msra.mxu0 0.0
    %1630 = vmatpush.msra.mxu0 %v1606
    %1631 = vmatpush.msra.mxu0 %v1605
    %1632 = vmatpush.msra.mxu0 %v1604
    %1633 = vmatpush.msra.mxu0 %v1603
    %1634 = vmatmul.f32.gmra.mxu0 %v1613
    %v1635 = vpop.f32.mrf.mxu0
    %v1636 = vadd.f32 %v1610, %v1635
    %1637 = vmatmul.f32.gmra.mxu0 %v1616
    %v1638 = vpop.f32.mrf.mxu0
    %v1639 = vadd.f32 %v1610, %v1638
    %1640 = vdwg.mxu0
    %s1641 = scalar_lea.vmem [#allocation11], 32
    %v1642 = vld [vmem:[%s1641] sm:$0xff]
    %v1643 = vld [vmem:[%s1641 + $0x8] sm:$0xff]
    %v1644 = vld [vmem:[%s1641 + $0x10] sm:$0xff]
    %v1645 = vld [vmem:[%s1641 + $0x18] sm:$0xff]
    %s1646 = scalar_lea.vmem %s17, 1
    %v1647 = vld [vmem:[%s1646] sm:$0x1]
    %1649 = vrot.lane.b32.xlu0 %v1636, 96
    %v1650 = vpop.permute.xlu0 %1649
    %v1651 = vsel %vm736, %v1636, 0
    %v1653 = vsel %vm736, %v1650, 0
    %1655 = vmatpush.xpose.msra.mxu0 0.0
    %1656 = vmatpush.xpose.msra.mxu0 0.0
    %1657 = vmatpush.xpose.msra.mxu0 0.0
    %1658 = vmatpush.xpose.msra.mxu0 0.0
    %1659 = vmatpush.xpose.msra.mxu0 0.0
    %1660 = vmatpush.xpose.msra.mxu0 0.0
    %1661 = vmatpush.xpose.msra.mxu0 0.0
    %1662 = vmatpush.xpose.msra.mxu0 0.0
    %1663 = vmatpush.xpose.msra.mxu0 0.0
    %1664 = vmatpush.xpose.msra.mxu0 0.0
    %1665 = vmatpush.xpose.msra.mxu0 0.0
    %1666 = vmatpush.xpose.msra.mxu0 0.0
    %1667 = vmatpush.xpose.msra.mxu0 0.0
    %1668 = vmatpush.xpose.msra.mxu0 0.0
    %1669 = vmatpush.xpose.msra.mxu0 0.0
    %1670 = vmatpush.xpose.msra.mxu0 %v1653
    %1671 = vmatmul.f32.gmra.mxu0 %v1651
    %v1672 = vpop.f32.mrf.mxu0
    %v1673 = vadd.f32 0.0, %v1672
    %1674 = vdwg.mxu0
    %1676 = vrot.lane.b32.xlu0 %v1639, 96
    %v1677 = vpop.permute.xlu0 %1676
    %v1678 = vsel %vm736, %v1639, 0
    %v1680 = vsel %vm736, %v1677, 0
    %1682 = vmatpush.xpose.msra.mxu0 0.0
    %1683 = vmatpush.xpose.msra.mxu0 0.0
    %1684 = vmatpush.xpose.msra.mxu0 0.0
    %1685 = vmatpush.xpose.msra.mxu0 0.0
    %1686 = vmatpush.xpose.msra.mxu0 0.0
    %1687 = vmatpush.xpose.msra.mxu0 0.0
    %1688 = vmatpush.xpose.msra.mxu0 0.0
    %1689 = vmatpush.xpose.msra.mxu0 0.0
    %1690 = vmatpush.xpose.msra.mxu0 0.0
    %1691 = vmatpush.xpose.msra.mxu0 0.0
    %1692 = vmatpush.xpose.msra.mxu0 0.0
    %1693 = vmatpush.xpose.msra.mxu0 0.0
    %1694 = vmatpush.xpose.msra.mxu0 0.0
    %1695 = vmatpush.xpose.msra.mxu0 0.0
    %1696 = vmatpush.xpose.msra.mxu0 0.0
    %1697 = vmatpush.xpose.msra.mxu0 %v1680
    %1698 = vmatmul.f32.gmra.mxu0 %v1678
    %v1699 = vpop.f32.mrf.mxu0
    %v1700 = vadd.f32 0.0, %v1699
    %1701 = vdwg.mxu0
    %v1702 = vmul.f32 %v1673, 0.35355338
    %v1703 = vmul.f32 %v1700, 0.35355338
    %v1704 = vsel %vm736, %v1702, -inf
    %1705 = vmax.xlane.f32.xlu0 %v1704
    %v1706 = vpop.xlane.xlu0 %1705
    %v1707 = vsel %vm736, %v1703, -inf
    %1708 = vmax.xlane.f32.xlu0 %v1707
    %v1709 = vpop.xlane.xlu0 %1708
    %v1710 = vsub.f32 %v1702, %v1706
    %v1711 = vsub.f32 %v1703, %v1709
    %v1712 = vmul.f32 %v1710, 1.442695
    %v1713 = vpow.pop %v1712
    %v1714 = vmul.f32 %v1711, 1.442695
    %v1715 = vpow.pop %v1714
    %v1716 = vsel %vm736, %v1713, 0.0
    %1717 = vadd.xlane.f32.xlu0 %v1716
    %v1718 = vpop.xlane.xlu0 %1717
    %v1719 = vsel %vm736, %v1715, 0.0
    %1720 = vadd.xlane.f32.xlu0 %v1719
    %v1721 = vpop.xlane.xlu0 %1720
    %v1722 = vrcp.pop %v1718
    %v1723 = vrcp.pop %v1721
    %v1724 = vmul.f32 %v1713, %v1722
    %v1725 = vmul.f32 %v1715, %v1723
    %1726 = vrot.lane.b32.xlu0 %v1636, 64
    %v1727 = vpop.permute.xlu0 %1726
    %v1730 = vsel %vm736, %v1724, 0
    %1732 = vmatpush.msra.mxu0 0.0
    %1733 = vmatpush.msra.mxu0 0.0
    %1734 = vmatpush.msra.mxu0 0.0
    %1735 = vmatpush.msra.mxu0 0.0
    %1736 = vmatpush.msra.mxu0 0.0
    %1737 = vmatpush.msra.mxu0 0.0
    %1738 = vmatpush.msra.mxu0 0.0
    %1739 = vmatpush.msra.mxu0 0.0
    %1740 = vmatpush.msra.mxu0 0.0
    %1741 = vmatpush.msra.mxu0 0.0
    %1742 = vmatpush.msra.mxu0 0.0
    %1743 = vmatpush.msra.mxu0 0.0
    %1744 = vmatpush.msra.mxu0 0.0
    %1745 = vmatpush.msra.mxu0 0.0
    %1746 = vmatpush.msra.mxu0 0.0
    %1747 = vmatpush.msra.mxu0 %v1727
    %1748 = vmatmul.f32.gmra.mxu0 %v1730
    %v1749 = vpop.f32.mrf.mxu0
    %v1750 = vadd.f32 0.0, %v1749
    %1751 = vdwg.mxu0
    %1752 = vrot.lane.b32.xlu0 %v1639, 64
    %v1753 = vpop.permute.xlu0 %1752
    %v1756 = vsel %vm736, %v1725, 0
    %1758 = vmatpush.msra.mxu0 0.0
    %1759 = vmatpush.msra.mxu0 0.0
    %1760 = vmatpush.msra.mxu0 0.0
    %1761 = vmatpush.msra.mxu0 0.0
    %1762 = vmatpush.msra.mxu0 0.0
    %1763 = vmatpush.msra.mxu0 0.0
    %1764 = vmatpush.msra.mxu0 0.0
    %1765 = vmatpush.msra.mxu0 0.0
    %1766 = vmatpush.msra.mxu0 0.0
    %1767 = vmatpush.msra.mxu0 0.0
    %1768 = vmatpush.msra.mxu0 0.0
    %1769 = vmatpush.msra.mxu0 0.0
    %1770 = vmatpush.msra.mxu0 0.0
    %1771 = vmatpush.msra.mxu0 0.0
    %1772 = vmatpush.msra.mxu0 0.0
    %1773 = vmatpush.msra.mxu0 %v1753
    %1774 = vmatmul.f32.gmra.mxu0 %v1756
    %v1775 = vpop.f32.mrf.mxu0
    %v1776 = vadd.f32 0.0, %v1775
    %1777 = vdwg.mxu0
    %v1779 = vsel %vm736, %v1750, 0
    %v1782 = vsel %vm736, %v1776, 0
    %1784 = vmatpush.msra.mxu0 0.0
    %1785 = vmatpush.msra.mxu0 0.0
    %1786 = vmatpush.msra.mxu0 0.0
    %1787 = vmatpush.msra.mxu0 0.0
    %1788 = vmatpush.msra.mxu0 0.0
    %1789 = vmatpush.msra.mxu0 0.0
    %1790 = vmatpush.msra.mxu0 0.0
    %1791 = vmatpush.msra.mxu0 0.0
    %1792 = vmatpush.msra.mxu0 0.0
    %1793 = vmatpush.msra.mxu0 0.0
    %1794 = vmatpush.msra.mxu0 0.0
    %1795 = vmatpush.msra.mxu0 0.0
    %1796 = vmatpush.msra.mxu0 0.0
    %1797 = vmatpush.msra.mxu0 0.0
    %1798 = vmatpush.msra.mxu0 0.0
    %1799 = vmatpush.msra.mxu0 %v1642
    %1800 = vmatmul.f32.gmra.mxu0 %v1779
    %v1801 = vpop.f32.mrf.mxu0
    %v1802 = vadd.f32 0.0, %v1801
    %1803 = vmatmul.f32.gmra.mxu0 %v1782
    %v1804 = vpop.f32.mrf.mxu0
    %v1805 = vadd.f32 0.0, %v1804
    %1806 = vdwg.mxu0
    %v1808 = vperm.slane %v1647, 0
    %v1810 = vadd.f32 %v1808, %v1802
    %v1811 = vadd.f32 %v1808, %v1805
    %1812 = vrot.lane.b32.xlu0 %v1636, 120
    %v1813 = vpop.permute.xlu0 %1812
    %1814 = vrot.lane.b32.xlu0 %v1636, 88
    %v1815 = vpop.permute.xlu0 %1814
    %v1816 = vsel %vm736, %v1813, 0
    %v1818 = vsel %vm736, %v1815, 0
    %1820 = vmatpush.xpose.msra.mxu0 0.0
    %1821 = vmatpush.xpose.msra.mxu0 0.0
    %1822 = vmatpush.xpose.msra.mxu0 0.0
    %1823 = vmatpush.xpose.msra.mxu0 0.0
    %1824 = vmatpush.xpose.msra.mxu0 0.0
    %1825 = vmatpush.xpose.msra.mxu0 0.0
    %1826 = vmatpush.xpose.msra.mxu0 0.0
    %1827 = vmatpush.xpose.msra.mxu0 0.0
    %1828 = vmatpush.xpose.msra.mxu0 0.0
    %1829 = vmatpush.xpose.msra.mxu0 0.0
    %1830 = vmatpush.xpose.msra.mxu0 0.0
    %1831 = vmatpush.xpose.msra.mxu0 0.0
    %1832 = vmatpush.xpose.msra.mxu0 0.0
    %1833 = vmatpush.xpose.msra.mxu0 0.0
    %1834 = vmatpush.xpose.msra.mxu0 0.0
    %1835 = vmatpush.xpose.msra.mxu0 %v1818
    %1836 = vmatmul.f32.gmra.mxu0 %v1816
    %v1837 = vpop.f32.mrf.mxu0
    %v1838 = vadd.f32 0.0, %v1837
    %1839 = vdwg.mxu0
    %1840 = vrot.lane.b32.xlu0 %v1639, 120
    %v1841 = vpop.permute.xlu0 %1840
    %1842 = vrot.lane.b32.xlu0 %v1639, 88
    %v1843 = vpop.permute.xlu0 %1842
    %v1844 = vsel %vm736, %v1841, 0
    %v1846 = vsel %vm736, %v1843, 0
    %1848 = vmatpush.xpose.msra.mxu0 0.0
    %1849 = vmatpush.xpose.msra.mxu0 0.0
    %1850 = vmatpush.xpose.msra.mxu0 0.0
    %1851 = vmatpush.xpose.msra.mxu0 0.0
    %1852 = vmatpush.xpose.msra.mxu0 0.0
    %1853 = vmatpush.xpose.msra.mxu0 0.0
    %1854 = vmatpush.xpose.msra.mxu0 0.0
    %1855 = vmatpush.xpose.msra.mxu0 0.0
    %1856 = vmatpush.xpose.msra.mxu0 0.0
    %1857 = vmatpush.xpose.msra.mxu0 0.0
    %1858 = vmatpush.xpose.msra.mxu0 0.0
    %1859 = vmatpush.xpose.msra.mxu0 0.0
    %1860 = vmatpush.xpose.msra.mxu0 0.0
    %1861 = vmatpush.xpose.msra.mxu0 0.0
    %1862 = vmatpush.xpose.msra.mxu0 0.0
    %1863 = vmatpush.xpose.msra.mxu0 %v1846
    %1864 = vmatmul.f32.gmra.mxu0 %v1844
    %v1865 = vpop.f32.mrf.mxu0
    %v1866 = vadd.f32 0.0, %v1865
    %1867 = vdwg.mxu0
    %v1868 = vmul.f32 %v1838, 0.35355338
    %v1869 = vmul.f32 %v1866, 0.35355338
    %v1870 = vsel %vm736, %v1868, -inf
    %1871 = vmax.xlane.f32.xlu0 %v1870
    %v1872 = vpop.xlane.xlu0 %1871
    %v1873 = vsel %vm736, %v1869, -inf
    %1874 = vmax.xlane.f32.xlu0 %v1873
    %v1875 = vpop.xlane.xlu0 %1874
    %v1876 = vsub.f32 %v1868, %v1872
    %v1877 = vsub.f32 %v1869, %v1875
    %v1878 = vmul.f32 %v1876, 1.442695
    %v1879 = vpow.pop %v1878
    %v1880 = vmul.f32 %v1877, 1.442695
    %v1881 = vpow.pop %v1880
    %v1882 = vsel %vm736, %v1879, 0.0
    %1883 = vadd.xlane.f32.xlu0 %v1882
    %v1884 = vpop.xlane.xlu0 %1883
    %v1885 = vsel %vm736, %v1881, 0.0
    %1886 = vadd.xlane.f32.xlu0 %v1885
    %v1887 = vpop.xlane.xlu0 %1886
    %v1888 = vrcp.pop %v1884
    %v1889 = vrcp.pop %v1887
    %v1890 = vmul.f32 %v1879, %v1888
    %v1891 = vmul.f32 %v1881, %v1889
    %1892 = vrot.lane.b32.xlu0 %v1636, 56
    %v1893 = vpop.permute.xlu0 %1892
    %v1896 = vsel %vm736, %v1890, 0
    %1898 = vmatpush.msra.mxu0 0.0
    %1899 = vmatpush.msra.mxu0 0.0
    %1900 = vmatpush.msra.mxu0 0.0
    %1901 = vmatpush.msra.mxu0 0.0
    %1902 = vmatpush.msra.mxu0 0.0
    %1903 = vmatpush.msra.mxu0 0.0
    %1904 = vmatpush.msra.mxu0 0.0
    %1905 = vmatpush.msra.mxu0 0.0
    %1906 = vmatpush.msra.mxu0 0.0
    %1907 = vmatpush.msra.mxu0 0.0
    %1908 = vmatpush.msra.mxu0 0.0
    %1909 = vmatpush.msra.mxu0 0.0
    %1910 = vmatpush.msra.mxu0 0.0
    %1911 = vmatpush.msra.mxu0 0.0
    %1912 = vmatpush.msra.mxu0 0.0
    %1913 = vmatpush.msra.mxu0 %v1893
    %1914 = vmatmul.f32.gmra.mxu0 %v1896
    %v1915 = vpop.f32.mrf.mxu0
    %v1916 = vadd.f32 0.0, %v1915
    %1917 = vdwg.mxu0
    %1918 = vrot.lane.b32.xlu0 %v1639, 56
    %v1919 = vpop.permute.xlu0 %1918
    %v1922 = vsel %vm736, %v1891, 0
    %1924 = vmatpush.msra.mxu0 0.0
    %1925 = vmatpush.msra.mxu0 0.0
    %1926 = vmatpush.msra.mxu0 0.0
    %1927 = vmatpush.msra.mxu0 0.0
    %1928 = vmatpush.msra.mxu0 0.0
    %1929 = vmatpush.msra.mxu0 0.0
    %1930 = vmatpush.msra.mxu0 0.0
    %1931 = vmatpush.msra.mxu0 0.0
    %1932 = vmatpush.msra.mxu0 0.0
    %1933 = vmatpush.msra.mxu0 0.0
    %1934 = vmatpush.msra.mxu0 0.0
    %1935 = vmatpush.msra.mxu0 0.0
    %1936 = vmatpush.msra.mxu0 0.0
    %1937 = vmatpush.msra.mxu0 0.0
    %1938 = vmatpush.msra.mxu0 0.0
    %1939 = vmatpush.msra.mxu0 %v1919
    %1940 = vmatmul.f32.gmra.mxu0 %v1922
    %v1941 = vpop.f32.mrf.mxu0
    %v1942 = vadd.f32 0.0, %v1941
    %1943 = vdwg.mxu0
    %v1945 = vsel %vm736, %v1916, 0
    %v1948 = vsel %vm736, %v1942, 0
    %1950 = vmatpush.msra.mxu0 0.0
    %1951 = vmatpush.msra.mxu0 0.0
    %1952 = vmatpush.msra.mxu0 0.0
    %1953 = vmatpush.msra.mxu0 0.0
    %1954 = vmatpush.msra.mxu0 0.0
    %1955 = vmatpush.msra.mxu0 0.0
    %1956 = vmatpush.msra.mxu0 0.0
    %1957 = vmatpush.msra.mxu0 0.0
    %1958 = vmatpush.msra.mxu0 0.0
    %1959 = vmatpush.msra.mxu0 0.0
    %1960 = vmatpush.msra.mxu0 0.0
    %1961 = vmatpush.msra.mxu0 0.0
    %1962 = vmatpush.msra.mxu0 0.0
    %1963 = vmatpush.msra.mxu0 0.0
    %1964 = vmatpush.msra.mxu0 0.0
    %1965 = vmatpush.msra.mxu0 %v1643
    %1966 = vmatmul.f32.gmra.mxu0 %v1945
    %v1967 = vpop.f32.mrf.mxu0
    %v1968 = vadd.f32 0.0, %v1967
    %1969 = vmatmul.f32.gmra.mxu0 %v1948
    %v1970 = vpop.f32.mrf.mxu0
    %v1971 = vadd.f32 0.0, %v1970
    %1972 = vdwg.mxu0
    %v1973 = vadd.f32 %v1810, %v1968
    %v1974 = vadd.f32 %v1811, %v1971
    %1975 = vrot.lane.b32.xlu0 %v1636, 112
    %v1976 = vpop.permute.xlu0 %1975
    %1977 = vrot.lane.b32.xlu0 %v1636, 80
    %v1978 = vpop.permute.xlu0 %1977
    %v1979 = vsel %vm736, %v1976, 0
    %v1981 = vsel %vm736, %v1978, 0
    %1983 = vmatpush.xpose.msra.mxu0 0.0
    %1984 = vmatpush.xpose.msra.mxu0 0.0
    %1985 = vmatpush.xpose.msra.mxu0 0.0
    %1986 = vmatpush.xpose.msra.mxu0 0.0
    %1987 = vmatpush.xpose.msra.mxu0 0.0
    %1988 = vmatpush.xpose.msra.mxu0 0.0
    %1989 = vmatpush.xpose.msra.mxu0 0.0
    %1990 = vmatpush.xpose.msra.mxu0 0.0
    %1991 = vmatpush.xpose.msra.mxu0 0.0
    %1992 = vmatpush.xpose.msra.mxu0 0.0
    %1993 = vmatpush.xpose.msra.mxu0 0.0
    %1994 = vmatpush.xpose.msra.mxu0 0.0
    %1995 = vmatpush.xpose.msra.mxu0 0.0
    %1996 = vmatpush.xpose.msra.mxu0 0.0
    %1997 = vmatpush.xpose.msra.mxu0 0.0
    %1998 = vmatpush.xpose.msra.mxu0 %v1981
    %1999 = vmatmul.f32.gmra.mxu0 %v1979
    %v2000 = vpop.f32.mrf.mxu0
    %v2001 = vadd.f32 0.0, %v2000
    %2002 = vdwg.mxu0
    %2003 = vrot.lane.b32.xlu0 %v1639, 112
    %v2004 = vpop.permute.xlu0 %2003
    %2005 = vrot.lane.b32.xlu0 %v1639, 80
    %v2006 = vpop.permute.xlu0 %2005
    %v2007 = vsel %vm736, %v2004, 0
    %v2009 = vsel %vm736, %v2006, 0
    %2011 = vmatpush.xpose.msra.mxu0 0.0
    %2012 = vmatpush.xpose.msra.mxu0 0.0
    %2013 = vmatpush.xpose.msra.mxu0 0.0
    %2014 = vmatpush.xpose.msra.mxu0 0.0
    %2015 = vmatpush.xpose.msra.mxu0 0.0
    %2016 = vmatpush.xpose.msra.mxu0 0.0
    %2017 = vmatpush.xpose.msra.mxu0 0.0
    %2018 = vmatpush.xpose.msra.mxu0 0.0
    %2019 = vmatpush.xpose.msra.mxu0 0.0
    %2020 = vmatpush.xpose.msra.mxu0 0.0
    %2021 = vmatpush.xpose.msra.mxu0 0.0
    %2022 = vmatpush.xpose.msra.mxu0 0.0
    %2023 = vmatpush.xpose.msra.mxu0 0.0
    %2024 = vmatpush.xpose.msra.mxu0 0.0
    %2025 = vmatpush.xpose.msra.mxu0 0.0
    %2026 = vmatpush.xpose.msra.mxu0 %v2009
    %2027 = vmatmul.f32.gmra.mxu0 %v2007
    %v2028 = vpop.f32.mrf.mxu0
    %v2029 = vadd.f32 0.0, %v2028
    %2030 = vdwg.mxu0
    %v2031 = vmul.f32 %v2001, 0.35355338
    %v2032 = vmul.f32 %v2029, 0.35355338
    %v2033 = vsel %vm736, %v2031, -inf
    %2034 = vmax.xlane.f32.xlu0 %v2033
    %v2035 = vpop.xlane.xlu0 %2034
    %v2036 = vsel %vm736, %v2032, -inf
    %2037 = vmax.xlane.f32.xlu0 %v2036
    %v2038 = vpop.xlane.xlu0 %2037
    %v2039 = vsub.f32 %v2031, %v2035
    %v2040 = vsub.f32 %v2032, %v2038
    %v2041 = vmul.f32 %v2039, 1.442695
    %v2042 = vpow.pop %v2041
    %v2043 = vmul.f32 %v2040, 1.442695
    %v2044 = vpow.pop %v2043
    %v2045 = vsel %vm736, %v2042, 0.0
    %2046 = vadd.xlane.f32.xlu0 %v2045
    %v2047 = vpop.xlane.xlu0 %2046
    %v2048 = vsel %vm736, %v2044, 0.0
    %2049 = vadd.xlane.f32.xlu0 %v2048
    %v2050 = vpop.xlane.xlu0 %2049
    %v2051 = vrcp.pop %v2047
    %v2052 = vrcp.pop %v2050
    %v2053 = vmul.f32 %v2042, %v2051
    %v2054 = vmul.f32 %v2044, %v2052
    %2055 = vrot.lane.b32.xlu0 %v1636, 48
    %v2056 = vpop.permute.xlu0 %2055
    %v2059 = vsel %vm736, %v2053, 0
    %2061 = vmatpush.msra.mxu0 0.0
    %2062 = vmatpush.msra.mxu0 0.0
    %2063 = vmatpush.msra.mxu0 0.0
    %2064 = vmatpush.msra.mxu0 0.0
    %2065 = vmatpush.msra.mxu0 0.0
    %2066 = vmatpush.msra.mxu0 0.0
    %2067 = vmatpush.msra.mxu0 0.0
    %2068 = vmatpush.msra.mxu0 0.0
    %2069 = vmatpush.msra.mxu0 0.0
    %2070 = vmatpush.msra.mxu0 0.0
    %2071 = vmatpush.msra.mxu0 0.0
    %2072 = vmatpush.msra.mxu0 0.0
    %2073 = vmatpush.msra.mxu0 0.0
    %2074 = vmatpush.msra.mxu0 0.0
    %2075 = vmatpush.msra.mxu0 0.0
    %2076 = vmatpush.msra.mxu0 %v2056
    %2077 = vmatmul.f32.gmra.mxu0 %v2059
    %v2078 = vpop.f32.mrf.mxu0
    %v2079 = vadd.f32 0.0, %v2078
    %2080 = vdwg.mxu0
    %2081 = vrot.lane.b32.xlu0 %v1639, 48
    %v2082 = vpop.permute.xlu0 %2081
    %v2085 = vsel %vm736, %v2054, 0
    %2087 = vmatpush.msra.mxu0 0.0
    %2088 = vmatpush.msra.mxu0 0.0
    %2089 = vmatpush.msra.mxu0 0.0
    %2090 = vmatpush.msra.mxu0 0.0
    %2091 = vmatpush.msra.mxu0 0.0
    %2092 = vmatpush.msra.mxu0 0.0
    %2093 = vmatpush.msra.mxu0 0.0
    %2094 = vmatpush.msra.mxu0 0.0
    %2095 = vmatpush.msra.mxu0 0.0
    %2096 = vmatpush.msra.mxu0 0.0
    %2097 = vmatpush.msra.mxu0 0.0
    %2098 = vmatpush.msra.mxu0 0.0
    %2099 = vmatpush.msra.mxu0 0.0
    %2100 = vmatpush.msra.mxu0 0.0
    %2101 = vmatpush.msra.mxu0 0.0
    %2102 = vmatpush.msra.mxu0 %v2082
    %2103 = vmatmul.f32.gmra.mxu0 %v2085
    %v2104 = vpop.f32.mrf.mxu0
    %v2105 = vadd.f32 0.0, %v2104
    %2106 = vdwg.mxu0
    %v2108 = vsel %vm736, %v2079, 0
    %v2111 = vsel %vm736, %v2105, 0
    %2113 = vmatpush.msra.mxu0 0.0
    %2114 = vmatpush.msra.mxu0 0.0
    %2115 = vmatpush.msra.mxu0 0.0
    %2116 = vmatpush.msra.mxu0 0.0
    %2117 = vmatpush.msra.mxu0 0.0
    %2118 = vmatpush.msra.mxu0 0.0
    %2119 = vmatpush.msra.mxu0 0.0
    %2120 = vmatpush.msra.mxu0 0.0
    %2121 = vmatpush.msra.mxu0 0.0
    %2122 = vmatpush.msra.mxu0 0.0
    %2123 = vmatpush.msra.mxu0 0.0
    %2124 = vmatpush.msra.mxu0 0.0
    %2125 = vmatpush.msra.mxu0 0.0
    %2126 = vmatpush.msra.mxu0 0.0
    %2127 = vmatpush.msra.mxu0 0.0
    %2128 = vmatpush.msra.mxu0 %v1644
    %2129 = vmatmul.f32.gmra.mxu0 %v2108
    %v2130 = vpop.f32.mrf.mxu0
    %v2131 = vadd.f32 0.0, %v2130
    %2132 = vmatmul.f32.gmra.mxu0 %v2111
    %v2133 = vpop.f32.mrf.mxu0
    %v2134 = vadd.f32 0.0, %v2133
    %2135 = vdwg.mxu0
    %v2136 = vadd.f32 %v1973, %v2131
    %v2137 = vadd.f32 %v1974, %v2134
    %2138 = vrot.lane.b32.xlu0 %v1636, 104
    %v2139 = vpop.permute.xlu0 %2138
    %2140 = vrot.lane.b32.xlu0 %v1636, 72
    %v2141 = vpop.permute.xlu0 %2140
    %v2142 = vsel %vm736, %v2139, 0
    %v2144 = vsel %vm736, %v2141, 0
    %2146 = vmatpush.xpose.msra.mxu0 0.0
    %2147 = vmatpush.xpose.msra.mxu0 0.0
    %2148 = vmatpush.xpose.msra.mxu0 0.0
    %2149 = vmatpush.xpose.msra.mxu0 0.0
    %2150 = vmatpush.xpose.msra.mxu0 0.0
    %2151 = vmatpush.xpose.msra.mxu0 0.0
    %2152 = vmatpush.xpose.msra.mxu0 0.0
    %2153 = vmatpush.xpose.msra.mxu0 0.0
    %2154 = vmatpush.xpose.msra.mxu0 0.0
    %2155 = vmatpush.xpose.msra.mxu0 0.0
    %2156 = vmatpush.xpose.msra.mxu0 0.0
    %2157 = vmatpush.xpose.msra.mxu0 0.0
    %2158 = vmatpush.xpose.msra.mxu0 0.0
    %2159 = vmatpush.xpose.msra.mxu0 0.0
    %2160 = vmatpush.xpose.msra.mxu0 0.0
    %2161 = vmatpush.xpose.msra.mxu0 %v2144
    %2162 = vmatmul.f32.gmra.mxu0 %v2142
    %v2163 = vpop.f32.mrf.mxu0
    %v2164 = vadd.f32 0.0, %v2163
    %2165 = vdwg.mxu0
    %2166 = vrot.lane.b32.xlu0 %v1639, 104
    %v2167 = vpop.permute.xlu0 %2166
    %2168 = vrot.lane.b32.xlu0 %v1639, 72
    %v2169 = vpop.permute.xlu0 %2168
    %v2170 = vsel %vm736, %v2167, 0
    %v2172 = vsel %vm736, %v2169, 0
    %2174 = vmatpush.xpose.msra.mxu0 0.0
    %2175 = vmatpush.xpose.msra.mxu0 0.0
    %2176 = vmatpush.xpose.msra.mxu0 0.0
    %2177 = vmatpush.xpose.msra.mxu0 0.0
    %2178 = vmatpush.xpose.msra.mxu0 0.0
    %2179 = vmatpush.xpose.msra.mxu0 0.0
    %2180 = vmatpush.xpose.msra.mxu0 0.0
    %2181 = vmatpush.xpose.msra.mxu0 0.0
    %2182 = vmatpush.xpose.msra.mxu0 0.0
    %2183 = vmatpush.xpose.msra.mxu0 0.0
    %2184 = vmatpush.xpose.msra.mxu0 0.0
    %2185 = vmatpush.xpose.msra.mxu0 0.0
    %2186 = vmatpush.xpose.msra.mxu0 0.0
    %2187 = vmatpush.xpose.msra.mxu0 0.0
    %2188 = vmatpush.xpose.msra.mxu0 0.0
    %2189 = vmatpush.xpose.msra.mxu0 %v2172
    %2190 = vmatmul.f32.gmra.mxu0 %v2170
    %v2191 = vpop.f32.mrf.mxu0
    %v2192 = vadd.f32 0.0, %v2191
    %2193 = vdwg.mxu0
    %v2194 = vmul.f32 %v2164, 0.35355338
    %v2195 = vmul.f32 %v2192, 0.35355338
    %v2196 = vsel %vm736, %v2194, -inf
    %2197 = vmax.xlane.f32.xlu0 %v2196
    %v2198 = vpop.xlane.xlu0 %2197
    %v2199 = vsel %vm736, %v2195, -inf
    %2200 = vmax.xlane.f32.xlu0 %v2199
    %v2201 = vpop.xlane.xlu0 %2200
    %v2202 = vsub.f32 %v2194, %v2198
    %v2203 = vsub.f32 %v2195, %v2201
    %v2204 = vmul.f32 %v2202, 1.442695
    %v2205 = vpow.pop %v2204
    %v2206 = vmul.f32 %v2203, 1.442695
    %v2207 = vpow.pop %v2206
    %v2208 = vsel %vm736, %v2205, 0.0
    %2209 = vadd.xlane.f32.xlu0 %v2208
    %v2210 = vpop.xlane.xlu0 %2209
    %v2211 = vsel %vm736, %v2207, 0.0
    %2212 = vadd.xlane.f32.xlu0 %v2211
    %v2213 = vpop.xlane.xlu0 %2212
    %v2214 = vrcp.pop %v2210
    %v2215 = vrcp.pop %v2213
    %v2216 = vmul.f32 %v2205, %v2214
    %v2217 = vmul.f32 %v2207, %v2215
    %2218 = vrot.lane.b32.xlu0 %v1636, 40
    %v2219 = vpop.permute.xlu0 %2218
    %v2222 = vsel %vm736, %v2216, 0
    %2224 = vmatpush.msra.mxu0 0.0
    %2225 = vmatpush.msra.mxu0 0.0
    %2226 = vmatpush.msra.mxu0 0.0
    %2227 = vmatpush.msra.mxu0 0.0
    %2228 = vmatpush.msra.mxu0 0.0
    %2229 = vmatpush.msra.mxu0 0.0
    %2230 = vmatpush.msra.mxu0 0.0
    %2231 = vmatpush.msra.mxu0 0.0
    %2232 = vmatpush.msra.mxu0 0.0
    %2233 = vmatpush.msra.mxu0 0.0
    %2234 = vmatpush.msra.mxu0 0.0
    %2235 = vmatpush.msra.mxu0 0.0
    %2236 = vmatpush.msra.mxu0 0.0
    %2237 = vmatpush.msra.mxu0 0.0
    %2238 = vmatpush.msra.mxu0 0.0
    %2239 = vmatpush.msra.mxu0 %v2219
    %2240 = vmatmul.f32.gmra.mxu0 %v2222
    %v2241 = vpop.f32.mrf.mxu0
    %v2242 = vadd.f32 0.0, %v2241
    %2243 = vdwg.mxu0
    %2244 = vrot.lane.b32.xlu0 %v1639, 40
    %v2245 = vpop.permute.xlu0 %2244
    %v2248 = vsel %vm736, %v2217, 0
    %2250 = vmatpush.msra.mxu0 0.0
    %2251 = vmatpush.msra.mxu0 0.0
    %2252 = vmatpush.msra.mxu0 0.0
    %2253 = vmatpush.msra.mxu0 0.0
    %2254 = vmatpush.msra.mxu0 0.0
    %2255 = vmatpush.msra.mxu0 0.0
    %2256 = vmatpush.msra.mxu0 0.0
    %2257 = vmatpush.msra.mxu0 0.0
    %2258 = vmatpush.msra.mxu0 0.0
    %2259 = vmatpush.msra.mxu0 0.0
    %2260 = vmatpush.msra.mxu0 0.0
    %2261 = vmatpush.msra.mxu0 0.0
    %2262 = vmatpush.msra.mxu0 0.0
    %2263 = vmatpush.msra.mxu0 0.0
    %2264 = vmatpush.msra.mxu0 0.0
    %2265 = vmatpush.msra.mxu0 %v2245
    %2266 = vmatmul.f32.gmra.mxu0 %v2248
    %v2267 = vpop.f32.mrf.mxu0
    %v2268 = vadd.f32 0.0, %v2267
    %2269 = vdwg.mxu0
    %v2271 = vsel %vm736, %v2242, 0
    %v2274 = vsel %vm736, %v2268, 0
    %2276 = vmatpush.msra.mxu0 0.0
    %2277 = vmatpush.msra.mxu0 0.0
    %2278 = vmatpush.msra.mxu0 0.0
    %2279 = vmatpush.msra.mxu0 0.0
    %2280 = vmatpush.msra.mxu0 0.0
    %2281 = vmatpush.msra.mxu0 0.0
    %2282 = vmatpush.msra.mxu0 0.0
    %2283 = vmatpush.msra.mxu0 0.0
    %2284 = vmatpush.msra.mxu0 0.0
    %2285 = vmatpush.msra.mxu0 0.0
    %2286 = vmatpush.msra.mxu0 0.0
    %2287 = vmatpush.msra.mxu0 0.0
    %2288 = vmatpush.msra.mxu0 0.0
    %2289 = vmatpush.msra.mxu0 0.0
    %2290 = vmatpush.msra.mxu0 0.0
    %2291 = vmatpush.msra.mxu0 %v1645
    %2292 = vmatmul.f32.gmra.mxu0 %v2271
    %v2293 = vpop.f32.mrf.mxu0
    %v2294 = vadd.f32 0.0, %v2293
    %2295 = vmatmul.f32.gmra.mxu0 %v2274
    %v2296 = vpop.f32.mrf.mxu0
    %v2297 = vadd.f32 0.0, %v2296
    %2298 = vdwg.mxu0
    %v2299 = vadd.f32 %v2136, %v2294
    %v2300 = vadd.f32 %v2137, %v2297
    %v2301 = vadd.f32 %v1600, %v2299
    %v2302 = vadd.f32 %v1601, %v2300
    %s2303 = scalar_lea.vmem %s19, 1
    %v2304 = vld [vmem:[%s2303] sm:$0x1]
    %s2305 = scalar_lea.vmem %s21, 1
    %v2306 = vld [vmem:[%s2305] sm:$0x1]
    %v2307 = vsel %vm698, %v2301, 0.0
    %2308 = vadd.xlane.f32.xlu0 %v2307
    %v2309 = vpop.xlane.xlu0 %2308
    %v2310 = vsel %vm698, %v2302, 0.0
    %2311 = vadd.xlane.f32.xlu0 %v2310
    %v2312 = vpop.xlane.xlu0 %2311
    %v2313 = vmul.f32 %v2309, %v1403
    %v2314 = vmul.f32 %v2312, %v1403
    %v2315 = vsub.f32 %v2301, %v2313
    %v2316 = vsub.f32 %v2302, %v2314
    %v2317 = vmul.f32 %v2315, %v2315
    %v2318 = vmul.f32 %v2316, %v2316
    %v2319 = vsel %vm698, %v2317, 0.0
    %2320 = vadd.xlane.f32.xlu0 %v2319
    %v2321 = vpop.xlane.xlu0 %2320
    %v2322 = vsel %vm698, %v2318, 0.0
    %2323 = vadd.xlane.f32.xlu0 %v2322
    %v2324 = vpop.xlane.xlu0 %2323
    %v2325 = vmul.f32 %v2321, %v1403
    %v2326 = vmul.f32 %v2324, %v1403
    %v2327 = vadd.f32 %v2325, 1e-05
    %v2328 = vadd.f32 %v2326, 1e-05
    %v2329 = vrsqrt.pop %v2327
    %v2330 = vmul.f32 %v2329, %v2327
    %v2331 = vmul.f32 %v2330, %v2329
    %v2332 = vmul.f32 0.5, %v2331
    %v2333 = vsub.f32 1.5, %v2332
    %v2334 = vmul.f32 %v2329, %v2333
    %vm2335 = vweird.f32 %v2327
    %vm2336 = vweird.f32 %v2329
    %vm2337 = vmor %vm2335, %vm2336
    %v2338 = vsel %vm2337, %v2329, %v2334
    %v2339 = vrsqrt.pop %v2328
    %v2340 = vmul.f32 %v2339, %v2328
    %v2341 = vmul.f32 %v2340, %v2339
    %v2342 = vmul.f32 0.5, %v2341
    %v2343 = vsub.f32 1.5, %v2342
    %v2344 = vmul.f32 %v2339, %v2343
    %vm2345 = vweird.f32 %v2328
    %vm2346 = vweird.f32 %v2339
    %vm2347 = vmor %vm2345, %vm2346
    %v2348 = vsel %vm2347, %v2339, %v2344
    %v2349 = vmul.f32 %v2315, %v2338
    %v2350 = vmul.f32 %v2316, %v2348
    %v2352 = vperm.slane %v2304, 0
    %v2354 = vmul.f32 %v2349, %v2352
    %v2355 = vmul.f32 %v2350, %v2352
    %v2357 = vperm.slane %v2306, 0
    %v2359 = vadd.f32 %v2354, %v2357
    %v2360 = vadd.f32 %v2355, %v2357
    %s2361 = scalar_lea.vmem [#allocation13], 32
    %v2362 = vld [vmem:[%s2361] sm:$0xff]
    %v2363 = vld [vmem:[%s2361 + $0x8] sm:$0xff]
    %v2364 = vld [vmem:[%s2361 + $0x10] sm:$0xff]
    %v2365 = vld [vmem:[%s2361 + $0x18] sm:$0xff]
    %s2366 = scalar_lea.vmem %s25, 1
    %v2367 = vld [vmem:[%s2366] sm:$0x1]
    %v2369 = vperm.slane %v2367, 0
    %v2372 = vsel %vm698, %v2359, 0
    %v2375 = vsel %vm698, %v2360, 0
    %2377 = vmatpush.msra.mxu0 0.0
    %2378 = vmatpush.msra.mxu0 0.0
    %2379 = vmatpush.msra.mxu0 0.0
    %2380 = vmatpush.msra.mxu0 0.0
    %2381 = vmatpush.msra.mxu0 0.0
    %2382 = vmatpush.msra.mxu0 0.0
    %2383 = vmatpush.msra.mxu0 0.0
    %2384 = vmatpush.msra.mxu0 0.0
    %2385 = vmatpush.msra.mxu0 0.0
    %2386 = vmatpush.msra.mxu0 0.0
    %2387 = vmatpush.msra.mxu0 0.0
    %2388 = vmatpush.msra.mxu0 0.0
    %2389 = vmatpush.msra.mxu0 %v2365
    %2390 = vmatpush.msra.mxu0 %v2364
    %2391 = vmatpush.msra.mxu0 %v2363
    %2392 = vmatpush.msra.mxu0 %v2362
    %2393 = vmatmul.f32.gmra.mxu0 %v2372
    %v2394 = vpop.f32.mrf.mxu0
    %v2395 = vadd.f32 %v2369, %v2394
    %2396 = vmatmul.f32.gmra.mxu0 %v2375
    %v2397 = vpop.f32.mrf.mxu0
    %v2398 = vadd.f32 %v2369, %v2397
    %2399 = vdwg.mxu0
    %v2400 = vmul.f32 %v2395, 0.5
    %v2401 = vmul.f32 %v2398, 0.5
    %v2402 = vmul.f32 %v2395, 0.044715
    %v2403 = vmul.f32 %v2398, 0.044715
    %v2404 = vmul.f32 %v2402, %v2395
    %v2405 = vmul.f32 %v2403, %v2398
    %v2406 = vmul.f32 %v2404, %v2395
    %v2407 = vmul.f32 %v2405, %v2398
    %v2408 = vadd.f32 %v2395, %v2406
    %v2409 = vadd.f32 %v2398, %v2407
    %v2410 = vmul.f32 %v2408, 0.7978846
    %v2411 = vmul.f32 %v2409, 0.7978846
    %v2412 = vtanh.pop %v2410
    %v2413 = vtanh.pop %v2411
    %v2414 = vadd.f32 %v2412, 1.0
    %v2415 = vadd.f32 %v2413, 1.0
    %v2416 = vmul.f32 %v2400, %v2414
    %v2417 = vmul.f32 %v2401, %v2415
    %s2418 = scalar_lea.vmem [#allocation14], 32
    %v2419 = vld [vmem:[%s2418] sm:$0xff]
    %v2420 = vld [vmem:[%s2418 + $0x8] sm:$0xff]
    %v2421 = vld [vmem:[%s2418 + $0x10] sm:$0xff]
    %v2422 = vld [vmem:[%s2418 + $0x18] sm:$0xff]
    %s2423 = scalar_lea.vmem %s29, 1
    %v2424 = vld [vmem:[%s2423] sm:$0x1]
    %v2426 = vperm.slane %v2424, 0
    %v2429 = vsel %vm698, %v2416, 0
    %v2432 = vsel %vm698, %v2417, 0
    %2434 = vmatpush.msra.mxu0 0.0
    %2435 = vmatpush.msra.mxu0 0.0
    %2436 = vmatpush.msra.mxu0 0.0
    %2437 = vmatpush.msra.mxu0 0.0
    %2438 = vmatpush.msra.mxu0 0.0
    %2439 = vmatpush.msra.mxu0 0.0
    %2440 = vmatpush.msra.mxu0 0.0
    %2441 = vmatpush.msra.mxu0 0.0
    %2442 = vmatpush.msra.mxu0 0.0
    %2443 = vmatpush.msra.mxu0 0.0
    %2444 = vmatpush.msra.mxu0 0.0
    %2445 = vmatpush.msra.mxu0 0.0
    %2446 = vmatpush.msra.mxu0 %v2422
    %2447 = vmatpush.msra.mxu0 %v2421
    %2448 = vmatpush.msra.mxu0 %v2420
    %2449 = vmatpush.msra.mxu0 %v2419
    %2450 = vmatmul.f32.gmra.mxu0 %v2429
    %v2451 = vpop.f32.mrf.mxu0
    %v2452 = vadd.f32 %v2426, %v2451
    %2453 = vmatmul.f32.gmra.mxu0 %v2432
    %v2454 = vpop.f32.mrf.mxu0
    %v2455 = vadd.f32 %v2426, %v2454
    %2456 = vdwg.mxu0
    %v2457 = vadd.f32 %v2359, %v2452
    %v2458 = vadd.f32 %v2360, %v2455
    %s2459 = scalar_lea.vmem [#allocation16], 1
    %v2460 = vld [vmem:[%s2459] sm:$0x1]
    %s2461 = scalar_lea.vmem [#allocation17], 1
    %v2462 = vld [vmem:[%s2461] sm:$0x1]
    %v2463 = vsel %vm698, %v2457, 0.0
    %2464 = vadd.xlane.f32.xlu0 %v2463
    %v2465 = vpop.xlane.xlu0 %2464
    %v2466 = vsel %vm698, %v2458, 0.0
    %2467 = vadd.xlane.f32.xlu0 %v2466
    %v2468 = vpop.xlane.xlu0 %2467
    %v2469 = vmul.f32 %v2465, %v1403
    %v2470 = vmul.f32 %v2468, %v1403
    %v2471 = vsub.f32 %v2457, %v2469
    %v2472 = vsub.f32 %v2458, %v2470
    %v2473 = vmul.f32 %v2471, %v2471
    %v2474 = vmul.f32 %v2472, %v2472
    %v2475 = vsel %vm698, %v2473, 0.0
    %2476 = vadd.xlane.f32.xlu0 %v2475
    %v2477 = vpop.xlane.xlu0 %2476
    %v2478 = vsel %vm698, %v2474, 0.0
    %2479 = vadd.xlane.f32.xlu0 %v2478
    %v2480 = vpop.xlane.xlu0 %2479
    %v2481 = vmul.f32 %v2477, %v1403
    %v2482 = vmul.f32 %v2480, %v1403
    %v2483 = vadd.f32 %v2481, 1e-05
    %v2484 = vadd.f32 %v2482, 1e-05
    %v2485 = vrsqrt.pop %v2483
    %v2486 = vmul.f32 %v2485, %v2483
    %v2487 = vmul.f32 %v2486, %v2485
    %v2488 = vmul.f32 0.5, %v2487
    %v2489 = vsub.f32 1.5, %v2488
    %v2490 = vmul.f32 %v2485, %v2489
    %vm2491 = vweird.f32 %v2483
    %vm2492 = vweird.f32 %v2485
    %vm2493 = vmor %vm2491, %vm2492
    %v2494 = vsel %vm2493, %v2485, %v2490
    %v2495 = vrsqrt.pop %v2484
    %v2496 = vmul.f32 %v2495, %v2484
    %v2497 = vmul.f32 %v2496, %v2495
    %v2498 = vmul.f32 0.5, %v2497
    %v2499 = vsub.f32 1.5, %v2498
    %v2500 = vmul.f32 %v2495, %v2499
    %vm2501 = vweird.f32 %v2484
    %vm2502 = vweird.f32 %v2495
    %vm2503 = vmor %vm2501, %vm2502
    %v2504 = vsel %vm2503, %v2495, %v2500
    %v2505 = vmul.f32 %v2471, %v2494
    %v2506 = vmul.f32 %v2472, %v2504
    %v2508 = vperm.slane %v2460, 0
    %v2510 = vmul.f32 %v2505, %v2508
    %v2511 = vmul.f32 %v2506, %v2508
    %v2513 = vperm.slane %v2462, 0
    %v2515 = vadd.f32 %v2510, %v2513
    %v2516 = vadd.f32 %v2511, %v2513
    %v2517 = vld [vmem:[#allocation19] sm:$0x1]
    %v2518 = vld [vmem:[#allocation20] sm:$0x1]
    %v2519 = vsel %vm698, %v2515, 0.0
    %2520 = vadd.xlane.f32.xlu0 %v2519
    %v2521 = vpop.xlane.xlu0 %2520
    %v2522 = vsel %vm698, %v2516, 0.0
    %2523 = vadd.xlane.f32.xlu0 %v2522
    %v2524 = vpop.xlane.xlu0 %2523
    %v2525 = vmul.f32 %v2521, %v1403
    %v2526 = vmul.f32 %v2524, %v1403
    %v2527 = vsub.f32 %v2515, %v2525
    %v2528 = vsub.f32 %v2516, %v2526
    %v2529 = vmul.f32 %v2527, %v2527
    %v2530 = vmul.f32 %v2528, %v2528
    %v2531 = vsel %vm698, %v2529, 0.0
    %2532 = vadd.xlane.f32.xlu0 %v2531
    %v2533 = vpop.xlane.xlu0 %2532
    %v2534 = vsel %vm698, %v2530, 0.0
    %2535 = vadd.xlane.f32.xlu0 %v2534
    %v2536 = vpop.xlane.xlu0 %2535
    %v2537 = vmul.f32 %v2533, %v1403
    %v2538 = vmul.f32 %v2536, %v1403
    %v2539 = vadd.f32 %v2537, 1e-05
    %v2540 = vadd.f32 %v2538, 1e-05
    %v2541 = vrsqrt.pop %v2539
    %v2542 = vmul.f32 %v2541, %v2539
    %v2543 = vmul.f32 %v2542, %v2541
    %v2544 = vmul.f32 0.5, %v2543
    %v2545 = vsub.f32 1.5, %v2544
    %v2546 = vmul.f32 %v2541, %v2545
    %vm2547 = vweird.f32 %v2539
    %vm2548 = vweird.f32 %v2541
    %vm2549 = vmor %vm2547, %vm2548
    %v2550 = vsel %vm2549, %v2541, %v2546
    %v2551 = vrsqrt.pop %v2540
    %v2552 = vmul.f32 %v2551, %v2540
    %v2553 = vmul.f32 %v2552, %v2551
    %v2554 = vmul.f32 0.5, %v2553
    %v2555 = vsub.f32 1.5, %v2554
    %v2556 = vmul.f32 %v2551, %v2555
    %vm2557 = vweird.f32 %v2540
    %vm2558 = vweird.f32 %v2551
    %vm2559 = vmor %vm2557, %vm2558
    %v2560 = vsel %vm2559, %v2551, %v2556
    %v2561 = vmul.f32 %v2527, %v2550
    %v2562 = vmul.f32 %v2528, %v2560
    %v2564 = vperm.slane %v2517, 0
    %v2566 = vmul.f32 %v2561, %v2564
    %v2567 = vmul.f32 %v2562, %v2564
    %v2569 = vperm.slane %v2518, 0
    %v2571 = vadd.f32 %v2566, %v2569
    %v2572 = vadd.f32 %v2567, %v2569
    %v2573 = vsel %vm698, %v2571, 0.0
    %v2574 = vrot.slane %v2573, 4
    %v2575 = vadd.f32 %v2573, %v2574
    %v2576 = vrot.slane %v2575, 2
    %v2577 = vadd.f32 %v2575, %v2576
    %v2578 = vrot.slane %v2577, 1
    %v2579 = vadd.f32 %v2577, %v2578
    %v2580 = vsel %vm698, %v2572, 0.0
    %v2581 = vrot.slane %v2580, 4
    %v2582 = vadd.f32 %v2580, %v2581
    %v2583 = vrot.slane %v2582, 2
    %v2584 = vadd.f32 %v2582, %v2583
    %v2585 = vrot.slane %v2584, 1
    %v2586 = vadd.f32 %v2584, %v2585
    %v2587 = vrcp.pop 8.0
    %v2588 = vmul.f32 8.0, %v2587
    %v2589 = vsub.f32 1.0, %v2588
    %v2590 = vmul.f32 %v2587, %v2589
    %v2591 = vadd.f32 %v2587, %v2590
    %vm2592 = vweird.f32 %v2587
    %v2593 = vsel %vm2592, %v2587, %v2591
    %v2594 = vmul.f32 %v2579, %v2593
    %v2595 = vmul.f32 %v2586, %v2593
    %v2596 = vld [vmem:[#allocation5] sm:$0xff]
    %v2597 = vld [vmem:[#allocation5 + $0x8] sm:$0xff]
    %v2598 = vld [vmem:[%s39] sm:$0xff]
    %v2599 = vld [vmem:[%s39 + $0x8] sm:$0xff]
    %v2600 = vld [vmem:[%s39 + $0x10] sm:$0x3]
    %v2601 = vld [vmem:[#allocation22] sm:$0x1]
    %v2603 = vperm.slane %v2601, 0
    %vm2605 = vcmask 146432
    %v2607 = vsel %vm2605, %v2596, 0
    %v2610 = vsel %vm2605, %v2597, 0
    %vm2612 = vcmask 1041408
    %v2614 = vsel %vm2612, %v2600, 0
    %2616 = vmatpush.msra.mxu0 0.0
    %2617 = vmatpush.msra.mxu0 0.0
    %2618 = vmatpush.msra.mxu0 0.0
    %2619 = vmatpush.msra.mxu0 0.0
    %2620 = vmatpush.msra.mxu0 0.0
    %2621 = vmatpush.msra.mxu0 0.0
    %2622 = vmatpush.msra.mxu0 0.0
    %2623 = vmatpush.msra.mxu0 0.0
    %2624 = vmatpush.msra.mxu0 0.0
    %2625 = vmatpush.msra.mxu0 0.0
    %2626 = vmatpush.msra.mxu0 0.0
    %2627 = vmatpush.msra.mxu0 0.0
    %2628 = vmatpush.msra.mxu0 0.0
    %2629 = vmatpush.msra.mxu0 %v2614
    %2630 = vmatpush.msra.mxu0 %v2599
    %2631 = vmatpush.msra.mxu0 %v2598
    %2632 = vmatmul.f32.gmra.mxu0 %v2607
    %v2633 = vpop.f32.mrf.mxu0
    %v2634 = vadd.f32 %v2603, %v2633
    %2635 = vmatmul.f32.gmra.mxu0 %v2610
    %v2636 = vpop.f32.mrf.mxu0
    %v2637 = vadd.f32 %v2603, %v2636
    %2638 = vdwg.mxu0
    %v2639 = vmax.f32 %v2634, 0.0
    %v2640 = vmax.f32 %v2637, 0.0
    %v2641 = vld [vmem:[#allocation23] sm:$0xff]
    %v2642 = vld [vmem:[#allocation23 + $0x8] sm:$0xff]
    %v2643 = vld [vmem:[#allocation23 + $0x10] sm:$0xff]
    %v2644 = vld [vmem:[#allocation23 + $0x18] sm:$0xff]
    %v2645 = vld [vmem:[#allocation25] sm:$0x1]
    %v2647 = vperm.slane %v2645, 0
    %v2650 = vsel %vm698, %v2639, 0
    %v2653 = vsel %vm698, %v2640, 0
    %2655 = vmatpush.msra.mxu0 0.0
    %2656 = vmatpush.msra.mxu0 0.0
    %2657 = vmatpush.msra.mxu0 0.0
    %2658 = vmatpush.msra.mxu0 0.0
    %2659 = vmatpush.msra.mxu0 0.0
    %2660 = vmatpush.msra.mxu0 0.0
    %2661 = vmatpush.msra.mxu0 0.0
    %2662 = vmatpush.msra.mxu0 0.0
    %2663 = vmatpush.msra.mxu0 0.0
    %2664 = vmatpush.msra.mxu0 0.0
    %2665 = vmatpush.msra.mxu0 0.0
    %2666 = vmatpush.msra.mxu0 0.0
    %2667 = vmatpush.msra.mxu0 %v2644
    %2668 = vmatpush.msra.mxu0 %v2643
    %2669 = vmatpush.msra.mxu0 %v2642
    %2670 = vmatpush.msra.mxu0 %v2641
    %2671 = vmatmul.f32.gmra.mxu0 %v2650
    %v2672 = vpop.f32.mrf.mxu0
    %v2673 = vadd.f32 %v2647, %v2672
    %2674 = vmatmul.f32.gmra.mxu0 %v2653
    %v2675 = vpop.f32.mrf.mxu0
    %v2676 = vadd.f32 %v2647, %v2675
    %2677 = vdwg.mxu0
    %v2678 = vld [vmem:[#allocation26] sm:$0xff]
    %v2679 = vld [vmem:[#allocation26 + $0x8] sm:$0xff]
    %v2680 = vld [vmem:[#allocation26 + $0x10] sm:$0xff]
    %v2681 = vld [vmem:[#allocation26 + $0x18] sm:$0xff]
    %v2682 = vld [vmem:[%s49] sm:$0x1]
    %2684 = vrot.lane.b32.xlu0 %v2673, 96
    %v2685 = vpop.permute.xlu0 %2684
    %v2686 = vsel %vm736, %v2673, 0
    %v2688 = vsel %vm736, %v2685, 0
    %2690 = vmatpush.xpose.msra.mxu0 0.0
    %2691 = vmatpush.xpose.msra.mxu0 0.0
    %2692 = vmatpush.xpose.msra.mxu0 0.0
    %2693 = vmatpush.xpose.msra.mxu0 0.0
    %2694 = vmatpush.xpose.msra.mxu0 0.0
    %2695 = vmatpush.xpose.msra.mxu0 0.0
    %2696 = vmatpush.xpose.msra.mxu0 0.0
    %2697 = vmatpush.xpose.msra.mxu0 0.0
    %2698 = vmatpush.xpose.msra.mxu0 0.0
    %2699 = vmatpush.xpose.msra.mxu0 0.0
    %2700 = vmatpush.xpose.msra.mxu0 0.0
    %2701 = vmatpush.xpose.msra.mxu0 0.0
    %2702 = vmatpush.xpose.msra.mxu0 0.0
    %2703 = vmatpush.xpose.msra.mxu0 0.0
    %2704 = vmatpush.xpose.msra.mxu0 0.0
    %2705 = vmatpush.xpose.msra.mxu0 %v2688
    %2706 = vmatmul.f32.gmra.mxu0 %v2686
    %v2707 = vpop.f32.mrf.mxu0
    %v2708 = vadd.f32 0.0, %v2707
    %2709 = vdwg.mxu0
    %2711 = vrot.lane.b32.xlu0 %v2676, 96
    %v2712 = vpop.permute.xlu0 %2711
    %v2713 = vsel %vm736, %v2676, 0
    %v2715 = vsel %vm736, %v2712, 0
    %2717 = vmatpush.xpose.msra.mxu0 0.0
    %2718 = vmatpush.xpose.msra.mxu0 0.0
    %2719 = vmatpush.xpose.msra.mxu0 0.0
    %2720 = vmatpush.xpose.msra.mxu0 0.0
    %2721 = vmatpush.xpose.msra.mxu0 0.0
    %2722 = vmatpush.xpose.msra.mxu0 0.0
    %2723 = vmatpush.xpose.msra.mxu0 0.0
    %2724 = vmatpush.xpose.msra.mxu0 0.0
    %2725 = vmatpush.xpose.msra.mxu0 0.0
    %2726 = vmatpush.xpose.msra.mxu0 0.0
    %2727 = vmatpush.xpose.msra.mxu0 0.0
    %2728 = vmatpush.xpose.msra.mxu0 0.0
    %2729 = vmatpush.xpose.msra.mxu0 0.0
    %2730 = vmatpush.xpose.msra.mxu0 0.0
    %2731 = vmatpush.xpose.msra.mxu0 0.0
    %2732 = vmatpush.xpose.msra.mxu0 %v2715
    %2733 = vmatmul.f32.gmra.mxu0 %v2713
    %v2734 = vpop.f32.mrf.mxu0
    %v2735 = vadd.f32 0.0, %v2734
    %2736 = vdwg.mxu0
    %v2737 = vmul.f32 %v2708, 0.35355338
    %v2738 = vmul.f32 %v2735, 0.35355338
    %v2739 = vsel %vm736, %v2737, -inf
    %2740 = vmax.xlane.f32.xlu0 %v2739
    %v2741 = vpop.xlane.xlu0 %2740
    %v2742 = vsel %vm736, %v2738, -inf
    %2743 = vmax.xlane.f32.xlu0 %v2742
    %v2744 = vpop.xlane.xlu0 %2743
    %v2745 = vsub.f32 %v2737, %v2741
    %v2746 = vsub.f32 %v2738, %v2744
    %v2747 = vmul.f32 %v2745, 1.442695
    %v2748 = vpow.pop %v2747
    %v2749 = vmul.f32 %v2746, 1.442695
    %v2750 = vpow.pop %v2749
    %v2751 = vsel %vm736, %v2748, 0.0
    %2752 = vadd.xlane.f32.xlu0 %v2751
    %v2753 = vpop.xlane.xlu0 %2752
    %v2754 = vsel %vm736, %v2750, 0.0
    %2755 = vadd.xlane.f32.xlu0 %v2754
    %v2756 = vpop.xlane.xlu0 %2755
    %v2757 = vrcp.pop %v2753
    %v2758 = vrcp.pop %v2756
    %v2759 = vmul.f32 %v2748, %v2757
    %v2760 = vmul.f32 %v2750, %v2758
    %2761 = vrot.lane.b32.xlu0 %v2673, 64
    %v2762 = vpop.permute.xlu0 %2761
    %v2765 = vsel %vm736, %v2759, 0
    %2767 = vmatpush.msra.mxu0 0.0
    %2768 = vmatpush.msra.mxu0 0.0
    %2769 = vmatpush.msra.mxu0 0.0
    %2770 = vmatpush.msra.mxu0 0.0
    %2771 = vmatpush.msra.mxu0 0.0
    %2772 = vmatpush.msra.mxu0 0.0
    %2773 = vmatpush.msra.mxu0 0.0
    %2774 = vmatpush.msra.mxu0 0.0
    %2775 = vmatpush.msra.mxu0 0.0
    %2776 = vmatpush.msra.mxu0 0.0
    %2777 = vmatpush.msra.mxu0 0.0
    %2778 = vmatpush.msra.mxu0 0.0
    %2779 = vmatpush.msra.mxu0 0.0
    %2780 = vmatpush.msra.mxu0 0.0
    %2781 = vmatpush.msra.mxu0 0.0
    %2782 = vmatpush.msra.mxu0 %v2762
    %2783 = vmatmul.f32.gmra.mxu0 %v2765
    %v2784 = vpop.f32.mrf.mxu0
    %v2785 = vadd.f32 0.0, %v2784
    %2786 = vdwg.mxu0
    %2787 = vrot.lane.b32.xlu0 %v2676, 64
    %v2788 = vpop.permute.xlu0 %2787
    %v2791 = vsel %vm736, %v2760, 0
    %2793 = vmatpush.msra.mxu0 0.0
    %2794 = vmatpush.msra.mxu0 0.0
    %2795 = vmatpush.msra.mxu0 0.0
    %2796 = vmatpush.msra.mxu0 0.0
    %2797 = vmatpush.msra.mxu0 0.0
    %2798 = vmatpush.msra.mxu0 0.0
    %2799 = vmatpush.msra.mxu0 0.0
    %2800 = vmatpush.msra.mxu0 0.0
    %2801 = vmatpush.msra.mxu0 0.0
    %2802 = vmatpush.msra.mxu0 0.0
    %2803 = vmatpush.msra.mxu0 0.0
    %2804 = vmatpush.msra.mxu0 0.0
    %2805 = vmatpush.msra.mxu0 0.0
    %2806 = vmatpush.msra.mxu0 0.0
    %2807 = vmatpush.msra.mxu0 0.0
    %2808 = vmatpush.msra.mxu0 %v2788
    %2809 = vmatmul.f32.gmra.mxu0 %v2791
    %v2810 = vpop.f32.mrf.mxu0
    %v2811 = vadd.f32 0.0, %v2810
    %2812 = vdwg.mxu0
    %v2814 = vsel %vm736, %v2785, 0
    %v2817 = vsel %vm736, %v2811, 0
    %2819 = vmatpush.msra.mxu0 0.0
    %2820 = vmatpush.msra.mxu0 0.0
    %2821 = vmatpush.msra.mxu0 0.0
    %2822 = vmatpush.msra.mxu0 0.0
    %2823 = vmatpush.msra.mxu0 0.0
    %2824 = vmatpush.msra.mxu0 0.0
    %2825 = vmatpush.msra.mxu0 0.0
    %2826 = vmatpush.msra.mxu0 0.0
    %2827 = vmatpush.msra.mxu0 0.0
    %2828 = vmatpush.msra.mxu0 0.0
    %2829 = vmatpush.msra.mxu0 0.0
    %2830 = vmatpush.msra.mxu0 0.0
    %2831 = vmatpush.msra.mxu0 0.0
    %2832 = vmatpush.msra.mxu0 0.0
    %2833 = vmatpush.msra.mxu0 0.0
    %2834 = vmatpush.msra.mxu0 %v2678
    %2835 = vmatmul.f32.gmra.mxu0 %v2814
    %v2836 = vpop.f32.mrf.mxu0
    %v2837 = vadd.f32 0.0, %v2836
    %2838 = vmatmul.f32.gmra.mxu0 %v2817
    %v2839 = vpop.f32.mrf.mxu0
    %v2840 = vadd.f32 0.0, %v2839
    %2841 = vdwg.mxu0
    %v2843 = vperm.slane %v2682, 0
    %v2845 = vadd.f32 %v2843, %v2837
    %v2846 = vadd.f32 %v2843, %v2840
    %2847 = vrot.lane.b32.xlu0 %v2673, 120
    %v2848 = vpop.permute.xlu0 %2847
    %2849 = vrot.lane.b32.xlu0 %v2673, 88
    %v2850 = vpop.permute.xlu0 %2849
    %v2851 = vsel %vm736, %v2848, 0
    %v2853 = vsel %vm736, %v2850, 0
    %2855 = vmatpush.xpose.msra.mxu0 0.0
    %2856 = vmatpush.xpose.msra.mxu0 0.0
    %2857 = vmatpush.xpose.msra.mxu0 0.0
    %2858 = vmatpush.xpose.msra.mxu0 0.0
    %2859 = vmatpush.xpose.msra.mxu0 0.0
    %2860 = vmatpush.xpose.msra.mxu0 0.0
    %2861 = vmatpush.xpose.msra.mxu0 0.0
    %2862 = vmatpush.xpose.msra.mxu0 0.0
    %2863 = vmatpush.xpose.msra.mxu0 0.0
    %2864 = vmatpush.xpose.msra.mxu0 0.0
    %2865 = vmatpush.xpose.msra.mxu0 0.0
    %2866 = vmatpush.xpose.msra.mxu0 0.0
    %2867 = vmatpush.xpose.msra.mxu0 0.0
    %2868 = vmatpush.xpose.msra.mxu0 0.0
    %2869 = vmatpush.xpose.msra.mxu0 0.0
    %2870 = vmatpush.xpose.msra.mxu0 %v2853
    %2871 = vmatmul.f32.gmra.mxu0 %v2851
    %v2872 = vpop.f32.mrf.mxu0
    %v2873 = vadd.f32 0.0, %v2872
    %2874 = vdwg.mxu0
    %2875 = vrot.lane.b32.xlu0 %v2676, 120
    %v2876 = vpop.permute.xlu0 %2875
    %2877 = vrot.lane.b32.xlu0 %v2676, 88
    %v2878 = vpop.permute.xlu0 %2877
    %v2879 = vsel %vm736, %v2876, 0
    %v2881 = vsel %vm736, %v2878, 0
    %2883 = vmatpush.xpose.msra.mxu0 0.0
    %2884 = vmatpush.xpose.msra.mxu0 0.0
    %2885 = vmatpush.xpose.msra.mxu0 0.0
    %2886 = vmatpush.xpose.msra.mxu0 0.0
    %2887 = vmatpush.xpose.msra.mxu0 0.0
    %2888 = vmatpush.xpose.msra.mxu0 0.0
    %2889 = vmatpush.xpose.msra.mxu0 0.0
    %2890 = vmatpush.xpose.msra.mxu0 0.0
    %2891 = vmatpush.xpose.msra.mxu0 0.0
    %2892 = vmatpush.xpose.msra.mxu0 0.0
    %2893 = vmatpush.xpose.msra.mxu0 0.0
    %2894 = vmatpush.xpose.msra.mxu0 0.0
    %2895 = vmatpush.xpose.msra.mxu0 0.0
    %2896 = vmatpush.xpose.msra.mxu0 0.0
    %2897 = vmatpush.xpose.msra.mxu0 0.0
    %2898 = vmatpush.xpose.msra.mxu0 %v2881
    %2899 = vmatmul.f32.gmra.mxu0 %v2879
    %v2900 = vpop.f32.mrf.mxu0
    %v2901 = vadd.f32 0.0, %v2900
    %2902 = vdwg.mxu0
    %v2903 = vmul.f32 %v2873, 0.35355338
    %v2904 = vmul.f32 %v2901, 0.35355338
    %v2905 = vsel %vm736, %v2903, -inf
    %2906 = vmax.xlane.f32.xlu0 %v2905
    %v2907 = vpop.xlane.xlu0 %2906
    %v2908 = vsel %vm736, %v2904, -inf
    %2909 = vmax.xlane.f32.xlu0 %v2908
    %v2910 = vpop.xlane.xlu0 %2909
    %v2911 = vsub.f32 %v2903, %v2907
    %v2912 = vsub.f32 %v2904, %v2910
    %v2913 = vmul.f32 %v2911, 1.442695
    %v2914 = vpow.pop %v2913
    %v2915 = vmul.f32 %v2912, 1.442695
    %v2916 = vpow.pop %v2915
    %v2917 = vsel %vm736, %v2914, 0.0
    %2918 = vadd.xlane.f32.xlu0 %v2917
    %v2919 = vpop.xlane.xlu0 %2918
    %v2920 = vsel %vm736, %v2916, 0.0
    %2921 = vadd.xlane.f32.xlu0 %v2920
    %v2922 = vpop.xlane.xlu0 %2921
    %v2923 = vrcp.pop %v2919
    %v2924 = vrcp.pop %v2922
    %v2925 = vmul.f32 %v2914, %v2923
    %v2926 = vmul.f32 %v2916, %v2924
    %2927 = vrot.lane.b32.xlu0 %v2673, 56
    %v2928 = vpop.permute.xlu0 %2927
    %v2931 = vsel %vm736, %v2925, 0
    %2933 = vmatpush.msra.mxu0 0.0
    %2934 = vmatpush.msra.mxu0 0.0
    %2935 = vmatpush.msra.mxu0 0.0
    %2936 = vmatpush.msra.mxu0 0.0
    %2937 = vmatpush.msra.mxu0 0.0
    %2938 = vmatpush.msra.mxu0 0.0
    %2939 = vmatpush.msra.mxu0 0.0
    %2940 = vmatpush.msra.mxu0 0.0
    %2941 = vmatpush.msra.mxu0 0.0
    %2942 = vmatpush.msra.mxu0 0.0
    %2943 = vmatpush.msra.mxu0 0.0
    %2944 = vmatpush.msra.mxu0 0.0
    %2945 = vmatpush.msra.mxu0 0.0
    %2946 = vmatpush.msra.mxu0 0.0
    %2947 = vmatpush.msra.mxu0 0.0
    %2948 = vmatpush.msra.mxu0 %v2928
    %2949 = vmatmul.f32.gmra.mxu0 %v2931
    %v2950 = vpop.f32.mrf.mxu0
    %v2951 = vadd.f32 0.0, %v2950
    %2952 = vdwg.mxu0
    %2953 = vrot.lane.b32.xlu0 %v2676, 56
    %v2954 = vpop.permute.xlu0 %2953
    %v2957 = vsel %vm736, %v2926, 0
    %2959 = vmatpush.msra.mxu0 0.0
    %2960 = vmatpush.msra.mxu0 0.0
    %2961 = vmatpush.msra.mxu0 0.0
    %2962 = vmatpush.msra.mxu0 0.0
    %2963 = vmatpush.msra.mxu0 0.0
    %2964 = vmatpush.msra.mxu0 0.0
    %2965 = vmatpush.msra.mxu0 0.0
    %2966 = vmatpush.msra.mxu0 0.0
    %2967 = vmatpush.msra.mxu0 0.0
    %2968 = vmatpush.msra.mxu0 0.0
    %2969 = vmatpush.msra.mxu0 0.0
    %2970 = vmatpush.msra.mxu0 0.0
    %2971 = vmatpush.msra.mxu0 0.0
    %2972 = vmatpush.msra.mxu0 0.0
    %2973 = vmatpush.msra.mxu0 0.0
    %2974 = vmatpush.msra.mxu0 %v2954
    %2975 = vmatmul.f32.gmra.mxu0 %v2957
    %v2976 = vpop.f32.mrf.mxu0
    %v2977 = vadd.f32 0.0, %v2976
    %2978 = vdwg.mxu0
    %v2980 = vsel %vm736, %v2951, 0
    %v2983 = vsel %vm736, %v2977, 0
    %2985 = vmatpush.msra.mxu0 0.0
    %2986 = vmatpush.msra.mxu0 0.0
    %2987 = vmatpush.msra.mxu0 0.0
    %2988 = vmatpush.msra.mxu0 0.0
    %2989 = vmatpush.msra.mxu0 0.0
    %2990 = vmatpush.msra.mxu0 0.0
    %2991 = vmatpush.msra.mxu0 0.0
    %2992 = vmatpush.msra.mxu0 0.0
    %2993 = vmatpush.msra.mxu0 0.0
    %2994 = vmatpush.msra.mxu0 0.0
    %2995 = vmatpush.msra.mxu0 0.0
    %2996 = vmatpush.msra.mxu0 0.0
    %2997 = vmatpush.msra.mxu0 0.0
    %2998 = vmatpush.msra.mxu0 0.0
    %2999 = vmatpush.msra.mxu0 0.0
    %3000 = vmatpush.msra.mxu0 %v2679
    %3001 = vmatmul.f32.gmra.mxu0 %v2980
    %v3002 = vpop.f32.mrf.mxu0
    %v3003 = vadd.f32 0.0, %v3002
    %3004 = vmatmul.f32.gmra.mxu0 %v2983
    %v3005 = vpop.f32.mrf.mxu0
    %v3006 = vadd.f32 0.0, %v3005
    %3007 = vdwg.mxu0
    %v3008 = vadd.f32 %v2845, %v3003
    %v3009 = vadd.f32 %v2846, %v3006
    %3010 = vrot.lane.b32.xlu0 %v2673, 112
    %v3011 = vpop.permute.xlu0 %3010
    %3012 = vrot.lane.b32.xlu0 %v2673, 80
    %v3013 = vpop.permute.xlu0 %3012
    %v3014 = vsel %vm736, %v3011, 0
    %v3016 = vsel %vm736, %v3013, 0
    %3018 = vmatpush.xpose.msra.mxu0 0.0
    %3019 = vmatpush.xpose.msra.mxu0 0.0
    %3020 = vmatpush.xpose.msra.mxu0 0.0
    %3021 = vmatpush.xpose.msra.mxu0 0.0
    %3022 = vmatpush.xpose.msra.mxu0 0.0
    %3023 = vmatpush.xpose.msra.mxu0 0.0
    %3024 = vmatpush.xpose.msra.mxu0 0.0
    %3025 = vmatpush.xpose.msra.mxu0 0.0
    %3026 = vmatpush.xpose.msra.mxu0 0.0
    %3027 = vmatpush.xpose.msra.mxu0 0.0
    %3028 = vmatpush.xpose.msra.mxu0 0.0
    %3029 = vmatpush.xpose.msra.mxu0 0.0
    %3030 = vmatpush.xpose.msra.mxu0 0.0
    %3031 = vmatpush.xpose.msra.mxu0 0.0
    %3032 = vmatpush.xpose.msra.mxu0 0.0
    %3033 = vmatpush.xpose.msra.mxu0 %v3016
    %3034 = vmatmul.f32.gmra.mxu0 %v3014
    %v3035 = vpop.f32.mrf.mxu0
    %v3036 = vadd.f32 0.0, %v3035
    %3037 = vdwg.mxu0
    %3038 = vrot.lane.b32.xlu0 %v2676, 112
    %v3039 = vpop.permute.xlu0 %3038
    %3040 = vrot.lane.b32.xlu0 %v2676, 80
    %v3041 = vpop.permute.xlu0 %3040
    %v3042 = vsel %vm736, %v3039, 0
    %v3044 = vsel %vm736, %v3041, 0
    %3046 = vmatpush.xpose.msra.mxu0 0.0
    %3047 = vmatpush.xpose.msra.mxu0 0.0
    %3048 = vmatpush.xpose.msra.mxu0 0.0
    %3049 = vmatpush.xpose.msra.mxu0 0.0
    %3050 = vmatpush.xpose.msra.mxu0 0.0
    %3051 = vmatpush.xpose.msra.mxu0 0.0
    %3052 = vmatpush.xpose.msra.mxu0 0.0
    %3053 = vmatpush.xpose.msra.mxu0 0.0
    %3054 = vmatpush.xpose.msra.mxu0 0.0
    %3055 = vmatpush.xpose.msra.mxu0 0.0
    %3056 = vmatpush.xpose.msra.mxu0 0.0
    %3057 = vmatpush.xpose.msra.mxu0 0.0
    %3058 = vmatpush.xpose.msra.mxu0 0.0
    %3059 = vmatpush.xpose.msra.mxu0 0.0
    %3060 = vmatpush.xpose.msra.mxu0 0.0
    %3061 = vmatpush.xpose.msra.mxu0 %v3044
    %3062 = vmatmul.f32.gmra.mxu0 %v3042
    %v3063 = vpop.f32.mrf.mxu0
    %v3064 = vadd.f32 0.0, %v3063
    %3065 = vdwg.mxu0
    %v3066 = vmul.f32 %v3036, 0.35355338
    %v3067 = vmul.f32 %v3064, 0.35355338
    %v3068 = vsel %vm736, %v3066, -inf
    %3069 = vmax.xlane.f32.xlu0 %v3068
    %v3070 = vpop.xlane.xlu0 %3069
    %v3071 = vsel %vm736, %v3067, -inf
    %3072 = vmax.xlane.f32.xlu0 %v3071
    %v3073 = vpop.xlane.xlu0 %3072
    %v3074 = vsub.f32 %v3066, %v3070
    %v3075 = vsub.f32 %v3067, %v3073
    %v3076 = vmul.f32 %v3074, 1.442695
    %v3077 = vpow.pop %v3076
    %v3078 = vmul.f32 %v3075, 1.442695
    %v3079 = vpow.pop %v3078
    %v3080 = vsel %vm736, %v3077, 0.0
    %3081 = vadd.xlane.f32.xlu0 %v3080
    %v3082 = vpop.xlane.xlu0 %3081
    %v3083 = vsel %vm736, %v3079, 0.0
    %3084 = vadd.xlane.f32.xlu0 %v3083
    %v3085 = vpop.xlane.xlu0 %3084
    %v3086 = vrcp.pop %v3082
    %v3087 = vrcp.pop %v3085
    %v3088 = vmul.f32 %v3077, %v3086
    %v3089 = vmul.f32 %v3079, %v3087
    %3090 = vrot.lane.b32.xlu0 %v2673, 48
    %v3091 = vpop.permute.xlu0 %3090
    %v3094 = vsel %vm736, %v3088, 0
    %3096 = vmatpush.msra.mxu0 0.0
    %3097 = vmatpush.msra.mxu0 0.0
    %3098 = vmatpush.msra.mxu0 0.0
    %3099 = vmatpush.msra.mxu0 0.0
    %3100 = vmatpush.msra.mxu0 0.0
    %3101 = vmatpush.msra.mxu0 0.0
    %3102 = vmatpush.msra.mxu0 0.0
    %3103 = vmatpush.msra.mxu0 0.0
    %3104 = vmatpush.msra.mxu0 0.0
    %3105 = vmatpush.msra.mxu0 0.0
    %3106 = vmatpush.msra.mxu0 0.0
    %3107 = vmatpush.msra.mxu0 0.0
    %3108 = vmatpush.msra.mxu0 0.0
    %3109 = vmatpush.msra.mxu0 0.0
    %3110 = vmatpush.msra.mxu0 0.0
    %3111 = vmatpush.msra.mxu0 %v3091
    %3112 = vmatmul.f32.gmra.mxu0 %v3094
    %v3113 = vpop.f32.mrf.mxu0
    %v3114 = vadd.f32 0.0, %v3113
    %3115 = vdwg.mxu0
    %3116 = vrot.lane.b32.xlu0 %v2676, 48
    %v3117 = vpop.permute.xlu0 %3116
    %v3120 = vsel %vm736, %v3089, 0
    %3122 = vmatpush.msra.mxu0 0.0
    %3123 = vmatpush.msra.mxu0 0.0
    %3124 = vmatpush.msra.mxu0 0.0
    %3125 = vmatpush.msra.mxu0 0.0
    %3126 = vmatpush.msra.mxu0 0.0
    %3127 = vmatpush.msra.mxu0 0.0
    %3128 = vmatpush.msra.mxu0 0.0
    %3129 = vmatpush.msra.mxu0 0.0
    %3130 = vmatpush.msra.mxu0 0.0
    %3131 = vmatpush.msra.mxu0 0.0
    %3132 = vmatpush.msra.mxu0 0.0
    %3133 = vmatpush.msra.mxu0 0.0
    %3134 = vmatpush.msra.mxu0 0.0
    %3135 = vmatpush.msra.mxu0 0.0
    %3136 = vmatpush.msra.mxu0 0.0
    %3137 = vmatpush.msra.mxu0 %v3117
    %3138 = vmatmul.f32.gmra.mxu0 %v3120
    %v3139 = vpop.f32.mrf.mxu0
    %v3140 = vadd.f32 0.0, %v3139
    %3141 = vdwg.mxu0
    %v3143 = vsel %vm736, %v3114, 0
    %v3146 = vsel %vm736, %v3140, 0
    %3148 = vmatpush.msra.mxu0 0.0
    %3149 = vmatpush.msra.mxu0 0.0
    %3150 = vmatpush.msra.mxu0 0.0
    %3151 = vmatpush.msra.mxu0 0.0
    %3152 = vmatpush.msra.mxu0 0.0
    %3153 = vmatpush.msra.mxu0 0.0
    %3154 = vmatpush.msra.mxu0 0.0
    %3155 = vmatpush.msra.mxu0 0.0
    %3156 = vmatpush.msra.mxu0 0.0
    %3157 = vmatpush.msra.mxu0 0.0
    %3158 = vmatpush.msra.mxu0 0.0
    %3159 = vmatpush.msra.mxu0 0.0
    %3160 = vmatpush.msra.mxu0 0.0
    %3161 = vmatpush.msra.mxu0 0.0
    %3162 = vmatpush.msra.mxu0 0.0
    %3163 = vmatpush.msra.mxu0 %v2680
    %3164 = vmatmul.f32.gmra.mxu0 %v3143
    %v3165 = vpop.f32.mrf.mxu0
    %v3166 = vadd.f32 0.0, %v3165
    %3167 = vmatmul.f32.gmra.mxu0 %v3146
    %v3168 = vpop.f32.mrf.mxu0
    %v3169 = vadd.f32 0.0, %v3168
    %3170 = vdwg.mxu0
    %v3171 = vadd.f32 %v3008, %v3166
    %v3172 = vadd.f32 %v3009, %v3169
    %3173 = vrot.lane.b32.xlu0 %v2673, 104
    %v3174 = vpop.permute.xlu0 %3173
    %3175 = vrot.lane.b32.xlu0 %v2673, 72
    %v3176 = vpop.permute.xlu0 %3175
    %v3177 = vsel %vm736, %v3174, 0
    %v3179 = vsel %vm736, %v3176, 0
    %3181 = vmatpush.xpose.msra.mxu0 0.0
    %3182 = vmatpush.xpose.msra.mxu0 0.0
    %3183 = vmatpush.xpose.msra.mxu0 0.0
    %3184 = vmatpush.xpose.msra.mxu0 0.0
    %3185 = vmatpush.xpose.msra.mxu0 0.0
    %3186 = vmatpush.xpose.msra.mxu0 0.0
    %3187 = vmatpush.xpose.msra.mxu0 0.0
    %3188 = vmatpush.xpose.msra.mxu0 0.0
    %3189 = vmatpush.xpose.msra.mxu0 0.0
    %3190 = vmatpush.xpose.msra.mxu0 0.0
    %3191 = vmatpush.xpose.msra.mxu0 0.0
    %3192 = vmatpush.xpose.msra.mxu0 0.0
    %3193 = vmatpush.xpose.msra.mxu0 0.0
    %3194 = vmatpush.xpose.msra.mxu0 0.0
    %3195 = vmatpush.xpose.msra.mxu0 0.0
    %3196 = vmatpush.xpose.msra.mxu0 %v3179
    %3197 = vmatmul.f32.gmra.mxu0 %v3177
    %v3198 = vpop.f32.mrf.mxu0
    %v3199 = vadd.f32 0.0, %v3198
    %3200 = vdwg.mxu0
    %3201 = vrot.lane.b32.xlu0 %v2676, 104
    %v3202 = vpop.permute.xlu0 %3201
    %3203 = vrot.lane.b32.xlu0 %v2676, 72
    %v3204 = vpop.permute.xlu0 %3203
    %v3205 = vsel %vm736, %v3202, 0
    %v3207 = vsel %vm736, %v3204, 0
    %3209 = vmatpush.xpose.msra.mxu0 0.0
    %3210 = vmatpush.xpose.msra.mxu0 0.0
    %3211 = vmatpush.xpose.msra.mxu0 0.0
    %3212 = vmatpush.xpose.msra.mxu0 0.0
    %3213 = vmatpush.xpose.msra.mxu0 0.0
    %3214 = vmatpush.xpose.msra.mxu0 0.0
    %3215 = vmatpush.xpose.msra.mxu0 0.0
    %3216 = vmatpush.xpose.msra.mxu0 0.0
    %3217 = vmatpush.xpose.msra.mxu0 0.0
    %3218 = vmatpush.xpose.msra.mxu0 0.0
    %3219 = vmatpush.xpose.msra.mxu0 0.0
    %3220 = vmatpush.xpose.msra.mxu0 0.0
    %3221 = vmatpush.xpose.msra.mxu0 0.0
    %3222 = vmatpush.xpose.msra.mxu0 0.0
    %3223 = vmatpush.xpose.msra.mxu0 0.0
    %3224 = vmatpush.xpose.msra.mxu0 %v3207
    %3225 = vmatmul.f32.gmra.mxu0 %v3205
    %v3226 = vpop.f32.mrf.mxu0
    %v3227 = vadd.f32 0.0, %v3226
    %3228 = vdwg.mxu0
    %v3229 = vmul.f32 %v3199, 0.35355338
    %v3230 = vmul.f32 %v3227, 0.35355338
    %v3231 = vsel %vm736, %v3229, -inf
    %3232 = vmax.xlane.f32.xlu0 %v3231
    %v3233 = vpop.xlane.xlu0 %3232
    %v3234 = vsel %vm736, %v3230, -inf
    %3235 = vmax.xlane.f32.xlu0 %v3234
    %v3236 = vpop.xlane.xlu0 %3235
    %v3237 = vsub.f32 %v3229, %v3233
    %v3238 = vsub.f32 %v3230, %v3236
    %v3239 = vmul.f32 %v3237, 1.442695
    %v3240 = vpow.pop %v3239
    %v3241 = vmul.f32 %v3238, 1.442695
    %v3242 = vpow.pop %v3241
    %v3243 = vsel %vm736, %v3240, 0.0
    %3244 = vadd.xlane.f32.xlu0 %v3243
    %v3245 = vpop.xlane.xlu0 %3244
    %v3246 = vsel %vm736, %v3242, 0.0
    %3247 = vadd.xlane.f32.xlu0 %v3246
    %v3248 = vpop.xlane.xlu0 %3247
    %v3249 = vrcp.pop %v3245
    %v3250 = vrcp.pop %v3248
    %v3251 = vmul.f32 %v3240, %v3249
    %v3252 = vmul.f32 %v3242, %v3250
    %3253 = vrot.lane.b32.xlu0 %v2673, 40
    %v3254 = vpop.permute.xlu0 %3253
    %v3257 = vsel %vm736, %v3251, 0
    %3259 = vmatpush.msra.mxu0 0.0
    %3260 = vmatpush.msra.mxu0 0.0
    %3261 = vmatpush.msra.mxu0 0.0
    %3262 = vmatpush.msra.mxu0 0.0
    %3263 = vmatpush.msra.mxu0 0.0
    %3264 = vmatpush.msra.mxu0 0.0
    %3265 = vmatpush.msra.mxu0 0.0
    %3266 = vmatpush.msra.mxu0 0.0
    %3267 = vmatpush.msra.mxu0 0.0
    %3268 = vmatpush.msra.mxu0 0.0
    %3269 = vmatpush.msra.mxu0 0.0
    %3270 = vmatpush.msra.mxu0 0.0
    %3271 = vmatpush.msra.mxu0 0.0
    %3272 = vmatpush.msra.mxu0 0.0
    %3273 = vmatpush.msra.mxu0 0.0
    %3274 = vmatpush.msra.mxu0 %v3254
    %3275 = vmatmul.f32.gmra.mxu0 %v3257
    %v3276 = vpop.f32.mrf.mxu0
    %v3277 = vadd.f32 0.0, %v3276
    %3278 = vdwg.mxu0
    %3279 = vrot.lane.b32.xlu0 %v2676, 40
    %v3280 = vpop.permute.xlu0 %3279
    %v3283 = vsel %vm736, %v3252, 0
    %3285 = vmatpush.msra.mxu0 0.0
    %3286 = vmatpush.msra.mxu0 0.0
    %3287 = vmatpush.msra.mxu0 0.0
    %3288 = vmatpush.msra.mxu0 0.0
    %3289 = vmatpush.msra.mxu0 0.0
    %3290 = vmatpush.msra.mxu0 0.0
    %3291 = vmatpush.msra.mxu0 0.0
    %3292 = vmatpush.msra.mxu0 0.0
    %3293 = vmatpush.msra.mxu0 0.0
    %3294 = vmatpush.msra.mxu0 0.0
    %3295 = vmatpush.msra.mxu0 0.0
    %3296 = vmatpush.msra.mxu0 0.0
    %3297 = vmatpush.msra.mxu0 0.0
    %3298 = vmatpush.msra.mxu0 0.0
    %3299 = vmatpush.msra.mxu0 0.0
    %3300 = vmatpush.msra.mxu0 %v3280
    %3301 = vmatmul.f32.gmra.mxu0 %v3283
    %v3302 = vpop.f32.mrf.mxu0
    %v3303 = vadd.f32 0.0, %v3302
    %3304 = vdwg.mxu0
    %v3306 = vsel %vm736, %v3277, 0
    %v3309 = vsel %vm736, %v3303, 0
    %3311 = vmatpush.msra.mxu0 0.0
    %3312 = vmatpush.msra.mxu0 0.0
    %3313 = vmatpush.msra.mxu0 0.0
    %3314 = vmatpush.msra.mxu0 0.0
    %3315 = vmatpush.msra.mxu0 0.0
    %3316 = vmatpush.msra.mxu0 0.0
    %3317 = vmatpush.msra.mxu0 0.0
    %3318 = vmatpush.msra.mxu0 0.0
    %3319 = vmatpush.msra.mxu0 0.0
    %3320 = vmatpush.msra.mxu0 0.0
    %3321 = vmatpush.msra.mxu0 0.0
    %3322 = vmatpush.msra.mxu0 0.0
    %3323 = vmatpush.msra.mxu0 0.0
    %3324 = vmatpush.msra.mxu0 0.0
    %3325 = vmatpush.msra.mxu0 0.0
    %3326 = vmatpush.msra.mxu0 %v2681
    %3327 = vmatmul.f32.gmra.mxu0 %v3306
    %v3328 = vpop.f32.mrf.mxu0
    %v3329 = vadd.f32 0.0, %v3328
    %3330 = vmatmul.f32.gmra.mxu0 %v3309
    %v3331 = vpop.f32.mrf.mxu0
    %v3332 = vadd.f32 0.0, %v3331
    %3333 = vdwg.mxu0
    %v3334 = vadd.f32 %v3171, %v3329
    %v3335 = vadd.f32 %v3172, %v3332
    %v3336 = vadd.f32 %v2639, %v3334
    %v3337 = vadd.f32 %v2640, %v3335
    %v3338 = vld [vmem:[#allocation28] sm:$0x1]
    %v3339 = vld [vmem:[%s53] sm:$0x1]
    %v3340 = vsel %vm698, %v3336, 0.0
    %3341 = vadd.xlane.f32.xlu0 %v3340
    %v3342 = vpop.xlane.xlu0 %3341
    %v3343 = vsel %vm698, %v3337, 0.0
    %3344 = vadd.xlane.f32.xlu0 %v3343
    %v3345 = vpop.xlane.xlu0 %3344
    %v3346 = vmul.f32 %v3342, %v1403
    %v3347 = vmul.f32 %v3345, %v1403
    %v3348 = vsub.f32 %v3336, %v3346
    %v3349 = vsub.f32 %v3337, %v3347
    %v3350 = vmul.f32 %v3348, %v3348
    %v3351 = vmul.f32 %v3349, %v3349
    %v3352 = vsel %vm698, %v3350, 0.0
    %3353 = vadd.xlane.f32.xlu0 %v3352
    %v3354 = vpop.xlane.xlu0 %3353
    %v3355 = vsel %vm698, %v3351, 0.0
    %3356 = vadd.xlane.f32.xlu0 %v3355
    %v3357 = vpop.xlane.xlu0 %3356
    %v3358 = vmul.f32 %v3354, %v1403
    %v3359 = vmul.f32 %v3357, %v1403
    %v3360 = vadd.f32 %v3358, 1e-05
    %v3361 = vadd.f32 %v3359, 1e-05
    %v3362 = vrsqrt.pop %v3360
    %v3363 = vmul.f32 %v3362, %v3360
    %v3364 = vmul.f32 %v3363, %v3362
    %v3365 = vmul.f32 0.5, %v3364
    %v3366 = vsub.f32 1.5, %v3365
    %v3367 = vmul.f32 %v3362, %v3366
    %vm3368 = vweird.f32 %v3360
    %vm3369 = vweird.f32 %v3362
    %vm3370 = vmor %vm3368, %vm3369
    %v3371 = vsel %vm3370, %v3362, %v3367
    %v3372 = vrsqrt.pop %v3361
    %v3373 = vmul.f32 %v3372, %v3361
    %v3374 = vmul.f32 %v3373, %v3372
    %v3375 = vmul.f32 0.5, %v3374
    %v3376 = vsub.f32 1.5, %v3375
    %v3377 = vmul.f32 %v3372, %v3376
    %vm3378 = vweird.f32 %v3361
    %vm3379 = vweird.f32 %v3372
    %vm3380 = vmor %vm3378, %vm3379
    %v3381 = vsel %vm3380, %v3372, %v3377
    %v3382 = vmul.f32 %v3348, %v3371
    %v3383 = vmul.f32 %v3349, %v3381
    %v3385 = vperm.slane %v3338, 0
    %v3387 = vmul.f32 %v3382, %v3385
    %v3388 = vmul.f32 %v3383, %v3385
    %v3390 = vperm.slane %v3339, 0
    %v3392 = vadd.f32 %v3387, %v3390
    %v3393 = vadd.f32 %v3388, %v3390
    %v3394 = vld [vmem:[#allocation29] sm:$0xff]
    %v3395 = vld [vmem:[#allocation29 + $0x8] sm:$0xff]
    %v3396 = vld [vmem:[#allocation29 + $0x10] sm:$0xff]
    %v3397 = vld [vmem:[#allocation29 + $0x18] sm:$0xff]
    %v3398 = vld [vmem:[%s57] sm:$0x1]
    %v3400 = vperm.slane %v3398, 0
    %v3403 = vsel %vm698, %v3392, 0
    %v3406 = vsel %vm698, %v3393, 0
    %3408 = vmatpush.msra.mxu0 0.0
    %3409 = vmatpush.msra.mxu0 0.0
    %3410 = vmatpush.msra.mxu0 0.0
    %3411 = vmatpush.msra.mxu0 0.0
    %3412 = vmatpush.msra.mxu0 0.0
    %3413 = vmatpush.msra.mxu0 0.0
    %3414 = vmatpush.msra.mxu0 0.0
    %3415 = vmatpush.msra.mxu0 0.0
    %3416 = vmatpush.msra.mxu0 0.0
    %3417 = vmatpush.msra.mxu0 0.0
    %3418 = vmatpush.msra.mxu0 0.0
    %3419 = vmatpush.msra.mxu0 0.0
    %3420 = vmatpush.msra.mxu0 %v3397
    %3421 = vmatpush.msra.mxu0 %v3396
    %3422 = vmatpush.msra.mxu0 %v3395
    %3423 = vmatpush.msra.mxu0 %v3394
    %3424 = vmatmul.f32.gmra.mxu0 %v3403
    %v3425 = vpop.f32.mrf.mxu0
    %v3426 = vadd.f32 %v3400, %v3425
    %3427 = vmatmul.f32.gmra.mxu0 %v3406
    %v3428 = vpop.f32.mrf.mxu0
    %v3429 = vadd.f32 %v3400, %v3428
    %3430 = vdwg.mxu0
    %v3431 = vmul.f32 %v3426, 0.5
    %v3432 = vmul.f32 %v3429, 0.5
    %v3433 = vmul.f32 %v3426, 0.044715
    %v3434 = vmul.f32 %v3429, 0.044715
    %v3435 = vmul.f32 %v3433, %v3426
    %v3436 = vmul.f32 %v3434, %v3429
    %v3437 = vmul.f32 %v3435, %v3426
    %v3438 = vmul.f32 %v3436, %v3429
    %v3439 = vadd.f32 %v3426, %v3437
    %v3440 = vadd.f32 %v3429, %v3438
    %v3441 = vmul.f32 %v3439, 0.7978846
    %v3442 = vmul.f32 %v3440, 0.7978846
    %v3443 = vtanh.pop %v3441
    %v3444 = vtanh.pop %v3442
    %v3445 = vadd.f32 %v3443, 1.0
    %v3446 = vadd.f32 %v3444, 1.0
    %v3447 = vmul.f32 %v3431, %v3445
    %v3448 = vmul.f32 %v3432, %v3446
    %v3449 = vld [vmem:[#allocation31] sm:$0xff]
    %v3450 = vld [vmem:[#allocation31 + $0x8] sm:$0xff]
    %v3451 = vld [vmem:[#allocation31 + $0x10] sm:$0xff]
    %v3452 = vld [vmem:[#allocation31 + $0x18] sm:$0xff]
    %v3453 = vld [vmem:[%s61] sm:$0x1]
    %v3455 = vperm.slane %v3453, 0
    %v3458 = vsel %vm698, %v3447, 0
    %v3461 = vsel %vm698, %v3448, 0
    %3463 = vmatpush.msra.mxu0 0.0
    %3464 = vmatpush.msra.mxu0 0.0
    %3465 = vmatpush.msra.mxu0 0.0
    %3466 = vmatpush.msra.mxu0 0.0
    %3467 = vmatpush.msra.mxu0 0.0
    %3468 = vmatpush.msra.mxu0 0.0
    %3469 = vmatpush.msra.mxu0 0.0
    %3470 = vmatpush.msra.mxu0 0.0
    %3471 = vmatpush.msra.mxu0 0.0
    %3472 = vmatpush.msra.mxu0 0.0
    %3473 = vmatpush.msra.mxu0 0.0
    %3474 = vmatpush.msra.mxu0 0.0
    %3475 = vmatpush.msra.mxu0 %v3452
    %3476 = vmatpush.msra.mxu0 %v3451
    %3477 = vmatpush.msra.mxu0 %v3450
    %3478 = vmatpush.msra.mxu0 %v3449
    %3479 = vmatmul.f32.gmra.mxu0 %v3458
    %v3480 = vpop.f32.mrf.mxu0
    %v3481 = vadd.f32 %v3455, %v3480
    %3482 = vmatmul.f32.gmra.mxu0 %v3461
    %v3483 = vpop.f32.mrf.mxu0
    %v3484 = vadd.f32 %v3455, %v3483
    %3485 = vdwg.mxu0
    %v3486 = vadd.f32 %v3392, %v3481
    %v3487 = vadd.f32 %v3393, %v3484
    %v3488 = vld [vmem:[#allocation32] sm:$0x1]
    %v3489 = vld [vmem:[%s65] sm:$0x1]
    %v3490 = vsel %vm698, %v3486, 0.0
    %3491 = vadd.xlane.f32.xlu0 %v3490
    %v3492 = vpop.xlane.xlu0 %3491
    %v3493 = vsel %vm698, %v3487, 0.0
    %3494 = vadd.xlane.f32.xlu0 %v3493
    %v3495 = vpop.xlane.xlu0 %3494
    %v3496 = vmul.f32 %v3492, %v1403
    %v3497 = vmul.f32 %v3495, %v1403
    %v3498 = vsub.f32 %v3486, %v3496
    %v3499 = vsub.f32 %v3487, %v3497
    %v3500 = vmul.f32 %v3498, %v3498
    %v3501 = vmul.f32 %v3499, %v3499
    %v3502 = vsel %vm698, %v3500, 0.0
    %3503 = vadd.xlane.f32.xlu0 %v3502
    %v3504 = vpop.xlane.xlu0 %3503
    %v3505 = vsel %vm698, %v3501, 0.0
    %3506 = vadd.xlane.f32.xlu0 %v3505
    %v3507 = vpop.xlane.xlu0 %3506
    %v3508 = vmul.f32 %v3504, %v1403
    %v3509 = vmul.f32 %v3507, %v1403
    %v3510 = vadd.f32 %v3508, 1e-05
    %v3511 = vadd.f32 %v3509, 1e-05
    %v3512 = vrsqrt.pop %v3510
    %v3513 = vmul.f32 %v3512, %v3510
    %v3514 = vmul.f32 %v3513, %v3512
    %v3515 = vmul.f32 0.5, %v3514
    %v3516 = vsub.f32 1.5, %v3515
    %v3517 = vmul.f32 %v3512, %v3516
    %vm3518 = vweird.f32 %v3510
    %vm3519 = vweird.f32 %v3512
    %vm3520 = vmor %vm3518, %vm3519
    %v3521 = vsel %vm3520, %v3512, %v3517
    %v3522 = vrsqrt.pop %v3511
    %v3523 = vmul.f32 %v3522, %v3511
    %v3524 = vmul.f32 %v3523, %v3522
    %v3525 = vmul.f32 0.5, %v3524
    %v3526 = vsub.f32 1.5, %v3525
    %v3527 = vmul.f32 %v3522, %v3526
    %vm3528 = vweird.f32 %v3511
    %vm3529 = vweird.f32 %v3522
    %vm3530 = vmor %vm3528, %vm3529
    %v3531 = vsel %vm3530, %v3522, %v3527
    %v3532 = vmul.f32 %v3498, %v3521
    %v3533 = vmul.f32 %v3499, %v3531
    %v3535 = vperm.slane %v3488, 0
    %v3537 = vmul.f32 %v3532, %v3535
    %v3538 = vmul.f32 %v3533, %v3535
    %v3540 = vperm.slane %v3489, 0
    %v3542 = vadd.f32 %v3537, %v3540
    %v3543 = vadd.f32 %v3538, %v3540
    %s3544 = scalar_lea.vmem [#allocation23], 32
    %v3545 = vld [vmem:[%s3544] sm:$0xff]
    %v3546 = vld [vmem:[%s3544 + $0x8] sm:$0xff]
    %v3547 = vld [vmem:[%s3544 + $0x10] sm:$0xff]
    %v3548 = vld [vmem:[%s3544 + $0x18] sm:$0xff]
    %s3549 = scalar_lea.vmem [#allocation25], 1
    %v3550 = vld [vmem:[%s3549] sm:$0x1]
    %v3552 = vperm.slane %v3550, 0
    %v3555 = vsel %vm698, %v3542, 0
    %v3558 = vsel %vm698, %v3543, 0
    %3560 = vmatpush.msra.mxu0 0.0
    %3561 = vmatpush.msra.mxu0 0.0
    %3562 = vmatpush.msra.mxu0 0.0
    %3563 = vmatpush.msra.mxu0 0.0
    %3564 = vmatpush.msra.mxu0 0.0
    %3565 = vmatpush.msra.mxu0 0.0
    %3566 = vmatpush.msra.mxu0 0.0
    %3567 = vmatpush.msra.mxu0 0.0
    %3568 = vmatpush.msra.mxu0 0.0
    %3569 = vmatpush.msra.mxu0 0.0
    %3570 = vmatpush.msra.mxu0 0.0
    %3571 = vmatpush.msra.mxu0 0.0
    %3572 = vmatpush.msra.mxu0 %v3548
    %3573 = vmatpush.msra.mxu0 %v3547
    %3574 = vmatpush.msra.mxu0 %v3546
    %3575 = vmatpush.msra.mxu0 %v3545
    %3576 = vmatmul.f32.gmra.mxu0 %v3555
    %v3577 = vpop.f32.mrf.mxu0
    %v3578 = vadd.f32 %v3552, %v3577
    %3579 = vmatmul.f32.gmra.mxu0 %v3558
    %v3580 = vpop.f32.mrf.mxu0
    %v3581 = vadd.f32 %v3552, %v3580
    %3582 = vdwg.mxu0
    %s3583 = scalar_lea.vmem [#allocation26], 32
    %v3584 = vld [vmem:[%s3583] sm:$0xff]
    %v3585 = vld [vmem:[%s3583 + $0x8] sm:$0xff]
    %v3586 = vld [vmem:[%s3583 + $0x10] sm:$0xff]
    %v3587 = vld [vmem:[%s3583 + $0x18] sm:$0xff]
    %s3588 = scalar_lea.vmem %s49, 1
    %v3589 = vld [vmem:[%s3588] sm:$0x1]
    %3591 = vrot.lane.b32.xlu0 %v3578, 96
    %v3592 = vpop.permute.xlu0 %3591
    %v3593 = vsel %vm736, %v3578, 0
    %v3595 = vsel %vm736, %v3592, 0
    %3597 = vmatpush.xpose.msra.mxu0 0.0
    %3598 = vmatpush.xpose.msra.mxu0 0.0
    %3599 = vmatpush.xpose.msra.mxu0 0.0
    %3600 = vmatpush.xpose.msra.mxu0 0.0
    %3601 = vmatpush.xpose.msra.mxu0 0.0
    %3602 = vmatpush.xpose.msra.mxu0 0.0
    %3603 = vmatpush.xpose.msra.mxu0 0.0
    %3604 = vmatpush.xpose.msra.mxu0 0.0
    %3605 = vmatpush.xpose.msra.mxu0 0.0
    %3606 = vmatpush.xpose.msra.mxu0 0.0
    %3607 = vmatpush.xpose.msra.mxu0 0.0
    %3608 = vmatpush.xpose.msra.mxu0 0.0
    %3609 = vmatpush.xpose.msra.mxu0 0.0
    %3610 = vmatpush.xpose.msra.mxu0 0.0
    %3611 = vmatpush.xpose.msra.mxu0 0.0
    %3612 = vmatpush.xpose.msra.mxu0 %v3595
    %3613 = vmatmul.f32.gmra.mxu0 %v3593
    %v3614 = vpop.f32.mrf.mxu0
    %v3615 = vadd.f32 0.0, %v3614
    %3616 = vdwg.mxu0
    %3618 = vrot.lane.b32.xlu0 %v3581, 96
    %v3619 = vpop.permute.xlu0 %3618
    %v3620 = vsel %vm736, %v3581, 0
    %v3622 = vsel %vm736, %v3619, 0
    %3624 = vmatpush.xpose.msra.mxu0 0.0
    %3625 = vmatpush.xpose.msra.mxu0 0.0
    %3626 = vmatpush.xpose.msra.mxu0 0.0
    %3627 = vmatpush.xpose.msra.mxu0 0.0
    %3628 = vmatpush.xpose.msra.mxu0 0.0
    %3629 = vmatpush.xpose.msra.mxu0 0.0
    %3630 = vmatpush.xpose.msra.mxu0 0.0
    %3631 = vmatpush.xpose.msra.mxu0 0.0
    %3632 = vmatpush.xpose.msra.mxu0 0.0
    %3633 = vmatpush.xpose.msra.mxu0 0.0
    %3634 = vmatpush.xpose.msra.mxu0 0.0
    %3635 = vmatpush.xpose.msra.mxu0 0.0
    %3636 = vmatpush.xpose.msra.mxu0 0.0
    %3637 = vmatpush.xpose.msra.mxu0 0.0
    %3638 = vmatpush.xpose.msra.mxu0 0.0
    %3639 = vmatpush.xpose.msra.mxu0 %v3622
    %3640 = vmatmul.f32.gmra.mxu0 %v3620
    %v3641 = vpop.f32.mrf.mxu0
    %v3642 = vadd.f32 0.0, %v3641
    %3643 = vdwg.mxu0
    %v3644 = vmul.f32 %v3615, 0.35355338
    %v3645 = vmul.f32 %v3642, 0.35355338
    %v3646 = vsel %vm736, %v3644, -inf
    %3647 = vmax.xlane.f32.xlu0 %v3646
    %v3648 = vpop.xlane.xlu0 %3647
    %v3649 = vsel %vm736, %v3645, -inf
    %3650 = vmax.xlane.f32.xlu0 %v3649
    %v3651 = vpop.xlane.xlu0 %3650
    %v3652 = vsub.f32 %v3644, %v3648
    %v3653 = vsub.f32 %v3645, %v3651
    %v3654 = vmul.f32 %v3652, 1.442695
    %v3655 = vpow.pop %v3654
    %v3656 = vmul.f32 %v3653, 1.442695
    %v3657 = vpow.pop %v3656
    %v3658 = vsel %vm736, %v3655, 0.0
    %3659 = vadd.xlane.f32.xlu0 %v3658
    %v3660 = vpop.xlane.xlu0 %3659
    %v3661 = vsel %vm736, %v3657, 0.0
    %3662 = vadd.xlane.f32.xlu0 %v3661
    %v3663 = vpop.xlane.xlu0 %3662
    %v3664 = vrcp.pop %v3660
    %v3665 = vrcp.pop %v3663
    %v3666 = vmul.f32 %v3655, %v3664
    %v3667 = vmul.f32 %v3657, %v3665
    %3668 = vrot.lane.b32.xlu0 %v3578, 64
    %v3669 = vpop.permute.xlu0 %3668
    %v3672 = vsel %vm736, %v3666, 0
    %3674 = vmatpush.msra.mxu0 0.0
    %3675 = vmatpush.msra.mxu0 0.0
    %3676 = vmatpush.msra.mxu0 0.0
    %3677 = vmatpush.msra.mxu0 0.0
    %3678 = vmatpush.msra.mxu0 0.0
    %3679 = vmatpush.msra.mxu0 0.0
    %3680 = vmatpush.msra.mxu0 0.0
    %3681 = vmatpush.msra.mxu0 0.0
    %3682 = vmatpush.msra.mxu0 0.0
    %3683 = vmatpush.msra.mxu0 0.0
    %3684 = vmatpush.msra.mxu0 0.0
    %3685 = vmatpush.msra.mxu0 0.0
    %3686 = vmatpush.msra.mxu0 0.0
    %3687 = vmatpush.msra.mxu0 0.0
    %3688 = vmatpush.msra.mxu0 0.0
    %3689 = vmatpush.msra.mxu0 %v3669
    %3690 = vmatmul.f32.gmra.mxu0 %v3672
    %v3691 = vpop.f32.mrf.mxu0
    %v3692 = vadd.f32 0.0, %v3691
    %3693 = vdwg.mxu0
    %3694 = vrot.lane.b32.xlu0 %v3581, 64
    %v3695 = vpop.permute.xlu0 %3694
    %v3698 = vsel %vm736, %v3667, 0
    %3700 = vmatpush.msra.mxu0 0.0
    %3701 = vmatpush.msra.mxu0 0.0
    %3702 = vmatpush.msra.mxu0 0.0
    %3703 = vmatpush.msra.mxu0 0.0
    %3704 = vmatpush.msra.mxu0 0.0
    %3705 = vmatpush.msra.mxu0 0.0
    %3706 = vmatpush.msra.mxu0 0.0
    %3707 = vmatpush.msra.mxu0 0.0
    %3708 = vmatpush.msra.mxu0 0.0
    %3709 = vmatpush.msra.mxu0 0.0
    %3710 = vmatpush.msra.mxu0 0.0
    %3711 = vmatpush.msra.mxu0 0.0
    %3712 = vmatpush.msra.mxu0 0.0
    %3713 = vmatpush.msra.mxu0 0.0
    %3714 = vmatpush.msra.mxu0 0.0
    %3715 = vmatpush.msra.mxu0 %v3695
    %3716 = vmatmul.f32.gmra.mxu0 %v3698
    %v3717 = vpop.f32.mrf.mxu0
    %v3718 = vadd.f32 0.0, %v3717
    %3719 = vdwg.mxu0
    %v3721 = vsel %vm736, %v3692, 0
    %v3724 = vsel %vm736, %v3718, 0
    %3726 = vmatpush.msra.mxu0 0.0
    %3727 = vmatpush.msra.mxu0 0.0
    %3728 = vmatpush.msra.mxu0 0.0
    %3729 = vmatpush.msra.mxu0 0.0
    %3730 = vmatpush.msra.mxu0 0.0
    %3731 = vmatpush.msra.mxu0 0.0
    %3732 = vmatpush.msra.mxu0 0.0
    %3733 = vmatpush.msra.mxu0 0.0
    %3734 = vmatpush.msra.mxu0 0.0
    %3735 = vmatpush.msra.mxu0 0.0
    %3736 = vmatpush.msra.mxu0 0.0
    %3737 = vmatpush.msra.mxu0 0.0
    %3738 = vmatpush.msra.mxu0 0.0
    %3739 = vmatpush.msra.mxu0 0.0
    %3740 = vmatpush.msra.mxu0 0.0
    %3741 = vmatpush.msra.mxu0 %v3584
    %3742 = vmatmul.f32.gmra.mxu0 %v3721
    %v3743 = vpop.f32.mrf.mxu0
    %v3744 = vadd.f32 0.0, %v3743
    %3745 = vmatmul.f32.gmra.mxu0 %v3724
    %v3746 = vpop.f32.mrf.mxu0
    %v3747 = vadd.f32 0.0, %v3746
    %3748 = vdwg.mxu0
    %v3750 = vperm.slane %v3589, 0
    %v3752 = vadd.f32 %v3750, %v3744
    %v3753 = vadd.f32 %v3750, %v3747
    %3754 = vrot.lane.b32.xlu0 %v3578, 120
    %v3755 = vpop.permute.xlu0 %3754
    %3756 = vrot.lane.b32.xlu0 %v3578, 88
    %v3757 = vpop.permute.xlu0 %3756
    %v3758 = vsel %vm736, %v3755, 0
    %v3760 = vsel %vm736, %v3757, 0
    %3762 = vmatpush.xpose.msra.mxu0 0.0
    %3763 = vmatpush.xpose.msra.mxu0 0.0
    %3764 = vmatpush.xpose.msra.mxu0 0.0
    %3765 = vmatpush.xpose.msra.mxu0 0.0
    %3766 = vmatpush.xpose.msra.mxu0 0.0
    %3767 = vmatpush.xpose.msra.mxu0 0.0
    %3768 = vmatpush.xpose.msra.mxu0 0.0
    %3769 = vmatpush.xpose.msra.mxu0 0.0
    %3770 = vmatpush.xpose.msra.mxu0 0.0
    %3771 = vmatpush.xpose.msra.mxu0 0.0
    %3772 = vmatpush.xpose.msra.mxu0 0.0
    %3773 = vmatpush.xpose.msra.mxu0 0.0
    %3774 = vmatpush.xpose.msra.mxu0 0.0
    %3775 = vmatpush.xpose.msra.mxu0 0.0
    %3776 = vmatpush.xpose.msra.mxu0 0.0
    %3777 = vmatpush.xpose.msra.mxu0 %v3760
    %3778 = vmatmul.f32.gmra.mxu0 %v3758
    %v3779 = vpop.f32.mrf.mxu0
    %v3780 = vadd.f32 0.0, %v3779
    %3781 = vdwg.mxu0
    %3782 = vrot.lane.b32.xlu0 %v3581, 120
    %v3783 = vpop.permute.xlu0 %3782
    %3784 = vrot.lane.b32.xlu0 %v3581, 88
    %v3785 = vpop.permute.xlu0 %3784
    %v3786 = vsel %vm736, %v3783, 0
    %v3788 = vsel %vm736, %v3785, 0
    %3790 = vmatpush.xpose.msra.mxu0 0.0
    %3791 = vmatpush.xpose.msra.mxu0 0.0
    %3792 = vmatpush.xpose.msra.mxu0 0.0
    %3793 = vmatpush.xpose.msra.mxu0 0.0
    %3794 = vmatpush.xpose.msra.mxu0 0.0
    %3795 = vmatpush.xpose.msra.mxu0 0.0
    %3796 = vmatpush.xpose.msra.mxu0 0.0
    %3797 = vmatpush.xpose.msra.mxu0 0.0
    %3798 = vmatpush.xpose.msra.mxu0 0.0
    %3799 = vmatpush.xpose.msra.mxu0 0.0
    %3800 = vmatpush.xpose.msra.mxu0 0.0
    %3801 = vmatpush.xpose.msra.mxu0 0.0
    %3802 = vmatpush.xpose.msra.mxu0 0.0
    %3803 = vmatpush.xpose.msra.mxu0 0.0
    %3804 = vmatpush.xpose.msra.mxu0 0.0
    %3805 = vmatpush.xpose.msra.mxu0 %v3788
    %3806 = vmatmul.f32.gmra.mxu0 %v3786
    %v3807 = vpop.f32.mrf.mxu0
    %v3808 = vadd.f32 0.0, %v3807
    %3809 = vdwg.mxu0
    %v3810 = vmul.f32 %v3780, 0.35355338
    %v3811 = vmul.f32 %v3808, 0.35355338
    %v3812 = vsel %vm736, %v3810, -inf
    %3813 = vmax.xlane.f32.xlu0 %v3812
    %v3814 = vpop.xlane.xlu0 %3813
    %v3815 = vsel %vm736, %v3811, -inf
    %3816 = vmax.xlane.f32.xlu0 %v3815
    %v3817 = vpop.xlane.xlu0 %3816
    %v3818 = vsub.f32 %v3810, %v3814
    %v3819 = vsub.f32 %v3811, %v3817
    %v3820 = vmul.f32 %v3818, 1.442695
    %v3821 = vpow.pop %v3820
    %v3822 = vmul.f32 %v3819, 1.442695
    %v3823 = vpow.pop %v3822
    %v3824 = vsel %vm736, %v3821, 0.0
    %3825 = vadd.xlane.f32.xlu0 %v3824
    %v3826 = vpop.xlane.xlu0 %3825
    %v3827 = vsel %vm736, %v3823, 0.0
    %3828 = vadd.xlane.f32.xlu0 %v3827
    %v3829 = vpop.xlane.xlu0 %3828
    %v3830 = vrcp.pop %v3826
    %v3831 = vrcp.pop %v3829
    %v3832 = vmul.f32 %v3821, %v3830
    %v3833 = vmul.f32 %v3823, %v3831
    %3834 = vrot.lane.b32.xlu0 %v3578, 56
    %v3835 = vpop.permute.xlu0 %3834
    %v3838 = vsel %vm736, %v3832, 0
    %3840 = vmatpush.msra.mxu0 0.0
    %3841 = vmatpush.msra.mxu0 0.0
    %3842 = vmatpush.msra.mxu0 0.0
    %3843 = vmatpush.msra.mxu0 0.0
    %3844 = vmatpush.msra.mxu0 0.0
    %3845 = vmatpush.msra.mxu0 0.0
    %3846 = vmatpush.msra.mxu0 0.0
    %3847 = vmatpush.msra.mxu0 0.0
    %3848 = vmatpush.msra.mxu0 0.0
    %3849 = vmatpush.msra.mxu0 0.0
    %3850 = vmatpush.msra.mxu0 0.0
    %3851 = vmatpush.msra.mxu0 0.0
    %3852 = vmatpush.msra.mxu0 0.0
    %3853 = vmatpush.msra.mxu0 0.0
    %3854 = vmatpush.msra.mxu0 0.0
    %3855 = vmatpush.msra.mxu0 %v3835
    %3856 = vmatmul.f32.gmra.mxu0 %v3838
    %v3857 = vpop.f32.mrf.mxu0
    %v3858 = vadd.f32 0.0, %v3857
    %3859 = vdwg.mxu0
    %3860 = vrot.lane.b32.xlu0 %v3581, 56
    %v3861 = vpop.permute.xlu0 %3860
    %v3864 = vsel %vm736, %v3833, 0
    %3866 = vmatpush.msra.mxu0 0.0
    %3867 = vmatpush.msra.mxu0 0.0
    %3868 = vmatpush.msra.mxu0 0.0
    %3869 = vmatpush.msra.mxu0 0.0
    %3870 = vmatpush.msra.mxu0 0.0
    %3871 = vmatpush.msra.mxu0 0.0
    %3872 = vmatpush.msra.mxu0 0.0
    %3873 = vmatpush.msra.mxu0 0.0
    %3874 = vmatpush.msra.mxu0 0.0
    %3875 = vmatpush.msra.mxu0 0.0
    %3876 = vmatpush.msra.mxu0 0.0
    %3877 = vmatpush.msra.mxu0 0.0
    %3878 = vmatpush.msra.mxu0 0.0
    %3879 = vmatpush.msra.mxu0 0.0
    %3880 = vmatpush.msra.mxu0 0.0
    %3881 = vmatpush.msra.mxu0 %v3861
    %3882 = vmatmul.f32.gmra.mxu0 %v3864
    %v3883 = vpop.f32.mrf.mxu0
    %v3884 = vadd.f32 0.0, %v3883
    %3885 = vdwg.mxu0
    %v3887 = vsel %vm736, %v3858, 0
    %v3890 = vsel %vm736, %v3884, 0
    %3892 = vmatpush.msra.mxu0 0.0
    %3893 = vmatpush.msra.mxu0 0.0
    %3894 = vmatpush.msra.mxu0 0.0
    %3895 = vmatpush.msra.mxu0 0.0
    %3896 = vmatpush.msra.mxu0 0.0
    %3897 = vmatpush.msra.mxu0 0.0
    %3898 = vmatpush.msra.mxu0 0.0
    %3899 = vmatpush.msra.mxu0 0.0
    %3900 = vmatpush.msra.mxu0 0.0
    %3901 = vmatpush.msra.mxu0 0.0
    %3902 = vmatpush.msra.mxu0 0.0
    %3903 = vmatpush.msra.mxu0 0.0
    %3904 = vmatpush.msra.mxu0 0.0
    %3905 = vmatpush.msra.mxu0 0.0
    %3906 = vmatpush.msra.mxu0 0.0
    %3907 = vmatpush.msra.mxu0 %v3585
    %3908 = vmatmul.f32.gmra.mxu0 %v3887
    %v3909 = vpop.f32.mrf.mxu0
    %v3910 = vadd.f32 0.0, %v3909
    %3911 = vmatmul.f32.gmra.mxu0 %v3890
    %v3912 = vpop.f32.mrf.mxu0
    %v3913 = vadd.f32 0.0, %v3912
    %3914 = vdwg.mxu0
    %v3915 = vadd.f32 %v3752, %v3910
    %v3916 = vadd.f32 %v3753, %v3913
    %3917 = vrot.lane.b32.xlu0 %v3578, 112
    %v3918 = vpop.permute.xlu0 %3917
    %3919 = vrot.lane.b32.xlu0 %v3578, 80
    %v3920 = vpop.permute.xlu0 %3919
    %v3921 = vsel %vm736, %v3918, 0
    %v3923 = vsel %vm736, %v3920, 0
    %3925 = vmatpush.xpose.msra.mxu0 0.0
    %3926 = vmatpush.xpose.msra.mxu0 0.0
    %3927 = vmatpush.xpose.msra.mxu0 0.0
    %3928 = vmatpush.xpose.msra.mxu0 0.0
    %3929 = vmatpush.xpose.msra.mxu0 0.0
    %3930 = vmatpush.xpose.msra.mxu0 0.0
    %3931 = vmatpush.xpose.msra.mxu0 0.0
    %3932 = vmatpush.xpose.msra.mxu0 0.0
    %3933 = vmatpush.xpose.msra.mxu0 0.0
    %3934 = vmatpush.xpose.msra.mxu0 0.0
    %3935 = vmatpush.xpose.msra.mxu0 0.0
    %3936 = vmatpush.xpose.msra.mxu0 0.0
    %3937 = vmatpush.xpose.msra.mxu0 0.0
    %3938 = vmatpush.xpose.msra.mxu0 0.0
    %3939 = vmatpush.xpose.msra.mxu0 0.0
    %3940 = vmatpush.xpose.msra.mxu0 %v3923
    %3941 = vmatmul.f32.gmra.mxu0 %v3921
    %v3942 = vpop.f32.mrf.mxu0
    %v3943 = vadd.f32 0.0, %v3942
    %3944 = vdwg.mxu0
    %3945 = vrot.lane.b32.xlu0 %v3581, 112
    %v3946 = vpop.permute.xlu0 %3945
    %3947 = vrot.lane.b32.xlu0 %v3581, 80
    %v3948 = vpop.permute.xlu0 %3947
    %v3949 = vsel %vm736, %v3946, 0
    %v3951 = vsel %vm736, %v3948, 0
    %3953 = vmatpush.xpose.msra.mxu0 0.0
    %3954 = vmatpush.xpose.msra.mxu0 0.0
    %3955 = vmatpush.xpose.msra.mxu0 0.0
    %3956 = vmatpush.xpose.msra.mxu0 0.0
    %3957 = vmatpush.xpose.msra.mxu0 0.0
    %3958 = vmatpush.xpose.msra.mxu0 0.0
    %3959 = vmatpush.xpose.msra.mxu0 0.0
    %3960 = vmatpush.xpose.msra.mxu0 0.0
    %3961 = vmatpush.xpose.msra.mxu0 0.0
    %3962 = vmatpush.xpose.msra.mxu0 0.0
    %3963 = vmatpush.xpose.msra.mxu0 0.0
    %3964 = vmatpush.xpose.msra.mxu0 0.0
    %3965 = vmatpush.xpose.msra.mxu0 0.0
    %3966 = vmatpush.xpose.msra.mxu0 0.0
    %3967 = vmatpush.xpose.msra.mxu0 0.0
    %3968 = vmatpush.xpose.msra.mxu0 %v3951
    %3969 = vmatmul.f32.gmra.mxu0 %v3949
    %v3970 = vpop.f32.mrf.mxu0
    %v3971 = vadd.f32 0.0, %v3970
    %3972 = vdwg.mxu0
    %v3973 = vmul.f32 %v3943, 0.35355338
    %v3974 = vmul.f32 %v3971, 0.35355338
    %v3975 = vsel %vm736, %v3973, -inf
    %3976 = vmax.xlane.f32.xlu0 %v3975
    %v3977 = vpop.xlane.xlu0 %3976
    %v3978 = vsel %vm736, %v3974, -inf
    %3979 = vmax.xlane.f32.xlu0 %v3978
    %v3980 = vpop.xlane.xlu0 %3979
    %v3981 = vsub.f32 %v3973, %v3977
    %v3982 = vsub.f32 %v3974, %v3980
    %v3983 = vmul.f32 %v3981, 1.442695
    %v3984 = vpow.pop %v3983
    %v3985 = vmul.f32 %v3982, 1.442695
    %v3986 = vpow.pop %v3985
    %v3987 = vsel %vm736, %v3984, 0.0
    %3988 = vadd.xlane.f32.xlu0 %v3987
    %v3989 = vpop.xlane.xlu0 %3988
    %v3990 = vsel %vm736, %v3986, 0.0
    %3991 = vadd.xlane.f32.xlu0 %v3990
    %v3992 = vpop.xlane.xlu0 %3991
    %v3993 = vrcp.pop %v3989
    %v3994 = vrcp.pop %v3992
    %v3995 = vmul.f32 %v3984, %v3993
    %v3996 = vmul.f32 %v3986, %v3994
    %3997 = vrot.lane.b32.xlu0 %v3578, 48
    %v3998 = vpop.permute.xlu0 %3997
    %v4001 = vsel %vm736, %v3995, 0
    %4003 = vmatpush.msra.mxu0 0.0
    %4004 = vmatpush.msra.mxu0 0.0
    %4005 = vmatpush.msra.mxu0 0.0
    %4006 = vmatpush.msra.mxu0 0.0
    %4007 = vmatpush.msra.mxu0 0.0
    %4008 = vmatpush.msra.mxu0 0.0
    %4009 = vmatpush.msra.mxu0 0.0
    %4010 = vmatpush.msra.mxu0 0.0
    %4011 = vmatpush.msra.mxu0 0.0
    %4012 = vmatpush.msra.mxu0 0.0
    %4013 = vmatpush.msra.mxu0 0.0
    %4014 = vmatpush.msra.mxu0 0.0
    %4015 = vmatpush.msra.mxu0 0.0
    %4016 = vmatpush.msra.mxu0 0.0
    %4017 = vmatpush.msra.mxu0 0.0
    %4018 = vmatpush.msra.mxu0 %v3998
    %4019 = vmatmul.f32.gmra.mxu0 %v4001
    %v4020 = vpop.f32.mrf.mxu0
    %v4021 = vadd.f32 0.0, %v4020
    %4022 = vdwg.mxu0
    %4023 = vrot.lane.b32.xlu0 %v3581, 48
    %v4024 = vpop.permute.xlu0 %4023
    %v4027 = vsel %vm736, %v3996, 0
    %4029 = vmatpush.msra.mxu0 0.0
    %4030 = vmatpush.msra.mxu0 0.0
    %4031 = vmatpush.msra.mxu0 0.0
    %4032 = vmatpush.msra.mxu0 0.0
    %4033 = vmatpush.msra.mxu0 0.0
    %4034 = vmatpush.msra.mxu0 0.0
    %4035 = vmatpush.msra.mxu0 0.0
    %4036 = vmatpush.msra.mxu0 0.0
    %4037 = vmatpush.msra.mxu0 0.0
    %4038 = vmatpush.msra.mxu0 0.0
    %4039 = vmatpush.msra.mxu0 0.0
    %4040 = vmatpush.msra.mxu0 0.0
    %4041 = vmatpush.msra.mxu0 0.0
    %4042 = vmatpush.msra.mxu0 0.0
    %4043 = vmatpush.msra.mxu0 0.0
    %4044 = vmatpush.msra.mxu0 %v4024
    %4045 = vmatmul.f32.gmra.mxu0 %v4027
    %v4046 = vpop.f32.mrf.mxu0
    %v4047 = vadd.f32 0.0, %v4046
    %4048 = vdwg.mxu0
    %v4050 = vsel %vm736, %v4021, 0
    %v4053 = vsel %vm736, %v4047, 0
    %4055 = vmatpush.msra.mxu0 0.0
    %4056 = vmatpush.msra.mxu0 0.0
    %4057 = vmatpush.msra.mxu0 0.0
    %4058 = vmatpush.msra.mxu0 0.0
    %4059 = vmatpush.msra.mxu0 0.0
    %4060 = vmatpush.msra.mxu0 0.0
    %4061 = vmatpush.msra.mxu0 0.0
    %4062 = vmatpush.msra.mxu0 0.0
    %4063 = vmatpush.msra.mxu0 0.0
    %4064 = vmatpush.msra.mxu0 0.0
    %4065 = vmatpush.msra.mxu0 0.0
    %4066 = vmatpush.msra.mxu0 0.0
    %4067 = vmatpush.msra.mxu0 0.0
    %4068 = vmatpush.msra.mxu0 0.0
    %4069 = vmatpush.msra.mxu0 0.0
    %4070 = vmatpush.msra.mxu0 %v3586
    %4071 = vmatmul.f32.gmra.mxu0 %v4050
    %v4072 = vpop.f32.mrf.mxu0
    %v4073 = vadd.f32 0.0, %v4072
    %4074 = vmatmul.f32.gmra.mxu0 %v4053
    %v4075 = vpop.f32.mrf.mxu0
    %v4076 = vadd.f32 0.0, %v4075
    %4077 = vdwg.mxu0
    %v4078 = vadd.f32 %v3915, %v4073
    %v4079 = vadd.f32 %v3916, %v4076
    %4080 = vrot.lane.b32.xlu0 %v3578, 104
    %v4081 = vpop.permute.xlu0 %4080
    %4082 = vrot.lane.b32.xlu0 %v3578, 72
    %v4083 = vpop.permute.xlu0 %4082
    %v4084 = vsel %vm736, %v4081, 0
    %v4086 = vsel %vm736, %v4083, 0
    %4088 = vmatpush.xpose.msra.mxu0 0.0
    %4089 = vmatpush.xpose.msra.mxu0 0.0
    %4090 = vmatpush.xpose.msra.mxu0 0.0
    %4091 = vmatpush.xpose.msra.mxu0 0.0
    %4092 = vmatpush.xpose.msra.mxu0 0.0
    %4093 = vmatpush.xpose.msra.mxu0 0.0
    %4094 = vmatpush.xpose.msra.mxu0 0.0
    %4095 = vmatpush.xpose.msra.mxu0 0.0
    %4096 = vmatpush.xpose.msra.mxu0 0.0
    %4097 = vmatpush.xpose.msra.mxu0 0.0
    %4098 = vmatpush.xpose.msra.mxu0 0.0
    %4099 = vmatpush.xpose.msra.mxu0 0.0
    %4100 = vmatpush.xpose.msra.mxu0 0.0
    %4101 = vmatpush.xpose.msra.mxu0 0.0
    %4102 = vmatpush.xpose.msra.mxu0 0.0
    %4103 = vmatpush.xpose.msra.mxu0 %v4086
    %4104 = vmatmul.f32.gmra.mxu0 %v4084
    %v4105 = vpop.f32.mrf.mxu0
    %v4106 = vadd.f32 0.0, %v4105
    %4107 = vdwg.mxu0
    %4108 = vrot.lane.b32.xlu0 %v3581, 104
    %v4109 = vpop.permute.xlu0 %4108
    %4110 = vrot.lane.b32.xlu0 %v3581, 72
    %v4111 = vpop.permute.xlu0 %4110
    %v4112 = vsel %vm736, %v4109, 0
    %v4114 = vsel %vm736, %v4111, 0
    %4116 = vmatpush.xpose.msra.mxu0 0.0
    %4117 = vmatpush.xpose.msra.mxu0 0.0
    %4118 = vmatpush.xpose.msra.mxu0 0.0
    %4119 = vmatpush.xpose.msra.mxu0 0.0
    %4120 = vmatpush.xpose.msra.mxu0 0.0
    %4121 = vmatpush.xpose.msra.mxu0 0.0
    %4122 = vmatpush.xpose.msra.mxu0 0.0
    %4123 = vmatpush.xpose.msra.mxu0 0.0
    %4124 = vmatpush.xpose.msra.mxu0 0.0
    %4125 = vmatpush.xpose.msra.mxu0 0.0
    %4126 = vmatpush.xpose.msra.mxu0 0.0
    %4127 = vmatpush.xpose.msra.mxu0 0.0
    %4128 = vmatpush.xpose.msra.mxu0 0.0
    %4129 = vmatpush.xpose.msra.mxu0 0.0
    %4130 = vmatpush.xpose.msra.mxu0 0.0
    %4131 = vmatpush.xpose.msra.mxu0 %v4114
    %4132 = vmatmul.f32.gmra.mxu0 %v4112
    %v4133 = vpop.f32.mrf.mxu0
    %v4134 = vadd.f32 0.0, %v4133
    %4135 = vdwg.mxu0
    %v4136 = vmul.f32 %v4106, 0.35355338
    %v4137 = vmul.f32 %v4134, 0.35355338
    %v4138 = vsel %vm736, %v4136, -inf
    %4139 = vmax.xlane.f32.xlu0 %v4138
    %v4140 = vpop.xlane.xlu0 %4139
    %v4141 = vsel %vm736, %v4137, -inf
    %4142 = vmax.xlane.f32.xlu0 %v4141
    %v4143 = vpop.xlane.xlu0 %4142
    %v4144 = vsub.f32 %v4136, %v4140
    %v4145 = vsub.f32 %v4137, %v4143
    %v4146 = vmul.f32 %v4144, 1.442695
    %v4147 = vpow.pop %v4146
    %v4148 = vmul.f32 %v4145, 1.442695
    %v4149 = vpow.pop %v4148
    %v4150 = vsel %vm736, %v4147, 0.0
    %4151 = vadd.xlane.f32.xlu0 %v4150
    %v4152 = vpop.xlane.xlu0 %4151
    %v4153 = vsel %vm736, %v4149, 0.0
    %4154 = vadd.xlane.f32.xlu0 %v4153
    %v4155 = vpop.xlane.xlu0 %4154
    %v4156 = vrcp.pop %v4152
    %v4157 = vrcp.pop %v4155
    %v4158 = vmul.f32 %v4147, %v4156
    %v4159 = vmul.f32 %v4149, %v4157
    %4160 = vrot.lane.b32.xlu0 %v3578, 40
    %v4161 = vpop.permute.xlu0 %4160
    %v4164 = vsel %vm736, %v4158, 0
    %4166 = vmatpush.msra.mxu0 0.0
    %4167 = vmatpush.msra.mxu0 0.0
    %4168 = vmatpush.msra.mxu0 0.0
    %4169 = vmatpush.msra.mxu0 0.0
    %4170 = vmatpush.msra.mxu0 0.0
    %4171 = vmatpush.msra.mxu0 0.0
    %4172 = vmatpush.msra.mxu0 0.0
    %4173 = vmatpush.msra.mxu0 0.0
    %4174 = vmatpush.msra.mxu0 0.0
    %4175 = vmatpush.msra.mxu0 0.0
    %4176 = vmatpush.msra.mxu0 0.0
    %4177 = vmatpush.msra.mxu0 0.0
    %4178 = vmatpush.msra.mxu0 0.0
    %4179 = vmatpush.msra.mxu0 0.0
    %4180 = vmatpush.msra.mxu0 0.0
    %4181 = vmatpush.msra.mxu0 %v4161
    %4182 = vmatmul.f32.gmra.mxu0 %v4164
    %v4183 = vpop.f32.mrf.mxu0
    %v4184 = vadd.f32 0.0, %v4183
    %4185 = vdwg.mxu0
    %4186 = vrot.lane.b32.xlu0 %v3581, 40
    %v4187 = vpop.permute.xlu0 %4186
    %v4190 = vsel %vm736, %v4159, 0
    %4192 = vmatpush.msra.mxu0 0.0
    %4193 = vmatpush.msra.mxu0 0.0
    %4194 = vmatpush.msra.mxu0 0.0
    %4195 = vmatpush.msra.mxu0 0.0
    %4196 = vmatpush.msra.mxu0 0.0
    %4197 = vmatpush.msra.mxu0 0.0
    %4198 = vmatpush.msra.mxu0 0.0
    %4199 = vmatpush.msra.mxu0 0.0
    %4200 = vmatpush.msra.mxu0 0.0
    %4201 = vmatpush.msra.mxu0 0.0
    %4202 = vmatpush.msra.mxu0 0.0
    %4203 = vmatpush.msra.mxu0 0.0
    %4204 = vmatpush.msra.mxu0 0.0
    %4205 = vmatpush.msra.mxu0 0.0
    %4206 = vmatpush.msra.mxu0 0.0
    %4207 = vmatpush.msra.mxu0 %v4187
    %4208 = vmatmul.f32.gmra.mxu0 %v4190
    %v4209 = vpop.f32.mrf.mxu0
    %v4210 = vadd.f32 0.0, %v4209
    %4211 = vdwg.mxu0
    %v4213 = vsel %vm736, %v4184, 0
    %v4216 = vsel %vm736, %v4210, 0
    %4218 = vmatpush.msra.mxu0 0.0
    %4219 = vmatpush.msra.mxu0 0.0
    %4220 = vmatpush.msra.mxu0 0.0
    %4221 = vmatpush.msra.mxu0 0.0
    %4222 = vmatpush.msra.mxu0 0.0
    %4223 = vmatpush.msra.mxu0 0.0
    %4224 = vmatpush.msra.mxu0 0.0
    %4225 = vmatpush.msra.mxu0 0.0
    %4226 = vmatpush.msra.mxu0 0.0
    %4227 = vmatpush.msra.mxu0 0.0
    %4228 = vmatpush.msra.mxu0 0.0
    %4229 = vmatpush.msra.mxu0 0.0
    %4230 = vmatpush.msra.mxu0 0.0
    %4231 = vmatpush.msra.mxu0 0.0
    %4232 = vmatpush.msra.mxu0 0.0
    %4233 = vmatpush.msra.mxu0 %v3587
    %4234 = vmatmul.f32.gmra.mxu0 %v4213
    %v4235 = vpop.f32.mrf.mxu0
    %v4236 = vadd.f32 0.0, %v4235
    %4237 = vmatmul.f32.gmra.mxu0 %v4216
    %v4238 = vpop.f32.mrf.mxu0
    %v4239 = vadd.f32 0.0, %v4238
    %4240 = vdwg.mxu0
    %v4241 = vadd.f32 %v4078, %v4236
    %v4242 = vadd.f32 %v4079, %v4239
    %v4243 = vadd.f32 %v3542, %v4241
    %v4244 = vadd.f32 %v3543, %v4242
    %s4245 = scalar_lea.vmem [#allocation28], 1
    %v4246 = vld [vmem:[%s4245] sm:$0x1]
    %s4247 = scalar_lea.vmem %s53, 1
    %v4248 = vld [vmem:[%s4247] sm:$0x1]
    %v4249 = vsel %vm698, %v4243, 0.0
    %4250 = vadd.xlane.f32.xlu0 %v4249
    %v4251 = vpop.xlane.xlu0 %4250
    %v4252 = vsel %vm698, %v4244, 0.0
    %4253 = vadd.xlane.f32.xlu0 %v4252
    %v4254 = vpop.xlane.xlu0 %4253
    %v4255 = vmul.f32 %v4251, %v1403
    %v4256 = vmul.f32 %v4254, %v1403
    %v4257 = vsub.f32 %v4243, %v4255
    %v4258 = vsub.f32 %v4244, %v4256
    %v4259 = vmul.f32 %v4257, %v4257
    %v4260 = vmul.f32 %v4258, %v4258
    %v4261 = vsel %vm698, %v4259, 0.0
    %4262 = vadd.xlane.f32.xlu0 %v4261
    %v4263 = vpop.xlane.xlu0 %4262
    %v4264 = vsel %vm698, %v4260, 0.0
    %4265 = vadd.xlane.f32.xlu0 %v4264
    %v4266 = vpop.xlane.xlu0 %4265
    %v4267 = vmul.f32 %v4263, %v1403
    %v4268 = vmul.f32 %v4266, %v1403
    %v4269 = vadd.f32 %v4267, 1e-05
    %v4270 = vadd.f32 %v4268, 1e-05
    %v4271 = vrsqrt.pop %v4269
    %v4272 = vmul.f32 %v4271, %v4269
    %v4273 = vmul.f32 %v4272, %v4271
    %v4274 = vmul.f32 0.5, %v4273
    %v4275 = vsub.f32 1.5, %v4274
    %v4276 = vmul.f32 %v4271, %v4275
    %vm4277 = vweird.f32 %v4269
    %vm4278 = vweird.f32 %v4271
    %vm4279 = vmor %vm4277, %vm4278
    %v4280 = vsel %vm4279, %v4271, %v4276
    %v4281 = vrsqrt.pop %v4270
    %v4282 = vmul.f32 %v4281, %v4270
    %v4283 = vmul.f32 %v4282, %v4281
    %v4284 = vmul.f32 0.5, %v4283
    %v4285 = vsub.f32 1.5, %v4284
    %v4286 = vmul.f32 %v4281, %v4285
    %vm4287 = vweird.f32 %v4270
    %vm4288 = vweird.f32 %v4281
    %vm4289 = vmor %vm4287, %vm4288
    %v4290 = vsel %vm4289, %v4281, %v4286
    %v4291 = vmul.f32 %v4257, %v4280
    %v4292 = vmul.f32 %v4258, %v4290
    %v4294 = vperm.slane %v4246, 0
    %v4296 = vmul.f32 %v4291, %v4294
    %v4297 = vmul.f32 %v4292, %v4294
    %v4299 = vperm.slane %v4248, 0
    %v4301 = vadd.f32 %v4296, %v4299
    %v4302 = vadd.f32 %v4297, %v4299
    %s4303 = scalar_lea.vmem [#allocation29], 32
    %v4304 = vld [vmem:[%s4303] sm:$0xff]
    %v4305 = vld [vmem:[%s4303 + $0x8] sm:$0xff]
    %v4306 = vld [vmem:[%s4303 + $0x10] sm:$0xff]
    %v4307 = vld [vmem:[%s4303 + $0x18] sm:$0xff]
    %s4308 = scalar_lea.vmem %s57, 1
    %v4309 = vld [vmem:[%s4308] sm:$0x1]
    %v4311 = vperm.slane %v4309, 0
    %v4314 = vsel %vm698, %v4301, 0
    %v4317 = vsel %vm698, %v4302, 0
    %4319 = vmatpush.msra.mxu0 0.0
    %4320 = vmatpush.msra.mxu0 0.0
    %4321 = vmatpush.msra.mxu0 0.0
    %4322 = vmatpush.msra.mxu0 0.0
    %4323 = vmatpush.msra.mxu0 0.0
    %4324 = vmatpush.msra.mxu0 0.0
    %4325 = vmatpush.msra.mxu0 0.0
    %4326 = vmatpush.msra.mxu0 0.0
    %4327 = vmatpush.msra.mxu0 0.0
    %4328 = vmatpush.msra.mxu0 0.0
    %4329 = vmatpush.msra.mxu0 0.0
    %4330 = vmatpush.msra.mxu0 0.0
    %4331 = vmatpush.msra.mxu0 %v4307
    %4332 = vmatpush.msra.mxu0 %v4306
    %4333 = vmatpush.msra.mxu0 %v4305
    %4334 = vmatpush.msra.mxu0 %v4304
    %4335 = vmatmul.f32.gmra.mxu0 %v4314
    %v4336 = vpop.f32.mrf.mxu0
    %v4337 = vadd.f32 %v4311, %v4336
    %4338 = vmatmul.f32.gmra.mxu0 %v4317
    %v4339 = vpop.f32.mrf.mxu0
    %v4340 = vadd.f32 %v4311, %v4339
    %4341 = vdwg.mxu0
    %v4342 = vmul.f32 %v4337, 0.5
    %v4343 = vmul.f32 %v4340, 0.5
    %v4344 = vmul.f32 %v4337, 0.044715
    %v4345 = vmul.f32 %v4340, 0.044715
    %v4346 = vmul.f32 %v4344, %v4337
    %v4347 = vmul.f32 %v4345, %v4340
    %v4348 = vmul.f32 %v4346, %v4337
    %v4349 = vmul.f32 %v4347, %v4340
    %v4350 = vadd.f32 %v4337, %v4348
    %v4351 = vadd.f32 %v4340, %v4349
    %v4352 = vmul.f32 %v4350, 0.7978846
    %v4353 = vmul.f32 %v4351, 0.7978846
    %v4354 = vtanh.pop %v4352
    %v4355 = vtanh.pop %v4353
    %v4356 = vadd.f32 %v4354, 1.0
    %v4357 = vadd.f32 %v4355, 1.0
    %v4358 = vmul.f32 %v4342, %v4356
    %v4359 = vmul.f32 %v4343, %v4357
    %s4360 = scalar_lea.vmem [#allocation31], 32
    %v4361 = vld [vmem:[%s4360] sm:$0xff]
    %v4362 = vld [vmem:[%s4360 + $0x8] sm:$0xff]
    %v4363 = vld [vmem:[%s4360 + $0x10] sm:$0xff]
    %v4364 = vld [vmem:[%s4360 + $0x18] sm:$0xff]
    %s4365 = scalar_lea.vmem %s61, 1
    %v4366 = vld [vmem:[%s4365] sm:$0x1]
    %v4368 = vperm.slane %v4366, 0
    %v4371 = vsel %vm698, %v4358, 0
    %v4374 = vsel %vm698, %v4359, 0
    %4376 = vmatpush.msra.mxu0 0.0
    %4377 = vmatpush.msra.mxu0 0.0
    %4378 = vmatpush.msra.mxu0 0.0
    %4379 = vmatpush.msra.mxu0 0.0
    %4380 = vmatpush.msra.mxu0 0.0
    %4381 = vmatpush.msra.mxu0 0.0
    %4382 = vmatpush.msra.mxu0 0.0
    %4383 = vmatpush.msra.mxu0 0.0
    %4384 = vmatpush.msra.mxu0 0.0
    %4385 = vmatpush.msra.mxu0 0.0
    %4386 = vmatpush.msra.mxu0 0.0
    %4387 = vmatpush.msra.mxu0 0.0
    %4388 = vmatpush.msra.mxu0 %v4364
    %4389 = vmatpush.msra.mxu0 %v4363
    %4390 = vmatpush.msra.mxu0 %v4362
    %4391 = vmatpush.msra.mxu0 %v4361
    %4392 = vmatmul.f32.gmra.mxu0 %v4371
    %v4393 = vpop.f32.mrf.mxu0
    %v4394 = vadd.f32 %v4368, %v4393
    %4395 = vmatmul.f32.gmra.mxu0 %v4374
    %v4396 = vpop.f32.mrf.mxu0
    %v4397 = vadd.f32 %v4368, %v4396
    %4398 = vdwg.mxu0
    %v4399 = vadd.f32 %v4301, %v4394
    %v4400 = vadd.f32 %v4302, %v4397
    %s4401 = scalar_lea.vmem [#allocation32], 1
    %v4402 = vld [vmem:[%s4401] sm:$0x1]
    %s4403 = scalar_lea.vmem %s65, 1
    %v4404 = vld [vmem:[%s4403] sm:$0x1]
    %v4405 = vsel %vm698, %v4399, 0.0
    %4406 = vadd.xlane.f32.xlu0 %v4405
    %v4407 = vpop.xlane.xlu0 %4406
    %v4408 = vsel %vm698, %v4400, 0.0
    %4409 = vadd.xlane.f32.xlu0 %v4408
    %v4410 = vpop.xlane.xlu0 %4409
    %v4411 = vmul.f32 %v4407, %v1403
    %v4412 = vmul.f32 %v4410, %v1403
    %v4413 = vsub.f32 %v4399, %v4411
    %v4414 = vsub.f32 %v4400, %v4412
    %v4415 = vmul.f32 %v4413, %v4413
    %v4416 = vmul.f32 %v4414, %v4414
    %v4417 = vsel %vm698, %v4415, 0.0
    %4418 = vadd.xlane.f32.xlu0 %v4417
    %v4419 = vpop.xlane.xlu0 %4418
    %v4420 = vsel %vm698, %v4416, 0.0
    %4421 = vadd.xlane.f32.xlu0 %v4420
    %v4422 = vpop.xlane.xlu0 %4421
    %v4423 = vmul.f32 %v4419, %v1403
    %v4424 = vmul.f32 %v4422, %v1403
    %v4425 = vadd.f32 %v4423, 1e-05
    %v4426 = vadd.f32 %v4424, 1e-05
    %v4427 = vrsqrt.pop %v4425
    %v4428 = vmul.f32 %v4427, %v4425
    %v4429 = vmul.f32 %v4428, %v4427
    %v4430 = vmul.f32 0.5, %v4429
    %v4431 = vsub.f32 1.5, %v4430
    %v4432 = vmul.f32 %v4427, %v4431
    %vm4433 = vweird.f32 %v4425
    %vm4434 = vweird.f32 %v4427
    %vm4435 = vmor %vm4433, %vm4434
    %v4436 = vsel %vm4435, %v4427, %v4432
    %v4437 = vrsqrt.pop %v4426
    %v4438 = vmul.f32 %v4437, %v4426
    %v4439 = vmul.f32 %v4438, %v4437
    %v4440 = vmul.f32 0.5, %v4439
    %v4441 = vsub.f32 1.5, %v4440
    %v4442 = vmul.f32 %v4437, %v4441
    %vm4443 = vweird.f32 %v4426
    %vm4444 = vweird.f32 %v4437
    %vm4445 = vmor %vm4443, %vm4444
    %v4446 = vsel %vm4445, %v4437, %v4442
    %v4447 = vmul.f32 %v4413, %v4436
    %v4448 = vmul.f32 %v4414, %v4446
    %v4450 = vperm.slane %v4402, 0
    %v4452 = vmul.f32 %v4447, %v4450
    %v4453 = vmul.f32 %v4448, %v4450
    %v4455 = vperm.slane %v4404, 0
    %v4457 = vadd.f32 %v4452, %v4455
    %v4458 = vadd.f32 %v4453, %v4455
    %v4459 = vld [vmem:[#allocation34] sm:$0x1]
    %v4460 = vld [vmem:[#allocation35] sm:$0x1]
    %v4461 = vsel %vm698, %v4457, 0.0
    %4462 = vadd.xlane.f32.xlu0 %v4461
    %v4463 = vpop.xlane.xlu0 %4462
    %v4464 = vsel %vm698, %v4458, 0.0
    %4465 = vadd.xlane.f32.xlu0 %v4464
    %v4466 = vpop.xlane.xlu0 %4465
    %v4467 = vmul.f32 %v4463, %v1403
    %v4468 = vmul.f32 %v4466, %v1403
    %v4469 = vsub.f32 %v4457, %v4467
    %v4470 = vsub.f32 %v4458, %v4468
    %v4471 = vmul.f32 %v4469, %v4469
    %v4472 = vmul.f32 %v4470, %v4470
    %v4473 = vsel %vm698, %v4471, 0.0
    %4474 = vadd.xlane.f32.xlu0 %v4473
    %v4475 = vpop.xlane.xlu0 %4474
    %v4476 = vsel %vm698, %v4472, 0.0
    %4477 = vadd.xlane.f32.xlu0 %v4476
    %v4478 = vpop.xlane.xlu0 %4477
    %v4479 = vmul.f32 %v4475, %v1403
    %v4480 = vmul.f32 %v4478, %v1403
    %v4481 = vadd.f32 %v4479, 1e-05
    %v4482 = vadd.f32 %v4480, 1e-05
    %v4483 = vrsqrt.pop %v4481
    %v4484 = vmul.f32 %v4483, %v4481
    %v4485 = vmul.f32 %v4484, %v4483
    %v4486 = vmul.f32 0.5, %v4485
    %v4487 = vsub.f32 1.5, %v4486
    %v4488 = vmul.f32 %v4483, %v4487
    %vm4489 = vweird.f32 %v4481
    %vm4490 = vweird.f32 %v4483
    %vm4491 = vmor %vm4489, %vm4490
    %v4492 = vsel %vm4491, %v4483, %v4488
    %v4493 = vrsqrt.pop %v4482
    %v4494 = vmul.f32 %v4493, %v4482
    %v4495 = vmul.f32 %v4494, %v4493
    %v4496 = vmul.f32 0.5, %v4495
    %v4497 = vsub.f32 1.5, %v4496
    %v4498 = vmul.f32 %v4493, %v4497
    %vm4499 = vweird.f32 %v4482
    %vm4500 = vweird.f32 %v4493
    %vm4501 = vmor %vm4499, %vm4500
    %v4502 = vsel %vm4501, %v4493, %v4498
    %v4503 = vmul.f32 %v4469, %v4492
    %v4504 = vmul.f32 %v4470, %v4502
    %v4506 = vperm.slane %v4459, 0
    %v4508 = vmul.f32 %v4503, %v4506
    %v4509 = vmul.f32 %v4504, %v4506
    %v4511 = vperm.slane %v4460, 0
    %v4513 = vadd.f32 %v4508, %v4511
    %v4514 = vadd.f32 %v4509, %v4511
    %v4515 = vsel %vm698, %v4513, 0.0
    %v4516 = vrot.slane %v4515, 4
    %v4517 = vadd.f32 %v4515, %v4516
    %v4518 = vrot.slane %v4517, 2
    %v4519 = vadd.f32 %v4517, %v4518
    %v4520 = vrot.slane %v4519, 1
    %v4521 = vadd.f32 %v4519, %v4520
    %v4522 = vsel %vm698, %v4514, 0.0
    %v4523 = vrot.slane %v4522, 4
    %v4524 = vadd.f32 %v4522, %v4523
    %v4525 = vrot.slane %v4524, 2
    %v4526 = vadd.f32 %v4524, %v4525
    %v4527 = vrot.slane %v4526, 1
    %v4528 = vadd.f32 %v4526, %v4527
    %v4529 = vmul.f32 %v4521, %v2593
    %v4530 = vmul.f32 %v4528, %v2593
    %v4531 = vld [vmem:[#allocation7] sm:$0xff]
    %v4532 = vld [vmem:[#allocation7 + $0x8] sm:$0xff]
    %v4533 = vld [vmem:[%s71] sm:$0xff]
    %v4534 = vld [vmem:[%s71 + $0x8] sm:$0x3]
    %v4535 = vld [vmem:[#allocation37] sm:$0x1]
    %v4537 = vperm.slane %v4535, 0
    %vm4539 = vcmask 80896
    %v4541 = vsel %vm4539, %v4531, 0
    %v4544 = vsel %vm4539, %v4532, 0
    %v4547 = vsel %vm2612, %v4534, 0
    %4549 = vmatpush.msra.mxu0 0.0
    %4550 = vmatpush.msra.mxu0 0.0
    %4551 = vmatpush.msra.mxu0 0.0
    %4552 = vmatpush.msra.mxu0 0.0
    %4553 = vmatpush.msra.mxu0 0.0
    %4554 = vmatpush.msra.mxu0 0.0
    %4555 = vmatpush.msra.mxu0 0.0
    %4556 = vmatpush.msra.mxu0 0.0
    %4557 = vmatpush.msra.mxu0 0.0
    %4558 = vmatpush.msra.mxu0 0.0
    %4559 = vmatpush.msra.mxu0 0.0
    %4560 = vmatpush.msra.mxu0 0.0
    %4561 = vmatpush.msra.mxu0 0.0
    %4562 = vmatpush.msra.mxu0 0.0
    %4563 = vmatpush.msra.mxu0 %v4547
    %4564 = vmatpush.msra.mxu0 %v4533
    %4565 = vmatmul.f32.gmra.mxu0 %v4541
    %v4566 = vpop.f32.mrf.mxu0
    %v4567 = vadd.f32 %v4537, %v4566
    %4568 = vmatmul.f32.gmra.mxu0 %v4544
    %v4569 = vpop.f32.mrf.mxu0
    %v4570 = vadd.f32 %v4537, %v4569
    %4571 = vdwg.mxu0
    %v4572 = vmax.f32 %v4567, 0.0
    %v4573 = vmax.f32 %v4570, 0.0
    %v4574 = vld [vmem:[#allocation38] sm:$0xff]
    %v4575 = vld [vmem:[#allocation38 + $0x8] sm:$0xff]
    %v4576 = vld [vmem:[#allocation38 + $0x10] sm:$0xff]
    %v4577 = vld [vmem:[#allocation38 + $0x18] sm:$0xff]
    %v4578 = vld [vmem:[%s77] sm:$0x1]
    %v4580 = vperm.slane %v4578, 0
    %v4583 = vsel %vm698, %v4572, 0
    %v4586 = vsel %vm698, %v4573, 0
    %4588 = vmatpush.msra.mxu0 0.0
    %4589 = vmatpush.msra.mxu0 0.0
    %4590 = vmatpush.msra.mxu0 0.0
    %4591 = vmatpush.msra.mxu0 0.0
    %4592 = vmatpush.msra.mxu0 0.0
    %4593 = vmatpush.msra.mxu0 0.0
    %4594 = vmatpush.msra.mxu0 0.0
    %4595 = vmatpush.msra.mxu0 0.0
    %4596 = vmatpush.msra.mxu0 0.0
    %4597 = vmatpush.msra.mxu0 0.0
    %4598 = vmatpush.msra.mxu0 0.0
    %4599 = vmatpush.msra.mxu0 0.0
    %4600 = vmatpush.msra.mxu0 %v4577
    %4601 = vmatpush.msra.mxu0 %v4576
    %4602 = vmatpush.msra.mxu0 %v4575
    %4603 = vmatpush.msra.mxu0 %v4574
    %4604 = vmatmul.f32.gmra.mxu0 %v4583
    %v4605 = vpop.f32.mrf.mxu0
    %v4606 = vadd.f32 %v4580, %v4605
    %4607 = vmatmul.f32.gmra.mxu0 %v4586
    %v4608 = vpop.f32.mrf.mxu0
    %v4609 = vadd.f32 %v4580, %v4608
    %4610 = vdwg.mxu0
    %v4611 = vld [vmem:[#allocation40] sm:$0xff]
    %v4612 = vld [vmem:[#allocation40 + $0x8] sm:$0xff]
    %v4613 = vld [vmem:[#allocation40 + $0x10] sm:$0xff]
    %v4614 = vld [vmem:[#allocation40 + $0x18] sm:$0xff]
    %v4615 = vld [vmem:[%s81] sm:$0x1]
    %4617 = vrot.lane.b32.xlu0 %v4606, 96
    %v4618 = vpop.permute.xlu0 %4617
    %v4619 = vsel %vm736, %v4606, 0
    %v4621 = vsel %vm736, %v4618, 0
    %4623 = vmatpush.xpose.msra.mxu0 0.0
    %4624 = vmatpush.xpose.msra.mxu0 0.0
    %4625 = vmatpush.xpose.msra.mxu0 0.0
    %4626 = vmatpush.xpose.msra.mxu0 0.0
    %4627 = vmatpush.xpose.msra.mxu0 0.0
    %4628 = vmatpush.xpose.msra.mxu0 0.0
    %4629 = vmatpush.xpose.msra.mxu0 0.0
    %4630 = vmatpush.xpose.msra.mxu0 0.0
    %4631 = vmatpush.xpose.msra.mxu0 0.0
    %4632 = vmatpush.xpose.msra.mxu0 0.0
    %4633 = vmatpush.xpose.msra.mxu0 0.0
    %4634 = vmatpush.xpose.msra.mxu0 0.0
    %4635 = vmatpush.xpose.msra.mxu0 0.0
    %4636 = vmatpush.xpose.msra.mxu0 0.0
    %4637 = vmatpush.xpose.msra.mxu0 0.0
    %4638 = vmatpush.xpose.msra.mxu0 %v4621
    %4639 = vmatmul.f32.gmra.mxu0 %v4619
    %v4640 = vpop.f32.mrf.mxu0
    %v4641 = vadd.f32 0.0, %v4640
    %4642 = vdwg.mxu0
    %4644 = vrot.lane.b32.xlu0 %v4609, 96
    %v4645 = vpop.permute.xlu0 %4644
    %v4646 = vsel %vm736, %v4609, 0
    %v4648 = vsel %vm736, %v4645, 0
    %4650 = vmatpush.xpose.msra.mxu0 0.0
    %4651 = vmatpush.xpose.msra.mxu0 0.0
    %4652 = vmatpush.xpose.msra.mxu0 0.0
    %4653 = vmatpush.xpose.msra.mxu0 0.0
    %4654 = vmatpush.xpose.msra.mxu0 0.0
    %4655 = vmatpush.xpose.msra.mxu0 0.0
    %4656 = vmatpush.xpose.msra.mxu0 0.0
    %4657 = vmatpush.xpose.msra.mxu0 0.0
    %4658 = vmatpush.xpose.msra.mxu0 0.0
    %4659 = vmatpush.xpose.msra.mxu0 0.0
    %4660 = vmatpush.xpose.msra.mxu0 0.0
    %4661 = vmatpush.xpose.msra.mxu0 0.0
    %4662 = vmatpush.xpose.msra.mxu0 0.0
    %4663 = vmatpush.xpose.msra.mxu0 0.0
    %4664 = vmatpush.xpose.msra.mxu0 0.0
    %4665 = vmatpush.xpose.msra.mxu0 %v4648
    %4666 = vmatmul.f32.gmra.mxu0 %v4646
    %v4667 = vpop.f32.mrf.mxu0
    %v4668 = vadd.f32 0.0, %v4667
    %4669 = vdwg.mxu0
    %v4670 = vmul.f32 %v4641, 0.35355338
    %v4671 = vmul.f32 %v4668, 0.35355338
    %v4672 = vsel %vm736, %v4670, -inf
    %4673 = vmax.xlane.f32.xlu0 %v4672
    %v4674 = vpop.xlane.xlu0 %4673
    %v4675 = vsel %vm736, %v4671, -inf
    %4676 = vmax.xlane.f32.xlu0 %v4675
    %v4677 = vpop.xlane.xlu0 %4676
    %v4678 = vsub.f32 %v4670, %v4674
    %v4679 = vsub.f32 %v4671, %v4677
    %v4680 = vmul.f32 %v4678, 1.442695
    %v4681 = vpow.pop %v4680
    %v4682 = vmul.f32 %v4679, 1.442695
    %v4683 = vpow.pop %v4682
    %v4684 = vsel %vm736, %v4681, 0.0
    %4685 = vadd.xlane.f32.xlu0 %v4684
    %v4686 = vpop.xlane.xlu0 %4685
    %v4687 = vsel %vm736, %v4683, 0.0
    %4688 = vadd.xlane.f32.xlu0 %v4687
    %v4689 = vpop.xlane.xlu0 %4688
    %v4690 = vrcp.pop %v4686
    %v4691 = vrcp.pop %v4689
    %v4692 = vmul.f32 %v4681, %v4690
    %v4693 = vmul.f32 %v4683, %v4691
    %4694 = vrot.lane.b32.xlu0 %v4606, 64
    %v4695 = vpop.permute.xlu0 %4694
    %v4698 = vsel %vm736, %v4692, 0
    %4700 = vmatpush.msra.mxu0 0.0
    %4701 = vmatpush.msra.mxu0 0.0
    %4702 = vmatpush.msra.mxu0 0.0
    %4703 = vmatpush.msra.mxu0 0.0
    %4704 = vmatpush.msra.mxu0 0.0
    %4705 = vmatpush.msra.mxu0 0.0
    %4706 = vmatpush.msra.mxu0 0.0
    %4707 = vmatpush.msra.mxu0 0.0
    %4708 = vmatpush.msra.mxu0 0.0
    %4709 = vmatpush.msra.mxu0 0.0
    %4710 = vmatpush.msra.mxu0 0.0
    %4711 = vmatpush.msra.mxu0 0.0
    %4712 = vmatpush.msra.mxu0 0.0
    %4713 = vmatpush.msra.mxu0 0.0
    %4714 = vmatpush.msra.mxu0 0.0
    %4715 = vmatpush.msra.mxu0 %v4695
    %4716 = vmatmul.f32.gmra.mxu0 %v4698
    %v4717 = vpop.f32.mrf.mxu0
    %v4718 = vadd.f32 0.0, %v4717
    %4719 = vdwg.mxu0
    %4720 = vrot.lane.b32.xlu0 %v4609, 64
    %v4721 = vpop.permute.xlu0 %4720
    %v4724 = vsel %vm736, %v4693, 0
    %4726 = vmatpush.msra.mxu0 0.0
    %4727 = vmatpush.msra.mxu0 0.0
    %4728 = vmatpush.msra.mxu0 0.0
    %4729 = vmatpush.msra.mxu0 0.0
    %4730 = vmatpush.msra.mxu0 0.0
    %4731 = vmatpush.msra.mxu0 0.0
    %4732 = vmatpush.msra.mxu0 0.0
    %4733 = vmatpush.msra.mxu0 0.0
    %4734 = vmatpush.msra.mxu0 0.0
    %4735 = vmatpush.msra.mxu0 0.0
    %4736 = vmatpush.msra.mxu0 0.0
    %4737 = vmatpush.msra.mxu0 0.0
    %4738 = vmatpush.msra.mxu0 0.0
    %4739 = vmatpush.msra.mxu0 0.0
    %4740 = vmatpush.msra.mxu0 0.0
    %4741 = vmatpush.msra.mxu0 %v4721
    %4742 = vmatmul.f32.gmra.mxu0 %v4724
    %v4743 = vpop.f32.mrf.mxu0
    %v4744 = vadd.f32 0.0, %v4743
    %4745 = vdwg.mxu0
    %v4747 = vsel %vm736, %v4718, 0
    %v4750 = vsel %vm736, %v4744, 0
    %4752 = vmatpush.msra.mxu0 0.0
    %4753 = vmatpush.msra.mxu0 0.0
    %4754 = vmatpush.msra.mxu0 0.0
    %4755 = vmatpush.msra.mxu0 0.0
    %4756 = vmatpush.msra.mxu0 0.0
    %4757 = vmatpush.msra.mxu0 0.0
    %4758 = vmatpush.msra.mxu0 0.0
    %4759 = vmatpush.msra.mxu0 0.0
    %4760 = vmatpush.msra.mxu0 0.0
    %4761 = vmatpush.msra.mxu0 0.0
    %4762 = vmatpush.msra.mxu0 0.0
    %4763 = vmatpush.msra.mxu0 0.0
    %4764 = vmatpush.msra.mxu0 0.0
    %4765 = vmatpush.msra.mxu0 0.0
    %4766 = vmatpush.msra.mxu0 0.0
    %4767 = vmatpush.msra.mxu0 %v4611
    %4768 = vmatmul.f32.gmra.mxu0 %v4747
    %v4769 = vpop.f32.mrf.mxu0
    %v4770 = vadd.f32 0.0, %v4769
    %4771 = vmatmul.f32.gmra.mxu0 %v4750
    %v4772 = vpop.f32.mrf.mxu0
    %v4773 = vadd.f32 0.0, %v4772
    %4774 = vdwg.mxu0
    %v4776 = vperm.slane %v4615, 0
    %v4778 = vadd.f32 %v4776, %v4770
    %v4779 = vadd.f32 %v4776, %v4773
    %4780 = vrot.lane.b32.xlu0 %v4606, 120
    %v4781 = vpop.permute.xlu0 %4780
    %4782 = vrot.lane.b32.xlu0 %v4606, 88
    %v4783 = vpop.permute.xlu0 %4782
    %v4784 = vsel %vm736, %v4781, 0
    %v4786 = vsel %vm736, %v4783, 0
    %4788 = vmatpush.xpose.msra.mxu0 0.0
    %4789 = vmatpush.xpose.msra.mxu0 0.0
    %4790 = vmatpush.xpose.msra.mxu0 0.0
    %4791 = vmatpush.xpose.msra.mxu0 0.0
    %4792 = vmatpush.xpose.msra.mxu0 0.0
    %4793 = vmatpush.xpose.msra.mxu0 0.0
    %4794 = vmatpush.xpose.msra.mxu0 0.0
    %4795 = vmatpush.xpose.msra.mxu0 0.0
    %4796 = vmatpush.xpose.msra.mxu0 0.0
    %4797 = vmatpush.xpose.msra.mxu0 0.0
    %4798 = vmatpush.xpose.msra.mxu0 0.0
    %4799 = vmatpush.xpose.msra.mxu0 0.0
    %4800 = vmatpush.xpose.msra.mxu0 0.0
    %4801 = vmatpush.xpose.msra.mxu0 0.0
    %4802 = vmatpush.xpose.msra.mxu0 0.0
    %4803 = vmatpush.xpose.msra.mxu0 %v4786
    %4804 = vmatmul.f32.gmra.mxu0 %v4784
    %v4805 = vpop.f32.mrf.mxu0
    %v4806 = vadd.f32 0.0, %v4805
    %4807 = vdwg.mxu0
    %4808 = vrot.lane.b32.xlu0 %v4609, 120
    %v4809 = vpop.permute.xlu0 %4808
    %4810 = vrot.lane.b32.xlu0 %v4609, 88
    %v4811 = vpop.permute.xlu0 %4810
    %v4812 = vsel %vm736, %v4809, 0
    %v4814 = vsel %vm736, %v4811, 0
    %4816 = vmatpush.xpose.msra.mxu0 0.0
    %4817 = vmatpush.xpose.msra.mxu0 0.0
    %4818 = vmatpush.xpose.msra.mxu0 0.0
    %4819 = vmatpush.xpose.msra.mxu0 0.0
    %4820 = vmatpush.xpose.msra.mxu0 0.0
    %4821 = vmatpush.xpose.msra.mxu0 0.0
    %4822 = vmatpush.xpose.msra.mxu0 0.0
    %4823 = vmatpush.xpose.msra.mxu0 0.0
    %4824 = vmatpush.xpose.msra.mxu0 0.0
    %4825 = vmatpush.xpose.msra.mxu0 0.0
    %4826 = vmatpush.xpose.msra.mxu0 0.0
    %4827 = vmatpush.xpose.msra.mxu0 0.0
    %4828 = vmatpush.xpose.msra.mxu0 0.0
    %4829 = vmatpush.xpose.msra.mxu0 0.0
    %4830 = vmatpush.xpose.msra.mxu0 0.0
    %4831 = vmatpush.xpose.msra.mxu0 %v4814
    %4832 = vmatmul.f32.gmra.mxu0 %v4812
    %v4833 = vpop.f32.mrf.mxu0
    %v4834 = vadd.f32 0.0, %v4833
    %4835 = vdwg.mxu0
    %v4836 = vmul.f32 %v4806, 0.35355338
    %v4837 = vmul.f32 %v4834, 0.35355338
    %v4838 = vsel %vm736, %v4836, -inf
    %4839 = vmax.xlane.f32.xlu0 %v4838
    %v4840 = vpop.xlane.xlu0 %4839
    %v4841 = vsel %vm736, %v4837, -inf
    %4842 = vmax.xlane.f32.xlu0 %v4841
    %v4843 = vpop.xlane.xlu0 %4842
    %v4844 = vsub.f32 %v4836, %v4840
    %v4845 = vsub.f32 %v4837, %v4843
    %v4846 = vmul.f32 %v4844, 1.442695
    %v4847 = vpow.pop %v4846
    %v4848 = vmul.f32 %v4845, 1.442695
    %v4849 = vpow.pop %v4848
    %v4850 = vsel %vm736, %v4847, 0.0
    %4851 = vadd.xlane.f32.xlu0 %v4850
    %v4852 = vpop.xlane.xlu0 %4851
    %v4853 = vsel %vm736, %v4849, 0.0
    %4854 = vadd.xlane.f32.xlu0 %v4853
    %v4855 = vpop.xlane.xlu0 %4854
    %v4856 = vrcp.pop %v4852
    %v4857 = vrcp.pop %v4855
    %v4858 = vmul.f32 %v4847, %v4856
    %v4859 = vmul.f32 %v4849, %v4857
    %4860 = vrot.lane.b32.xlu0 %v4606, 56
    %v4861 = vpop.permute.xlu0 %4860
    %v4864 = vsel %vm736, %v4858, 0
    %4866 = vmatpush.msra.mxu0 0.0
    %4867 = vmatpush.msra.mxu0 0.0
    %4868 = vmatpush.msra.mxu0 0.0
    %4869 = vmatpush.msra.mxu0 0.0
    %4870 = vmatpush.msra.mxu0 0.0
    %4871 = vmatpush.msra.mxu0 0.0
    %4872 = vmatpush.msra.mxu0 0.0
    %4873 = vmatpush.msra.mxu0 0.0
    %4874 = vmatpush.msra.mxu0 0.0
    %4875 = vmatpush.msra.mxu0 0.0
    %4876 = vmatpush.msra.mxu0 0.0
    %4877 = vmatpush.msra.mxu0 0.0
    %4878 = vmatpush.msra.mxu0 0.0
    %4879 = vmatpush.msra.mxu0 0.0
    %4880 = vmatpush.msra.mxu0 0.0
    %4881 = vmatpush.msra.mxu0 %v4861
    %4882 = vmatmul.f32.gmra.mxu0 %v4864
    %v4883 = vpop.f32.mrf.mxu0
    %v4884 = vadd.f32 0.0, %v4883
    %4885 = vdwg.mxu0
    %4886 = vrot.lane.b32.xlu0 %v4609, 56
    %v4887 = vpop.permute.xlu0 %4886
    %v4890 = vsel %vm736, %v4859, 0
    %4892 = vmatpush.msra.mxu0 0.0
    %4893 = vmatpush.msra.mxu0 0.0
    %4894 = vmatpush.msra.mxu0 0.0
    %4895 = vmatpush.msra.mxu0 0.0
    %4896 = vmatpush.msra.mxu0 0.0
    %4897 = vmatpush.msra.mxu0 0.0
    %4898 = vmatpush.msra.mxu0 0.0
    %4899 = vmatpush.msra.mxu0 0.0
    %4900 = vmatpush.msra.mxu0 0.0
    %4901 = vmatpush.msra.mxu0 0.0
    %4902 = vmatpush.msra.mxu0 0.0
    %4903 = vmatpush.msra.mxu0 0.0
    %4904 = vmatpush.msra.mxu0 0.0
    %4905 = vmatpush.msra.mxu0 0.0
    %4906 = vmatpush.msra.mxu0 0.0
    %4907 = vmatpush.msra.mxu0 %v4887
    %4908 = vmatmul.f32.gmra.mxu0 %v4890
    %v4909 = vpop.f32.mrf.mxu0
    %v4910 = vadd.f32 0.0, %v4909
    %4911 = vdwg.mxu0
    %v4913 = vsel %vm736, %v4884, 0
    %v4916 = vsel %vm736, %v4910, 0
    %4918 = vmatpush.msra.mxu0 0.0
    %4919 = vmatpush.msra.mxu0 0.0
    %4920 = vmatpush.msra.mxu0 0.0
    %4921 = vmatpush.msra.mxu0 0.0
    %4922 = vmatpush.msra.mxu0 0.0
    %4923 = vmatpush.msra.mxu0 0.0
    %4924 = vmatpush.msra.mxu0 0.0
    %4925 = vmatpush.msra.mxu0 0.0
    %4926 = vmatpush.msra.mxu0 0.0
    %4927 = vmatpush.msra.mxu0 0.0
    %4928 = vmatpush.msra.mxu0 0.0
    %4929 = vmatpush.msra.mxu0 0.0
    %4930 = vmatpush.msra.mxu0 0.0
    %4931 = vmatpush.msra.mxu0 0.0
    %4932 = vmatpush.msra.mxu0 0.0
    %4933 = vmatpush.msra.mxu0 %v4612
    %4934 = vmatmul.f32.gmra.mxu0 %v4913
    %v4935 = vpop.f32.mrf.mxu0
    %v4936 = vadd.f32 0.0, %v4935
    %4937 = vmatmul.f32.gmra.mxu0 %v4916
    %v4938 = vpop.f32.mrf.mxu0
    %v4939 = vadd.f32 0.0, %v4938
    %4940 = vdwg.mxu0
    %v4941 = vadd.f32 %v4778, %v4936
    %v4942 = vadd.f32 %v4779, %v4939
    %4943 = vrot.lane.b32.xlu0 %v4606, 112
    %v4944 = vpop.permute.xlu0 %4943
    %4945 = vrot.lane.b32.xlu0 %v4606, 80
    %v4946 = vpop.permute.xlu0 %4945
    %v4947 = vsel %vm736, %v4944, 0
    %v4949 = vsel %vm736, %v4946, 0
    %4951 = vmatpush.xpose.msra.mxu0 0.0
    %4952 = vmatpush.xpose.msra.mxu0 0.0
    %4953 = vmatpush.xpose.msra.mxu0 0.0
    %4954 = vmatpush.xpose.msra.mxu0 0.0
    %4955 = vmatpush.xpose.msra.mxu0 0.0
    %4956 = vmatpush.xpose.msra.mxu0 0.0
    %4957 = vmatpush.xpose.msra.mxu0 0.0
    %4958 = vmatpush.xpose.msra.mxu0 0.0
    %4959 = vmatpush.xpose.msra.mxu0 0.0
    %4960 = vmatpush.xpose.msra.mxu0 0.0
    %4961 = vmatpush.xpose.msra.mxu0 0.0
    %4962 = vmatpush.xpose.msra.mxu0 0.0
    %4963 = vmatpush.xpose.msra.mxu0 0.0
    %4964 = vmatpush.xpose.msra.mxu0 0.0
    %4965 = vmatpush.xpose.msra.mxu0 0.0
    %4966 = vmatpush.xpose.msra.mxu0 %v4949
    %4967 = vmatmul.f32.gmra.mxu0 %v4947
    %v4968 = vpop.f32.mrf.mxu0
    %v4969 = vadd.f32 0.0, %v4968
    %4970 = vdwg.mxu0
    %4971 = vrot.lane.b32.xlu0 %v4609, 112
    %v4972 = vpop.permute.xlu0 %4971
    %4973 = vrot.lane.b32.xlu0 %v4609, 80
    %v4974 = vpop.permute.xlu0 %4973
    %v4975 = vsel %vm736, %v4972, 0
    %v4977 = vsel %vm736, %v4974, 0
    %4979 = vmatpush.xpose.msra.mxu0 0.0
    %4980 = vmatpush.xpose.msra.mxu0 0.0
    %4981 = vmatpush.xpose.msra.mxu0 0.0
    %4982 = vmatpush.xpose.msra.mxu0 0.0
    %4983 = vmatpush.xpose.msra.mxu0 0.0
    %4984 = vmatpush.xpose.msra.mxu0 0.0
    %4985 = vmatpush.xpose.msra.mxu0 0.0
    %4986 = vmatpush.xpose.msra.mxu0 0.0
    %4987 = vmatpush.xpose.msra.mxu0 0.0
    %4988 = vmatpush.xpose.msra.mxu0 0.0
    %4989 = vmatpush.xpose.msra.mxu0 0.0
    %4990 = vmatpush.xpose.msra.mxu0 0.0
    %4991 = vmatpush.xpose.msra.mxu0 0.0
    %4992 = vmatpush.xpose.msra.mxu0 0.0
    %4993 = vmatpush.xpose.msra.mxu0 0.0
    %4994 = vmatpush.xpose.msra.mxu0 %v4977
    %4995 = vmatmul.f32.gmra.mxu0 %v4975
    %v4996 = vpop.f32.mrf.mxu0
    %v4997 = vadd.f32 0.0, %v4996
    %4998 = vdwg.mxu0
    %v4999 = vmul.f32 %v4969, 0.35355338
    %v5000 = vmul.f32 %v4997, 0.35355338
    %v5001 = vsel %vm736, %v4999, -inf
    %5002 = vmax.xlane.f32.xlu0 %v5001
    %v5003 = vpop.xlane.xlu0 %5002
    %v5004 = vsel %vm736, %v5000, -inf
    %5005 = vmax.xlane.f32.xlu0 %v5004
    %v5006 = vpop.xlane.xlu0 %5005
    %v5007 = vsub.f32 %v4999, %v5003
    %v5008 = vsub.f32 %v5000, %v5006
    %v5009 = vmul.f32 %v5007, 1.442695
    %v5010 = vpow.pop %v5009
    %v5011 = vmul.f32 %v5008, 1.442695
    %v5012 = vpow.pop %v5011
    %v5013 = vsel %vm736, %v5010, 0.0
    %5014 = vadd.xlane.f32.xlu0 %v5013
    %v5015 = vpop.xlane.xlu0 %5014
    %v5016 = vsel %vm736, %v5012, 0.0
    %5017 = vadd.xlane.f32.xlu0 %v5016
    %v5018 = vpop.xlane.xlu0 %5017
    %v5019 = vrcp.pop %v5015
    %v5020 = vrcp.pop %v5018
    %v5021 = vmul.f32 %v5010, %v5019
    %v5022 = vmul.f32 %v5012, %v5020
    %5023 = vrot.lane.b32.xlu0 %v4606, 48
    %v5024 = vpop.permute.xlu0 %5023
    %v5027 = vsel %vm736, %v5021, 0
    %5029 = vmatpush.msra.mxu0 0.0
    %5030 = vmatpush.msra.mxu0 0.0
    %5031 = vmatpush.msra.mxu0 0.0
    %5032 = vmatpush.msra.mxu0 0.0
    %5033 = vmatpush.msra.mxu0 0.0
    %5034 = vmatpush.msra.mxu0 0.0
    %5035 = vmatpush.msra.mxu0 0.0
    %5036 = vmatpush.msra.mxu0 0.0
    %5037 = vmatpush.msra.mxu0 0.0
    %5038 = vmatpush.msra.mxu0 0.0
    %5039 = vmatpush.msra.mxu0 0.0
    %5040 = vmatpush.msra.mxu0 0.0
    %5041 = vmatpush.msra.mxu0 0.0
    %5042 = vmatpush.msra.mxu0 0.0
    %5043 = vmatpush.msra.mxu0 0.0
    %5044 = vmatpush.msra.mxu0 %v5024
    %5045 = vmatmul.f32.gmra.mxu0 %v5027
    %v5046 = vpop.f32.mrf.mxu0
    %v5047 = vadd.f32 0.0, %v5046
    %5048 = vdwg.mxu0
    %5049 = vrot.lane.b32.xlu0 %v4609, 48
    %v5050 = vpop.permute.xlu0 %5049
    %v5053 = vsel %vm736, %v5022, 0
    %5055 = vmatpush.msra.mxu0 0.0
    %5056 = vmatpush.msra.mxu0 0.0
    %5057 = vmatpush.msra.mxu0 0.0
    %5058 = vmatpush.msra.mxu0 0.0
    %5059 = vmatpush.msra.mxu0 0.0
    %5060 = vmatpush.msra.mxu0 0.0
    %5061 = vmatpush.msra.mxu0 0.0
    %5062 = vmatpush.msra.mxu0 0.0
    %5063 = vmatpush.msra.mxu0 0.0
    %5064 = vmatpush.msra.mxu0 0.0
    %5065 = vmatpush.msra.mxu0 0.0
    %5066 = vmatpush.msra.mxu0 0.0
    %5067 = vmatpush.msra.mxu0 0.0
    %5068 = vmatpush.msra.mxu0 0.0
    %5069 = vmatpush.msra.mxu0 0.0
    %5070 = vmatpush.msra.mxu0 %v5050
    %5071 = vmatmul.f32.gmra.mxu0 %v5053
    %v5072 = vpop.f32.mrf.mxu0
    %v5073 = vadd.f32 0.0, %v5072
    %5074 = vdwg.mxu0
    %v5076 = vsel %vm736, %v5047, 0
    %v5079 = vsel %vm736, %v5073, 0
    %5081 = vmatpush.msra.mxu0 0.0
    %5082 = vmatpush.msra.mxu0 0.0
    %5083 = vmatpush.msra.mxu0 0.0
    %5084 = vmatpush.msra.mxu0 0.0
    %5085 = vmatpush.msra.mxu0 0.0
    %5086 = vmatpush.msra.mxu0 0.0
    %5087 = vmatpush.msra.mxu0 0.0
    %5088 = vmatpush.msra.mxu0 0.0
    %5089 = vmatpush.msra.mxu0 0.0
    %5090 = vmatpush.msra.mxu0 0.0
    %5091 = vmatpush.msra.mxu0 0.0
    %5092 = vmatpush.msra.mxu0 0.0
    %5093 = vmatpush.msra.mxu0 0.0
    %5094 = vmatpush.msra.mxu0 0.0
    %5095 = vmatpush.msra.mxu0 0.0
    %5096 = vmatpush.msra.mxu0 %v4613
    %5097 = vmatmul.f32.gmra.mxu0 %v5076
    %v5098 = vpop.f32.mrf.mxu0
    %v5099 = vadd.f32 0.0, %v5098
    %5100 = vmatmul.f32.gmra.mxu0 %v5079
    %v5101 = vpop.f32.mrf.mxu0
    %v5102 = vadd.f32 0.0, %v5101
    %5103 = vdwg.mxu0
    %v5104 = vadd.f32 %v4941, %v5099
    %v5105 = vadd.f32 %v4942, %v5102
    %5106 = vrot.lane.b32.xlu0 %v4606, 104
    %v5107 = vpop.permute.xlu0 %5106
    %5108 = vrot.lane.b32.xlu0 %v4606, 72
    %v5109 = vpop.permute.xlu0 %5108
    %v5110 = vsel %vm736, %v5107, 0
    %v5112 = vsel %vm736, %v5109, 0
    %5114 = vmatpush.xpose.msra.mxu0 0.0
    %5115 = vmatpush.xpose.msra.mxu0 0.0
    %5116 = vmatpush.xpose.msra.mxu0 0.0
    %5117 = vmatpush.xpose.msra.mxu0 0.0
    %5118 = vmatpush.xpose.msra.mxu0 0.0
    %5119 = vmatpush.xpose.msra.mxu0 0.0
    %5120 = vmatpush.xpose.msra.mxu0 0.0
    %5121 = vmatpush.xpose.msra.mxu0 0.0
    %5122 = vmatpush.xpose.msra.mxu0 0.0
    %5123 = vmatpush.xpose.msra.mxu0 0.0
    %5124 = vmatpush.xpose.msra.mxu0 0.0
    %5125 = vmatpush.xpose.msra.mxu0 0.0
    %5126 = vmatpush.xpose.msra.mxu0 0.0
    %5127 = vmatpush.xpose.msra.mxu0 0.0
    %5128 = vmatpush.xpose.msra.mxu0 0.0
    %5129 = vmatpush.xpose.msra.mxu0 %v5112
    %5130 = vmatmul.f32.gmra.mxu0 %v5110
    %v5131 = vpop.f32.mrf.mxu0
    %v5132 = vadd.f32 0.0, %v5131
    %5133 = vdwg.mxu0
    %5134 = vrot.lane.b32.xlu0 %v4609, 104
    %v5135 = vpop.permute.xlu0 %5134
    %5136 = vrot.lane.b32.xlu0 %v4609, 72
    %v5137 = vpop.permute.xlu0 %5136
    %v5138 = vsel %vm736, %v5135, 0
    %v5140 = vsel %vm736, %v5137, 0
    %5142 = vmatpush.xpose.msra.mxu0 0.0
    %5143 = vmatpush.xpose.msra.mxu0 0.0
    %5144 = vmatpush.xpose.msra.mxu0 0.0
    %5145 = vmatpush.xpose.msra.mxu0 0.0
    %5146 = vmatpush.xpose.msra.mxu0 0.0
    %5147 = vmatpush.xpose.msra.mxu0 0.0
    %5148 = vmatpush.xpose.msra.mxu0 0.0
    %5149 = vmatpush.xpose.msra.mxu0 0.0
    %5150 = vmatpush.xpose.msra.mxu0 0.0
    %5151 = vmatpush.xpose.msra.mxu0 0.0
    %5152 = vmatpush.xpose.msra.mxu0 0.0
    %5153 = vmatpush.xpose.msra.mxu0 0.0
    %5154 = vmatpush.xpose.msra.mxu0 0.0
    %5155 = vmatpush.xpose.msra.mxu0 0.0
    %5156 = vmatpush.xpose.msra.mxu0 0.0
    %5157 = vmatpush.xpose.msra.mxu0 %v5140
    %5158 = vmatmul.f32.gmra.mxu0 %v5138
    %v5159 = vpop.f32.mrf.mxu0
    %v5160 = vadd.f32 0.0, %v5159
    %5161 = vdwg.mxu0
    %v5162 = vmul.f32 %v5132, 0.35355338
    %v5163 = vmul.f32 %v5160, 0.35355338
    %v5164 = vsel %vm736, %v5162, -inf
    %5165 = vmax.xlane.f32.xlu0 %v5164
    %v5166 = vpop.xlane.xlu0 %5165
    %v5167 = vsel %vm736, %v5163, -inf
    %5168 = vmax.xlane.f32.xlu0 %v5167
    %v5169 = vpop.xlane.xlu0 %5168
    %v5170 = vsub.f32 %v5162, %v5166
    %v5171 = vsub.f32 %v5163, %v5169
    %v5172 = vmul.f32 %v5170, 1.442695
    %v5173 = vpow.pop %v5172
    %v5174 = vmul.f32 %v5171, 1.442695
    %v5175 = vpow.pop %v5174
    %v5176 = vsel %vm736, %v5173, 0.0
    %5177 = vadd.xlane.f32.xlu0 %v5176
    %v5178 = vpop.xlane.xlu0 %5177
    %v5179 = vsel %vm736, %v5175, 0.0
    %5180 = vadd.xlane.f32.xlu0 %v5179
    %v5181 = vpop.xlane.xlu0 %5180
    %v5182 = vrcp.pop %v5178
    %v5183 = vrcp.pop %v5181
    %v5184 = vmul.f32 %v5173, %v5182
    %v5185 = vmul.f32 %v5175, %v5183
    %5186 = vrot.lane.b32.xlu0 %v4606, 40
    %v5187 = vpop.permute.xlu0 %5186
    %v5190 = vsel %vm736, %v5184, 0
    %5192 = vmatpush.msra.mxu0 0.0
    %5193 = vmatpush.msra.mxu0 0.0
    %5194 = vmatpush.msra.mxu0 0.0
    %5195 = vmatpush.msra.mxu0 0.0
    %5196 = vmatpush.msra.mxu0 0.0
    %5197 = vmatpush.msra.mxu0 0.0
    %5198 = vmatpush.msra.mxu0 0.0
    %5199 = vmatpush.msra.mxu0 0.0
    %5200 = vmatpush.msra.mxu0 0.0
    %5201 = vmatpush.msra.mxu0 0.0
    %5202 = vmatpush.msra.mxu0 0.0
    %5203 = vmatpush.msra.mxu0 0.0
    %5204 = vmatpush.msra.mxu0 0.0
    %5205 = vmatpush.msra.mxu0 0.0
    %5206 = vmatpush.msra.mxu0 0.0
    %5207 = vmatpush.msra.mxu0 %v5187
    %5208 = vmatmul.f32.gmra.mxu0 %v5190
    %v5209 = vpop.f32.mrf.mxu0
    %v5210 = vadd.f32 0.0, %v5209
    %5211 = vdwg.mxu0
    %5212 = vrot.lane.b32.xlu0 %v4609, 40
    %v5213 = vpop.permute.xlu0 %5212
    %v5216 = vsel %vm736, %v5185, 0
    %5218 = vmatpush.msra.mxu0 0.0
    %5219 = vmatpush.msra.mxu0 0.0
    %5220 = vmatpush.msra.mxu0 0.0
    %5221 = vmatpush.msra.mxu0 0.0
    %5222 = vmatpush.msra.mxu0 0.0
    %5223 = vmatpush.msra.mxu0 0.0
    %5224 = vmatpush.msra.mxu0 0.0
    %5225 = vmatpush.msra.mxu0 0.0
    %5226 = vmatpush.msra.mxu0 0.0
    %5227 = vmatpush.msra.mxu0 0.0
    %5228 = vmatpush.msra.mxu0 0.0
    %5229 = vmatpush.msra.mxu0 0.0
    %5230 = vmatpush.msra.mxu0 0.0
    %5231 = vmatpush.msra.mxu0 0.0
    %5232 = vmatpush.msra.mxu0 0.0
    %5233 = vmatpush.msra.mxu0 %v5213
    %5234 = vmatmul.f32.gmra.mxu0 %v5216
    %v5235 = vpop.f32.mrf.mxu0
    %v5236 = vadd.f32 0.0, %v5235
    %5237 = vdwg.mxu0
    %v5239 = vsel %vm736, %v5210, 0
    %v5242 = vsel %vm736, %v5236, 0
    %5244 = vmatpush.msra.mxu0 0.0
    %5245 = vmatpush.msra.mxu0 0.0
    %5246 = vmatpush.msra.mxu0 0.0
    %5247 = vmatpush.msra.mxu0 0.0
    %5248 = vmatpush.msra.mxu0 0.0
    %5249 = vmatpush.msra.mxu0 0.0
    %5250 = vmatpush.msra.mxu0 0.0
    %5251 = vmatpush.msra.mxu0 0.0
    %5252 = vmatpush.msra.mxu0 0.0
    %5253 = vmatpush.msra.mxu0 0.0
    %5254 = vmatpush.msra.mxu0 0.0
    %5255 = vmatpush.msra.mxu0 0.0
    %5256 = vmatpush.msra.mxu0 0.0
    %5257 = vmatpush.msra.mxu0 0.0
    %5258 = vmatpush.msra.mxu0 0.0
    %5259 = vmatpush.msra.mxu0 %v4614
    %5260 = vmatmul.f32.gmra.mxu0 %v5239
    %v5261 = vpop.f32.mrf.mxu0
    %v5262 = vadd.f32 0.0, %v5261
    %5263 = vmatmul.f32.gmra.mxu0 %v5242
    %v5264 = vpop.f32.mrf.mxu0
    %v5265 = vadd.f32 0.0, %v5264
    %5266 = vdwg.mxu0
    %v5267 = vadd.f32 %v5104, %v5262
    %v5268 = vadd.f32 %v5105, %v5265
    %v5269 = vadd.f32 %v4572, %v5267
    %v5270 = vadd.f32 %v4573, %v5268
    %v5271 = vld [vmem:[%s83] sm:$0x1]
    %v5272 = vld [vmem:[%s85] sm:$0x1]
    %v5273 = vsel %vm698, %v5269, 0.0
    %5274 = vadd.xlane.f32.xlu0 %v5273
    %v5275 = vpop.xlane.xlu0 %5274
    %v5276 = vsel %vm698, %v5270, 0.0
    %5277 = vadd.xlane.f32.xlu0 %v5276
    %v5278 = vpop.xlane.xlu0 %5277
    %v5279 = vmul.f32 %v5275, %v1403
    %v5280 = vmul.f32 %v5278, %v1403
    %v5281 = vsub.f32 %v5269, %v5279
    %v5282 = vsub.f32 %v5270, %v5280
    %v5283 = vmul.f32 %v5281, %v5281
    %v5284 = vmul.f32 %v5282, %v5282
    %v5285 = vsel %vm698, %v5283, 0.0
    %5286 = vadd.xlane.f32.xlu0 %v5285
    %v5287 = vpop.xlane.xlu0 %5286
    %v5288 = vsel %vm698, %v5284, 0.0
    %5289 = vadd.xlane.f32.xlu0 %v5288
    %v5290 = vpop.xlane.xlu0 %5289
    %v5291 = vmul.f32 %v5287, %v1403
    %v5292 = vmul.f32 %v5290, %v1403
    %v5293 = vadd.f32 %v5291, 1e-05
    %v5294 = vadd.f32 %v5292, 1e-05
    %v5295 = vrsqrt.pop %v5293
    %v5296 = vmul.f32 %v5295, %v5293
    %v5297 = vmul.f32 %v5296, %v5295
    %v5298 = vmul.f32 0.5, %v5297
    %v5299 = vsub.f32 1.5, %v5298
    %v5300 = vmul.f32 %v5295, %v5299
    %vm5301 = vweird.f32 %v5293
    %vm5302 = vweird.f32 %v5295
    %vm5303 = vmor %vm5301, %vm5302
    %v5304 = vsel %vm5303, %v5295, %v5300
    %v5305 = vrsqrt.pop %v5294
    %v5306 = vmul.f32 %v5305, %v5294
    %v5307 = vmul.f32 %v5306, %v5305
    %v5308 = vmul.f32 0.5, %v5307
    %v5309 = vsub.f32 1.5, %v5308
    %v5310 = vmul.f32 %v5305, %v5309
    %vm5311 = vweird.f32 %v5294
    %vm5312 = vweird.f32 %v5305
    %vm5313 = vmor %vm5311, %vm5312
    %v5314 = vsel %vm5313, %v5305, %v5310
    %v5315 = vmul.f32 %v5281, %v5304
    %v5316 = vmul.f32 %v5282, %v5314
    %v5318 = vperm.slane %v5271, 0
    %v5320 = vmul.f32 %v5315, %v5318
    %v5321 = vmul.f32 %v5316, %v5318
    %v5323 = vperm.slane %v5272, 0
    %v5325 = vadd.f32 %v5320, %v5323
    %v5326 = vadd.f32 %v5321, %v5323
    %v5327 = vld [vmem:[#allocation41] sm:$0xff]
    %v5328 = vld [vmem:[#allocation41 + $0x8] sm:$0xff]
    %v5329 = vld [vmem:[#allocation41 + $0x10] sm:$0xff]
    %v5330 = vld [vmem:[#allocation41 + $0x18] sm:$0xff]
    %v5331 = vld [vmem:[%s89] sm:$0x1]
    %v5333 = vperm.slane %v5331, 0
    %v5336 = vsel %vm698, %v5325, 0
    %v5339 = vsel %vm698, %v5326, 0
    %5341 = vmatpush.msra.mxu0 0.0
    %5342 = vmatpush.msra.mxu0 0.0
    %5343 = vmatpush.msra.mxu0 0.0
    %5344 = vmatpush.msra.mxu0 0.0
    %5345 = vmatpush.msra.mxu0 0.0
    %5346 = vmatpush.msra.mxu0 0.0
    %5347 = vmatpush.msra.mxu0 0.0
    %5348 = vmatpush.msra.mxu0 0.0
    %5349 = vmatpush.msra.mxu0 0.0
    %5350 = vmatpush.msra.mxu0 0.0
    %5351 = vmatpush.msra.mxu0 0.0
    %5352 = vmatpush.msra.mxu0 0.0
    %5353 = vmatpush.msra.mxu0 %v5330
    %5354 = vmatpush.msra.mxu0 %v5329
    %5355 = vmatpush.msra.mxu0 %v5328
    %5356 = vmatpush.msra.mxu0 %v5327
    %5357 = vmatmul.f32.gmra.mxu0 %v5336
    %v5358 = vpop.f32.mrf.mxu0
    %v5359 = vadd.f32 %v5333, %v5358
    %5360 = vmatmul.f32.gmra.mxu0 %v5339
    %v5361 = vpop.f32.mrf.mxu0
    %v5362 = vadd.f32 %v5333, %v5361
    %5363 = vdwg.mxu0
    %v5364 = vmul.f32 %v5359, 0.5
    %v5365 = vmul.f32 %v5362, 0.5
    %v5366 = vmul.f32 %v5359, 0.044715
    %v5367 = vmul.f32 %v5362, 0.044715
    %v5368 = vmul.f32 %v5366, %v5359
    %v5369 = vmul.f32 %v5367, %v5362
    %v5370 = vmul.f32 %v5368, %v5359
    %v5371 = vmul.f32 %v5369, %v5362
    %v5372 = vadd.f32 %v5359, %v5370
    %v5373 = vadd.f32 %v5362, %v5371
    %v5374 = vmul.f32 %v5372, 0.7978846
    %v5375 = vmul.f32 %v5373, 0.7978846
    %v5376 = vtanh.pop %v5374
    %v5377 = vtanh.pop %v5375
    %v5378 = vadd.f32 %v5376, 1.0
    %v5379 = vadd.f32 %v5377, 1.0
    %v5380 = vmul.f32 %v5364, %v5378
    %v5381 = vmul.f32 %v5365, %v5379
    %v5382 = vld [vmem:[#allocation43] sm:$0xff]
    %v5383 = vld [vmem:[#allocation43 + $0x8] sm:$0xff]
    %v5384 = vld [vmem:[#allocation43 + $0x10] sm:$0xff]
    %v5385 = vld [vmem:[#allocation43 + $0x18] sm:$0xff]
    %v5386 = vld [vmem:[%s93] sm:$0x1]
    %v5388 = vperm.slane %v5386, 0
    %v5391 = vsel %vm698, %v5380, 0
    %v5394 = vsel %vm698, %v5381, 0
    %5396 = vmatpush.msra.mxu0 0.0
    %5397 = vmatpush.msra.mxu0 0.0
    %5398 = vmatpush.msra.mxu0 0.0
    %5399 = vmatpush.msra.mxu0 0.0
    %5400 = vmatpush.msra.mxu0 0.0
    %5401 = vmatpush.msra.mxu0 0.0
    %5402 = vmatpush.msra.mxu0 0.0
    %5403 = vmatpush.msra.mxu0 0.0
    %5404 = vmatpush.msra.mxu0 0.0
    %5405 = vmatpush.msra.mxu0 0.0
    %5406 = vmatpush.msra.mxu0 0.0
    %5407 = vmatpush.msra.mxu0 0.0
    %5408 = vmatpush.msra.mxu0 %v5385
    %5409 = vmatpush.msra.mxu0 %v5384
    %5410 = vmatpush.msra.mxu0 %v5383
    %5411 = vmatpush.msra.mxu0 %v5382
    %5412 = vmatmul.f32.gmra.mxu0 %v5391
    %v5413 = vpop.f32.mrf.mxu0
    %v5414 = vadd.f32 %v5388, %v5413
    %5415 = vmatmul.f32.gmra.mxu0 %v5394
    %v5416 = vpop.f32.mrf.mxu0
    %v5417 = vadd.f32 %v5388, %v5416
    %5418 = vdwg.mxu0
    %v5419 = vadd.f32 %v5325, %v5414
    %v5420 = vadd.f32 %v5326, %v5417
    %v5421 = vld [vmem:[%s95] sm:$0x1]
    %v5422 = vld [vmem:[%s97] sm:$0x1]
    %v5423 = vsel %vm698, %v5419, 0.0
    %5424 = vadd.xlane.f32.xlu0 %v5423
    %v5425 = vpop.xlane.xlu0 %5424
    %v5426 = vsel %vm698, %v5420, 0.0
    %5427 = vadd.xlane.f32.xlu0 %v5426
    %v5428 = vpop.xlane.xlu0 %5427
    %v5429 = vmul.f32 %v5425, %v1403
    %v5430 = vmul.f32 %v5428, %v1403
    %v5431 = vsub.f32 %v5419, %v5429
    %v5432 = vsub.f32 %v5420, %v5430
    %v5433 = vmul.f32 %v5431, %v5431
    %v5434 = vmul.f32 %v5432, %v5432
    %v5435 = vsel %vm698, %v5433, 0.0
    %5436 = vadd.xlane.f32.xlu0 %v5435
    %v5437 = vpop.xlane.xlu0 %5436
    %v5438 = vsel %vm698, %v5434, 0.0
    %5439 = vadd.xlane.f32.xlu0 %v5438
    %v5440 = vpop.xlane.xlu0 %5439
    %v5441 = vmul.f32 %v5437, %v1403
    %v5442 = vmul.f32 %v5440, %v1403
    %v5443 = vadd.f32 %v5441, 1e-05
    %v5444 = vadd.f32 %v5442, 1e-05
    %v5445 = vrsqrt.pop %v5443
    %v5446 = vmul.f32 %v5445, %v5443
    %v5447 = vmul.f32 %v5446, %v5445
    %v5448 = vmul.f32 0.5, %v5447
    %v5449 = vsub.f32 1.5, %v5448
    %v5450 = vmul.f32 %v5445, %v5449
    %vm5451 = vweird.f32 %v5443
    %vm5452 = vweird.f32 %v5445
    %vm5453 = vmor %vm5451, %vm5452
    %v5454 = vsel %vm5453, %v5445, %v5450
    %v5455 = vrsqrt.pop %v5444
    %v5456 = vmul.f32 %v5455, %v5444
    %v5457 = vmul.f32 %v5456, %v5455
    %v5458 = vmul.f32 0.5, %v5457
    %v5459 = vsub.f32 1.5, %v5458
    %v5460 = vmul.f32 %v5455, %v5459
    %vm5461 = vweird.f32 %v5444
    %vm5462 = vweird.f32 %v5455
    %vm5463 = vmor %vm5461, %vm5462
    %v5464 = vsel %vm5463, %v5455, %v5460
    %v5465 = vmul.f32 %v5431, %v5454
    %v5466 = vmul.f32 %v5432, %v5464
    %v5468 = vperm.slane %v5421, 0
    %v5470 = vmul.f32 %v5465, %v5468
    %v5471 = vmul.f32 %v5466, %v5468
    %v5473 = vperm.slane %v5422, 0
    %v5475 = vadd.f32 %v5470, %v5473
    %v5476 = vadd.f32 %v5471, %v5473
    %s5477 = scalar_lea.vmem [#allocation38], 32
    %v5478 = vld [vmem:[%s5477] sm:$0xff]
    %v5479 = vld [vmem:[%s5477 + $0x8] sm:$0xff]
    %v5480 = vld [vmem:[%s5477 + $0x10] sm:$0xff]
    %v5481 = vld [vmem:[%s5477 + $0x18] sm:$0xff]
    %s5482 = scalar_lea.vmem %s77, 1
    %v5483 = vld [vmem:[%s5482] sm:$0x1]
    %v5485 = vperm.slane %v5483, 0
    %v5488 = vsel %vm698, %v5475, 0
    %v5491 = vsel %vm698, %v5476, 0
    %5493 = vmatpush.msra.mxu0 0.0
    %5494 = vmatpush.msra.mxu0 0.0
    %5495 = vmatpush.msra.mxu0 0.0
    %5496 = vmatpush.msra.mxu0 0.0
    %5497 = vmatpush.msra.mxu0 0.0
    %5498 = vmatpush.msra.mxu0 0.0
    %5499 = vmatpush.msra.mxu0 0.0
    %5500 = vmatpush.msra.mxu0 0.0
    %5501 = vmatpush.msra.mxu0 0.0
    %5502 = vmatpush.msra.mxu0 0.0
    %5503 = vmatpush.msra.mxu0 0.0
    %5504 = vmatpush.msra.mxu0 0.0
    %5505 = vmatpush.msra.mxu0 %v5481
    %5506 = vmatpush.msra.mxu0 %v5480
    %5507 = vmatpush.msra.mxu0 %v5479
    %5508 = vmatpush.msra.mxu0 %v5478
    %5509 = vmatmul.f32.gmra.mxu0 %v5488
    %v5510 = vpop.f32.mrf.mxu0
    %v5511 = vadd.f32 %v5485, %v5510
    %5512 = vmatmul.f32.gmra.mxu0 %v5491
    %v5513 = vpop.f32.mrf.mxu0
    %v5514 = vadd.f32 %v5485, %v5513
    %5515 = vdwg.mxu0
    %s5516 = scalar_lea.vmem [#allocation40], 32
    %v5517 = vld [vmem:[%s5516] sm:$0xff]
    %v5518 = vld [vmem:[%s5516 + $0x8] sm:$0xff]
    %v5519 = vld [vmem:[%s5516 + $0x10] sm:$0xff]
    %v5520 = vld [vmem:[%s5516 + $0x18] sm:$0xff]
    %s5521 = scalar_lea.vmem %s81, 1
    %v5522 = vld [vmem:[%s5521] sm:$0x1]
    %5524 = vrot.lane.b32.xlu0 %v5511, 96
    %v5525 = vpop.permute.xlu0 %5524
    %v5526 = vsel %vm736, %v5511, 0
    %v5528 = vsel %vm736, %v5525, 0
    %5530 = vmatpush.xpose.msra.mxu0 0.0
    %5531 = vmatpush.xpose.msra.mxu0 0.0
    %5532 = vmatpush.xpose.msra.mxu0 0.0
    %5533 = vmatpush.xpose.msra.mxu0 0.0
    %5534 = vmatpush.xpose.msra.mxu0 0.0
    %5535 = vmatpush.xpose.msra.mxu0 0.0
    %5536 = vmatpush.xpose.msra.mxu0 0.0
    %5537 = vmatpush.xpose.msra.mxu0 0.0
    %5538 = vmatpush.xpose.msra.mxu0 0.0
    %5539 = vmatpush.xpose.msra.mxu0 0.0
    %5540 = vmatpush.xpose.msra.mxu0 0.0
    %5541 = vmatpush.xpose.msra.mxu0 0.0
    %5542 = vmatpush.xpose.msra.mxu0 0.0
    %5543 = vmatpush.xpose.msra.mxu0 0.0
    %5544 = vmatpush.xpose.msra.mxu0 0.0
    %5545 = vmatpush.xpose.msra.mxu0 %v5528
    %5546 = vmatmul.f32.gmra.mxu0 %v5526
    %v5547 = vpop.f32.mrf.mxu0
    %v5548 = vadd.f32 0.0, %v5547
    %5549 = vdwg.mxu0
    %5551 = vrot.lane.b32.xlu0 %v5514, 96
    %v5552 = vpop.permute.xlu0 %5551
    %v5553 = vsel %vm736, %v5514, 0
    %v5555 = vsel %vm736, %v5552, 0
    %5557 = vmatpush.xpose.msra.mxu0 0.0
    %5558 = vmatpush.xpose.msra.mxu0 0.0
    %5559 = vmatpush.xpose.msra.mxu0 0.0
    %5560 = vmatpush.xpose.msra.mxu0 0.0
    %5561 = vmatpush.xpose.msra.mxu0 0.0
    %5562 = vmatpush.xpose.msra.mxu0 0.0
    %5563 = vmatpush.xpose.msra.mxu0 0.0
    %5564 = vmatpush.xpose.msra.mxu0 0.0
    %5565 = vmatpush.xpose.msra.mxu0 0.0
    %5566 = vmatpush.xpose.msra.mxu0 0.0
    %5567 = vmatpush.xpose.msra.mxu0 0.0
    %5568 = vmatpush.xpose.msra.mxu0 0.0
    %5569 = vmatpush.xpose.msra.mxu0 0.0
    %5570 = vmatpush.xpose.msra.mxu0 0.0
    %5571 = vmatpush.xpose.msra.mxu0 0.0
    %5572 = vmatpush.xpose.msra.mxu0 %v5555
    %5573 = vmatmul.f32.gmra.mxu0 %v5553
    %v5574 = vpop.f32.mrf.mxu0
    %v5575 = vadd.f32 0.0, %v5574
    %5576 = vdwg.mxu0
    %v5577 = vmul.f32 %v5548, 0.35355338
    %v5578 = vmul.f32 %v5575, 0.35355338
    %v5579 = vsel %vm736, %v5577, -inf
    %5580 = vmax.xlane.f32.xlu0 %v5579
    %v5581 = vpop.xlane.xlu0 %5580
    %v5582 = vsel %vm736, %v5578, -inf
    %5583 = vmax.xlane.f32.xlu0 %v5582
    %v5584 = vpop.xlane.xlu0 %5583
    %v5585 = vsub.f32 %v5577, %v5581
    %v5586 = vsub.f32 %v5578, %v5584
    %v5587 = vmul.f32 %v5585, 1.442695
    %v5588 = vpow.pop %v5587
    %v5589 = vmul.f32 %v5586, 1.442695
    %v5590 = vpow.pop %v5589
    %v5591 = vsel %vm736, %v5588, 0.0
    %5592 = vadd.xlane.f32.xlu0 %v5591
    %v5593 = vpop.xlane.xlu0 %5592
    %v5594 = vsel %vm736, %v5590, 0.0
    %5595 = vadd.xlane.f32.xlu0 %v5594
    %v5596 = vpop.xlane.xlu0 %5595
    %v5597 = vrcp.pop %v5593
    %v5598 = vrcp.pop %v5596
    %v5599 = vmul.f32 %v5588, %v5597
    %v5600 = vmul.f32 %v5590, %v5598
    %5601 = vrot.lane.b32.xlu0 %v5511, 64
    %v5602 = vpop.permute.xlu0 %5601
    %v5605 = vsel %vm736, %v5599, 0
    %5607 = vmatpush.msra.mxu0 0.0
    %5608 = vmatpush.msra.mxu0 0.0
    %5609 = vmatpush.msra.mxu0 0.0
    %5610 = vmatpush.msra.mxu0 0.0
    %5611 = vmatpush.msra.mxu0 0.0
    %5612 = vmatpush.msra.mxu0 0.0
    %5613 = vmatpush.msra.mxu0 0.0
    %5614 = vmatpush.msra.mxu0 0.0
    %5615 = vmatpush.msra.mxu0 0.0
    %5616 = vmatpush.msra.mxu0 0.0
    %5617 = vmatpush.msra.mxu0 0.0
    %5618 = vmatpush.msra.mxu0 0.0
    %5619 = vmatpush.msra.mxu0 0.0
    %5620 = vmatpush.msra.mxu0 0.0
    %5621 = vmatpush.msra.mxu0 0.0
    %5622 = vmatpush.msra.mxu0 %v5602
    %5623 = vmatmul.f32.gmra.mxu0 %v5605
    %v5624 = vpop.f32.mrf.mxu0
    %v5625 = vadd.f32 0.0, %v5624
    %5626 = vdwg.mxu0
    %5627 = vrot.lane.b32.xlu0 %v5514, 64
    %v5628 = vpop.permute.xlu0 %5627
    %v5631 = vsel %vm736, %v5600, 0
    %5633 = vmatpush.msra.mxu0 0.0
    %5634 = vmatpush.msra.mxu0 0.0
    %5635 = vmatpush.msra.mxu0 0.0
    %5636 = vmatpush.msra.mxu0 0.0
    %5637 = vmatpush.msra.mxu0 0.0
    %5638 = vmatpush.msra.mxu0 0.0
    %5639 = vmatpush.msra.mxu0 0.0
    %5640 = vmatpush.msra.mxu0 0.0
    %5641 = vmatpush.msra.mxu0 0.0
    %5642 = vmatpush.msra.mxu0 0.0
    %5643 = vmatpush.msra.mxu0 0.0
    %5644 = vmatpush.msra.mxu0 0.0
    %5645 = vmatpush.msra.mxu0 0.0
    %5646 = vmatpush.msra.mxu0 0.0
    %5647 = vmatpush.msra.mxu0 0.0
    %5648 = vmatpush.msra.mxu0 %v5628
    %5649 = vmatmul.f32.gmra.mxu0 %v5631
    %v5650 = vpop.f32.mrf.mxu0
    %v5651 = vadd.f32 0.0, %v5650
    %5652 = vdwg.mxu0
    %v5654 = vsel %vm736, %v5625, 0
    %v5657 = vsel %vm736, %v5651, 0
    %5659 = vmatpush.msra.mxu0 0.0
    %5660 = vmatpush.msra.mxu0 0.0
    %5661 = vmatpush.msra.mxu0 0.0
    %5662 = vmatpush.msra.mxu0 0.0
    %5663 = vmatpush.msra.mxu0 0.0
    %5664 = vmatpush.msra.mxu0 0.0
    %5665 = vmatpush.msra.mxu0 0.0
    %5666 = vmatpush.msra.mxu0 0.0
    %5667 = vmatpush.msra.mxu0 0.0
    %5668 = vmatpush.msra.mxu0 0.0
    %5669 = vmatpush.msra.mxu0 0.0
    %5670 = vmatpush.msra.mxu0 0.0
    %5671 = vmatpush.msra.mxu0 0.0
    %5672 = vmatpush.msra.mxu0 0.0
    %5673 = vmatpush.msra.mxu0 0.0
    %5674 = vmatpush.msra.mxu0 %v5517
    %5675 = vmatmul.f32.gmra.mxu0 %v5654
    %v5676 = vpop.f32.mrf.mxu0
    %v5677 = vadd.f32 0.0, %v5676
    %5678 = vmatmul.f32.gmra.mxu0 %v5657
    %v5679 = vpop.f32.mrf.mxu0
    %v5680 = vadd.f32 0.0, %v5679
    %5681 = vdwg.mxu0
    %v5683 = vperm.slane %v5522, 0
    %v5685 = vadd.f32 %v5683, %v5677
    %v5686 = vadd.f32 %v5683, %v5680
    %5687 = vrot.lane.b32.xlu0 %v5511, 120
    %v5688 = vpop.permute.xlu0 %5687
    %5689 = vrot.lane.b32.xlu0 %v5511, 88
    %v5690 = vpop.permute.xlu0 %5689
    %v5691 = vsel %vm736, %v5688, 0
    %v5693 = vsel %vm736, %v5690, 0
    %5695 = vmatpush.xpose.msra.mxu0 0.0
    %5696 = vmatpush.xpose.msra.mxu0 0.0
    %5697 = vmatpush.xpose.msra.mxu0 0.0
    %5698 = vmatpush.xpose.msra.mxu0 0.0
    %5699 = vmatpush.xpose.msra.mxu0 0.0
    %5700 = vmatpush.xpose.msra.mxu0 0.0
    %5701 = vmatpush.xpose.msra.mxu0 0.0
    %5702 = vmatpush.xpose.msra.mxu0 0.0
    %5703 = vmatpush.xpose.msra.mxu0 0.0
    %5704 = vmatpush.xpose.msra.mxu0 0.0
    %5705 = vmatpush.xpose.msra.mxu0 0.0
    %5706 = vmatpush.xpose.msra.mxu0 0.0
    %5707 = vmatpush.xpose.msra.mxu0 0.0
    %5708 = vmatpush.xpose.msra.mxu0 0.0
    %5709 = vmatpush.xpose.msra.mxu0 0.0
    %5710 = vmatpush.xpose.msra.mxu0 %v5693
    %5711 = vmatmul.f32.gmra.mxu0 %v5691
    %v5712 = vpop.f32.mrf.mxu0
    %v5713 = vadd.f32 0.0, %v5712
    %5714 = vdwg.mxu0
    %5715 = vrot.lane.b32.xlu0 %v5514, 120
    %v5716 = vpop.permute.xlu0 %5715
    %5717 = vrot.lane.b32.xlu0 %v5514, 88
    %v5718 = vpop.permute.xlu0 %5717
    %v5719 = vsel %vm736, %v5716, 0
    %v5721 = vsel %vm736, %v5718, 0
    %5723 = vmatpush.xpose.msra.mxu0 0.0
    %5724 = vmatpush.xpose.msra.mxu0 0.0
    %5725 = vmatpush.xpose.msra.mxu0 0.0
    %5726 = vmatpush.xpose.msra.mxu0 0.0
    %5727 = vmatpush.xpose.msra.mxu0 0.0
    %5728 = vmatpush.xpose.msra.mxu0 0.0
    %5729 = vmatpush.xpose.msra.mxu0 0.0
    %5730 = vmatpush.xpose.msra.mxu0 0.0
    %5731 = vmatpush.xpose.msra.mxu0 0.0
    %5732 = vmatpush.xpose.msra.mxu0 0.0
    %5733 = vmatpush.xpose.msra.mxu0 0.0
    %5734 = vmatpush.xpose.msra.mxu0 0.0
    %5735 = vmatpush.xpose.msra.mxu0 0.0
    %5736 = vmatpush.xpose.msra.mxu0 0.0
    %5737 = vmatpush.xpose.msra.mxu0 0.0
    %5738 = vmatpush.xpose.msra.mxu0 %v5721
    %5739 = vmatmul.f32.gmra.mxu0 %v5719
    %v5740 = vpop.f32.mrf.mxu0
    %v5741 = vadd.f32 0.0, %v5740
    %5742 = vdwg.mxu0
    %v5743 = vmul.f32 %v5713, 0.35355338
    %v5744 = vmul.f32 %v5741, 0.35355338
    %v5745 = vsel %vm736, %v5743, -inf
    %5746 = vmax.xlane.f32.xlu0 %v5745
    %v5747 = vpop.xlane.xlu0 %5746
    %v5748 = vsel %vm736, %v5744, -inf
    %5749 = vmax.xlane.f32.xlu0 %v5748
    %v5750 = vpop.xlane.xlu0 %5749
    %v5751 = vsub.f32 %v5743, %v5747
    %v5752 = vsub.f32 %v5744, %v5750
    %v5753 = vmul.f32 %v5751, 1.442695
    %v5754 = vpow.pop %v5753
    %v5755 = vmul.f32 %v5752, 1.442695
    %v5756 = vpow.pop %v5755
    %v5757 = vsel %vm736, %v5754, 0.0
    %5758 = vadd.xlane.f32.xlu0 %v5757
    %v5759 = vpop.xlane.xlu0 %5758
    %v5760 = vsel %vm736, %v5756, 0.0
    %5761 = vadd.xlane.f32.xlu0 %v5760
    %v5762 = vpop.xlane.xlu0 %5761
    %v5763 = vrcp.pop %v5759
    %v5764 = vrcp.pop %v5762
    %v5765 = vmul.f32 %v5754, %v5763
    %v5766 = vmul.f32 %v5756, %v5764
    %5767 = vrot.lane.b32.xlu0 %v5511, 56
    %v5768 = vpop.permute.xlu0 %5767
    %v5771 = vsel %vm736, %v5765, 0
    %5773 = vmatpush.msra.mxu0 0.0
    %5774 = vmatpush.msra.mxu0 0.0
    %5775 = vmatpush.msra.mxu0 0.0
    %5776 = vmatpush.msra.mxu0 0.0
    %5777 = vmatpush.msra.mxu0 0.0
    %5778 = vmatpush.msra.mxu0 0.0
    %5779 = vmatpush.msra.mxu0 0.0
    %5780 = vmatpush.msra.mxu0 0.0
    %5781 = vmatpush.msra.mxu0 0.0
    %5782 = vmatpush.msra.mxu0 0.0
    %5783 = vmatpush.msra.mxu0 0.0
    %5784 = vmatpush.msra.mxu0 0.0
    %5785 = vmatpush.msra.mxu0 0.0
    %5786 = vmatpush.msra.mxu0 0.0
    %5787 = vmatpush.msra.mxu0 0.0
    %5788 = vmatpush.msra.mxu0 %v5768
    %5789 = vmatmul.f32.gmra.mxu0 %v5771
    %v5790 = vpop.f32.mrf.mxu0
    %v5791 = vadd.f32 0.0, %v5790
    %5792 = vdwg.mxu0
    %5793 = vrot.lane.b32.xlu0 %v5514, 56
    %v5794 = vpop.permute.xlu0 %5793
    %v5797 = vsel %vm736, %v5766, 0
    %5799 = vmatpush.msra.mxu0 0.0
    %5800 = vmatpush.msra.mxu0 0.0
    %5801 = vmatpush.msra.mxu0 0.0
    %5802 = vmatpush.msra.mxu0 0.0
    %5803 = vmatpush.msra.mxu0 0.0
    %5804 = vmatpush.msra.mxu0 0.0
    %5805 = vmatpush.msra.mxu0 0.0
    %5806 = vmatpush.msra.mxu0 0.0
    %5807 = vmatpush.msra.mxu0 0.0
    %5808 = vmatpush.msra.mxu0 0.0
    %5809 = vmatpush.msra.mxu0 0.0
    %5810 = vmatpush.msra.mxu0 0.0
    %5811 = vmatpush.msra.mxu0 0.0
    %5812 = vmatpush.msra.mxu0 0.0
    %5813 = vmatpush.msra.mxu0 0.0
    %5814 = vmatpush.msra.mxu0 %v5794
    %5815 = vmatmul.f32.gmra.mxu0 %v5797
    %v5816 = vpop.f32.mrf.mxu0
    %v5817 = vadd.f32 0.0, %v5816
    %5818 = vdwg.mxu0
    %v5820 = vsel %vm736, %v5791, 0
    %v5823 = vsel %vm736, %v5817, 0
    %5825 = vmatpush.msra.mxu0 0.0
    %5826 = vmatpush.msra.mxu0 0.0
    %5827 = vmatpush.msra.mxu0 0.0
    %5828 = vmatpush.msra.mxu0 0.0
    %5829 = vmatpush.msra.mxu0 0.0
    %5830 = vmatpush.msra.mxu0 0.0
    %5831 = vmatpush.msra.mxu0 0.0
    %5832 = vmatpush.msra.mxu0 0.0
    %5833 = vmatpush.msra.mxu0 0.0
    %5834 = vmatpush.msra.mxu0 0.0
    %5835 = vmatpush.msra.mxu0 0.0
    %5836 = vmatpush.msra.mxu0 0.0
    %5837 = vmatpush.msra.mxu0 0.0
    %5838 = vmatpush.msra.mxu0 0.0
    %5839 = vmatpush.msra.mxu0 0.0
    %5840 = vmatpush.msra.mxu0 %v5518
    %5841 = vmatmul.f32.gmra.mxu0 %v5820
    %v5842 = vpop.f32.mrf.mxu0
    %v5843 = vadd.f32 0.0, %v5842
    %5844 = vmatmul.f32.gmra.mxu0 %v5823
    %v5845 = vpop.f32.mrf.mxu0
    %v5846 = vadd.f32 0.0, %v5845
    %5847 = vdwg.mxu0
    %v5848 = vadd.f32 %v5685, %v5843
    %v5849 = vadd.f32 %v5686, %v5846
    %5850 = vrot.lane.b32.xlu0 %v5511, 112
    %v5851 = vpop.permute.xlu0 %5850
    %5852 = vrot.lane.b32.xlu0 %v5511, 80
    %v5853 = vpop.permute.xlu0 %5852
    %v5854 = vsel %vm736, %v5851, 0
    %v5856 = vsel %vm736, %v5853, 0
    %5858 = vmatpush.xpose.msra.mxu0 0.0
    %5859 = vmatpush.xpose.msra.mxu0 0.0
    %5860 = vmatpush.xpose.msra.mxu0 0.0
    %5861 = vmatpush.xpose.msra.mxu0 0.0
    %5862 = vmatpush.xpose.msra.mxu0 0.0
    %5863 = vmatpush.xpose.msra.mxu0 0.0
    %5864 = vmatpush.xpose.msra.mxu0 0.0
    %5865 = vmatpush.xpose.msra.mxu0 0.0
    %5866 = vmatpush.xpose.msra.mxu0 0.0
    %5867 = vmatpush.xpose.msra.mxu0 0.0
    %5868 = vmatpush.xpose.msra.mxu0 0.0
    %5869 = vmatpush.xpose.msra.mxu0 0.0
    %5870 = vmatpush.xpose.msra.mxu0 0.0
    %5871 = vmatpush.xpose.msra.mxu0 0.0
    %5872 = vmatpush.xpose.msra.mxu0 0.0
    %5873 = vmatpush.xpose.msra.mxu0 %v5856
    %5874 = vmatmul.f32.gmra.mxu0 %v5854
    %v5875 = vpop.f32.mrf.mxu0
    %v5876 = vadd.f32 0.0, %v5875
    %5877 = vdwg.mxu0
    %5878 = vrot.lane.b32.xlu0 %v5514, 112
    %v5879 = vpop.permute.xlu0 %5878
    %5880 = vrot.lane.b32.xlu0 %v5514, 80
    %v5881 = vpop.permute.xlu0 %5880
    %v5882 = vsel %vm736, %v5879, 0
    %v5884 = vsel %vm736, %v5881, 0
    %5886 = vmatpush.xpose.msra.mxu0 0.0
    %5887 = vmatpush.xpose.msra.mxu0 0.0
    %5888 = vmatpush.xpose.msra.mxu0 0.0
    %5889 = vmatpush.xpose.msra.mxu0 0.0
    %5890 = vmatpush.xpose.msra.mxu0 0.0
    %5891 = vmatpush.xpose.msra.mxu0 0.0
    %5892 = vmatpush.xpose.msra.mxu0 0.0
    %5893 = vmatpush.xpose.msra.mxu0 0.0
    %5894 = vmatpush.xpose.msra.mxu0 0.0
    %5895 = vmatpush.xpose.msra.mxu0 0.0
    %5896 = vmatpush.xpose.msra.mxu0 0.0
    %5897 = vmatpush.xpose.msra.mxu0 0.0
    %5898 = vmatpush.xpose.msra.mxu0 0.0
    %5899 = vmatpush.xpose.msra.mxu0 0.0
    %5900 = vmatpush.xpose.msra.mxu0 0.0
    %5901 = vmatpush.xpose.msra.mxu0 %v5884
    %5902 = vmatmul.f32.gmra.mxu0 %v5882
    %v5903 = vpop.f32.mrf.mxu0
    %v5904 = vadd.f32 0.0, %v5903
    %5905 = vdwg.mxu0
    %v5906 = vmul.f32 %v5876, 0.35355338
    %v5907 = vmul.f32 %v5904, 0.35355338
    %v5908 = vsel %vm736, %v5906, -inf
    %5909 = vmax.xlane.f32.xlu0 %v5908
    %v5910 = vpop.xlane.xlu0 %5909
    %v5911 = vsel %vm736, %v5907, -inf
    %5912 = vmax.xlane.f32.xlu0 %v5911
    %v5913 = vpop.xlane.xlu0 %5912
    %v5914 = vsub.f32 %v5906, %v5910
    %v5915 = vsub.f32 %v5907, %v5913
    %v5916 = vmul.f32 %v5914, 1.442695
    %v5917 = vpow.pop %v5916
    %v5918 = vmul.f32 %v5915, 1.442695
    %v5919 = vpow.pop %v5918
    %v5920 = vsel %vm736, %v5917, 0.0
    %5921 = vadd.xlane.f32.xlu0 %v5920
    %v5922 = vpop.xlane.xlu0 %5921
    %v5923 = vsel %vm736, %v5919, 0.0
    %5924 = vadd.xlane.f32.xlu0 %v5923
    %v5925 = vpop.xlane.xlu0 %5924
    %v5926 = vrcp.pop %v5922
    %v5927 = vrcp.pop %v5925
    %v5928 = vmul.f32 %v5917, %v5926
    %v5929 = vmul.f32 %v5919, %v5927
    %5930 = vrot.lane.b32.xlu0 %v5511, 48
    %v5931 = vpop.permute.xlu0 %5930
    %v5934 = vsel %vm736, %v5928, 0
    %5936 = vmatpush.msra.mxu0 0.0
    %5937 = vmatpush.msra.mxu0 0.0
    %5938 = vmatpush.msra.mxu0 0.0
    %5939 = vmatpush.msra.mxu0 0.0
    %5940 = vmatpush.msra.mxu0 0.0
    %5941 = vmatpush.msra.mxu0 0.0
    %5942 = vmatpush.msra.mxu0 0.0
    %5943 = vmatpush.msra.mxu0 0.0
    %5944 = vmatpush.msra.mxu0 0.0
    %5945 = vmatpush.msra.mxu0 0.0
    %5946 = vmatpush.msra.mxu0 0.0
    %5947 = vmatpush.msra.mxu0 0.0
    %5948 = vmatpush.msra.mxu0 0.0
    %5949 = vmatpush.msra.mxu0 0.0
    %5950 = vmatpush.msra.mxu0 0.0
    %5951 = vmatpush.msra.mxu0 %v5931
    %5952 = vmatmul.f32.gmra.mxu0 %v5934
    %v5953 = vpop.f32.mrf.mxu0
    %v5954 = vadd.f32 0.0, %v5953
    %5955 = vdwg.mxu0
    %5956 = vrot.lane.b32.xlu0 %v5514, 48
    %v5957 = vpop.permute.xlu0 %5956
    %v5960 = vsel %vm736, %v5929, 0
    %5962 = vmatpush.msra.mxu0 0.0
    %5963 = vmatpush.msra.mxu0 0.0
    %5964 = vmatpush.msra.mxu0 0.0
    %5965 = vmatpush.msra.mxu0 0.0
    %5966 = vmatpush.msra.mxu0 0.0
    %5967 = vmatpush.msra.mxu0 0.0
    %5968 = vmatpush.msra.mxu0 0.0
    %5969 = vmatpush.msra.mxu0 0.0
    %5970 = vmatpush.msra.mxu0 0.0
    %5971 = vmatpush.msra.mxu0 0.0
    %5972 = vmatpush.msra.mxu0 0.0
    %5973 = vmatpush.msra.mxu0 0.0
    %5974 = vmatpush.msra.mxu0 0.0
    %5975 = vmatpush.msra.mxu0 0.0
    %5976 = vmatpush.msra.mxu0 0.0
    %5977 = vmatpush.msra.mxu0 %v5957
    %5978 = vmatmul.f32.gmra.mxu0 %v5960
    %v5979 = vpop.f32.mrf.mxu0
    %v5980 = vadd.f32 0.0, %v5979
    %5981 = vdwg.mxu0
    %v5983 = vsel %vm736, %v5954, 0
    %v5986 = vsel %vm736, %v5980, 0
    %5988 = vmatpush.msra.mxu0 0.0
    %5989 = vmatpush.msra.mxu0 0.0
    %5990 = vmatpush.msra.mxu0 0.0
    %5991 = vmatpush.msra.mxu0 0.0
    %5992 = vmatpush.msra.mxu0 0.0
    %5993 = vmatpush.msra.mxu0 0.0
    %5994 = vmatpush.msra.mxu0 0.0
    %5995 = vmatpush.msra.mxu0 0.0
    %5996 = vmatpush.msra.mxu0 0.0
    %5997 = vmatpush.msra.mxu0 0.0
    %5998 = vmatpush.msra.mxu0 0.0
    %5999 = vmatpush.msra.mxu0 0.0
    %6000 = vmatpush.msra.mxu0 0.0
    %6001 = vmatpush.msra.mxu0 0.0
    %6002 = vmatpush.msra.mxu0 0.0
    %6003 = vmatpush.msra.mxu0 %v5519
    %6004 = vmatmul.f32.gmra.mxu0 %v5983
    %v6005 = vpop.f32.mrf.mxu0
    %v6006 = vadd.f32 0.0, %v6005
    %6007 = vmatmul.f32.gmra.mxu0 %v5986
    %v6008 = vpop.f32.mrf.mxu0
    %v6009 = vadd.f32 0.0, %v6008
    %6010 = vdwg.mxu0
    %v6011 = vadd.f32 %v5848, %v6006
    %v6012 = vadd.f32 %v5849, %v6009
    %6013 = vrot.lane.b32.xlu0 %v5511, 104
    %v6014 = vpop.permute.xlu0 %6013
    %6015 = vrot.lane.b32.xlu0 %v5511, 72
    %v6016 = vpop.permute.xlu0 %6015
    %v6017 = vsel %vm736, %v6014, 0
    %v6019 = vsel %vm736, %v6016, 0
    %6021 = vmatpush.xpose.msra.mxu0 0.0
    %6022 = vmatpush.xpose.msra.mxu0 0.0
    %6023 = vmatpush.xpose.msra.mxu0 0.0
    %6024 = vmatpush.xpose.msra.mxu0 0.0
    %6025 = vmatpush.xpose.msra.mxu0 0.0
    %6026 = vmatpush.xpose.msra.mxu0 0.0
    %6027 = vmatpush.xpose.msra.mxu0 0.0
    %6028 = vmatpush.xpose.msra.mxu0 0.0
    %6029 = vmatpush.xpose.msra.mxu0 0.0
    %6030 = vmatpush.xpose.msra.mxu0 0.0
    %6031 = vmatpush.xpose.msra.mxu0 0.0
    %6032 = vmatpush.xpose.msra.mxu0 0.0
    %6033 = vmatpush.xpose.msra.mxu0 0.0
    %6034 = vmatpush.xpose.msra.mxu0 0.0
    %6035 = vmatpush.xpose.msra.mxu0 0.0
    %6036 = vmatpush.xpose.msra.mxu0 %v6019
    %6037 = vmatmul.f32.gmra.mxu0 %v6017
    %v6038 = vpop.f32.mrf.mxu0
    %v6039 = vadd.f32 0.0, %v6038
    %6040 = vdwg.mxu0
    %6041 = vrot.lane.b32.xlu0 %v5514, 104
    %v6042 = vpop.permute.xlu0 %6041
    %6043 = vrot.lane.b32.xlu0 %v5514, 72
    %v6044 = vpop.permute.xlu0 %6043
    %v6045 = vsel %vm736, %v6042, 0
    %v6047 = vsel %vm736, %v6044, 0
    %6049 = vmatpush.xpose.msra.mxu0 0.0
    %6050 = vmatpush.xpose.msra.mxu0 0.0
    %6051 = vmatpush.xpose.msra.mxu0 0.0
    %6052 = vmatpush.xpose.msra.mxu0 0.0
    %6053 = vmatpush.xpose.msra.mxu0 0.0
    %6054 = vmatpush.xpose.msra.mxu0 0.0
    %6055 = vmatpush.xpose.msra.mxu0 0.0
    %6056 = vmatpush.xpose.msra.mxu0 0.0
    %6057 = vmatpush.xpose.msra.mxu0 0.0
    %6058 = vmatpush.xpose.msra.mxu0 0.0
    %6059 = vmatpush.xpose.msra.mxu0 0.0
    %6060 = vmatpush.xpose.msra.mxu0 0.0
    %6061 = vmatpush.xpose.msra.mxu0 0.0
    %6062 = vmatpush.xpose.msra.mxu0 0.0
    %6063 = vmatpush.xpose.msra.mxu0 0.0
    %6064 = vmatpush.xpose.msra.mxu0 %v6047
    %6065 = vmatmul.f32.gmra.mxu0 %v6045
    %v6066 = vpop.f32.mrf.mxu0
    %v6067 = vadd.f32 0.0, %v6066
    %6068 = vdwg.mxu0
    %v6069 = vmul.f32 %v6039, 0.35355338
    %v6070 = vmul.f32 %v6067, 0.35355338
    %v6071 = vsel %vm736, %v6069, -inf
    %6072 = vmax.xlane.f32.xlu0 %v6071
    %v6073 = vpop.xlane.xlu0 %6072
    %v6074 = vsel %vm736, %v6070, -inf
    %6075 = vmax.xlane.f32.xlu0 %v6074
    %v6076 = vpop.xlane.xlu0 %6075
    %v6077 = vsub.f32 %v6069, %v6073
    %v6078 = vsub.f32 %v6070, %v6076
    %v6079 = vmul.f32 %v6077, 1.442695
    %v6080 = vpow.pop %v6079
    %v6081 = vmul.f32 %v6078, 1.442695
    %v6082 = vpow.pop %v6081
    %v6083 = vsel %vm736, %v6080, 0.0
    %6084 = vadd.xlane.f32.xlu0 %v6083
    %v6085 = vpop.xlane.xlu0 %6084
    %v6086 = vsel %vm736, %v6082, 0.0
    %6087 = vadd.xlane.f32.xlu0 %v6086
    %v6088 = vpop.xlane.xlu0 %6087
    %v6089 = vrcp.pop %v6085
    %v6090 = vrcp.pop %v6088
    %v6091 = vmul.f32 %v6080, %v6089
    %v6092 = vmul.f32 %v6082, %v6090
    %6093 = vrot.lane.b32.xlu0 %v5511, 40
    %v6094 = vpop.permute.xlu0 %6093
    %v6097 = vsel %vm736, %v6091, 0
    %6099 = vmatpush.msra.mxu0 0.0
    %6100 = vmatpush.msra.mxu0 0.0
    %6101 = vmatpush.msra.mxu0 0.0
    %6102 = vmatpush.msra.mxu0 0.0
    %6103 = vmatpush.msra.mxu0 0.0
    %6104 = vmatpush.msra.mxu0 0.0
    %6105 = vmatpush.msra.mxu0 0.0
    %6106 = vmatpush.msra.mxu0 0.0
    %6107 = vmatpush.msra.mxu0 0.0
    %6108 = vmatpush.msra.mxu0 0.0
    %6109 = vmatpush.msra.mxu0 0.0
    %6110 = vmatpush.msra.mxu0 0.0
    %6111 = vmatpush.msra.mxu0 0.0
    %6112 = vmatpush.msra.mxu0 0.0
    %6113 = vmatpush.msra.mxu0 0.0
    %6114 = vmatpush.msra.mxu0 %v6094
    %6115 = vmatmul.f32.gmra.mxu0 %v6097
    %v6116 = vpop.f32.mrf.mxu0
    %v6117 = vadd.f32 0.0, %v6116
    %6118 = vdwg.mxu0
    %6119 = vrot.lane.b32.xlu0 %v5514, 40
    %v6120 = vpop.permute.xlu0 %6119
    %v6123 = vsel %vm736, %v6092, 0
    %6125 = vmatpush.msra.mxu0 0.0
    %6126 = vmatpush.msra.mxu0 0.0
    %6127 = vmatpush.msra.mxu0 0.0
    %6128 = vmatpush.msra.mxu0 0.0
    %6129 = vmatpush.msra.mxu0 0.0
    %6130 = vmatpush.msra.mxu0 0.0
    %6131 = vmatpush.msra.mxu0 0.0
    %6132 = vmatpush.msra.mxu0 0.0
    %6133 = vmatpush.msra.mxu0 0.0
    %6134 = vmatpush.msra.mxu0 0.0
    %6135 = vmatpush.msra.mxu0 0.0
    %6136 = vmatpush.msra.mxu0 0.0
    %6137 = vmatpush.msra.mxu0 0.0
    %6138 = vmatpush.msra.mxu0 0.0
    %6139 = vmatpush.msra.mxu0 0.0
    %6140 = vmatpush.msra.mxu0 %v6120
    %6141 = vmatmul.f32.gmra.mxu0 %v6123
    %v6142 = vpop.f32.mrf.mxu0
    %v6143 = vadd.f32 0.0, %v6142
    %6144 = vdwg.mxu0
    %v6146 = vsel %vm736, %v6117, 0
    %v6149 = vsel %vm736, %v6143, 0
    %6151 = vmatpush.msra.mxu0 0.0
    %6152 = vmatpush.msra.mxu0 0.0
    %6153 = vmatpush.msra.mxu0 0.0
    %6154 = vmatpush.msra.mxu0 0.0
    %6155 = vmatpush.msra.mxu0 0.0
    %6156 = vmatpush.msra.mxu0 0.0
    %6157 = vmatpush.msra.mxu0 0.0
    %6158 = vmatpush.msra.mxu0 0.0
    %6159 = vmatpush.msra.mxu0 0.0
    %6160 = vmatpush.msra.mxu0 0.0
    %6161 = vmatpush.msra.mxu0 0.0
    %6162 = vmatpush.msra.mxu0 0.0
    %6163 = vmatpush.msra.mxu0 0.0
    %6164 = vmatpush.msra.mxu0 0.0
    %6165 = vmatpush.msra.mxu0 0.0
    %6166 = vmatpush.msra.mxu0 %v5520
    %6167 = vmatmul.f32.gmra.mxu0 %v6146
    %v6168 = vpop.f32.mrf.mxu0
    %v6169 = vadd.f32 0.0, %v6168
    %6170 = vmatmul.f32.gmra.mxu0 %v6149
    %v6171 = vpop.f32.mrf.mxu0
    %v6172 = vadd.f32 0.0, %v6171
    %6173 = vdwg.mxu0
    %v6174 = vadd.f32 %v6011, %v6169
    %v6175 = vadd.f32 %v6012, %v6172
    %v6176 = vadd.f32 %v5475, %v6174
    %v6177 = vadd.f32 %v5476, %v6175
    %s6178 = scalar_lea.vmem %s83, 1
    %v6179 = vld [vmem:[%s6178] sm:$0x1]
    %s6180 = scalar_lea.vmem %s85, 1
    %v6181 = vld [vmem:[%s6180] sm:$0x1]
    %v6182 = vsel %vm698, %v6176, 0.0
    %6183 = vadd.xlane.f32.xlu0 %v6182
    %v6184 = vpop.xlane.xlu0 %6183
    %v6185 = vsel %vm698, %v6177, 0.0
    %6186 = vadd.xlane.f32.xlu0 %v6185
    %v6187 = vpop.xlane.xlu0 %6186
    %v6188 = vmul.f32 %v6184, %v1403
    %v6189 = vmul.f32 %v6187, %v1403
    %v6190 = vsub.f32 %v6176, %v6188
    %v6191 = vsub.f32 %v6177, %v6189
    %v6192 = vmul.f32 %v6190, %v6190
    %v6193 = vmul.f32 %v6191, %v6191
    %v6194 = vsel %vm698, %v6192, 0.0
    %6195 = vadd.xlane.f32.xlu0 %v6194
    %v6196 = vpop.xlane.xlu0 %6195
    %v6197 = vsel %vm698, %v6193, 0.0
    %6198 = vadd.xlane.f32.xlu0 %v6197
    %v6199 = vpop.xlane.xlu0 %6198
    %v6200 = vmul.f32 %v6196, %v1403
    %v6201 = vmul.f32 %v6199, %v1403
    %v6202 = vadd.f32 %v6200, 1e-05
    %v6203 = vadd.f32 %v6201, 1e-05
    %v6204 = vrsqrt.pop %v6202
    %v6205 = vmul.f32 %v6204, %v6202
    %v6206 = vmul.f32 %v6205, %v6204
    %v6207 = vmul.f32 0.5, %v6206
    %v6208 = vsub.f32 1.5, %v6207
    %v6209 = vmul.f32 %v6204, %v6208
    %vm6210 = vweird.f32 %v6202
    %vm6211 = vweird.f32 %v6204
    %vm6212 = vmor %vm6210, %vm6211
    %v6213 = vsel %vm6212, %v6204, %v6209
    %v6214 = vrsqrt.pop %v6203
    %v6215 = vmul.f32 %v6214, %v6203
    %v6216 = vmul.f32 %v6215, %v6214
    %v6217 = vmul.f32 0.5, %v6216
    %v6218 = vsub.f32 1.5, %v6217
    %v6219 = vmul.f32 %v6214, %v6218
    %vm6220 = vweird.f32 %v6203
    %vm6221 = vweird.f32 %v6214
    %vm6222 = vmor %vm6220, %vm6221
    %v6223 = vsel %vm6222, %v6214, %v6219
    %v6224 = vmul.f32 %v6190, %v6213
    %v6225 = vmul.f32 %v6191, %v6223
    %v6227 = vperm.slane %v6179, 0
    %v6229 = vmul.f32 %v6224, %v6227
    %v6230 = vmul.f32 %v6225, %v6227
    %v6232 = vperm.slane %v6181, 0
    %v6234 = vadd.f32 %v6229, %v6232
    %v6235 = vadd.f32 %v6230, %v6232
    %s6236 = scalar_lea.vmem [#allocation41], 32
    %v6237 = vld [vmem:[%s6236] sm:$0xff]
    %v6238 = vld [vmem:[%s6236 + $0x8] sm:$0xff]
    %v6239 = vld [vmem:[%s6236 + $0x10] sm:$0xff]
    %v6240 = vld [vmem:[%s6236 + $0x18] sm:$0xff]
    %s6241 = scalar_lea.vmem %s89, 1
    %v6242 = vld [vmem:[%s6241] sm:$0x1]
    %v6244 = vperm.slane %v6242, 0
    %v6247 = vsel %vm698, %v6234, 0
    %v6250 = vsel %vm698, %v6235, 0
    %6252 = vmatpush.msra.mxu0 0.0
    %6253 = vmatpush.msra.mxu0 0.0
    %6254 = vmatpush.msra.mxu0 0.0
    %6255 = vmatpush.msra.mxu0 0.0
    %6256 = vmatpush.msra.mxu0 0.0
    %6257 = vmatpush.msra.mxu0 0.0
    %6258 = vmatpush.msra.mxu0 0.0
    %6259 = vmatpush.msra.mxu0 0.0
    %6260 = vmatpush.msra.mxu0 0.0
    %6261 = vmatpush.msra.mxu0 0.0
    %6262 = vmatpush.msra.mxu0 0.0
    %6263 = vmatpush.msra.mxu0 0.0
    %6264 = vmatpush.msra.mxu0 %v6240
    %6265 = vmatpush.msra.mxu0 %v6239
    %6266 = vmatpush.msra.mxu0 %v6238
    %6267 = vmatpush.msra.mxu0 %v6237
    %6268 = vmatmul.f32.gmra.mxu0 %v6247
    %v6269 = vpop.f32.mrf.mxu0
    %v6270 = vadd.f32 %v6244, %v6269
    %6271 = vmatmul.f32.gmra.mxu0 %v6250
    %v6272 = vpop.f32.mrf.mxu0
    %v6273 = vadd.f32 %v6244, %v6272
    %6274 = vdwg.mxu0
    %v6275 = vmul.f32 %v6270, 0.5
    %v6276 = vmul.f32 %v6273, 0.5
    %v6277 = vmul.f32 %v6270, 0.044715
    %v6278 = vmul.f32 %v6273, 0.044715
    %v6279 = vmul.f32 %v6277, %v6270
    %v6280 = vmul.f32 %v6278, %v6273
    %v6281 = vmul.f32 %v6279, %v6270
    %v6282 = vmul.f32 %v6280, %v6273
    %v6283 = vadd.f32 %v6270, %v6281
    %v6284 = vadd.f32 %v6273, %v6282
    %v6285 = vmul.f32 %v6283, 0.7978846
    %v6286 = vmul.f32 %v6284, 0.7978846
    %v6287 = vtanh.pop %v6285
    %v6288 = vtanh.pop %v6286
    %v6289 = vadd.f32 %v6287, 1.0
    %v6290 = vadd.f32 %v6288, 1.0
    %v6291 = vmul.f32 %v6275, %v6289
    %v6292 = vmul.f32 %v6276, %v6290
    %s6293 = scalar_lea.vmem [#allocation43], 32
    %v6294 = vld [vmem:[%s6293] sm:$0xff]
    %v6295 = vld [vmem:[%s6293 + $0x8] sm:$0xff]
    %v6296 = vld [vmem:[%s6293 + $0x10] sm:$0xff]
    %v6297 = vld [vmem:[%s6293 + $0x18] sm:$0xff]
    %s6298 = scalar_lea.vmem %s93, 1
    %v6299 = vld [vmem:[%s6298] sm:$0x1]
    %v6301 = vperm.slane %v6299, 0
    %v6304 = vsel %vm698, %v6291, 0
    %v6307 = vsel %vm698, %v6292, 0
    %6309 = vmatpush.msra.mxu0 0.0
    %6310 = vmatpush.msra.mxu0 0.0
    %6311 = vmatpush.msra.mxu0 0.0
    %6312 = vmatpush.msra.mxu0 0.0
    %6313 = vmatpush.msra.mxu0 0.0
    %6314 = vmatpush.msra.mxu0 0.0
    %6315 = vmatpush.msra.mxu0 0.0
    %6316 = vmatpush.msra.mxu0 0.0
    %6317 = vmatpush.msra.mxu0 0.0
    %6318 = vmatpush.msra.mxu0 0.0
    %6319 = vmatpush.msra.mxu0 0.0
    %6320 = vmatpush.msra.mxu0 0.0
    %6321 = vmatpush.msra.mxu0 %v6297
    %6322 = vmatpush.msra.mxu0 %v6296
    %6323 = vmatpush.msra.mxu0 %v6295
    %6324 = vmatpush.msra.mxu0 %v6294
    %6325 = vmatmul.f32.gmra.mxu0 %v6304
    %v6326 = vpop.f32.mrf.mxu0
    %v6327 = vadd.f32 %v6301, %v6326
    %6328 = vmatmul.f32.gmra.mxu0 %v6307
    %v6329 = vpop.f32.mrf.mxu0
    %v6330 = vadd.f32 %v6301, %v6329
    %6331 = vdwg.mxu0
    %v6332 = vadd.f32 %v6234, %v6327
    %v6333 = vadd.f32 %v6235, %v6330
    %s6334 = scalar_lea.vmem %s95, 1
    %v6335 = vld [vmem:[%s6334] sm:$0x1]
    %s6336 = scalar_lea.vmem %s97, 1
    %v6337 = vld [vmem:[%s6336] sm:$0x1]
    %v6338 = vsel %vm698, %v6332, 0.0
    %6339 = vadd.xlane.f32.xlu0 %v6338
    %v6340 = vpop.xlane.xlu0 %6339
    %v6341 = vsel %vm698, %v6333, 0.0
    %6342 = vadd.xlane.f32.xlu0 %v6341
    %v6343 = vpop.xlane.xlu0 %6342
    %v6344 = vmul.f32 %v6340, %v1403
    %v6345 = vmul.f32 %v6343, %v1403
    %v6346 = vsub.f32 %v6332, %v6344
    %v6347 = vsub.f32 %v6333, %v6345
    %v6348 = vmul.f32 %v6346, %v6346
    %v6349 = vmul.f32 %v6347, %v6347
    %v6350 = vsel %vm698, %v6348, 0.0
    %6351 = vadd.xlane.f32.xlu0 %v6350
    %v6352 = vpop.xlane.xlu0 %6351
    %v6353 = vsel %vm698, %v6349, 0.0
    %6354 = vadd.xlane.f32.xlu0 %v6353
    %v6355 = vpop.xlane.xlu0 %6354
    %v6356 = vmul.f32 %v6352, %v1403
    %v6357 = vmul.f32 %v6355, %v1403
    %v6358 = vadd.f32 %v6356, 1e-05
    %v6359 = vadd.f32 %v6357, 1e-05
    %v6360 = vrsqrt.pop %v6358
    %v6361 = vmul.f32 %v6360, %v6358
    %v6362 = vmul.f32 %v6361, %v6360
    %v6363 = vmul.f32 0.5, %v6362
    %v6364 = vsub.f32 1.5, %v6363
    %v6365 = vmul.f32 %v6360, %v6364
    %vm6366 = vweird.f32 %v6358
    %vm6367 = vweird.f32 %v6360
    %vm6368 = vmor %vm6366, %vm6367
    %v6369 = vsel %vm6368, %v6360, %v6365
    %v6370 = vrsqrt.pop %v6359
    %v6371 = vmul.f32 %v6370, %v6359
    %v6372 = vmul.f32 %v6371, %v6370
    %v6373 = vmul.f32 0.5, %v6372
    %v6374 = vsub.f32 1.5, %v6373
    %v6375 = vmul.f32 %v6370, %v6374
    %vm6376 = vweird.f32 %v6359
    %vm6377 = vweird.f32 %v6370
    %vm6378 = vmor %vm6376, %vm6377
    %v6379 = vsel %vm6378, %v6370, %v6375
    %v6380 = vmul.f32 %v6346, %v6369
    %v6381 = vmul.f32 %v6347, %v6379
    %v6383 = vperm.slane %v6335, 0
    %v6385 = vmul.f32 %v6380, %v6383
    %v6386 = vmul.f32 %v6381, %v6383
    %v6388 = vperm.slane %v6337, 0
    %v6390 = vadd.f32 %v6385, %v6388
    %v6391 = vadd.f32 %v6386, %v6388
    %v6392 = vld [vmem:[#allocation44] sm:$0x1]
    %v6393 = vld [vmem:[%s101] sm:$0x1]
    %v6394 = vsel %vm698, %v6390, 0.0
    %6395 = vadd.xlane.f32.xlu0 %v6394
    %v6396 = vpop.xlane.xlu0 %6395
    %v6397 = vsel %vm698, %v6391, 0.0
    %6398 = vadd.xlane.f32.xlu0 %v6397
    %v6399 = vpop.xlane.xlu0 %6398
    %v6400 = vmul.f32 %v6396, %v1403
    %v6401 = vmul.f32 %v6399, %v1403
    %v6402 = vsub.f32 %v6390, %v6400
    %v6403 = vsub.f32 %v6391, %v6401
    %v6404 = vmul.f32 %v6402, %v6402
    %v6405 = vmul.f32 %v6403, %v6403
    %v6406 = vsel %vm698, %v6404, 0.0
    %6407 = vadd.xlane.f32.xlu0 %v6406
    %v6408 = vpop.xlane.xlu0 %6407
    %v6409 = vsel %vm698, %v6405, 0.0
    %6410 = vadd.xlane.f32.xlu0 %v6409
    %v6411 = vpop.xlane.xlu0 %6410
    %v6412 = vmul.f32 %v6408, %v1403
    %v6413 = vmul.f32 %v6411, %v1403
    %v6414 = vadd.f32 %v6412, 1e-05
    %v6415 = vadd.f32 %v6413, 1e-05
    %v6416 = vrsqrt.pop %v6414
    %v6417 = vmul.f32 %v6416, %v6414
    %v6418 = vmul.f32 %v6417, %v6416
    %v6419 = vmul.f32 0.5, %v6418
    %v6420 = vsub.f32 1.5, %v6419
    %v6421 = vmul.f32 %v6416, %v6420
    %vm6422 = vweird.f32 %v6414
    %vm6423 = vweird.f32 %v6416
    %vm6424 = vmor %vm6422, %vm6423
    %v6425 = vsel %vm6424, %v6416, %v6421
    %v6426 = vrsqrt.pop %v6415
    %v6427 = vmul.f32 %v6426, %v6415
    %v6428 = vmul.f32 %v6427, %v6426
    %v6429 = vmul.f32 0.5, %v6428
    %v6430 = vsub.f32 1.5, %v6429
    %v6431 = vmul.f32 %v6426, %v6430
    %vm6432 = vweird.f32 %v6415
    %vm6433 = vweird.f32 %v6426
    %vm6434 = vmor %vm6432, %vm6433
    %v6435 = vsel %vm6434, %v6426, %v6431
    %v6436 = vmul.f32 %v6402, %v6425
    %v6437 = vmul.f32 %v6403, %v6435
    %v6439 = vperm.slane %v6392, 0
    %v6441 = vmul.f32 %v6436, %v6439
    %v6442 = vmul.f32 %v6437, %v6439
    %v6444 = vperm.slane %v6393, 0
    %v6446 = vadd.f32 %v6441, %v6444
    %v6447 = vadd.f32 %v6442, %v6444
    %v6448 = vsel %vm698, %v6446, 0.0
    %v6449 = vrot.slane %v6448, 4
    %v6450 = vadd.f32 %v6448, %v6449
    %v6451 = vrot.slane %v6450, 2
    %v6452 = vadd.f32 %v6450, %v6451
    %v6453 = vrot.slane %v6452, 1
    %v6454 = vadd.f32 %v6452, %v6453
    %v6455 = vsel %vm698, %v6447, 0.0
    %v6456 = vrot.slane %v6455, 4
    %v6457 = vadd.f32 %v6455, %v6456
    %v6458 = vrot.slane %v6457, 2
    %v6459 = vadd.f32 %v6457, %v6458
    %v6460 = vrot.slane %v6459, 1
    %v6461 = vadd.f32 %v6459, %v6460
    %v6462 = vmul.f32 %v6454, %v2593
    %v6463 = vmul.f32 %v6461, %v2593
    %v6464 = vld [vmem:[%s109] sm:$0x1]
    %v6465 = vld [vmem:[%s103] sm:$0xff]
    %v6466 = vld [vmem:[%s103 + $0x8] sm:$0xff]
    %v6467 = vld [vmem:[%s103 + $0x10] sm:$0xff]
    %v6468 = vld [vmem:[%s103 + $0x18] sm:$0xff]
    %vm6471 = vcmask 1041409
    %v6472 = vsel %vm6471, %v2595, %v2594
    %v6473 = vsel %vm698, %v6472, 0
    %6475 = vmatpush.msra.mxu0 0.0
    %6476 = vmatpush.msra.mxu0 0.0
    %6477 = vmatpush.msra.mxu0 0.0
    %6478 = vmatpush.msra.mxu0 0.0
    %6479 = vmatpush.msra.mxu0 0.0
    %6480 = vmatpush.msra.mxu0 0.0
    %6481 = vmatpush.msra.mxu0 0.0
    %6482 = vmatpush.msra.mxu0 0.0
    %6483 = vmatpush.msra.mxu0 0.0
    %6484 = vmatpush.msra.mxu0 0.0
    %6485 = vmatpush.msra.mxu0 0.0
    %6486 = vmatpush.msra.mxu0 0.0
    %6487 = vmatpush.msra.mxu0 %v6468
    %6488 = vmatpush.msra.mxu0 %v6467
    %6489 = vmatpush.msra.mxu0 %v6466
    %6490 = vmatpush.msra.mxu0 %v6465
    %6491 = vmatmul.f32.gmra.mxu0 %v6473
    %v6492 = vpop.f32.mrf.mxu0
    %v6493 = vadd.f32 0.0, %v6492
    %6494 = vdwg.mxu0
    %v6496 = vperm.slane %v6464, 0
    %v6498 = vadd.f32 %v6496, %v6493
    %v6499 = vld [vmem:[%s105] sm:$0xff]
    %v6500 = vld [vmem:[%s105 + $0x8] sm:$0xff]
    %v6501 = vld [vmem:[%s105 + $0x10] sm:$0xff]
    %v6502 = vld [vmem:[%s105 + $0x18] sm:$0xff]
    %v6505 = vsel %vm6471, %v4530, %v4529
    %v6506 = vsel %vm698, %v6505, 0
    %6508 = vmatpush.msra.mxu0 0.0
    %6509 = vmatpush.msra.mxu0 0.0
    %6510 = vmatpush.msra.mxu0 0.0
    %6511 = vmatpush.msra.mxu0 0.0
    %6512 = vmatpush.msra.mxu0 0.0
    %6513 = vmatpush.msra.mxu0 0.0
    %6514 = vmatpush.msra.mxu0 0.0
    %6515 = vmatpush.msra.mxu0 0.0
    %6516 = vmatpush.msra.mxu0 0.0
    %6517 = vmatpush.msra.mxu0 0.0
    %6518 = vmatpush.msra.mxu0 0.0
    %6519 = vmatpush.msra.mxu0 0.0
    %6520 = vmatpush.msra.mxu0 %v6502
    %6521 = vmatpush.msra.mxu0 %v6501
    %6522 = vmatpush.msra.mxu0 %v6500
    %6523 = vmatpush.msra.mxu0 %v6499
    %6524 = vmatmul.f32.gmra.mxu0 %v6506
    %v6525 = vpop.f32.mrf.mxu0
    %v6526 = vadd.f32 0.0, %v6525
    %6527 = vdwg.mxu0
    %v6528 = vadd.f32 %v6498, %v6526
    %v6529 = vld [vmem:[%s107] sm:$0xff]
    %v6530 = vld [vmem:[%s107 + $0x8] sm:$0xff]
    %v6531 = vld [vmem:[%s107 + $0x10] sm:$0xff]
    %v6532 = vld [vmem:[%s107 + $0x18] sm:$0xff]
    %v6535 = vsel %vm6471, %v6463, %v6462
    %v6536 = vsel %vm698, %v6535, 0
    %6538 = vmatpush.msra.mxu0 0.0
    %6539 = vmatpush.msra.mxu0 0.0
    %6540 = vmatpush.msra.mxu0 0.0
    %6541 = vmatpush.msra.mxu0 0.0
    %6542 = vmatpush.msra.mxu0 0.0
    %6543 = vmatpush.msra.mxu0 0.0
    %6544 = vmatpush.msra.mxu0 0.0
    %6545 = vmatpush.msra.mxu0 0.0
    %6546 = vmatpush.msra.mxu0 0.0
    %6547 = vmatpush.msra.mxu0 0.0
    %6548 = vmatpush.msra.mxu0 0.0
    %6549 = vmatpush.msra.mxu0 0.0
    %6550 = vmatpush.msra.mxu0 %v6532
    %6551 = vmatpush.msra.mxu0 %v6531
    %6552 = vmatpush.msra.mxu0 %v6530
    %6553 = vmatpush.msra.mxu0 %v6529
    %6554 = vmatmul.f32.gmra.mxu0 %v6536
    %v6555 = vpop.f32.mrf.mxu0
    %v6556 = vadd.f32 0.0, %v6555
    %6557 = vdwg.mxu0
    %v6558 = vadd.f32 %v6528, %v6556
    %v6559 = vmul.f32 %v6558, 0.5
    %v6560 = vtanh.pop %v6559
    %v6561 = vadd.f32 %v6560, 1.0
    %v6562 = vmul.f32 %v6561, 0.5
    %vm6563 = vcmask 25600
    %6564 = vst.msk [vmem:[#allocation46] sm:$0x3] %vm6563, %v6562
    // Predicated region
    $region334: #{tpu_custom_call.1} parent=1 // pred_check
      _
    $region335: #{tpu_custom_call.1} parent=1 // pred_check_branch
      %6566 = sbr.rel (0) target = $region337
    $region336: #{tpu_custom_call.1} parent=1 // pred_region
      %6568 = vsyncadd [#allocation4], 0
      %s6570 = sshll.u32 [#allocation46], 4
      %s6571 = int_to_ptr.vmem [resolvable:$true] %s6570
      %s6572 = sshll.u32 %s111, 4
      %s6573 = int_to_ptr.hbm [resolvable:$true] %s6572
      %6575 = dma.vmem_to_hbm [thread:$0]  %s6571, 32, %s6573, [#allocation4]
    $region337: #{tpu_custom_call.1} parent=1 // pred_fallthru
      _
    // Predicated region
    $region338: #{tpu_custom_call.1} parent=1 // pred_check
      _
    $region339: #{tpu_custom_call.1} parent=1 // pred_check_branch
      %6577 = sbr.rel (0) target = $region341
    $region340: #{tpu_custom_call.1} parent=1 // pred_region
      %6579 = dma.done [#allocation4], 32
    $region341: #{tpu_custom_call.1} parent=1 // pred_fallthru
      _
    %6580 = vsyncpa [#allocation3], 1
    %6581 = vsyncpa [#allocation6], 1
    %6582 = vsyncpa [#allocation9], 1
    %6583 = vsyncpa [#allocation12], 1
    %6584 = vsyncpa [#allocation15], 1
    %6585 = vsyncpa [#allocation18], 1
    %6586 = vsyncpa [#allocation21], 1
    %6587 = vsyncpa [#allocation24], 1
    %6588 = vsyncpa [#allocation27], 1
    %6589 = vsyncpa [#allocation30], 1
    %6590 = vsyncpa [#allocation33], 1
    %6591 = vsyncpa [#allocation36], 1
    %6592 = vsyncpa [#allocation39], 1
    %6593 = vsyncpa [#allocation42], 1
    %6594 = vsyncpa [#allocation45], 1
    %6595 = vsyncpa [#allocation4], 1

</llo_original>
